<compile_context>
chip_gen: v6e
topology: v6e:2x2x1
jax: 0.10.0
libtpu: 0.0.40
codegen_flags: <defaults>
</compile_context>

<pallas_src>
import functools
import math

import jax
import jax.numpy as jnp
from jax.experimental import pallas as pl
from jax.experimental.pallas import tpu as pltpu


# ------------------------- conv1: GATv2 (heads, concat) + fused ELU -------------------------

def gatv2_conv1_kernel(x_ref, edge_ref, mask_ref, wl_ref, wr_ref, b_ref,
                       we_ref, att_ref, hout_ref, *, heads, out_ch, fe, tile):
    i = pl.program_id(0)
    start = pl.multiple_of(i * tile, tile)

    x = x_ref[...]                                              # [Np, Fin]
    b_l = b_ref[0:1, :]                                         # [1, HC]
    b_r = b_ref[1:2, :]
    bias = b_ref[2:3, :]

    # lin_l over ALL source nodes (every target tile needs them); lin_r only for this tile.
    xl = jnp.dot(x, wl_ref[...], preferred_element_type=jnp.float32) + b_l        # [Np, HC]
    xl_t = jnp.transpose(xl)                                                       # [HC, Np]
    x_tile = x_ref[pl.ds(start, tile), :]                                          # [T, Fin]
    xr = jnp.dot(x_tile, wr_ref[...], preferred_element_type=jnp.float32) + b_r    # [T, HC]

    mask = mask_ref[...]                                        # [T, Np]  1.0 where edge j->i
    planes = [edge_ref[f] for f in range(fe)]                   # Fe x [T, Np], lane-dense sources
    neg = jnp.float32(-1e30)

    for h in range(heads):                                      # static unroll over heads
        # GATv2 scores built per channel as lane-dense [T, Np] planes (leaky is per-channel).
        logit = jnp.zeros(mask.shape, jnp.float32)
        for c in range(out_ch):
            hc = h * out_ch + c
            e = we_ref[0, hc] * planes[0]
            for f in range(1, fe):
                e = e + we_ref[f, hc] * planes[f]
            s = xr[:, hc:hc + 1] + xl_t[hc:hc + 1, :] + e        # [T, Np]
            s = jnp.where(s > 0, s, 0.2 * s)                     # LeakyReLU(0.2)
            logit = logit + att_ref[hc] * s
        # masked softmax over the (lane-dense) source axis
        logit = jnp.where(mask > 0, logit, neg)
        m = jnp.max(logit, axis=-1, keepdims=True)               # [T, 1]
        p = jnp.exp(logit - m) * mask
        denom = jnp.maximum(jnp.sum(p, axis=-1, keepdims=True), jnp.float32(1e-20))
        alpha = p / denom                                        # exact division (torch parity)
        # aggregation on the MXU: [T, Np] @ [Np, C]
        agg = jnp.dot(alpha, xl[:, h * out_ch:(h + 1) * out_ch],
                      preferred_element_type=jnp.float32)
        agg = agg + bias[:, h * out_ch:(h + 1) * out_ch]
        # fused F.elu; per-head slab store avoids a lane-misaligned 30-wide concat
        hout_ref[h] = jnp.where(agg > 0, agg, jnp.exp(jnp.minimum(agg, 0.0)) - 1.0)


# ------------------------- conv2: GATv2 (1 head, concat=False) -------------------------

def gatv2_conv2_kernel(hf_ref, ht_ref, edge_ref, mask_ref, w2_ref, sc_ref, out_ref,
                       *, heads_in, out_in, fe):
    w2 = w2_ref[...]                                             # [heads_in*out_in, 2] = [lin_l|lin_r]
    # fold conv1's head-concat into per-head matmuls against row blocks of w2
    xlr_all = jnp.dot(hf_ref[0], w2[0:out_in, :], preferred_element_type=jnp.float32)
    xlr_tile = jnp.dot(ht_ref[0], w2[0:out_in, :], preferred_element_type=jnp.float32)
    for hh in range(1, heads_in):
        rows = slice(hh * out_in, (hh + 1) * out_in)
        xlr_all = xlr_all + jnp.dot(hf_ref[hh], w2[rows, :], preferred_element_type=jnp.float32)
        xlr_tile = xlr_tile + jnp.dot(ht_ref[hh], w2[rows, :], preferred_element_type=jnp.float32)

    xl = xlr_all[:, 0:1] + sc_ref[fe + 2]                        # [Np, 1]  source projection (+b_l)
    xl_row = jnp.transpose(xl)                                   # [1, Np]
    xr = xlr_tile[:, 1:2] + sc_ref[fe + 3]                       # [T, 1]   target projection (+b_r)

    e = sc_ref[0] * edge_ref[0]
    for f in range(1, fe):
        e = e + sc_ref[f] * edge_ref[f]                          # [T, Np]
    s = xr + xl_row + e
    s = jnp.where(s > 0, s, 0.2 * s)                             # LeakyReLU(0.2)
    logit = sc_ref[fe] * s                                       # att (single head, out=1)

    mask = mask_ref[...]
    logit = jnp.where(mask > 0, logit, jnp.float32(-1e30))
    m = jnp.max(logit, axis=-1, keepdims=True)
    p = jnp.exp(logit - m) * mask
    denom = jnp.maximum(jnp.sum(p, axis=-1, keepdims=True), jnp.float32(1e-20))
    alpha = p / denom
    out = jnp.dot(alpha, xl, preferred_element_type=jnp.float32) + sc_ref[fe + 1]   # +bias
    out_ref[...] = out


# ------------------------- pallas_call wrappers -------------------------

def gat_forward_pallas(x_pad, edge_t, mask, p1, p2, *, heads1, out1, out2, tile):
    n_pad, fin = x_pad.shape
    fe = edge_t.shape[0]
    hc1 = heads1 * out1
    grid = (n_pad // tile,)
    cparams = pltpu.CompilerParams(
        dimension_semantics=("parallel",),           # independent target tiles (2 TCs on v7x)
        vmem_limit_bytes=48 * 1024 * 1024)

    conv1 = pl.pallas_call(
        functools.partial(gatv2_conv1_kernel, heads=heads1, out_ch=out1, fe=fe, tile=tile),
        out_shape=jax.ShapeDtypeStruct((heads1, n_pad, out1), jnp.float32),
        grid=grid,
        in_specs=[
            pl.BlockSpec((n_pad, fin), lambda i: (0, 0)),             # x (full, stays resident)
            pl.BlockSpec((fe, tile, n_pad), lambda i: (0, i, 0)),     # edge tile [Fe, T, Np]
            pl.BlockSpec((tile, n_pad), lambda i: (i, 0)),            # mask tile [T, Np]
            pl.BlockSpec((fin, hc1), lambda i: (0, 0)),               # w_l
            pl.BlockSpec((fin, hc1), lambda i: (0, 0)),               # w_r
            pl.BlockSpec((3, hc1), lambda i: (0, 0)),                 # [b_l; b_r; bias]
            pl.BlockSpec(memory_space=pltpu.MemorySpace.SMEM),        # we  [Fe, HC]  (scalars)
            pl.BlockSpec(memory_space=pltpu.MemorySpace.SMEM),        # att [HC]      (scalars)
        ],
        out_specs=pl.BlockSpec((heads1, tile, out1), lambda i: (0, i, 0)),
        compiler_params=cparams,
    )
    h = conv1(x_pad, edge_t, mask, p1["w_l"], p1["w_r"], p1["b"], p1["we"], p1["att"])

    conv2 = pl.pallas_call(
        functools.partial(gatv2_conv2_kernel, heads_in=heads1, out_in=out1, fe=fe),
        out_shape=jax.ShapeDtypeStruct((n_pad, out2), jnp.float32),
        grid=grid,
        in_specs=[
            pl.BlockSpec((heads1, n_pad, out1), lambda i: (0, 0, 0)),  # h full (sources)
            pl.BlockSpec((heads1, tile, out1), lambda i: (0, i, 0)),   # h tile (targets)
            pl.BlockSpec((fe, tile, n_pad), lambda i: (0, i, 0)),      # edge tile
            pl.BlockSpec((tile, n_pad), lambda i: (i, 0)),             # mask tile
            pl.BlockSpec((hc1, 2), lambda i: (0, 0)),                  # [w_l2 | w_r2]
            pl.BlockSpec(memory_space=pltpu.MemorySpace.SMEM),         # [we2.., att2, bias2, b_l2, b_r2]
        ],
        out_specs=pl.BlockSpec((tile, out2), lambda i: (i, 0)),
        compiler_params=cparams,
    )
    return conv2(h, h, edge_t, mask, p2["w2"], p2["scal"])


# ------------------------- plain-JAX glue -------------------------

def build_dense_graph(edge_index, edge_attr, num_nodes, n_pad):
    """Dense edge tensor [Fe, N_tgt, N_src] (source nodes on the lane axis) and 2-D adjacency
    mask [N_tgt, N_src], with PyG-style self-loops whose attrs are the mean of each node's
    incoming non-self edge attrs (remove_self_loops + add_self_loops(fill_value='mean'))."""
    src, dst = edge_index[0], edge_index[1]
    non_self = (src != dst).astype(jnp.float32)
    sums = jax.ops.segment_sum(edge_attr * non_self[:, None], dst, num_segments=num_nodes)
    counts = jax.ops.segment_sum(non_self, dst, num_segments=num_nodes)
    loop_attr = sums / jnp.maximum(counts, 1.0)[:, None]

    fe = edge_attr.shape[1]
    edge_dense = jnp.zeros((n_pad, n_pad, fe), jnp.float32)
    edge_dense = edge_dense.at[dst, src].set(edge_attr)
    diag = jnp.arange(num_nodes)
    edge_dense = edge_dense.at[diag, diag].set(loop_attr)
    edge_t = jnp.transpose(edge_dense, (2, 0, 1))                      # [Fe, Np, Np]

    mask = jnp.zeros((n_pad, n_pad), jnp.float32)
    mask = mask.at[dst, src].set(1.0)
    diag_all = jnp.arange(n_pad)
    mask = mask.at[diag_all, diag_all].set(1.0)   # self-loops; also keeps padded rows finite
    # TODO(synk): duplicate parallel edges collapse to one dense entry (PyG softmax counts each);
    #             for large sparse graphs use a CSR scalar-prefetch kernel; bf16 edge on v5e.
    return edge_t, mask


@functools.partial(jax.jit, static_argnames=("heads1", "out1", "out2", "tile", "n_pad"))
def gat_model_forward(x, edge_index, edge_attr, params, *, heads1, out1, out2, tile, n_pad):
    n, fin = x.shape
    x_pad = jnp.zeros((n_pad, fin), jnp.float32).at[:n].set(x)
    edge_t, mask = build_dense_graph(edge_index, edge_attr, n, n_pad)
    out = gat_forward_pallas(x_pad, edge_t, mask, params["conv1"], params["conv2"],
                             heads1=heads1, out1=out1, out2=out2, tile=tile)
    return out[:n]


# ------------------------- deterministic params -------------------------

def _glorot(key, shape):
    a = math.sqrt(6.0 / (shape[-2] + shape[-1]))
    return jax.random.uniform(key, shape, jnp.float32, minval=-a, maxval=a)


def init_params(key, fin, fe, hidden, heads, target):
    # NOTE: when importing trained PyG weights, att is [1, heads, out] (flatten head-major) and
    #       lin_* weights are [heads*out, in] (transpose) -- this layout matches that convention.
    hc1 = heads * hidden
    k = jax.random.split(key, 14)
    conv1 = {
        "w_l": _glorot(k[0], (fin, hc1)),
        "w_r": _glorot(k[1], (fin, hc1)),
        "b": jnp.stack([0.1 * jax.random.normal(k[2], (hc1,), jnp.float32),
                        0.1 * jax.random.normal(k[3], (hc1,), jnp.float32),
                        0.1 * jax.random.normal(k[4], (hc1,), jnp.float32)], axis=0),
        "we": _glorot(k[5], (fe, hc1)),
        "att": _glorot(k[6], (heads, hidden)).reshape(hc1),      # head-major
    }
    assert target == 1, "conv2 packing below assumes target_size == 1 (as in the spec)"
    w_l2 = _glorot(k[7], (hc1, target))
    w_r2 = _glorot(k[8], (hc1, target))
    we2 = _glorot(k[9], (fe, target))
    att2 = _glorot(k[10], (1, target)).reshape(target)
    bias2 = 0.1 * jax.random.normal(k[11], (target,), jnp.float32)
    b_l2 = 0.1 * jax.random.normal(k[12], (target,), jnp.float32)
    b_r2 = 0.1 * jax.random.normal(k[13], (target,), jnp.float32)
    conv2 = {
        "w2": jnp.concatenate([w_l2, w_r2], axis=1),                               # [hc1, 2]
        "scal": jnp.concatenate([we2.reshape(-1), att2, bias2, b_l2, b_r2]),       # [fe + 4]
    }
    return {"conv1": conv1, "conv2": conv2}


if __name__ == "__main__":
    num_node_features, num_edge_features = 4, 3
    hidden_size, target_size, num_heads = 10, 1, 3
    n = 12            # nodes
    tile = 64         # target-node tile (use ~128 on v7x, ~256 on v6e/v5e for large graphs)
    n_pad = max(128, ((n + tile - 1) // tile) * tile)   # lane-dense source axis, mult of tile
    assert n_pad % tile == 0

    key = jax.random.PRNGKey(0)
    kx, ke, kp = jax.random.split(key, 3)

    x = jax.random.normal(kx, (n, num_node_features), jnp.float32)

    # simple directed graph: ring in both directions (no self loops, no duplicates)
    fwd = jnp.arange(n, dtype=jnp.int32)
    bwd = (fwd + 1) % n
    edge_index = jnp.stack([jnp.concatenate([fwd, bwd]),
                            jnp.concatenate([bwd, fwd])], axis=0)        # [2, 24]
    edge_attr = jax.random.normal(ke, (edge_index.shape[1], num_edge_features), jnp.float32)

    params = init_params(kp, num_node_features, num_edge_features,
                         hidden_size, num_heads, target_size)

    # TODO(synk): F.dropout(p=0.6) is stochastic in training; eval-mode (identity) implemented.
    out = gat_model_forward(x, edge_index, edge_attr, params,
                            heads1=num_heads, out1=hidden_size, out2=target_size,
                            tile=tile, n_pad=n_pad)
    out = jax.block_until_ready(out)
    assert out.shape == (n, target_size) and out.dtype == jnp.float32
    assert bool(jnp.all(jnp.isfinite(out)))
    print("KERNEL_OK")
</pallas_src>

<mosaic_0001>
module attributes {stable_mosaic.version = 11 : i64} {
  func.func private @main(%arg0: i32) attributes {dimension_semantics = [#tpu.dimension_semantics<core_parallel>], iteration_bounds = array<i64: 2>, tpu.core_type = #tpu.core_type<sc_scalar_subcore>, window_params = []} {
    return
  }
}

module attributes {stable_mosaic.version = 11 : i64} {
  func.func private @main(%arg0: i32) attributes {dimension_semantics = [#tpu.dimension_semantics<core_parallel>], iteration_bounds = array<i64: 2>, tpu.core_type = #tpu.core_type<sc_scalar_subcore>, window_params = []} {
    return
  }
}

module attributes {stable_mosaic.version = 11 : i64} {
  func.func @gatv2_conv2_kernel(%arg0: i32, %arg1: memref<3x128x10xf32, #tpu.memory_space<vmem>>, %arg2: memref<3x64x10xf32, #tpu.memory_space<vmem>>, %arg3: memref<3x64x128xf32, #tpu.memory_space<vmem>>, %arg4: memref<64x128xf32, #tpu.memory_space<vmem>>, %arg5: memref<30x2xf32, #tpu.memory_space<vmem>>, %arg6: memref<7xf32, #tpu.memory_space<smem>>, %arg7: memref<64x1xf32, #tpu.memory_space<vmem>>) attributes {dimension_semantics = [#tpu.dimension_semantics<parallel>], iteration_bounds = array<i64: 2>, scalar_prefetch = 0 : i64, scratch_operands = 0 : i64, tpu.core_type = #tpu.core_type<tc>, window_params = [{pipeline_mode = #tpu.pipeline_mode<synchronous>, transform_indices = @transform_0, window_bounds = array<i64: 3, 128, 10>}, {transform_indices = @transform_1, window_bounds = array<i64: 3, 64, 10>}, {transform_indices = @transform_2, window_bounds = array<i64: 3, 64, 128>}, {transform_indices = @transform_3, window_bounds = array<i64: 64, 128>}, {pipeline_mode = #tpu.pipeline_mode<synchronous>, transform_indices = @transform_4, window_bounds = array<i64: 30, 2>}, {transform_indices = @transform_5, window_bounds = array<i64: 7>}, {transform_indices = @transform_6, window_bounds = array<i64: 64, 1>}]} {
    %c0 = arith.constant 0 : index
    %c0_0 = arith.constant 0 : index
    %0 = vector.load %arg5[%c0, %c0_0] : memref<30x2xf32, #tpu.memory_space<vmem>>, vector<30x2xf32>
    %c0_1 = arith.constant 0 : index
    %c0_2 = arith.constant 0 : index
    %c0_3 = arith.constant 0 : index
    %1 = vector.load %arg1[%c0_1, %c0_2, %c0_3] : memref<3x128x10xf32, #tpu.memory_space<vmem>>, vector<1x128x10xf32>
    %2 = vector.shape_cast %1 : vector<1x128x10xf32> to vector<128x10xf32>
    %3 = vector.extract_strided_slice %0 {offsets = [0, 0], sizes = [10, 2], strides = [1, 1]} : vector<30x2xf32> to vector<10x2xf32>
    %cst = arith.constant dense<0.000000e+00> : vector<128x2xf32>
    %4 = tpu.matmul %2, %3, %cst {dimension_numbers = #tpu.dot_dimension_numbers<[1], [0], [0], [1], [0, 0, 1, 1], [], []>} : vector<128x10xf32>, vector<10x2xf32>, vector<128x2xf32> -> vector<128x2xf32>
    %c0_4 = arith.constant 0 : index
    %c0_5 = arith.constant 0 : index
    %c0_6 = arith.constant 0 : index
    %5 = vector.load %arg2[%c0_4, %c0_5, %c0_6] : memref<3x64x10xf32, #tpu.memory_space<vmem>>, vector<1x64x10xf32>
    %6 = vector.shape_cast %5 : vector<1x64x10xf32> to vector<64x10xf32>
    %7 = vector.extract_strided_slice %0 {offsets = [0, 0], sizes = [10, 2], strides = [1, 1]} : vector<30x2xf32> to vector<10x2xf32>
    %cst_7 = arith.constant dense<0.000000e+00> : vector<64x2xf32>
    %8 = tpu.matmul %6, %7, %cst_7 {dimension_numbers = #tpu.dot_dimension_numbers<[1], [0], [0], [1], [0, 0, 1, 1], [], []>} : vector<64x10xf32>, vector<10x2xf32>, vector<64x2xf32> -> vector<64x2xf32>
    %c1 = arith.constant 1 : index
    %c0_8 = arith.constant 0 : index
    %c0_9 = arith.constant 0 : index
    %9 = vector.load %arg1[%c1, %c0_8, %c0_9] : memref<3x128x10xf32, #tpu.memory_space<vmem>>, vector<1x128x10xf32>
    %10 = vector.shape_cast %9 : vector<1x128x10xf32> to vector<128x10xf32>
    %11 = vector.extract_strided_slice %0 {offsets = [10, 0], sizes = [10, 2], strides = [1, 1]} : vector<30x2xf32> to vector<10x2xf32>
    %cst_10 = arith.constant dense<0.000000e+00> : vector<128x2xf32>
    %12 = tpu.matmul %10, %11, %cst_10 {dimension_numbers = #tpu.dot_dimension_numbers<[1], [0], [0], [1], [0, 0, 1, 1], [], []>} : vector<128x10xf32>, vector<10x2xf32>, vector<128x2xf32> -> vector<128x2xf32>
    %13 = arith.addf %4, %12 : vector<128x2xf32>
    %c1_11 = arith.constant 1 : index
    %c0_12 = arith.constant 0 : index
    %c0_13 = arith.constant 0 : index
    %14 = vector.load %arg2[%c1_11, %c0_12, %c0_13] : memref<3x64x10xf32, #tpu.memory_space<vmem>>, vector<1x64x10xf32>
    %15 = vector.shape_cast %14 : vector<1x64x10xf32> to vector<64x10xf32>
    %16 = vector.extract_strided_slice %0 {offsets = [10, 0], sizes = [10, 2], strides = [1, 1]} : vector<30x2xf32> to vector<10x2xf32>
    %cst_14 = arith.constant dense<0.000000e+00> : vector<64x2xf32>
    %17 = tpu.matmul %15, %16, %cst_14 {dimension_numbers = #tpu.dot_dimension_numbers<[1], [0], [0], [1], [0, 0, 1, 1], [], []>} : vector<64x10xf32>, vector<10x2xf32>, vector<64x2xf32> -> vector<64x2xf32>
    %18 = arith.addf %8, %17 : vector<64x2xf32>
    %c2 = arith.constant 2 : index
    %c0_15 = arith.constant 0 : index
    %c0_16 = arith.constant 0 : index
    %19 = vector.load %arg1[%c2, %c0_15, %c0_16] : memref<3x128x10xf32, #tpu.memory_space<vmem>>, vector<1x128x10xf32>
    %20 = vector.shape_cast %19 : vector<1x128x10xf32> to vector<128x10xf32>
    %21 = vector.extract_strided_slice %0 {offsets = [20, 0], sizes = [10, 2], strides = [1, 1]} : vector<30x2xf32> to vector<10x2xf32>
    %cst_17 = arith.constant dense<0.000000e+00> : vector<128x2xf32>
    %22 = tpu.matmul %20, %21, %cst_17 {dimension_numbers = #tpu.dot_dimension_numbers<[1], [0], [0], [1], [0, 0, 1, 1], [], []>} : vector<128x10xf32>, vector<10x2xf32>, vector<128x2xf32> -> vector<128x2xf32>
    %23 = arith.addf %13, %22 : vector<128x2xf32>
    %c2_18 = arith.constant 2 : index
    %c0_19 = arith.constant 0 : index
    %c0_20 = arith.constant 0 : index
    %24 = vector.load %arg2[%c2_18, %c0_19, %c0_20] : memref<3x64x10xf32, #tpu.memory_space<vmem>>, vector<1x64x10xf32>
    %25 = vector.shape_cast %24 : vector<1x64x10xf32> to vector<64x10xf32>
    %26 = vector.extract_strided_slice %0 {offsets = [20, 0], sizes = [10, 2], strides = [1, 1]} : vector<30x2xf32> to vector<10x2xf32>
    %cst_21 = arith.constant dense<0.000000e+00> : vector<64x2xf32>
    %27 = tpu.matmul %25, %26, %cst_21 {dimension_numbers = #tpu.dot_dimension_numbers<[1], [0], [0], [1], [0, 0, 1, 1], [], []>} : vector<64x10xf32>, vector<10x2xf32>, vector<64x2xf32> -> vector<64x2xf32>
    %28 = arith.addf %18, %27 : vector<64x2xf32>
    %29 = vector.extract_strided_slice %23 {offsets = [0, 0], sizes = [128, 1], strides = [1, 1]} : vector<128x2xf32> to vector<128x1xf32>
    %c5 = arith.constant 5 : index
    %30 = memref.load %arg6[%c5] : memref<7xf32, #tpu.memory_space<smem>>
    %31 = vector.broadcast %30 : f32 to vector<128x1xf32>
    %32 = arith.addf %29, %31 : vector<128x1xf32>
    %33 = tpu.transpose %32, [1, 0] : vector<128x1xf32> -> vector<1x128xf32>
    %34 = vector.extract_strided_slice %28 {offsets = [0, 1], sizes = [64, 1], strides = [1, 1]} : vector<64x2xf32> to vector<64x1xf32>
    %c6 = arith.constant 6 : index
    %35 = memref.load %arg6[%c6] : memref<7xf32, #tpu.memory_space<smem>>
    %36 = vector.broadcast %35 : f32 to vector<64x1xf32>
    %37 = arith.addf %34, %36 : vector<64x1xf32>
    %c0_22 = arith.constant 0 : index
    %38 = memref.load %arg6[%c0_22] : memref<7xf32, #tpu.memory_space<smem>>
    %c0_23 = arith.constant 0 : index
    %c0_24 = arith.constant 0 : index
    %c0_25 = arith.constant 0 : index
    %39 = vector.load %arg3[%c0_23, %c0_24, %c0_25] : memref<3x64x128xf32, #tpu.memory_space<vmem>>, vector<1x64x128xf32>
    %40 = vector.shape_cast %39 : vector<1x64x128xf32> to vector<64x128xf32>
    %41 = vector.broadcast %38 : f32 to vector<64x128xf32>
    %42 = arith.mulf %41, %40 : vector<64x128xf32>
    %c1_26 = arith.constant 1 : index
    %43 = memref.load %arg6[%c1_26] : memref<7xf32, #tpu.memory_space<smem>>
    %c1_27 = arith.constant 1 : index
    %c0_28 = arith.constant 0 : index
    %c0_29 = arith.constant 0 : index
    %44 = vector.load %arg3[%c1_27, %c0_28, %c0_29] : memref<3x64x128xf32, #tpu.memory_space<vmem>>, vector<1x64x128xf32>
    %45 = vector.shape_cast %44 : vector<1x64x128xf32> to vector<64x128xf32>
    %46 = vector.broadcast %43 : f32 to vector<64x128xf32>
    %47 = arith.mulf %46, %45 : vector<64x128xf32>
    %48 = arith.addf %42, %47 : vector<64x128xf32>
    %c2_30 = arith.constant 2 : index
    %49 = memref.load %arg6[%c2_30] : memref<7xf32, #tpu.memory_space<smem>>
    %c2_31 = arith.constant 2 : index
    %c0_32 = arith.constant 0 : index
    %c0_33 = arith.constant 0 : index
    %50 = vector.load %arg3[%c2_31, %c0_32, %c0_33] : memref<3x64x128xf32, #tpu.memory_space<vmem>>, vector<1x64x128xf32>
    %51 = vector.shape_cast %50 : vector<1x64x128xf32> to vector<64x128xf32>
    %52 = vector.broadcast %49 : f32 to vector<64x128xf32>
    %53 = arith.mulf %52, %51 : vector<64x128xf32>
    %54 = arith.addf %48, %53 : vector<64x128xf32>
    %55 = vector.broadcast %37 : vector<64x1xf32> to vector<64x128xf32>
    %56 = vector.broadcast %33 : vector<1x128xf32> to vector<64x128xf32>
    %57 = arith.addf %55, %56 : vector<64x128xf32>
    %58 = arith.addf %57, %54 : vector<64x128xf32>
    %cst_34 = arith.constant 0.000000e+00 : f32
    %59 = vector.broadcast %cst_34 : f32 to vector<64x128xf32>
    %60 = arith.cmpf ogt, %58, %59 : vector<64x128xf32>
    %cst_35 = arith.constant 2.000000e-01 : f32
    %61 = vector.broadcast %cst_35 : f32 to vector<64x128xf32>
    %62 = arith.mulf %61, %58 : vector<64x128xf32>
    %63 = arith.select %60, %58, %62 : vector<64x128xi1>, vector<64x128xf32>
    %c3 = arith.constant 3 : index
    %64 = memref.load %arg6[%c3] : memref<7xf32, #tpu.memory_space<smem>>
    %65 = vector.broadcast %64 : f32 to vector<64x128xf32>
    %66 = arith.mulf %65, %63 : vector<64x128xf32>
    %c0_36 = arith.constant 0 : index
    %c0_37 = arith.constant 0 : index
    %67 = vector.load %arg4[%c0_36, %c0_37] : memref<64x128xf32, #tpu.memory_space<vmem>>, vector<64x128xf32>
    %cst_38 = arith.constant 0.000000e+00 : f32
    %68 = vector.broadcast %cst_38 : f32 to vector<64x128xf32>
    %69 = arith.cmpf ogt, %67, %68 : vector<64x128xf32>
    %cst_39 = arith.constant -1.000000e+30 : f32
    %70 = vector.broadcast %cst_39 : f32 to vector<64x128xf32>
    %71 = arith.select %69, %66, %70 : vector<64x128xi1>, vector<64x128xf32>
    %cst_40 = arith.constant dense<0xFF800000> : vector<64xf32>
    %72 = vector.multi_reduction <maximumf>, %71, %cst_40 [1] : vector<64x128xf32> to vector<64xf32>
    %73 = vector.shape_cast %72 : vector<64xf32> to vector<64x1xf32>
    %74 = vector.broadcast %73 : vector<64x1xf32> to vector<64x128xf32>
    %75 = arith.subf %71, %74 : vector<64x128xf32>
    %76 = math.exp %75 : vector<64x128xf32>
    %77 = arith.mulf %76, %67 : vector<64x128xf32>
    %cst_41 = arith.constant dense<0.000000e+00> : vector<64xf32>
    %78 = vector.multi_reduction <add>, %77, %cst_41 [1] : vector<64x128xf32> to vector<64xf32>
    %79 = vector.shape_cast %78 : vector<64xf32> to vector<64x1xf32>
    %cst_42 = arith.constant 9.99999968E-21 : f32
    %80 = vector.broadcast %cst_42 : f32 to vector<64x1xf32>
    %81 = arith.maximumf %79, %80 : vector<64x1xf32>
    %82 = vector.broadcast %81 : vector<64x1xf32> to vector<64x128xf32>
    %83 = arith.divf %77, %82 : vector<64x128xf32>
    %cst_43 = arith.constant dense<0.000000e+00> : vector<64x1xf32>
    %84 = tpu.matmul %83, %32, %cst_43 {dimension_numbers = #tpu.dot_dimension_numbers<[1], [0], [0], [1], [0, 0, 1, 1], [], []>} : vector<64x128xf32>, vector<128x1xf32>, vector<64x1xf32> -> vector<64x1xf32>
    %c4 = arith.constant 4 : index
    %85 = memref.load %arg6[%c4] : memref<7xf32, #tpu.memory_space<smem>>
    %86 = vector.broadcast %85 : f32 to vector<64x1xf32>
    %87 = arith.addf %84, %86 : vector<64x1xf32>
    %c0_44 = arith.constant 0 : index
    %c0_45 = arith.constant 0 : index
    %88 = vector.load %arg7[%c0_44, %c0_45] : memref<64x1xf32, #tpu.memory_space<vmem>>, vector<64x1xf32>
    tpu.vector_store %arg7[%c0_44, %c0_45], %87 {strides = array<i32>} : memref<64x1xf32, #tpu.memory_space<vmem>>, vector<64x1xf32>,
    return
  }
  func.func @transform_0(%arg0: i32) -> (i32, i32, i32) {
    %c0_i32 = arith.constant 0 : i32
    %c0_i32_0 = arith.constant 0 : i32
    %c0_i32_1 = arith.constant 0 : i32
    %c0_i32_2 = arith.constant 0 : i32
    return %c0_i32, %c0_i32_0, %c0_i32_1 : i32, i32, i32
  }
  func.func @transform_1(%arg0: i32) -> (i32, i32, i32) {
    %c0_i32 = arith.constant 0 : i32
    %c0_i32_0 = arith.constant 0 : i32
    %c0_i32_1 = arith.constant 0 : i32
    return %c0_i32, %arg0, %c0_i32_0 : i32, i32, i32
  }
  func.func @transform_2(%arg0: i32) -> (i32, i32, i32) {
    %c0_i32 = arith.constant 0 : i32
    %c0_i32_0 = arith.constant 0 : i32
    %c0_i32_1 = arith.constant 0 : i32
    return %c0_i32, %arg0, %c0_i32_0 : i32, i32, i32
  }
  func.func @transform_3(%arg0: i32) -> (i32, i32) {
    %c0_i32 = arith.constant 0 : i32
    %c0_i32_0 = arith.constant 0 : i32
    return %arg0, %c0_i32 : i32, i32
  }
  func.func @transform_4(%arg0: i32) -> (i32, i32) {
    %c0_i32 = arith.constant 0 : i32
    %c0_i32_0 = arith.constant 0 : i32
    %c0_i32_1 = arith.constant 0 : i32
    return %c0_i32, %c0_i32_0 : i32, i32
  }
  func.func @transform_5(%arg0: i32) -> i32 {
    %c0_i32 = arith.constant 0 : i32
    %c0_i32_0 = arith.constant 0 : i32
    return %c0_i32 : i32
  }
  func.func @transform_6(%arg0: i32) -> (i32, i32) {
    %c0_i32 = arith.constant 0 : i32
    %c0_i32_0 = arith.constant 0 : i32
    return %arg0, %c0_i32 : i32, i32
  }
}

module attributes {stable_mosaic.version = 11 : i64} {
  func.func @gatv2_conv1_kernel(%arg0: i32, %arg1: memref<128x4xf32, #tpu.memory_space<vmem>>, %arg2: memref<3x64x128xf32, #tpu.memory_space<vmem>>, %arg3: memref<64x128xf32, #tpu.memory_space<vmem>>, %arg4: memref<4x30xf32, #tpu.memory_space<vmem>>, %arg5: memref<4x30xf32, #tpu.memory_space<vmem>>, %arg6: memref<3x30xf32, #tpu.memory_space<vmem>>, %arg7: memref<3x30xf32, #tpu.memory_space<smem>>, %arg8: memref<30xf32, #tpu.memory_space<smem>>, %arg9: memref<3x64x10xf32, #tpu.memory_space<vmem>>) attributes {dimension_semantics = [#tpu.dimension_semantics<parallel>], iteration_bounds = array<i64: 2>, scalar_prefetch = 0 : i64, scratch_operands = 0 : i64, tpu.core_type = #tpu.core_type<tc>, window_params = [{pipeline_mode = #tpu.pipeline_mode<synchronous>, transform_indices = @transform_0, window_bounds = array<i64: 128, 4>}, {transform_indices = @transform_1, window_bounds = array<i64: 3, 64, 128>}, {transform_indices = @transform_2, window_bounds = array<i64: 64, 128>}, {pipeline_mode = #tpu.pipeline_mode<synchronous>, transform_indices = @transform_3, window_bounds = array<i64: 4, 30>}, {pipeline_mode = #tpu.pipeline_mode<synchronous>, transform_indices = @transform_4, window_bounds = array<i64: 4, 30>}, {pipeline_mode = #tpu.pipeline_mode<synchronous>, transform_indices = @transform_5, window_bounds = array<i64: 3, 30>}, {transform_indices = @transform_6, window_bounds = array<i64: 3, 30>}, {transform_indices = @transform_7, window_bounds = array<i64: 30>}, {transform_indices = @transform_8, window_bounds = array<i64: 3, 64, 10>}]} {
    %c64_i32 = arith.constant 64 : i32
    %0 = arith.muli %arg0, %c64_i32 : i32
    %1 = tpu.assume_multiple %0, 64 : i32
    %c0 = arith.constant 0 : index
    %c0_0 = arith.constant 0 : index
    %2 = vector.load %arg1[%c0, %c0_0] : memref<128x4xf32, #tpu.memory_space<vmem>>, vector<128x4xf32>
    %c0_1 = arith.constant 0 : index
    %c0_2 = arith.constant 0 : index
    %3 = vector.load %arg6[%c0_1, %c0_2] : memref<3x30xf32, #tpu.memory_space<vmem>>, vector<1x30xf32>
    %c1 = arith.constant 1 : index
    %c0_3 = arith.constant 0 : index
    %4 = vector.load %arg6[%c1, %c0_3] : memref<3x30xf32, #tpu.memory_space<vmem>>, vector<1x30xf32>
    %c2 = arith.constant 2 : index
    %c0_4 = arith.constant 0 : index
    %5 = vector.load %arg6[%c2, %c0_4] : memref<3x30xf32, #tpu.memory_space<vmem>>, vector<1x30xf32>
    %c0_5 = arith.constant 0 : index
    %c0_6 = arith.constant 0 : index
    %6 = vector.load %arg4[%c0_5, %c0_6] : memref<4x30xf32, #tpu.memory_space<vmem>>, vector<4x30xf32>
    %cst = arith.constant dense<0.000000e+00> : vector<128x30xf32>
    %7 = tpu.matmul %2, %6, %cst {dimension_numbers = #tpu.dot_dimension_numbers<[1], [0], [0], [1], [0, 0, 1, 1], [], []>} : vector<128x4xf32>, vector<4x30xf32>, vector<128x30xf32> -> vector<128x30xf32>
    %8 = vector.broadcast %3 : vector<1x30xf32> to vector<128x30xf32>
    %9 = arith.addf %7, %8 : vector<128x30xf32>
    %10 = tpu.transpose %9, [1, 0] : vector<128x30xf32> -> vector<30x128xf32>
    %11 = arith.index_cast %1 : i32 to index
    %c0_7 = arith.constant 0 : index
    %12 = vector.load %arg1[%11, %c0_7] : memref<128x4xf32, #tpu.memory_space<vmem>>, vector<64x4xf32>
    %c0_8 = arith.constant 0 : index
    %c0_9 = arith.constant 0 : index
    %13 = vector.load %arg5[%c0_8, %c0_9] : memref<4x30xf32, #tpu.memory_space<vmem>>, vector<4x30xf32>
    %cst_10 = arith.constant dense<0.000000e+00> : vector<64x30xf32>
    %14 = tpu.matmul %12, %13, %cst_10 {dimension_numbers = #tpu.dot_dimension_numbers<[1], [0], [0], [1], [0, 0, 1, 1], [], []>} : vector<64x4xf32>, vector<4x30xf32>, vector<64x30xf32> -> vector<64x30xf32>
    %15 = vector.broadcast %4 : vector<1x30xf32> to vector<64x30xf32>
    %16 = arith.addf %14, %15 : vector<64x30xf32>
    %c0_11 = arith.constant 0 : index
    %c0_12 = arith.constant 0 : index
    %17 = vector.load %arg3[%c0_11, %c0_12] : memref<64x128xf32, #tpu.memory_space<vmem>>, vector<64x128xf32>
    %c0_13 = arith.constant 0 : index
    %c0_14 = arith.constant 0 : index
    %c0_15 = arith.constant 0 : index
    %18 = vector.load %arg2[%c0_13, %c0_14, %c0_15] : memref<3x64x128xf32, #tpu.memory_space<vmem>>, vector<1x64x128xf32>
    %19 = vector.shape_cast %18 : vector<1x64x128xf32> to vector<64x128xf32>
    %c1_16 = arith.constant 1 : index
    %c0_17 = arith.constant 0 : index
    %c0_18 = arith.constant 0 : index
    %20 = vector.load %arg2[%c1_16, %c0_17, %c0_18] : memref<3x64x128xf32, #tpu.memory_space<vmem>>, vector<1x64x128xf32>
    %21 = vector.shape_cast %20 : vector<1x64x128xf32> to vector<64x128xf32>
    %c2_19 = arith.constant 2 : index
    %c0_20 = arith.constant 0 : index
    %c0_21 = arith.constant 0 : index
    %22 = vector.load %arg2[%c2_19, %c0_20, %c0_21] : memref<3x64x128xf32, #tpu.memory_space<vmem>>, vector<1x64x128xf32>
    %23 = vector.shape_cast %22 : vector<1x64x128xf32> to vector<64x128xf32>
    %cst_22 = arith.constant 0.000000e+00 : f32
    %24 = vector.broadcast %cst_22 : f32 to vector<64x128xf32>
    %c0_23 = arith.constant 0 : index
    %c0_24 = arith.constant 0 : index
    %25 = memref.load %arg7[%c0_23, %c0_24] : memref<3x30xf32, #tpu.memory_space<smem>>
    %26 = vector.broadcast %25 : f32 to vector<64x128xf32>
    %27 = arith.mulf %26, %19 : vector<64x128xf32>
    %c1_25 = arith.constant 1 : index
    %c0_26 = arith.constant 0 : index
    %28 = memref.load %arg7[%c1_25, %c0_26] : memref<3x30xf32, #tpu.memory_space<smem>>
    %29 = vector.broadcast %28 : f32 to vector<64x128xf32>
    %30 = arith.mulf %29, %21 : vector<64x128xf32>
    %31 = arith.addf %27, %30 : vector<64x128xf32>
    %c2_27 = arith.constant 2 : index
    %c0_28 = arith.constant 0 : index
    %32 = memref.load %arg7[%c2_27, %c0_28] : memref<3x30xf32, #tpu.memory_space<smem>>
    %33 = vector.broadcast %32 : f32 to vector<64x128xf32>
    %34 = arith.mulf %33, %23 : vector<64x128xf32>
    %35 = arith.addf %31, %34 : vector<64x128xf32>
    %36 = vector.extract_strided_slice %16 {offsets = [0, 0], sizes = [64, 1], strides = [1, 1]} : vector<64x30xf32> to vector<64x1xf32>
    %37 = vector.extract_strided_slice %10 {offsets = [0, 0], sizes = [1, 128], strides = [1, 1]} : vector<30x128xf32> to vector<1x128xf32>
    %38 = vector.broadcast %36 : vector<64x1xf32> to vector<64x128xf32>
    %39 = vector.broadcast %37 : vector<1x128xf32> to vector<64x128xf32>
    %40 = arith.addf %38, %39 : vector<64x128xf32>
    %41 = arith.addf %40, %35 : vector<64x128xf32>
    %cst_29 = arith.constant 0.000000e+00 : f32
    %42 = vector.broadcast %cst_29 : f32 to vector<64x128xf32>
    %43 = arith.cmpf ogt, %41, %42 : vector<64x128xf32>
    %cst_30 = arith.constant 2.000000e-01 : f32
    %44 = vector.broadcast %cst_30 : f32 to vector<64x128xf32>
    %45 = arith.mulf %44, %41 : vector<64x128xf32>
    %46 = arith.select %43, %41, %45 : vector<64x128xi1>, vector<64x128xf32>
    %c0_31 = arith.constant 0 : index
    %47 = memref.load %arg8[%c0_31] : memref<30xf32, #tpu.memory_space<smem>>
    %48 = vector.broadcast %47 : f32 to vector<64x128xf32>
    %49 = arith.mulf %48, %46 : vector<64x128xf32>
    %50 = arith.addf %24, %49 : vector<64x128xf32>
    %c0_32 = arith.constant 0 : index
    %c1_33 = arith.constant 1 : index
    %51 = memref.load %arg7[%c0_32, %c1_33] : memref<3x30xf32, #tpu.memory_space<smem>>
    %52 = vector.broadcast %51 : f32 to vector<64x128xf32>
    %53 = arith.mulf %52, %19 : vector<64x128xf32>
    %c1_34 = arith.constant 1 : index
    %c1_35 = arith.constant 1 : index
    %54 = memref.load %arg7[%c1_34, %c1_35] : memref<3x30xf32, #tpu.memory_space<smem>>
    %55 = vector.broadcast %54 : f32 to vector<64x128xf32>
    %56 = arith.mulf %55, %21 : vector<64x128xf32>
    %57 = arith.addf %53, %56 : vector<64x128xf32>
    %c2_36 = arith.constant 2 : index
    %c1_37 = arith.constant 1 : index
    %58 = memref.load %arg7[%c2_36, %c1_37] : memref<3x30xf32, #tpu.memory_space<smem>>
    %59 = vector.broadcast %58 : f32 to vector<64x128xf32>
    %60 = arith.mulf %59, %23 : vector<64x128xf32>
    %61 = arith.addf %57, %60 : vector<64x128xf32>
    %62 = vector.extract_strided_slice %16 {offsets = [0, 1], sizes = [64, 1], strides = [1, 1]} : vector<64x30xf32> to vector<64x1xf32>
    %63 = vector.extract_strided_slice %10 {offsets = [1, 0], sizes = [1, 128], strides = [1, 1]} : vector<30x128xf32> to vector<1x128xf32>
    %64 = vector.broadcast %62 : vector<64x1xf32> to vector<64x128xf32>
    %65 = vector.broadcast %63 : vector<1x128xf32> to vector<64x128xf32>
    %66 = arith.addf %64, %65 : vector<64x128xf32>
    %67 = arith.addf %66, %61 : vector<64x128xf32>
    %cst_38 = arith.constant 0.000000e+00 : f32
    %68 = vector.broadcast %cst_38 : f32 to vector<64x128xf32>
    %69 = arith.cmpf ogt, %67, %68 : vector<64x128xf32>
    %cst_39 = arith.constant 2.000000e-01 : f32
    %70 = vector.broadcast %cst_39 : f32 to vector<64x128xf32>
    %71 = arith.mulf %70, %67 : vector<64x128xf32>
    %72 = arith.select %69, %67, %71 : vector<64x128xi1>, vector<64x128xf32>
    %c1_40 = arith.constant 1 : index
    %73 = memref.load %arg8[%c1_40] : memref<30xf32, #tpu.memory_space<smem>>
    %74 = vector.broadcast %73 : f32 to vector<64x128xf32>
    %75 = arith.mulf %74, %72 : vector<64x128xf32>
    %76 = arith.addf %50, %75 : vector<64x128xf32>
    %c0_41 = arith.constant 0 : index
    %c2_42 = arith.constant 2 : index
    %77 = memref.load %arg7[%c0_41, %c2_42] : memref<3x30xf32, #tpu.memory_space<smem>>
    %78 = vector.broadcast %77 : f32 to vector<64x128xf32>
    %79 = arith.mulf %78, %19 : vector<64x128xf32>
    %c1_43 = arith.constant 1 : index
    %c2_44 = arith.constant 2 : index
    %80 = memref.load %arg7[%c1_43, %c2_44] : memref<3x30xf32, #tpu.memory_space<smem>>
    %81 = vector.broadcast %80 : f32 to vector<64x128xf32>
    %82 = arith.mulf %81, %21 : vector<64x128xf32>
    %83 = arith.addf %79, %82 : vector<64x128xf32>
    %c2_45 = arith.constant 2 : index
    %c2_46 = arith.constant 2 : index
    %84 = memref.load %arg7[%c2_45, %c2_46] : memref<3x30xf32, #tpu.memory_space<smem>>
    %85 = vector.broadcast %84 : f32 to vector<64x128xf32>
    %86 = arith.mulf %85, %23 : vector<64x128xf32>
    %87 = arith.addf %83, %86 : vector<64x128xf32>
    %88 = vector.extract_strided_slice %16 {offsets = [0, 2], sizes = [64, 1], strides = [1, 1]} : vector<64x30xf32> to vector<64x1xf32>
    %89 = vector.extract_strided_slice %10 {offsets = [2, 0], sizes = [1, 128], strides = [1, 1]} : vector<30x128xf32> to vector<1x128xf32>
    %90 = vector.broadcast %88 : vector<64x1xf32> to vector<64x128xf32>
    %91 = vector.broadcast %89 : vector<1x128xf32> to vector<64x128xf32>
    %92 = arith.addf %90, %91 : vector<64x128xf32>
    %93 = arith.addf %92, %87 : vector<64x128xf32>
    %cst_47 = arith.constant 0.000000e+00 : f32
    %94 = vector.broadcast %cst_47 : f32 to vector<64x128xf32>
    %95 = arith.cmpf ogt, %93, %94 : vector<64x128xf32>
    %cst_48 = arith.constant 2.000000e-01 : f32
    %96 = vector.broadcast %cst_48 : f32 to vector<64x128xf32>
    %97 = arith.mulf %96, %93 : vector<64x128xf32>
    %98 = arith.select %95, %93, %97 : vector<64x128xi1>, vector<64x128xf32>
    %c2_49 = arith.constant 2 : index
    %99 = memref.load %arg8[%c2_49] : memref<30xf32, #tpu.memory_space<smem>>
    %100 = vector.broadcast %99 : f32 to vector<64x128xf32>
    %101 = arith.mulf %100, %98 : vector<64x128xf32>
    %102 = arith.addf %76, %101 : vector<64x128xf32>
    %c0_50 = arith.constant 0 : index
    %c3 = arith.constant 3 : index
    %103 = memref.load %arg7[%c0_50, %c3] : memref<3x30xf32, #tpu.memory_space<smem>>
    %104 = vector.broadcast %103 : f32 to vector<64x128xf32>
    %105 = arith.mulf %104, %19 : vector<64x128xf32>
    %c1_51 = arith.constant 1 : index
    %c3_52 = arith.constant 3 : index
    %106 = memref.load %arg7[%c1_51, %c3_52] : memref<3x30xf32, #tpu.memory_space<smem>>
    %107 = vector.broadcast %106 : f32 to vector<64x128xf32>
    %108 = arith.mulf %107, %21 : vector<64x128xf32>
    %109 = arith.addf %105, %108 : vector<64x128xf32>
    %c2_53 = arith.constant 2 : index
    %c3_54 = arith.constant 3 : index
    %110 = memref.load %arg7[%c2_53, %c3_54] : memref<3x30xf32, #tpu.memory_space<smem>>
    %111 = vector.broadcast %110 : f32 to vector<64x128xf32>
    %112 = arith.mulf %111, %23 : vector<64x128xf32>
    %113 = arith.addf %109, %112 : vector<64x128xf32>
    %114 = vector.extract_strided_slice %16 {offsets = [0, 3], sizes = [64, 1], strides = [1, 1]} : vector<64x30xf32> to vector<64x1xf32>
    %115 = vector.extract_strided_slice %10 {offsets = [3, 0], sizes = [1, 128], strides = [1, 1]} : vector<30x128xf32> to vector<1x128xf32>
    %116 = vector.broadcast %114 : vector<64x1xf32> to vector<64x128xf32>
    %117 = vector.broadcast %115 : vector<1x128xf32> to vector<64x128xf32>
    %118 = arith.addf %116, %117 : vector<64x128xf32>
    %119 = arith.addf %118, %113 : vector<64x128xf32>
    %cst_55 = arith.constant 0.000000e+00 : f32
    %120 = vector.broadcast %cst_55 : f32 to vector<64x128xf32>
    %121 = arith.cmpf ogt, %119, %120 : vector<64x128xf32>
    %cst_56 = arith.constant 2.000000e-01 : f32
    %122 = vector.broadcast %cst_56 : f32 to vector<64x128xf32>
    %123 = arith.mulf %122, %119 : vector<64x128xf32>
    %124 = arith.select %121, %119, %123 : vector<64x128xi1>, vector<64x128xf32>
    %c3_57 = arith.constant 3 : index
    %125 = memref.load %arg8[%c3_57] : memref<30xf32, #tpu.memory_space<smem>>
    %126 = vector.broadcast %125 : f32 to vector<64x128xf32>
    %127 = arith.mulf %126, %124 : vector<64x128xf32>
    %128 = arith.addf %102, %127 : vector<64x128xf32>
    %c0_58 = arith.constant 0 : index
    %c4 = arith.constant 4 : index
    %129 = memref.load %arg7[%c0_58, %c4] : memref<3x30xf32, #tpu.memory_space<smem>>
    %130 = vector.broadcast %129 : f32 to vector<64x128xf32>
    %131 = arith.mulf %130, %19 : vector<64x128xf32>
    %c1_59 = arith.constant 1 : index
    %c4_60 = arith.constant 4 : index
    %132 = memref.load %arg7[%c1_59, %c4_60] : memref<3x30xf32, #tpu.memory_space<smem>>
    %133 = vector.broadcast %132 : f32 to vector<64x128xf32>
    %134 = arith.mulf %133, %21 : vector<64x128xf32>
    %135 = arith.addf %131, %134 : vector<64x128xf32>
    %c2_61 = arith.constant 2 : index
    %c4_62 = arith.constant 4 : index
    %136 = memref.load %arg7[%c2_61, %c4_62] : memref<3x30xf32, #tpu.memory_space<smem>>
    %137 = vector.broadcast %136 : f32 to vector<64x128xf32>
    %138 = arith.mulf %137, %23 : vector<64x128xf32>
    %139 = arith.addf %135, %138 : vector<64x128xf32>
    %140 = vector.extract_strided_slice %16 {offsets = [0, 4], sizes = [64, 1], strides = [1, 1]} : vector<64x30xf32> to vector<64x1xf32>
    %141 = vector.extract_strided_slice %10 {offsets = [4, 0], sizes = [1, 128], strides = [1, 1]} : vector<30x128xf32> to vector<1x128xf32>
    %142 = vector.broadcast %140 : vector<64x1xf32> to vector<64x128xf32>
    %143 = vector.broadcast %141 : vector<1x128xf32> to vector<64x128xf32>
    %144 = arith.addf %142, %143 : vector<64x128xf32>
    %145 = arith.addf %144, %139 : vector<64x128xf32>
    %cst_63 = arith.constant 0.000000e+00 : f32
    %146 = vector.broadcast %cst_63 : f32 to vector<64x128xf32>
    %147 = arith.cmpf ogt, %145, %146 : vector<64x128xf32>
    %cst_64 = arith.constant 2.000000e-01 : f32
    %148 = vector.broadcast %cst_64 : f32 to vector<64x128xf32>
    %149 = arith.mulf %148, %145 : vector<64x128xf32>
    %150 = arith.select %147, %145, %149 : vector<64x128xi1>, vector<64x128xf32>
    %c4_65 = arith.constant 4 : index
    %151 = memref.load %arg8[%c4_65] : memref<30xf32, #tpu.memory_space<smem>>
    %152 = vector.broadcast %151 : f32 to vector<64x128xf32>
    %153 = arith.mulf %152, %150 : vector<64x128xf32>
    %154 = arith.addf %128, %153 : vector<64x128xf32>
    %c0_66 = arith.constant 0 : index
    %c5 = arith.constant 5 : index
    %155 = memref.load %arg7[%c0_66, %c5] : memref<3x30xf32, #tpu.memory_space<smem>>
    %156 = vector.broadcast %155 : f32 to vector<64x128xf32>
    %157 = arith.mulf %156, %19 : vector<64x128xf32>
    %c1_67 = arith.constant 1 : index
    %c5_68 = arith.constant 5 : index
    %158 = memref.load %arg7[%c1_67, %c5_68] : memref<3x30xf32, #tpu.memory_space<smem>>
    %159 = vector.broadcast %158 : f32 to vector<64x128xf32>
    %160 = arith.mulf %159, %21 : vector<64x128xf32>
    %161 = arith.addf %157, %160 : vector<64x128xf32>
    %c2_69 = arith.constant 2 : index
    %c5_70 = arith.constant 5 : index
    %162 = memref.load %arg7[%c2_69, %c5_70] : memref<3x30xf32, #tpu.memory_space<smem>>
    %163 = vector.broadcast %162 : f32 to vector<64x128xf32>
    %164 = arith.mulf %163, %23 : vector<64x128xf32>
    %165 = arith.addf %161, %164 : vector<64x128xf32>
    %166 = vector.extract_strided_slice %16 {offsets = [0, 5], sizes = [64, 1], strides = [1, 1]} : vector<64x30xf32> to vector<64x1xf32>
    %167 = vector.extract_strided_slice %10 {offsets = [5, 0], sizes = [1, 128], strides = [1, 1]} : vector<30x128xf32> to vector<1x128xf32>
    %168 = vector.broadcast %166 : vector<64x1xf32> to vector<64x128xf32>
    %169 = vector.broadcast %167 : vector<1x128xf32> to vector<64x128xf32>
    %170 = arith.addf %168, %169 : vector<64x128xf32>
    %171 = arith.addf %170, %165 : vector<64x128xf32>
    %cst_71 = arith.constant 0.000000e+00 : f32
    %172 = vector.broadcast %cst_71 : f32 to vector<64x128xf32>
    %173 = arith.cmpf ogt, %171, %172 : vector<64x128xf32>
    %cst_72 = arith.constant 2.000000e-01 : f32
    %174 = vector.broadcast %cst_72 : f32 to vector<64x128xf32>
    %175 = arith.mulf %174, %171 : vector<64x128xf32>
    %176 = arith.select %173, %171, %175 : vector<64x128xi1>, vector<64x128xf32>
    %c5_73 = arith.constant 5 : index
    %177 = memref.load %arg8[%c5_73] : memref<30xf32, #tpu.memory_space<smem>>
    %178 = vector.broadcast %177 : f32 to vector<64x128xf32>
    %179 = arith.mulf %178, %176 : vector<64x128xf32>
    %180 = arith.addf %154, %179 : vector<64x128xf32>
    %c0_74 = arith.constant 0 : index
    %c6 = arith.constant 6 : index
    %181 = memref.load %arg7[%c0_74, %c6] : memref<3x30xf32, #tpu.memory_space<smem>>
    %182 = vector.broadcast %181 : f32 to vector<64x128xf32>
    %183 = arith.mulf %182, %19 : vector<64x128xf32>
    %c1_75 = arith.constant 1 : index
    %c6_76 = arith.constant 6 : index
    %184 = memref.load %arg7[%c1_75, %c6_76] : memref<3x30xf32, #tpu.memory_space<smem>>
    %185 = vector.broadcast %184 : f32 to vector<64x128xf32>
    %186 = arith.mulf %185, %21 : vector<64x128xf32>
    %187 = arith.addf %183, %186 : vector<64x128xf32>
    %c2_77 = arith.constant 2 : index
    %c6_78 = arith.constant 6 : index
    %188 = memref.load %arg7[%c2_77, %c6_78] : memref<3x30xf32, #tpu.memory_space<smem>>
    %189 = vector.broadcast %188 : f32 to vector<64x128xf32>
    %190 = arith.mulf %189, %23 : vector<64x128xf32>
    %191 = arith.addf %187, %190 : vector<64x128xf32>
    %192 = vector.extract_strided_slice %16 {offsets = [0, 6], sizes = [64, 1], strides = [1, 1]} : vector<64x30xf32> to vector<64x1xf32>
    %193 = vector.extract_strided_slice %10 {offsets = [6, 0], sizes = [1, 128], strides = [1, 1]} : vector<30x128xf32> to vector<1x128xf32>
    %194 = vector.broadcast %192 : vector<64x1xf32> to vector<64x128xf32>
    %195 = vector.broadcast %193 : vector<1x128xf32> to vector<64x128xf32>
    %196 = arith.addf %194, %195 : vector<64x128xf32>
    %197 = arith.addf %196, %191 : vector<64x128xf32>
    %cst_79 = arith.constant 0.000000e+00 : f32
    %198 = vector.broadcast %cst_79 : f32 to vector<64x128xf32>
    %199 = arith.cmpf ogt, %197, %198 : vector<64x128xf32>
    %cst_80 = arith.constant 2.000000e-01 : f32
    %200 = vector.broadcast %cst_80 : f32 to vector<64x128xf32>
    %201 = arith.mulf %200, %197 : vector<64x128xf32>
    %202 = arith.select %199, %197, %201 : vector<64x128xi1>, vector<64x128xf32>
    %c6_81 = arith.constant 6 : index
    %203 = memref.load %arg8[%c6_81] : memref<30xf32, #tpu.memory_space<smem>>
    %204 = vector.broadcast %203 : f32 to vector<64x128xf32>
    %205 = arith.mulf %204, %202 : vector<64x128xf32>
    %206 = arith.addf %180, %205 : vector<64x128xf32>
    %c0_82 = arith.constant 0 : index
    %c7 = arith.constant 7 : index
    %207 = memref.load %arg7[%c0_82, %c7] : memref<3x30xf32, #tpu.memory_space<smem>>
    %208 = vector.broadcast %207 : f32 to vector<64x128xf32>
    %209 = arith.mulf %208, %19 : vector<64x128xf32>
    %c1_83 = arith.constant 1 : index
    %c7_84 = arith.constant 7 : index
    %210 = memref.load %arg7[%c1_83, %c7_84] : memref<3x30xf32, #tpu.memory_space<smem>>
    %211 = vector.broadcast %210 : f32 to vector<64x128xf32>
    %212 = arith.mulf %211, %21 : vector<64x128xf32>
    %213 = arith.addf %209, %212 : vector<64x128xf32>
    %c2_85 = arith.constant 2 : index
    %c7_86 = arith.constant 7 : index
    %214 = memref.load %arg7[%c2_85, %c7_86] : memref<3x30xf32, #tpu.memory_space<smem>>
    %215 = vector.broadcast %214 : f32 to vector<64x128xf32>
    %216 = arith.mulf %215, %23 : vector<64x128xf32>
    %217 = arith.addf %213, %216 : vector<64x128xf32>
    %218 = vector.extract_strided_slice %16 {offsets = [0, 7], sizes = [64, 1], strides = [1, 1]} : vector<64x30xf32> to vector<64x1xf32>
    %219 = vector.extract_strided_slice %10 {offsets = [7, 0], sizes = [1, 128], strides = [1, 1]} : vector<30x128xf32> to vector<1x128xf32>
    %220 = vector.broadcast %218 : vector<64x1xf32> to vector<64x128xf32>
    %221 = vector.broadcast %219 : vector<1x128xf32> to vector<64x128xf32>
    %222 = arith.addf %220, %221 : vector<64x128xf32>
    %223 = arith.addf %222, %217 : vector<64x128xf32>
    %cst_87 = arith.constant 0.000000e+00 : f32
    %224 = vector.broadcast %cst_87 : f32 to vector<64x128xf32>
    %225 = arith.cmpf ogt, %223, %224 : vector<64x128xf32>
    %cst_88 = arith.constant 2.000000e-01 : f32
    %226 = vector.broadcast %cst_88 : f32 to vector<64x128xf32>
    %227 = arith.mulf %226, %223 : vector<64x128xf32>
    %228 = arith.select %225, %223, %227 : vector<64x128xi1>, vector<64x128xf32>
    %c7_89 = arith.constant 7 : index
    %229 = memref.load %arg8[%c7_89] : memref<30xf32, #tpu.memory_space<smem>>
    %230 = vector.broadcast %229 : f32 to vector<64x128xf32>
    %231 = arith.mulf %230, %228 : vector<64x128xf32>
    %232 = arith.addf %206, %231 : vector<64x128xf32>
    %c0_90 = arith.constant 0 : index
    %c8 = arith.constant 8 : index
    %233 = memref.load %arg7[%c0_90, %c8] : memref<3x30xf32, #tpu.memory_space<smem>>
    %234 = vector.broadcast %233 : f32 to vector<64x128xf32>
    %235 = arith.mulf %234, %19 : vector<64x128xf32>
    %c1_91 = arith.constant 1 : index
    %c8_92 = arith.constant 8 : index
    %236 = memref.load %arg7[%c1_91, %c8_92] : memref<3x30xf32, #tpu.memory_space<smem>>
    %237 = vector.broadcast %236 : f32 to vector<64x128xf32>
    %238 = arith.mulf %237, %21 : vector<64x128xf32>
    %239 = arith.addf %235, %238 : vector<64x128xf32>
    %c2_93 = arith.constant 2 : index
    %c8_94 = arith.constant 8 : index
    %240 = memref.load %arg7[%c2_93, %c8_94] : memref<3x30xf32, #tpu.memory_space<smem>>
    %241 = vector.broadcast %240 : f32 to vector<64x128xf32>
    %242 = arith.mulf %241, %23 : vector<64x128xf32>
    %243 = arith.addf %239, %242 : vector<64x128xf32>
    %244 = vector.extract_strided_slice %16 {offsets = [0, 8], sizes = [64, 1], strides = [1, 1]} : vector<64x30xf32> to vector<64x1xf32>
    %245 = vector.extract_strided_slice %10 {offsets = [8, 0], sizes = [1, 128], strides = [1, 1]} : vector<30x128xf32> to vector<1x128xf32>
    %246 = vector.broadcast %244 : vector<64x1xf32> to vector<64x128xf32>
    %247 = vector.broadcast %245 : vector<1x128xf32> to vector<64x128xf32>
    %248 = arith.addf %246, %247 : vector<64x128xf32>
    %249 = arith.addf %248, %243 : vector<64x128xf32>
    %cst_95 = arith.constant 0.000000e+00 : f32
    %250 = vector.broadcast %cst_95 : f32 to vector<64x128xf32>
    %251 = arith.cmpf ogt, %249, %250 : vector<64x128xf32>
    %cst_96 = arith.constant 2.000000e-01 : f32
    %252 = vector.broadcast %cst_96 : f32 to vector<64x128xf32>
    %253 = arith.mulf %252, %249 : vector<64x128xf32>
    %254 = arith.select %251, %249, %253 : vector<64x128xi1>, vector<64x128xf32>
    %c8_97 = arith.constant 8 : index
    %255 = memref.load %arg8[%c8_97] : memref<30xf32, #tpu.memory_space<smem>>
    %256 = vector.broadcast %255 : f32 to vector<64x128xf32>
    %257 = arith.mulf %256, %254 : vector<64x128xf32>
    %258 = arith.addf %232, %257 : vector<64x128xf32>
    %c0_98 = arith.constant 0 : index
    %c9 = arith.constant 9 : index
    %259 = memref.load %arg7[%c0_98, %c9] : memref<3x30xf32, #tpu.memory_space<smem>>
    %260 = vector.broadcast %259 : f32 to vector<64x128xf32>
    %261 = arith.mulf %260, %19 : vector<64x128xf32>
    %c1_99 = arith.constant 1 : index
    %c9_100 = arith.constant 9 : index
    %262 = memref.load %arg7[%c1_99, %c9_100] : memref<3x30xf32, #tpu.memory_space<smem>>
    %263 = vector.broadcast %262 : f32 to vector<64x128xf32>
    %264 = arith.mulf %263, %21 : vector<64x128xf32>
    %265 = arith.addf %261, %264 : vector<64x128xf32>
    %c2_101 = arith.constant 2 : index
    %c9_102 = arith.constant 9 : index
    %266 = memref.load %arg7[%c2_101, %c9_102] : memref<3x30xf32, #tpu.memory_space<smem>>
    %267 = vector.broadcast %266 : f32 to vector<64x128xf32>
    %268 = arith.mulf %267, %23 : vector<64x128xf32>
    %269 = arith.addf %265, %268 : vector<64x128xf32>
    %270 = vector.extract_strided_slice %16 {offsets = [0, 9], sizes = [64, 1], strides = [1, 1]} : vector<64x30xf32> to vector<64x1xf32>
    %271 = vector.extract_strided_slice %10 {offsets = [9, 0], sizes = [1, 128], strides = [1, 1]} : vector<30x128xf32> to vector<1x128xf32>
    %272 = vector.broadcast %270 : vector<64x1xf32> to vector<64x128xf32>
    %273 = vector.broadcast %271 : vector<1x128xf32> to vector<64x128xf32>
    %274 = arith.addf %272, %273 : vector<64x128xf32>
    %275 = arith.addf %274, %269 : vector<64x128xf32>
    %cst_103 = arith.constant 0.000000e+00 : f32
    %276 = vector.broadcast %cst_103 : f32 to vector<64x128xf32>
    %277 = arith.cmpf ogt, %275, %276 : vector<64x128xf32>
    %cst_104 = arith.constant 2.000000e-01 : f32
    %278 = vector.broadcast %cst_104 : f32 to vector<64x128xf32>
    %279 = arith.mulf %278, %275 : vector<64x128xf32>
    %280 = arith.select %277, %275, %279 : vector<64x128xi1>, vector<64x128xf32>
    %c9_105 = arith.constant 9 : index
    %281 = memref.load %arg8[%c9_105] : memref<30xf32, #tpu.memory_space<smem>>
    %282 = vector.broadcast %281 : f32 to vector<64x128xf32>
    %283 = arith.mulf %282, %280 : vector<64x128xf32>
    %284 = arith.addf %258, %283 : vector<64x128xf32>
    %cst_106 = arith.constant 0.000000e+00 : f32
    %285 = vector.broadcast %cst_106 : f32 to vector<64x128xf32>
    %286 = arith.cmpf ogt, %17, %285 : vector<64x128xf32>
    %cst_107 = arith.constant -1.000000e+30 : f32
    %287 = vector.broadcast %cst_107 : f32 to vector<64x128xf32>
    %288 = arith.select %286, %284, %287 : vector<64x128xi1>, vector<64x128xf32>
    %cst_108 = arith.constant dense<0xFF800000> : vector<64xf32>
    %289 = vector.multi_reduction <maximumf>, %288, %cst_108 [1] : vector<64x128xf32> to vector<64xf32>
    %290 = vector.shape_cast %289 : vector<64xf32> to vector<64x1xf32>
    %291 = vector.broadcast %290 : vector<64x1xf32> to vector<64x128xf32>
    %292 = arith.subf %288, %291 : vector<64x128xf32>
    %293 = math.exp %292 : vector<64x128xf32>
    %294 = arith.mulf %293, %17 : vector<64x128xf32>
    %cst_109 = arith.constant dense<0.000000e+00> : vector<64xf32>
    %295 = vector.multi_reduction <add>, %294, %cst_109 [1] : vector<64x128xf32> to vector<64xf32>
    %296 = vector.shape_cast %295 : vector<64xf32> to vector<64x1xf32>
    %cst_110 = arith.constant 9.99999968E-21 : f32
    %297 = vector.broadcast %cst_110 : f32 to vector<64x1xf32>
    %298 = arith.maximumf %296, %297 : vector<64x1xf32>
    %299 = vector.broadcast %298 : vector<64x1xf32> to vector<64x128xf32>
    %300 = arith.divf %294, %299 : vector<64x128xf32>
    %301 = vector.extract_strided_slice %9 {offsets = [0, 0], sizes = [128, 10], strides = [1, 1]} : vector<128x30xf32> to vector<128x10xf32>
    %cst_111 = arith.constant dense<0.000000e+00> : vector<64x10xf32>
    %302 = tpu.matmul %300, %301, %cst_111 {dimension_numbers = #tpu.dot_dimension_numbers<[1], [0], [0], [1], [0, 0, 1, 1], [], []>} : vector<64x128xf32>, vector<128x10xf32>, vector<64x10xf32> -> vector<64x10xf32>
    %303 = vector.extract_strided_slice %5 {offsets = [0, 0], sizes = [1, 10], strides = [1, 1]} : vector<1x30xf32> to vector<1x10xf32>
    %304 = vector.broadcast %303 : vector<1x10xf32> to vector<64x10xf32>
    %305 = arith.addf %302, %304 : vector<64x10xf32>
    %cst_112 = arith.constant 0.000000e+00 : f32
    %306 = vector.broadcast %cst_112 : f32 to vector<64x10xf32>
    %307 = arith.cmpf ogt, %305, %306 : vector<64x10xf32>
    %cst_113 = arith.constant 0.000000e+00 : f32
    %308 = vector.broadcast %cst_113 : f32 to vector<64x10xf32>
    %309 = arith.minimumf %305, %308 : vector<64x10xf32>
    %310 = math.exp %309 : vector<64x10xf32>
    %cst_114 = arith.constant 1.000000e+00 : f32
    %311 = vector.broadcast %cst_114 : f32 to vector<64x10xf32>
    %312 = arith.subf %310, %311 : vector<64x10xf32>
    %313 = arith.select %307, %305, %312 : vector<64x10xi1>, vector<64x10xf32>
    %c0_115 = arith.constant 0 : index
    %c0_116 = arith.constant 0 : index
    %c0_117 = arith.constant 0 : index
    %314 = vector.load %arg9[%c0_115, %c0_116, %c0_117] : memref<3x64x10xf32, #tpu.memory_space<vmem>>, vector<1x64x10xf32>
    %315 = vector.shape_cast %314 : vector<1x64x10xf32> to vector<64x10xf32>
    %316 = vector.shape_cast %313 : vector<64x10xf32> to vector<1x64x10xf32>
    tpu.vector_store %arg9[%c0_115, %c0_116, %c0_117], %316 {strides = array<i32>} : memref<3x64x10xf32, #tpu.memory_space<vmem>>, vector<1x64x10xf32>,
    %cst_118 = arith.constant 0.000000e+00 : f32
    %317 = vector.broadcast %cst_118 : f32 to vector<64x128xf32>
    %c0_119 = arith.constant 0 : index
    %c10 = arith.constant 10 : index
    %318 = memref.load %arg7[%c0_119, %c10] : memref<3x30xf32, #tpu.memory_space<smem>>
    %319 = vector.broadcast %318 : f32 to vector<64x128xf32>
    %320 = arith.mulf %319, %19 : vector<64x128xf32>
    %c1_120 = arith.constant 1 : index
    %c10_121 = arith.constant 10 : index
    %321 = memref.load %arg7[%c1_120, %c10_121] : memref<3x30xf32, #tpu.memory_space<smem>>
    %322 = vector.broadcast %321 : f32 to vector<64x128xf32>
    %323 = arith.mulf %322, %21 : vector<64x128xf32>
    %324 = arith.addf %320, %323 : vector<64x128xf32>
    %c2_122 = arith.constant 2 : index
    %c10_123 = arith.constant 10 : index
    %325 = memref.load %arg7[%c2_122, %c10_123] : memref<3x30xf32, #tpu.memory_space<smem>>
    %326 = vector.broadcast %325 : f32 to vector<64x128xf32>
    %327 = arith.mulf %326, %23 : vector<64x128xf32>
    %328 = arith.addf %324, %327 : vector<64x128xf32>
    %329 = vector.extract_strided_slice %16 {offsets = [0, 10], sizes = [64, 1], strides = [1, 1]} : vector<64x30xf32> to vector<64x1xf32>
    %330 = vector.extract_strided_slice %10 {offsets = [10, 0], sizes = [1, 128], strides = [1, 1]} : vector<30x128xf32> to vector<1x128xf32>
    %331 = vector.broadcast %329 : vector<64x1xf32> to vector<64x128xf32>
    %332 = vector.broadcast %330 : vector<1x128xf32> to vector<64x128xf32>
    %333 = arith.addf %331, %332 : vector<64x128xf32>
    %334 = arith.addf %333, %328 : vector<64x128xf32>
    %cst_124 = arith.constant 0.000000e+00 : f32
    %335 = vector.broadcast %cst_124 : f32 to vector<64x128xf32>
    %336 = arith.cmpf ogt, %334, %335 : vector<64x128xf32>
    %cst_125 = arith.constant 2.000000e-01 : f32
    %337 = vector.broadcast %cst_125 : f32 to vector<64x128xf32>
    %338 = arith.mulf %337, %334 : vector<64x128xf32>
    %339 = arith.select %336, %334, %338 : vector<64x128xi1>, vector<64x128xf32>
    %c10_126 = arith.constant 10 : index
    %340 = memref.load %arg8[%c10_126] : memref<30xf32, #tpu.memory_space<smem>>
    %341 = vector.broadcast %340 : f32 to vector<64x128xf32>
    %342 = arith.mulf %341, %339 : vector<64x128xf32>
    %343 = arith.addf %317, %342 : vector<64x128xf32>
    %c0_127 = arith.constant 0 : index
    %c11 = arith.constant 11 : index
    %344 = memref.load %arg7[%c0_127, %c11] : memref<3x30xf32, #tpu.memory_space<smem>>
    %345 = vector.broadcast %344 : f32 to vector<64x128xf32>
    %346 = arith.mulf %345, %19 : vector<64x128xf32>
    %c1_128 = arith.constant 1 : index
    %c11_129 = arith.constant 11 : index
    %347 = memref.load %arg7[%c1_128, %c11_129] : memref<3x30xf32, #tpu.memory_space<smem>>
    %348 = vector.broadcast %347 : f32 to vector<64x128xf32>
    %349 = arith.mulf %348, %21 : vector<64x128xf32>
    %350 = arith.addf %346, %349 : vector<64x128xf32>
    %c2_130 = arith.constant 2 : index
    %c11_131 = arith.constant 11 : index
    %351 = memref.load %arg7[%c2_130, %c11_131] : memref<3x30xf32, #tpu.memory_space<smem>>
    %352 = vector.broadcast %351 : f32 to vector<64x128xf32>
    %353 = arith.mulf %352, %23 : vector<64x128xf32>
    %354 = arith.addf %350, %353 : vector<64x128xf32>
    %355 = vector.extract_strided_slice %16 {offsets = [0, 11], sizes = [64, 1], strides = [1, 1]} : vector<64x30xf32> to vector<64x1xf32>
    %356 = vector.extract_strided_slice %10 {offsets = [11, 0], sizes = [1, 128], strides = [1, 1]} : vector<30x128xf32> to vector<1x128xf32>
    %357 = vector.broadcast %355 : vector<64x1xf32> to vector<64x128xf32>
    %358 = vector.broadcast %356 : vector<1x128xf32> to vector<64x128xf32>
    %359 = arith.addf %357, %358 : vector<64x128xf32>
    %360 = arith.addf %359, %354 : vector<64x128xf32>
    %cst_132 = arith.constant 0.000000e+00 : f32
    %361 = vector.broadcast %cst_132 : f32 to vector<64x128xf32>
    %362 = arith.cmpf ogt, %360, %361 : vector<64x128xf32>
    %cst_133 = arith.constant 2.000000e-01 : f32
    %363 = vector.broadcast %cst_133 : f32 to vector<64x128xf32>
    %364 = arith.mulf %363, %360 : vector<64x128xf32>
    %365 = arith.select %362, %360, %364 : vector<64x128xi1>, vector<64x128xf32>
    %c11_134 = arith.constant 11 : index
    %366 = memref.load %arg8[%c11_134] : memref<30xf32, #tpu.memory_space<smem>>
    %367 = vector.broadcast %366 : f32 to vector<64x128xf32>
    %368 = arith.mulf %367, %365 : vector<64x128xf32>
    %369 = arith.addf %343, %368 : vector<64x128xf32>
    %c0_135 = arith.constant 0 : index
    %c12 = arith.constant 12 : index
    %370 = memref.load %arg7[%c0_135, %c12] : memref<3x30xf32, #tpu.memory_space<smem>>
    %371 = vector.broadcast %370 : f32 to vector<64x128xf32>
    %372 = arith.mulf %371, %19 : vector<64x128xf32>
    %c1_136 = arith.constant 1 : index
    %c12_137 = arith.constant 12 : index
    %373 = memref.load %arg7[%c1_136, %c12_137] : memref<3x30xf32, #tpu.memory_space<smem>>
    %374 = vector.broadcast %373 : f32 to vector<64x128xf32>
    %375 = arith.mulf %374, %21 : vector<64x128xf32>
    %376 = arith.addf %372, %375 : vector<64x128xf32>
    %c2_138 = arith.constant 2 : index
    %c12_139 = arith.constant 12 : index
    %377 = memref.load %arg7[%c2_138, %c12_139] : memref<3x30xf32, #tpu.memory_space<smem>>
    %378 = vector.broadcast %377 : f32 to vector<64x128xf32>
    %379 = arith.mulf %378, %23 : vector<64x128xf32>
    %380 = arith.addf %376, %379 : vector<64x128xf32>
    %381 = vector.extract_strided_slice %16 {offsets = [0, 12], sizes = [64, 1], strides = [1, 1]} : vector<64x30xf32> to vector<64x1xf32>
    %382 = vector.extract_strided_slice %10 {offsets = [12, 0], sizes = [1, 128], strides = [1, 1]} : vector<30x128xf32> to vector<1x128xf32>
    %383 = vector.broadcast %381 : vector<64x1xf32> to vector<64x128xf32>
    %384 = vector.broadcast %382 : vector<1x128xf32> to vector<64x128xf32>
    %385 = arith.addf %383, %384 : vector<64x128xf32>
    %386 = arith.addf %385, %380 : vector<64x128xf32>
    %cst_140 = arith.constant 0.000000e+00 : f32
    %387 = vector.broadcast %cst_140 : f32 to vector<64x128xf32>
    %388 = arith.cmpf ogt, %386, %387 : vector<64x128xf32>
    %cst_141 = arith.constant 2.000000e-01 : f32
    %389 = vector.broadcast %cst_141 : f32 to vector<64x128xf32>
    %390 = arith.mulf %389, %386 : vector<64x128xf32>
    %391 = arith.select %388, %386, %390 : vector<64x128xi1>, vector<64x128xf32>
    %c12_142 = arith.constant 12 : index
    %392 = memref.load %arg8[%c12_142] : memref<30xf32, #tpu.memory_space<smem>>
    %393 = vector.broadcast %392 : f32 to vector<64x128xf32>
    %394 = arith.mulf %393, %391 : vector<64x128xf32>
    %395 = arith.addf %369, %394 : vector<64x128xf32>
    %c0_143 = arith.constant 0 : index
    %c13 = arith.constant 13 : index
    %396 = memref.load %arg7[%c0_143, %c13] : memref<3x30xf32, #tpu.memory_space<smem>>
    %397 = vector.broadcast %396 : f32 to vector<64x128xf32>
    %398 = arith.mulf %397, %19 : vector<64x128xf32>
    %c1_144 = arith.constant 1 : index
    %c13_145 = arith.constant 13 : index
    %399 = memref.load %arg7[%c1_144, %c13_145] : memref<3x30xf32, #tpu.memory_space<smem>>
    %400 = vector.broadcast %399 : f32 to vector<64x128xf32>
    %401 = arith.mulf %400, %21 : vector<64x128xf32>
    %402 = arith.addf %398, %401 : vector<64x128xf32>
    %c2_146 = arith.constant 2 : index
    %c13_147 = arith.constant 13 : index
    %403 = memref.load %arg7[%c2_146, %c13_147] : memref<3x30xf32, #tpu.memory_space<smem>>
    %404 = vector.broadcast %403 : f32 to vector<64x128xf32>
    %405 = arith.mulf %404, %23 : vector<64x128xf32>
    %406 = arith.addf %402, %405 : vector<64x128xf32>
    %407 = vector.extract_strided_slice %16 {offsets = [0, 13], sizes = [64, 1], strides = [1, 1]} : vector<64x30xf32> to vector<64x1xf32>
    %408 = vector.extract_strided_slice %10 {offsets = [13, 0], sizes = [1, 128], strides = [1, 1]} : vector<30x128xf32> to vector<1x128xf32>
    %409 = vector.broadcast %407 : vector<64x1xf32> to vector<64x128xf32>
    %410 = vector.broadcast %408 : vector<1x128xf32> to vector<64x128xf32>
    %411 = arith.addf %409, %410 : vector<64x128xf32>
    %412 = arith.addf %411, %406 : vector<64x128xf32>
    %cst_148 = arith.constant 0.000000e+00 : f32
    %413 = vector.broadcast %cst_148 : f32 to vector<64x128xf32>
    %414 = arith.cmpf ogt, %412, %413 : vector<64x128xf32>
    %cst_149 = arith.constant 2.000000e-01 : f32
    %415 = vector.broadcast %cst_149 : f32 to vector<64x128xf32>
    %416 = arith.mulf %415, %412 : vector<64x128xf32>
    %417 = arith.select %414, %412, %416 : vector<64x128xi1>, vector<64x128xf32>
    %c13_150 = arith.constant 13 : index
    %418 = memref.load %arg8[%c13_150] : memref<30xf32, #tpu.memory_space<smem>>
    %419 = vector.broadcast %418 : f32 to vector<64x128xf32>
    %420 = arith.mulf %419, %417 : vector<64x128xf32>
    %421 = arith.addf %395, %420 : vector<64x128xf32>
    %c0_151 = arith.constant 0 : index
    %c14 = arith.constant 14 : index
    %422 = memref.load %arg7[%c0_151, %c14] : memref<3x30xf32, #tpu.memory_space<smem>>
    %423 = vector.broadcast %422 : f32 to vector<64x128xf32>
    %424 = arith.mulf %423, %19 : vector<64x128xf32>
    %c1_152 = arith.constant 1 : index
    %c14_153 = arith.constant 14 : index
    %425 = memref.load %arg7[%c1_152, %c14_153] : memref<3x30xf32, #tpu.memory_space<smem>>
    %426 = vector.broadcast %425 : f32 to vector<64x128xf32>
    %427 = arith.mulf %426, %21 : vector<64x128xf32>
    %428 = arith.addf %424, %427 : vector<64x128xf32>
    %c2_154 = arith.constant 2 : index
    %c14_155 = arith.constant 14 : index
    %429 = memref.load %arg7[%c2_154, %c14_155] : memref<3x30xf32, #tpu.memory_space<smem>>
    %430 = vector.broadcast %429 : f32 to vector<64x128xf32>
    %431 = arith.mulf %430, %23 : vector<64x128xf32>
    %432 = arith.addf %428, %431 : vector<64x128xf32>
    %433 = vector.extract_strided_slice %16 {offsets = [0, 14], sizes = [64, 1], strides = [1, 1]} : vector<64x30xf32> to vector<64x1xf32>
    %434 = vector.extract_strided_slice %10 {offsets = [14, 0], sizes = [1, 128], strides = [1, 1]} : vector<30x128xf32> to vector<1x128xf32>
    %435 = vector.broadcast %433 : vector<64x1xf32> to vector<64x128xf32>
    %436 = vector.broadcast %434 : vector<1x128xf32> to vector<64x128xf32>
    %437 = arith.addf %435, %436 : vector<64x128xf32>
    %438 = arith.addf %437, %432 : vector<64x128xf32>
    %cst_156 = arith.constant 0.000000e+00 : f32
    %439 = vector.broadcast %cst_156 : f32 to vector<64x128xf32>
    %440 = arith.cmpf ogt, %438, %439 : vector<64x128xf32>
    %cst_157 = arith.constant 2.000000e-01 : f32
    %441 = vector.broadcast %cst_157 : f32 to vector<64x128xf32>
    %442 = arith.mulf %441, %438 : vector<64x128xf32>
    %443 = arith.select %440, %438, %442 : vector<64x128xi1>, vector<64x128xf32>
    %c14_158 = arith.constant 14 : index
    %444 = memref.load %arg8[%c14_158] : memref<30xf32, #tpu.memory_space<smem>>
    %445 = vector.broadcast %444 : f32 to vector<64x128xf32>
    %446 = arith.mulf %445, %443 : vector<64x128xf32>
    %447 = arith.addf %421, %446 : vector<64x128xf32>
    %c0_159 = arith.constant 0 : index
    %c15 = arith.constant 15 : index
    %448 = memref.load %arg7[%c0_159, %c15] : memref<3x30xf32, #tpu.memory_space<smem>>
    %449 = vector.broadcast %448 : f32 to vector<64x128xf32>
    %450 = arith.mulf %449, %19 : vector<64x128xf32>
    %c1_160 = arith.constant 1 : index
    %c15_161 = arith.constant 15 : index
    %451 = memref.load %arg7[%c1_160, %c15_161] : memref<3x30xf32, #tpu.memory_space<smem>>
    %452 = vector.broadcast %451 : f32 to vector<64x128xf32>
    %453 = arith.mulf %452, %21 : vector<64x128xf32>
    %454 = arith.addf %450, %453 : vector<64x128xf32>
    %c2_162 = arith.constant 2 : index
    %c15_163 = arith.constant 15 : index
    %455 = memref.load %arg7[%c2_162, %c15_163] : memref<3x30xf32, #tpu.memory_space<smem>>
    %456 = vector.broadcast %455 : f32 to vector<64x128xf32>
    %457 = arith.mulf %456, %23 : vector<64x128xf32>
    %458 = arith.addf %454, %457 : vector<64x128xf32>
    %459 = vector.extract_strided_slice %16 {offsets = [0, 15], sizes = [64, 1], strides = [1, 1]} : vector<64x30xf32> to vector<64x1xf32>
    %460 = vector.extract_strided_slice %10 {offsets = [15, 0], sizes = [1, 128], strides = [1, 1]} : vector<30x128xf32> to vector<1x128xf32>
    %461 = vector.broadcast %459 : vector<64x1xf32> to vector<64x128xf32>
    %462 = vector.broadcast %460 : vector<1x128xf32> to vector<64x128xf32>
    %463 = arith.addf %461, %462 : vector<64x128xf32>
    %464 = arith.addf %463, %458 : vector<64x128xf32>
    %cst_164 = arith.constant 0.000000e+00 : f32
    %465 = vector.broadcast %cst_164 : f32 to vector<64x128xf32>
    %466 = arith.cmpf ogt, %464, %465 : vector<64x128xf32>
    %cst_165 = arith.constant 2.000000e-01 : f32
    %467 = vector.broadcast %cst_165 : f32 to vector<64x128xf32>
    %468 = arith.mulf %467, %464 : vector<64x128xf32>
    %469 = arith.select %466, %464, %468 : vector<64x128xi1>, vector<64x128xf32>
    %c15_166 = arith.constant 15 : index
    %470 = memref.load %arg8[%c15_166] : memref<30xf32, #tpu.memory_space<smem>>
    %471 = vector.broadcast %470 : f32 to vector<64x128xf32>
    %472 = arith.mulf %471, %469 : vector<64x128xf32>
    %473 = arith.addf %447, %472 : vector<64x128xf32>
    %c0_167 = arith.constant 0 : index
    %c16 = arith.constant 16 : index
    %474 = memref.load %arg7[%c0_167, %c16] : memref<3x30xf32, #tpu.memory_space<smem>>
    %475 = vector.broadcast %474 : f32 to vector<64x128xf32>
    %476 = arith.mulf %475, %19 : vector<64x128xf32>
    %c1_168 = arith.constant 1 : index
    %c16_169 = arith.constant 16 : index
    %477 = memref.load %arg7[%c1_168, %c16_169] : memref<3x30xf32, #tpu.memory_space<smem>>
    %478 = vector.broadcast %477 : f32 to vector<64x128xf32>
    %479 = arith.mulf %478, %21 : vector<64x128xf32>
    %480 = arith.addf %476, %479 : vector<64x128xf32>
    %c2_170 = arith.constant 2 : index
    %c16_171 = arith.constant 16 : index
    %481 = memref.load %arg7[%c2_170, %c16_171] : memref<3x30xf32, #tpu.memory_space<smem>>
    %482 = vector.broadcast %481 : f32 to vector<64x128xf32>
    %483 = arith.mulf %482, %23 : vector<64x128xf32>
    %484 = arith.addf %480, %483 : vector<64x128xf32>
    %485 = vector.extract_strided_slice %16 {offsets = [0, 16], sizes = [64, 1], strides = [1, 1]} : vector<64x30xf32> to vector<64x1xf32>
    %486 = vector.extract_strided_slice %10 {offsets = [16, 0], sizes = [1, 128], strides = [1, 1]} : vector<30x128xf32> to vector<1x128xf32>
    %487 = vector.broadcast %485 : vector<64x1xf32> to vector<64x128xf32>
    %488 = vector.broadcast %486 : vector<1x128xf32> to vector<64x128xf32>
    %489 = arith.addf %487, %488 : vector<64x128xf32>
    %490 = arith.addf %489, %484 : vector<64x128xf32>
    %cst_172 = arith.constant 0.000000e+00 : f32
    %491 = vector.broadcast %cst_172 : f32 to vector<64x128xf32>
    %492 = arith.cmpf ogt, %490, %491 : vector<64x128xf32>
    %cst_173 = arith.constant 2.000000e-01 : f32
    %493 = vector.broadcast %cst_173 : f32 to vector<64x128xf32>
    %494 = arith.mulf %493, %490 : vector<64x128xf32>
    %495 = arith.select %492, %490, %494 : vector<64x128xi1>, vector<64x128xf32>
    %c16_174 = arith.constant 16 : index
    %496 = memref.load %arg8[%c16_174] : memref<30xf32, #tpu.memory_space<smem>>
    %497 = vector.broadcast %496 : f32 to vector<64x128xf32>
    %498 = arith.mulf %497, %495 : vector<64x128xf32>
    %499 = arith.addf %473, %498 : vector<64x128xf32>
    %c0_175 = arith.constant 0 : index
    %c17 = arith.constant 17 : index
    %500 = memref.load %arg7[%c0_175, %c17] : memref<3x30xf32, #tpu.memory_space<smem>>
    %501 = vector.broadcast %500 : f32 to vector<64x128xf32>
    %502 = arith.mulf %501, %19 : vector<64x128xf32>
    %c1_176 = arith.constant 1 : index
    %c17_177 = arith.constant 17 : index
    %503 = memref.load %arg7[%c1_176, %c17_177] : memref<3x30xf32, #tpu.memory_space<smem>>
    %504 = vector.broadcast %503 : f32 to vector<64x128xf32>
    %505 = arith.mulf %504, %21 : vector<64x128xf32>
    %506 = arith.addf %502, %505 : vector<64x128xf32>
    %c2_178 = arith.constant 2 : index
    %c17_179 = arith.constant 17 : index
    %507 = memref.load %arg7[%c2_178, %c17_179] : memref<3x30xf32, #tpu.memory_space<smem>>
    %508 = vector.broadcast %507 : f32 to vector<64x128xf32>
    %509 = arith.mulf %508, %23 : vector<64x128xf32>
    %510 = arith.addf %506, %509 : vector<64x128xf32>
    %511 = vector.extract_strided_slice %16 {offsets = [0, 17], sizes = [64, 1], strides = [1, 1]} : vector<64x30xf32> to vector<64x1xf32>
    %512 = vector.extract_strided_slice %10 {offsets = [17, 0], sizes = [1, 128], strides = [1, 1]} : vector<30x128xf32> to vector<1x128xf32>
    %513 = vector.broadcast %511 : vector<64x1xf32> to vector<64x128xf32>
    %514 = vector.broadcast %512 : vector<1x128xf32> to vector<64x128xf32>
    %515 = arith.addf %513, %514 : vector<64x128xf32>
    %516 = arith.addf %515, %510 : vector<64x128xf32>
    %cst_180 = arith.constant 0.000000e+00 : f32
    %517 = vector.broadcast %cst_180 : f32 to vector<64x128xf32>
    %518 = arith.cmpf ogt, %516, %517 : vector<64x128xf32>
    %cst_181 = arith.constant 2.000000e-01 : f32
    %519 = vector.broadcast %cst_181 : f32 to vector<64x128xf32>
    %520 = arith.mulf %519, %516 : vector<64x128xf32>
    %521 = arith.select %518, %516, %520 : vector<64x128xi1>, vector<64x128xf32>
    %c17_182 = arith.constant 17 : index
    %522 = memref.load %arg8[%c17_182] : memref<30xf32, #tpu.memory_space<smem>>
    %523 = vector.broadcast %522 : f32 to vector<64x128xf32>
    %524 = arith.mulf %523, %521 : vector<64x128xf32>
    %525 = arith.addf %499, %524 : vector<64x128xf32>
    %c0_183 = arith.constant 0 : index
    %c18 = arith.constant 18 : index
    %526 = memref.load %arg7[%c0_183, %c18] : memref<3x30xf32, #tpu.memory_space<smem>>
    %527 = vector.broadcast %526 : f32 to vector<64x128xf32>
    %528 = arith.mulf %527, %19 : vector<64x128xf32>
    %c1_184 = arith.constant 1 : index
    %c18_185 = arith.constant 18 : index
    %529 = memref.load %arg7[%c1_184, %c18_185] : memref<3x30xf32, #tpu.memory_space<smem>>
    %530 = vector.broadcast %529 : f32 to vector<64x128xf32>
    %531 = arith.mulf %530, %21 : vector<64x128xf32>
    %532 = arith.addf %528, %531 : vector<64x128xf32>
    %c2_186 = arith.constant 2 : index
    %c18_187 = arith.constant 18 : index
    %533 = memref.load %arg7[%c2_186, %c18_187] : memref<3x30xf32, #tpu.memory_space<smem>>
    %534 = vector.broadcast %533 : f32 to vector<64x128xf32>
    %535 = arith.mulf %534, %23 : vector<64x128xf32>
    %536 = arith.addf %532, %535 : vector<64x128xf32>
    %537 = vector.extract_strided_slice %16 {offsets = [0, 18], sizes = [64, 1], strides = [1, 1]} : vector<64x30xf32> to vector<64x1xf32>
    %538 = vector.extract_strided_slice %10 {offsets = [18, 0], sizes = [1, 128], strides = [1, 1]} : vector<30x128xf32> to vector<1x128xf32>
    %539 = vector.broadcast %537 : vector<64x1xf32> to vector<64x128xf32>
    %540 = vector.broadcast %538 : vector<1x128xf32> to vector<64x128xf32>
    %541 = arith.addf %539, %540 : vector<64x128xf32>
    %542 = arith.addf %541, %536 : vector<64x128xf32>
    %cst_188 = arith.constant 0.000000e+00 : f32
    %543 = vector.broadcast %cst_188 : f32 to vector<64x128xf32>
    %544 = arith.cmpf ogt, %542, %543 : vector<64x128xf32>
    %cst_189 = arith.constant 2.000000e-01 : f32
    %545 = vector.broadcast %cst_189 : f32 to vector<64x128xf32>
    %546 = arith.mulf %545, %542 : vector<64x128xf32>
    %547 = arith.select %544, %542, %546 : vector<64x128xi1>, vector<64x128xf32>
    %c18_190 = arith.constant 18 : index
    %548 = memref.load %arg8[%c18_190] : memref<30xf32, #tpu.memory_space<smem>>
    %549 = vector.broadcast %548 : f32 to vector<64x128xf32>
    %550 = arith.mulf %549, %547 : vector<64x128xf32>
    %551 = arith.addf %525, %550 : vector<64x128xf32>
    %c0_191 = arith.constant 0 : index
    %c19 = arith.constant 19 : index
    %552 = memref.load %arg7[%c0_191, %c19] : memref<3x30xf32, #tpu.memory_space<smem>>
    %553 = vector.broadcast %552 : f32 to vector<64x128xf32>
    %554 = arith.mulf %553, %19 : vector<64x128xf32>
    %c1_192 = arith.constant 1 : index
    %c19_193 = arith.constant 19 : index
    %555 = memref.load %arg7[%c1_192, %c19_193] : memref<3x30xf32, #tpu.memory_space<smem>>
    %556 = vector.broadcast %555 : f32 to vector<64x128xf32>
    %557 = arith.mulf %556, %21 : vector<64x128xf32>
    %558 = arith.addf %554, %557 : vector<64x128xf32>
    %c2_194 = arith.constant 2 : index
    %c19_195 = arith.constant 19 : index
    %559 = memref.load %arg7[%c2_194, %c19_195] : memref<3x30xf32, #tpu.memory_space<smem>>
    %560 = vector.broadcast %559 : f32 to vector<64x128xf32>
    %561 = arith.mulf %560, %23 : vector<64x128xf32>
    %562 = arith.addf %558, %561 : vector<64x128xf32>
    %563 = vector.extract_strided_slice %16 {offsets = [0, 19], sizes = [64, 1], strides = [1, 1]} : vector<64x30xf32> to vector<64x1xf32>
    %564 = vector.extract_strided_slice %10 {offsets = [19, 0], sizes = [1, 128], strides = [1, 1]} : vector<30x128xf32> to vector<1x128xf32>
    %565 = vector.broadcast %563 : vector<64x1xf32> to vector<64x128xf32>
    %566 = vector.broadcast %564 : vector<1x128xf32> to vector<64x128xf32>
    %567 = arith.addf %565, %566 : vector<64x128xf32>
    %568 = arith.addf %567, %562 : vector<64x128xf32>
    %cst_196 = arith.constant 0.000000e+00 : f32
    %569 = vector.broadcast %cst_196 : f32 to vector<64x128xf32>
    %570 = arith.cmpf ogt, %568, %569 : vector<64x128xf32>
    %cst_197 = arith.constant 2.000000e-01 : f32
    %571 = vector.broadcast %cst_197 : f32 to vector<64x128xf32>
    %572 = arith.mulf %571, %568 : vector<64x128xf32>
    %573 = arith.select %570, %568, %572 : vector<64x128xi1>, vector<64x128xf32>
    %c19_198 = arith.constant 19 : index
    %574 = memref.load %arg8[%c19_198] : memref<30xf32, #tpu.memory_space<smem>>
    %575 = vector.broadcast %574 : f32 to vector<64x128xf32>
    %576 = arith.mulf %575, %573 : vector<64x128xf32>
    %577 = arith.addf %551, %576 : vector<64x128xf32>
    %cst_199 = arith.constant 0.000000e+00 : f32
    %578 = vector.broadcast %cst_199 : f32 to vector<64x128xf32>
    %579 = arith.cmpf ogt, %17, %578 : vector<64x128xf32>
    %cst_200 = arith.constant -1.000000e+30 : f32
    %580 = vector.broadcast %cst_200 : f32 to vector<64x128xf32>
    %581 = arith.select %579, %577, %580 : vector<64x128xi1>, vector<64x128xf32>
    %cst_201 = arith.constant dense<0xFF800000> : vector<64xf32>
    %582 = vector.multi_reduction <maximumf>, %581, %cst_201 [1] : vector<64x128xf32> to vector<64xf32>
    %583 = vector.shape_cast %582 : vector<64xf32> to vector<64x1xf32>
    %584 = vector.broadcast %583 : vector<64x1xf32> to vector<64x128xf32>
    %585 = arith.subf %581, %584 : vector<64x128xf32>
    %586 = math.exp %585 : vector<64x128xf32>
    %587 = arith.mulf %586, %17 : vector<64x128xf32>
    %cst_202 = arith.constant dense<0.000000e+00> : vector<64xf32>
    %588 = vector.multi_reduction <add>, %587, %cst_202 [1] : vector<64x128xf32> to vector<64xf32>
    %589 = vector.shape_cast %588 : vector<64xf32> to vector<64x1xf32>
    %cst_203 = arith.constant 9.99999968E-21 : f32
    %590 = vector.broadcast %cst_203 : f32 to vector<64x1xf32>
    %591 = arith.maximumf %589, %590 : vector<64x1xf32>
    %592 = vector.broadcast %591 : vector<64x1xf32> to vector<64x128xf32>
    %593 = arith.divf %587, %592 : vector<64x128xf32>
    %594 = vector.extract_strided_slice %9 {offsets = [0, 10], sizes = [128, 10], strides = [1, 1]} : vector<128x30xf32> to vector<128x10xf32>
    %cst_204 = arith.constant dense<0.000000e+00> : vector<64x10xf32>
    %595 = tpu.matmul %593, %594, %cst_204 {dimension_numbers = #tpu.dot_dimension_numbers<[1], [0], [0], [1], [0, 0, 1, 1], [], []>} : vector<64x128xf32>, vector<128x10xf32>, vector<64x10xf32> -> vector<64x10xf32>
    %596 = vector.extract_strided_slice %5 {offsets = [0, 10], sizes = [1, 10], strides = [1, 1]} : vector<1x30xf32> to vector<1x10xf32>
    %597 = vector.broadcast %596 : vector<1x10xf32> to vector<64x10xf32>
    %598 = arith.addf %595, %597 : vector<64x10xf32>
    %cst_205 = arith.constant 0.000000e+00 : f32
    %599 = vector.broadcast %cst_205 : f32 to vector<64x10xf32>
    %600 = arith.cmpf ogt, %598, %599 : vector<64x10xf32>
    %cst_206 = arith.constant 0.000000e+00 : f32
    %601 = vector.broadcast %cst_206 : f32 to vector<64x10xf32>
    %602 = arith.minimumf %598, %601 : vector<64x10xf32>
    %603 = math.exp %602 : vector<64x10xf32>
    %cst_207 = arith.constant 1.000000e+00 : f32
    %604 = vector.broadcast %cst_207 : f32 to vector<64x10xf32>
    %605 = arith.subf %603, %604 : vector<64x10xf32>
    %606 = arith.select %600, %598, %605 : vector<64x10xi1>, vector<64x10xf32>
    %c1_208 = arith.constant 1 : index
    %c0_209 = arith.constant 0 : index
    %c0_210 = arith.constant 0 : index
    %607 = vector.load %arg9[%c1_208, %c0_209, %c0_210] : memref<3x64x10xf32, #tpu.memory_space<vmem>>, vector<1x64x10xf32>
    %608 = vector.shape_cast %607 : vector<1x64x10xf32> to vector<64x10xf32>
    %609 = vector.shape_cast %606 : vector<64x10xf32> to vector<1x64x10xf32>
    tpu.vector_store %arg9[%c1_208, %c0_209, %c0_210], %609 {strides = array<i32>} : memref<3x64x10xf32, #tpu.memory_space<vmem>>, vector<1x64x10xf32>,
    %cst_211 = arith.constant 0.000000e+00 : f32
    %610 = vector.broadcast %cst_211 : f32 to vector<64x128xf32>
    %c0_212 = arith.constant 0 : index
    %c20 = arith.constant 20 : index
    %611 = memref.load %arg7[%c0_212, %c20] : memref<3x30xf32, #tpu.memory_space<smem>>
    %612 = vector.broadcast %611 : f32 to vector<64x128xf32>
    %613 = arith.mulf %612, %19 : vector<64x128xf32>
    %c1_213 = arith.constant 1 : index
    %c20_214 = arith.constant 20 : index
    %614 = memref.load %arg7[%c1_213, %c20_214] : memref<3x30xf32, #tpu.memory_space<smem>>
    %615 = vector.broadcast %614 : f32 to vector<64x128xf32>
    %616 = arith.mulf %615, %21 : vector<64x128xf32>
    %617 = arith.addf %613, %616 : vector<64x128xf32>
    %c2_215 = arith.constant 2 : index
    %c20_216 = arith.constant 20 : index
    %618 = memref.load %arg7[%c2_215, %c20_216] : memref<3x30xf32, #tpu.memory_space<smem>>
    %619 = vector.broadcast %618 : f32 to vector<64x128xf32>
    %620 = arith.mulf %619, %23 : vector<64x128xf32>
    %621 = arith.addf %617, %620 : vector<64x128xf32>
    %622 = vector.extract_strided_slice %16 {offsets = [0, 20], sizes = [64, 1], strides = [1, 1]} : vector<64x30xf32> to vector<64x1xf32>
    %623 = vector.extract_strided_slice %10 {offsets = [20, 0], sizes = [1, 128], strides = [1, 1]} : vector<30x128xf32> to vector<1x128xf32>
    %624 = vector.broadcast %622 : vector<64x1xf32> to vector<64x128xf32>
    %625 = vector.broadcast %623 : vector<1x128xf32> to vector<64x128xf32>
    %626 = arith.addf %624, %625 : vector<64x128xf32>
    %627 = arith.addf %626, %621 : vector<64x128xf32>
    %cst_217 = arith.constant 0.000000e+00 : f32
    %628 = vector.broadcast %cst_217 : f32 to vector<64x128xf32>
    %629 = arith.cmpf ogt, %627, %628 : vector<64x128xf32>
    %cst_218 = arith.constant 2.000000e-01 : f32
    %630 = vector.broadcast %cst_218 : f32 to vector<64x128xf32>
    %631 = arith.mulf %630, %627 : vector<64x128xf32>
    %632 = arith.select %629, %627, %631 : vector<64x128xi1>, vector<64x128xf32>
    %c20_219 = arith.constant 20 : index
    %633 = memref.load %arg8[%c20_219] : memref<30xf32, #tpu.memory_space<smem>>
    %634 = vector.broadcast %633 : f32 to vector<64x128xf32>
    %635 = arith.mulf %634, %632 : vector<64x128xf32>
    %636 = arith.addf %610, %635 : vector<64x128xf32>
    %c0_220 = arith.constant 0 : index
    %c21 = arith.constant 21 : index
    %637 = memref.load %arg7[%c0_220, %c21] : memref<3x30xf32, #tpu.memory_space<smem>>
    %638 = vector.broadcast %637 : f32 to vector<64x128xf32>
    %639 = arith.mulf %638, %19 : vector<64x128xf32>
    %c1_221 = arith.constant 1 : index
    %c21_222 = arith.constant 21 : index
    %640 = memref.load %arg7[%c1_221, %c21_222] : memref<3x30xf32, #tpu.memory_space<smem>>
    %641 = vector.broadcast %640 : f32 to vector<64x128xf32>
    %642 = arith.mulf %641, %21 : vector<64x128xf32>
    %643 = arith.addf %639, %642 : vector<64x128xf32>
    %c2_223 = arith.constant 2 : index
    %c21_224 = arith.constant 21 : index
    %644 = memref.load %arg7[%c2_223, %c21_224] : memref<3x30xf32, #tpu.memory_space<smem>>
    %645 = vector.broadcast %644 : f32 to vector<64x128xf32>
    %646 = arith.mulf %645, %23 : vector<64x128xf32>
    %647 = arith.addf %643, %646 : vector<64x128xf32>
    %648 = vector.extract_strided_slice %16 {offsets = [0, 21], sizes = [64, 1], strides = [1, 1]} : vector<64x30xf32> to vector<64x1xf32>
    %649 = vector.extract_strided_slice %10 {offsets = [21, 0], sizes = [1, 128], strides = [1, 1]} : vector<30x128xf32> to vector<1x128xf32>
    %650 = vector.broadcast %648 : vector<64x1xf32> to vector<64x128xf32>
    %651 = vector.broadcast %649 : vector<1x128xf32> to vector<64x128xf32>
    %652 = arith.addf %650, %651 : vector<64x128xf32>
    %653 = arith.addf %652, %647 : vector<64x128xf32>
    %cst_225 = arith.constant 0.000000e+00 : f32
    %654 = vector.broadcast %cst_225 : f32 to vector<64x128xf32>
    %655 = arith.cmpf ogt, %653, %654 : vector<64x128xf32>
    %cst_226 = arith.constant 2.000000e-01 : f32
    %656 = vector.broadcast %cst_226 : f32 to vector<64x128xf32>
    %657 = arith.mulf %656, %653 : vector<64x128xf32>
    %658 = arith.select %655, %653, %657 : vector<64x128xi1>, vector<64x128xf32>
    %c21_227 = arith.constant 21 : index
    %659 = memref.load %arg8[%c21_227] : memref<30xf32, #tpu.memory_space<smem>>
    %660 = vector.broadcast %659 : f32 to vector<64x128xf32>
    %661 = arith.mulf %660, %658 : vector<64x128xf32>
    %662 = arith.addf %636, %661 : vector<64x128xf32>
    %c0_228 = arith.constant 0 : index
    %c22 = arith.constant 22 : index
    %663 = memref.load %arg7[%c0_228, %c22] : memref<3x30xf32, #tpu.memory_space<smem>>
    %664 = vector.broadcast %663 : f32 to vector<64x128xf32>
    %665 = arith.mulf %664, %19 : vector<64x128xf32>
    %c1_229 = arith.constant 1 : index
    %c22_230 = arith.constant 22 : index
    %666 = memref.load %arg7[%c1_229, %c22_230] : memref<3x30xf32, #tpu.memory_space<smem>>
    %667 = vector.broadcast %666 : f32 to vector<64x128xf32>
    %668 = arith.mulf %667, %21 : vector<64x128xf32>
    %669 = arith.addf %665, %668 : vector<64x128xf32>
    %c2_231 = arith.constant 2 : index
    %c22_232 = arith.constant 22 : index
    %670 = memref.load %arg7[%c2_231, %c22_232] : memref<3x30xf32, #tpu.memory_space<smem>>
    %671 = vector.broadcast %670 : f32 to vector<64x128xf32>
    %672 = arith.mulf %671, %23 : vector<64x128xf32>
    %673 = arith.addf %669, %672 : vector<64x128xf32>
    %674 = vector.extract_strided_slice %16 {offsets = [0, 22], sizes = [64, 1], strides = [1, 1]} : vector<64x30xf32> to vector<64x1xf32>
    %675 = vector.extract_strided_slice %10 {offsets = [22, 0], sizes = [1, 128], strides = [1, 1]} : vector<30x128xf32> to vector<1x128xf32>
    %676 = vector.broadcast %674 : vector<64x1xf32> to vector<64x128xf32>
    %677 = vector.broadcast %675 : vector<1x128xf32> to vector<64x128xf32>
    %678 = arith.addf %676, %677 : vector<64x128xf32>
    %679 = arith.addf %678, %673 : vector<64x128xf32>
    %cst_233 = arith.constant 0.000000e+00 : f32
    %680 = vector.broadcast %cst_233 : f32 to vector<64x128xf32>
    %681 = arith.cmpf ogt, %679, %680 : vector<64x128xf32>
    %cst_234 = arith.constant 2.000000e-01 : f32
    %682 = vector.broadcast %cst_234 : f32 to vector<64x128xf32>
    %683 = arith.mulf %682, %679 : vector<64x128xf32>
    %684 = arith.select %681, %679, %683 : vector<64x128xi1>, vector<64x128xf32>
    %c22_235 = arith.constant 22 : index
    %685 = memref.load %arg8[%c22_235] : memref<30xf32, #tpu.memory_space<smem>>
    %686 = vector.broadcast %685 : f32 to vector<64x128xf32>
    %687 = arith.mulf %686, %684 : vector<64x128xf32>
    %688 = arith.addf %662, %687 : vector<64x128xf32>
    %c0_236 = arith.constant 0 : index
    %c23 = arith.constant 23 : index
    %689 = memref.load %arg7[%c0_236, %c23] : memref<3x30xf32, #tpu.memory_space<smem>>
    %690 = vector.broadcast %689 : f32 to vector<64x128xf32>
    %691 = arith.mulf %690, %19 : vector<64x128xf32>
    %c1_237 = arith.constant 1 : index
    %c23_238 = arith.constant 23 : index
    %692 = memref.load %arg7[%c1_237, %c23_238] : memref<3x30xf32, #tpu.memory_space<smem>>
    %693 = vector.broadcast %692 : f32 to vector<64x128xf32>
    %694 = arith.mulf %693, %21 : vector<64x128xf32>
    %695 = arith.addf %691, %694 : vector<64x128xf32>
    %c2_239 = arith.constant 2 : index
    %c23_240 = arith.constant 23 : index
    %696 = memref.load %arg7[%c2_239, %c23_240] : memref<3x30xf32, #tpu.memory_space<smem>>
    %697 = vector.broadcast %696 : f32 to vector<64x128xf32>
    %698 = arith.mulf %697, %23 : vector<64x128xf32>
    %699 = arith.addf %695, %698 : vector<64x128xf32>
    %700 = vector.extract_strided_slice %16 {offsets = [0, 23], sizes = [64, 1], strides = [1, 1]} : vector<64x30xf32> to vector<64x1xf32>
    %701 = vector.extract_strided_slice %10 {offsets = [23, 0], sizes = [1, 128], strides = [1, 1]} : vector<30x128xf32> to vector<1x128xf32>
    %702 = vector.broadcast %700 : vector<64x1xf32> to vector<64x128xf32>
    %703 = vector.broadcast %701 : vector<1x128xf32> to vector<64x128xf32>
    %704 = arith.addf %702, %703 : vector<64x128xf32>
    %705 = arith.addf %704, %699 : vector<64x128xf32>
    %cst_241 = arith.constant 0.000000e+00 : f32
    %706 = vector.broadcast %cst_241 : f32 to vector<64x128xf32>
    %707 = arith.cmpf ogt, %705, %706 : vector<64x128xf32>
    %cst_242 = arith.constant 2.000000e-01 : f32
    %708 = vector.broadcast %cst_242 : f32 to vector<64x128xf32>
    %709 = arith.mulf %708, %705 : vector<64x128xf32>
    %710 = arith.select %707, %705, %709 : vector<64x128xi1>, vector<64x128xf32>
    %c23_243 = arith.constant 23 : index
    %711 = memref.load %arg8[%c23_243] : memref<30xf32, #tpu.memory_space<smem>>
    %712 = vector.broadcast %711 : f32 to vector<64x128xf32>
    %713 = arith.mulf %712, %710 : vector<64x128xf32>
    %714 = arith.addf %688, %713 : vector<64x128xf32>
    %c0_244 = arith.constant 0 : index
    %c24 = arith.constant 24 : index
    %715 = memref.load %arg7[%c0_244, %c24] : memref<3x30xf32, #tpu.memory_space<smem>>
    %716 = vector.broadcast %715 : f32 to vector<64x128xf32>
    %717 = arith.mulf %716, %19 : vector<64x128xf32>
    %c1_245 = arith.constant 1 : index
    %c24_246 = arith.constant 24 : index
    %718 = memref.load %arg7[%c1_245, %c24_246] : memref<3x30xf32, #tpu.memory_space<smem>>
    %719 = vector.broadcast %718 : f32 to vector<64x128xf32>
    %720 = arith.mulf %719, %21 : vector<64x128xf32>
    %721 = arith.addf %717, %720 : vector<64x128xf32>
    %c2_247 = arith.constant 2 : index
    %c24_248 = arith.constant 24 : index
    %722 = memref.load %arg7[%c2_247, %c24_248] : memref<3x30xf32, #tpu.memory_space<smem>>
    %723 = vector.broadcast %722 : f32 to vector<64x128xf32>
    %724 = arith.mulf %723, %23 : vector<64x128xf32>
    %725 = arith.addf %721, %724 : vector<64x128xf32>
    %726 = vector.extract_strided_slice %16 {offsets = [0, 24], sizes = [64, 1], strides = [1, 1]} : vector<64x30xf32> to vector<64x1xf32>
    %727 = vector.extract_strided_slice %10 {offsets = [24, 0], sizes = [1, 128], strides = [1, 1]} : vector<30x128xf32> to vector<1x128xf32>
    %728 = vector.broadcast %726 : vector<64x1xf32> to vector<64x128xf32>
    %729 = vector.broadcast %727 : vector<1x128xf32> to vector<64x128xf32>
    %730 = arith.addf %728, %729 : vector<64x128xf32>
    %731 = arith.addf %730, %725 : vector<64x128xf32>
    %cst_249 = arith.constant 0.000000e+00 : f32
    %732 = vector.broadcast %cst_249 : f32 to vector<64x128xf32>
    %733 = arith.cmpf ogt, %731, %732 : vector<64x128xf32>
    %cst_250 = arith.constant 2.000000e-01 : f32
    %734 = vector.broadcast %cst_250 : f32 to vector<64x128xf32>
    %735 = arith.mulf %734, %731 : vector<64x128xf32>
    %736 = arith.select %733, %731, %735 : vector<64x128xi1>, vector<64x128xf32>
    %c24_251 = arith.constant 24 : index
    %737 = memref.load %arg8[%c24_251] : memref<30xf32, #tpu.memory_space<smem>>
    %738 = vector.broadcast %737 : f32 to vector<64x128xf32>
    %739 = arith.mulf %738, %736 : vector<64x128xf32>
    %740 = arith.addf %714, %739 : vector<64x128xf32>
    %c0_252 = arith.constant 0 : index
    %c25 = arith.constant 25 : index
    %741 = memref.load %arg7[%c0_252, %c25] : memref<3x30xf32, #tpu.memory_space<smem>>
    %742 = vector.broadcast %741 : f32 to vector<64x128xf32>
    %743 = arith.mulf %742, %19 : vector<64x128xf32>
    %c1_253 = arith.constant 1 : index
    %c25_254 = arith.constant 25 : index
    %744 = memref.load %arg7[%c1_253, %c25_254] : memref<3x30xf32, #tpu.memory_space<smem>>
    %745 = vector.broadcast %744 : f32 to vector<64x128xf32>
    %746 = arith.mulf %745, %21 : vector<64x128xf32>
    %747 = arith.addf %743, %746 : vector<64x128xf32>
    %c2_255 = arith.constant 2 : index
    %c25_256 = arith.constant 25 : index
    %748 = memref.load %arg7[%c2_255, %c25_256] : memref<3x30xf32, #tpu.memory_space<smem>>
    %749 = vector.broadcast %748 : f32 to vector<64x128xf32>
    %750 = arith.mulf %749, %23 : vector<64x128xf32>
    %751 = arith.addf %747, %750 : vector<64x128xf32>
    %752 = vector.extract_strided_slice %16 {offsets = [0, 25], sizes = [64, 1], strides = [1, 1]} : vector<64x30xf32> to vector<64x1xf32>
    %753 = vector.extract_strided_slice %10 {offsets = [25, 0], sizes = [1, 128], strides = [1, 1]} : vector<30x128xf32> to vector<1x128xf32>
    %754 = vector.broadcast %752 : vector<64x1xf32> to vector<64x128xf32>
    %755 = vector.broadcast %753 : vector<1x128xf32> to vector<64x128xf32>
    %756 = arith.addf %754, %755 : vector<64x128xf32>
    %757 = arith.addf %756, %751 : vector<64x128xf32>
    %cst_257 = arith.constant 0.000000e+00 : f32
    %758 = vector.broadcast %cst_257 : f32 to vector<64x128xf32>
    %759 = arith.cmpf ogt, %757, %758 : vector<64x128xf32>
    %cst_258 = arith.constant 2.000000e-01 : f32
    %760 = vector.broadcast %cst_258 : f32 to vector<64x128xf32>
    %761 = arith.mulf %760, %757 : vector<64x128xf32>
    %762 = arith.select %759, %757, %761 : vector<64x128xi1>, vector<64x128xf32>
    %c25_259 = arith.constant 25 : index
    %763 = memref.load %arg8[%c25_259] : memref<30xf32, #tpu.memory_space<smem>>
    %764 = vector.broadcast %763 : f32 to vector<64x128xf32>
    %765 = arith.mulf %764, %762 : vector<64x128xf32>
    %766 = arith.addf %740, %765 : vector<64x128xf32>
    %c0_260 = arith.constant 0 : index
    %c26 = arith.constant 26 : index
    %767 = memref.load %arg7[%c0_260, %c26] : memref<3x30xf32, #tpu.memory_space<smem>>
    %768 = vector.broadcast %767 : f32 to vector<64x128xf32>
    %769 = arith.mulf %768, %19 : vector<64x128xf32>
    %c1_261 = arith.constant 1 : index
    %c26_262 = arith.constant 26 : index
    %770 = memref.load %arg7[%c1_261, %c26_262] : memref<3x30xf32, #tpu.memory_space<smem>>
    %771 = vector.broadcast %770 : f32 to vector<64x128xf32>
    %772 = arith.mulf %771, %21 : vector<64x128xf32>
    %773 = arith.addf %769, %772 : vector<64x128xf32>
    %c2_263 = arith.constant 2 : index
    %c26_264 = arith.constant 26 : index
    %774 = memref.load %arg7[%c2_263, %c26_264] : memref<3x30xf32, #tpu.memory_space<smem>>
    %775 = vector.broadcast %774 : f32 to vector<64x128xf32>
    %776 = arith.mulf %775, %23 : vector<64x128xf32>
    %777 = arith.addf %773, %776 : vector<64x128xf32>
    %778 = vector.extract_strided_slice %16 {offsets = [0, 26], sizes = [64, 1], strides = [1, 1]} : vector<64x30xf32> to vector<64x1xf32>
    %779 = vector.extract_strided_slice %10 {offsets = [26, 0], sizes = [1, 128], strides = [1, 1]} : vector<30x128xf32> to vector<1x128xf32>
    %780 = vector.broadcast %778 : vector<64x1xf32> to vector<64x128xf32>
    %781 = vector.broadcast %779 : vector<1x128xf32> to vector<64x128xf32>
    %782 = arith.addf %780, %781 : vector<64x128xf32>
    %783 = arith.addf %782, %777 : vector<64x128xf32>
    %cst_265 = arith.constant 0.000000e+00 : f32
    %784 = vector.broadcast %cst_265 : f32 to vector<64x128xf32>
    %785 = arith.cmpf ogt, %783, %784 : vector<64x128xf32>
    %cst_266 = arith.constant 2.000000e-01 : f32
    %786 = vector.broadcast %cst_266 : f32 to vector<64x128xf32>
    %787 = arith.mulf %786, %783 : vector<64x128xf32>
    %788 = arith.select %785, %783, %787 : vector<64x128xi1>, vector<64x128xf32>
    %c26_267 = arith.constant 26 : index
    %789 = memref.load %arg8[%c26_267] : memref<30xf32, #tpu.memory_space<smem>>
    %790 = vector.broadcast %789 : f32 to vector<64x128xf32>
    %791 = arith.mulf %790, %788 : vector<64x128xf32>
    %792 = arith.addf %766, %791 : vector<64x128xf32>
    %c0_268 = arith.constant 0 : index
    %c27 = arith.constant 27 : index
    %793 = memref.load %arg7[%c0_268, %c27] : memref<3x30xf32, #tpu.memory_space<smem>>
    %794 = vector.broadcast %793 : f32 to vector<64x128xf32>
    %795 = arith.mulf %794, %19 : vector<64x128xf32>
    %c1_269 = arith.constant 1 : index
    %c27_270 = arith.constant 27 : index
    %796 = memref.load %arg7[%c1_269, %c27_270] : memref<3x30xf32, #tpu.memory_space<smem>>
    %797 = vector.broadcast %796 : f32 to vector<64x128xf32>
    %798 = arith.mulf %797, %21 : vector<64x128xf32>
    %799 = arith.addf %795, %798 : vector<64x128xf32>
    %c2_271 = arith.constant 2 : index
    %c27_272 = arith.constant 27 : index
    %800 = memref.load %arg7[%c2_271, %c27_272] : memref<3x30xf32, #tpu.memory_space<smem>>
    %801 = vector.broadcast %800 : f32 to vector<64x128xf32>
    %802 = arith.mulf %801, %23 : vector<64x128xf32>
    %803 = arith.addf %799, %802 : vector<64x128xf32>
    %804 = vector.extract_strided_slice %16 {offsets = [0, 27], sizes = [64, 1], strides = [1, 1]} : vector<64x30xf32> to vector<64x1xf32>
    %805 = vector.extract_strided_slice %10 {offsets = [27, 0], sizes = [1, 128], strides = [1, 1]} : vector<30x128xf32> to vector<1x128xf32>
    %806 = vector.broadcast %804 : vector<64x1xf32> to vector<64x128xf32>
    %807 = vector.broadcast %805 : vector<1x128xf32> to vector<64x128xf32>
    %808 = arith.addf %806, %807 : vector<64x128xf32>
    %809 = arith.addf %808, %803 : vector<64x128xf32>
    %cst_273 = arith.constant 0.000000e+00 : f32
    %810 = vector.broadcast %cst_273 : f32 to vector<64x128xf32>
    %811 = arith.cmpf ogt, %809, %810 : vector<64x128xf32>
    %cst_274 = arith.constant 2.000000e-01 : f32
    %812 = vector.broadcast %cst_274 : f32 to vector<64x128xf32>
    %813 = arith.mulf %812, %809 : vector<64x128xf32>
    %814 = arith.select %811, %809, %813 : vector<64x128xi1>, vector<64x128xf32>
    %c27_275 = arith.constant 27 : index
    %815 = memref.load %arg8[%c27_275] : memref<30xf32, #tpu.memory_space<smem>>
    %816 = vector.broadcast %815 : f32 to vector<64x128xf32>
    %817 = arith.mulf %816, %814 : vector<64x128xf32>
    %818 = arith.addf %792, %817 : vector<64x128xf32>
    %c0_276 = arith.constant 0 : index
    %c28 = arith.constant 28 : index
    %819 = memref.load %arg7[%c0_276, %c28] : memref<3x30xf32, #tpu.memory_space<smem>>
    %820 = vector.broadcast %819 : f32 to vector<64x128xf32>
    %821 = arith.mulf %820, %19 : vector<64x128xf32>
    %c1_277 = arith.constant 1 : index
    %c28_278 = arith.constant 28 : index
    %822 = memref.load %arg7[%c1_277, %c28_278] : memref<3x30xf32, #tpu.memory_space<smem>>
    %823 = vector.broadcast %822 : f32 to vector<64x128xf32>
    %824 = arith.mulf %823, %21 : vector<64x128xf32>
    %825 = arith.addf %821, %824 : vector<64x128xf32>
    %c2_279 = arith.constant 2 : index
    %c28_280 = arith.constant 28 : index
    %826 = memref.load %arg7[%c2_279, %c28_280] : memref<3x30xf32, #tpu.memory_space<smem>>
    %827 = vector.broadcast %826 : f32 to vector<64x128xf32>
    %828 = arith.mulf %827, %23 : vector<64x128xf32>
    %829 = arith.addf %825, %828 : vector<64x128xf32>
    %830 = vector.extract_strided_slice %16 {offsets = [0, 28], sizes = [64, 1], strides = [1, 1]} : vector<64x30xf32> to vector<64x1xf32>
    %831 = vector.extract_strided_slice %10 {offsets = [28, 0], sizes = [1, 128], strides = [1, 1]} : vector<30x128xf32> to vector<1x128xf32>
    %832 = vector.broadcast %830 : vector<64x1xf32> to vector<64x128xf32>
    %833 = vector.broadcast %831 : vector<1x128xf32> to vector<64x128xf32>
    %834 = arith.addf %832, %833 : vector<64x128xf32>
    %835 = arith.addf %834, %829 : vector<64x128xf32>
    %cst_281 = arith.constant 0.000000e+00 : f32
    %836 = vector.broadcast %cst_281 : f32 to vector<64x128xf32>
    %837 = arith.cmpf ogt, %835, %836 : vector<64x128xf32>
    %cst_282 = arith.constant 2.000000e-01 : f32
    %838 = vector.broadcast %cst_282 : f32 to vector<64x128xf32>
    %839 = arith.mulf %838, %835 : vector<64x128xf32>
    %840 = arith.select %837, %835, %839 : vector<64x128xi1>, vector<64x128xf32>
    %c28_283 = arith.constant 28 : index
    %841 = memref.load %arg8[%c28_283] : memref<30xf32, #tpu.memory_space<smem>>
    %842 = vector.broadcast %841 : f32 to vector<64x128xf32>
    %843 = arith.mulf %842, %840 : vector<64x128xf32>
    %844 = arith.addf %818, %843 : vector<64x128xf32>
    %c0_284 = arith.constant 0 : index
    %c29 = arith.constant 29 : index
    %845 = memref.load %arg7[%c0_284, %c29] : memref<3x30xf32, #tpu.memory_space<smem>>
    %846 = vector.broadcast %845 : f32 to vector<64x128xf32>
    %847 = arith.mulf %846, %19 : vector<64x128xf32>
    %c1_285 = arith.constant 1 : index
    %c29_286 = arith.constant 29 : index
    %848 = memref.load %arg7[%c1_285, %c29_286] : memref<3x30xf32, #tpu.memory_space<smem>>
    %849 = vector.broadcast %848 : f32 to vector<64x128xf32>
    %850 = arith.mulf %849, %21 : vector<64x128xf32>
    %851 = arith.addf %847, %850 : vector<64x128xf32>
    %c2_287 = arith.constant 2 : index
    %c29_288 = arith.constant 29 : index
    %852 = memref.load %arg7[%c2_287, %c29_288] : memref<3x30xf32, #tpu.memory_space<smem>>
    %853 = vector.broadcast %852 : f32 to vector<64x128xf32>
    %854 = arith.mulf %853, %23 : vector<64x128xf32>
    %855 = arith.addf %851, %854 : vector<64x128xf32>
    %856 = vector.extract_strided_slice %16 {offsets = [0, 29], sizes = [64, 1], strides = [1, 1]} : vector<64x30xf32> to vector<64x1xf32>
    %857 = vector.extract_strided_slice %10 {offsets = [29, 0], sizes = [1, 128], strides = [1, 1]} : vector<30x128xf32> to vector<1x128xf32>
    %858 = vector.broadcast %856 : vector<64x1xf32> to vector<64x128xf32>
    %859 = vector.broadcast %857 : vector<1x128xf32> to vector<64x128xf32>
    %860 = arith.addf %858, %859 : vector<64x128xf32>
    %861 = arith.addf %860, %855 : vector<64x128xf32>
    %cst_289 = arith.constant 0.000000e+00 : f32
    %862 = vector.broadcast %cst_289 : f32 to vector<64x128xf32>
    %863 = arith.cmpf ogt, %861, %862 : vector<64x128xf32>
    %cst_290 = arith.constant 2.000000e-01 : f32
    %864 = vector.broadcast %cst_290 : f32 to vector<64x128xf32>
    %865 = arith.mulf %864, %861 : vector<64x128xf32>
    %866 = arith.select %863, %861, %865 : vector<64x128xi1>, vector<64x128xf32>
    %c29_291 = arith.constant 29 : index
    %867 = memref.load %arg8[%c29_291] : memref<30xf32, #tpu.memory_space<smem>>
    %868 = vector.broadcast %867 : f32 to vector<64x128xf32>
    %869 = arith.mulf %868, %866 : vector<64x128xf32>
    %870 = arith.addf %844, %869 : vector<64x128xf32>
    %cst_292 = arith.constant 0.000000e+00 : f32
    %871 = vector.broadcast %cst_292 : f32 to vector<64x128xf32>
    %872 = arith.cmpf ogt, %17, %871 : vector<64x128xf32>
    %cst_293 = arith.constant -1.000000e+30 : f32
    %873 = vector.broadcast %cst_293 : f32 to vector<64x128xf32>
    %874 = arith.select %872, %870, %873 : vector<64x128xi1>, vector<64x128xf32>
    %cst_294 = arith.constant dense<0xFF800000> : vector<64xf32>
    %875 = vector.multi_reduction <maximumf>, %874, %cst_294 [1] : vector<64x128xf32> to vector<64xf32>
    %876 = vector.shape_cast %875 : vector<64xf32> to vector<64x1xf32>
    %877 = vector.broadcast %876 : vector<64x1xf32> to vector<64x128xf32>
    %878 = arith.subf %874, %877 : vector<64x128xf32>
    %879 = math.exp %878 : vector<64x128xf32>
    %880 = arith.mulf %879, %17 : vector<64x128xf32>
    %cst_295 = arith.constant dense<0.000000e+00> : vector<64xf32>
    %881 = vector.multi_reduction <add>, %880, %cst_295 [1] : vector<64x128xf32> to vector<64xf32>
    %882 = vector.shape_cast %881 : vector<64xf32> to vector<64x1xf32>
    %cst_296 = arith.constant 9.99999968E-21 : f32
    %883 = vector.broadcast %cst_296 : f32 to vector<64x1xf32>
    %884 = arith.maximumf %882, %883 : vector<64x1xf32>
    %885 = vector.broadcast %884 : vector<64x1xf32> to vector<64x128xf32>
    %886 = arith.divf %880, %885 : vector<64x128xf32>
    %887 = vector.extract_strided_slice %9 {offsets = [0, 20], sizes = [128, 10], strides = [1, 1]} : vector<128x30xf32> to vector<128x10xf32>
    %cst_297 = arith.constant dense<0.000000e+00> : vector<64x10xf32>
    %888 = tpu.matmul %886, %887, %cst_297 {dimension_numbers = #tpu.dot_dimension_numbers<[1], [0], [0], [1], [0, 0, 1, 1], [], []>} : vector<64x128xf32>, vector<128x10xf32>, vector<64x10xf32> -> vector<64x10xf32>
    %889 = vector.extract_strided_slice %5 {offsets = [0, 20], sizes = [1, 10], strides = [1, 1]} : vector<1x30xf32> to vector<1x10xf32>
    %890 = vector.broadcast %889 : vector<1x10xf32> to vector<64x10xf32>
    %891 = arith.addf %888, %890 : vector<64x10xf32>
    %cst_298 = arith.constant 0.000000e+00 : f32
    %892 = vector.broadcast %cst_298 : f32 to vector<64x10xf32>
    %893 = arith.cmpf ogt, %891, %892 : vector<64x10xf32>
    %cst_299 = arith.constant 0.000000e+00 : f32
    %894 = vector.broadcast %cst_299 : f32 to vector<64x10xf32>
    %895 = arith.minimumf %891, %894 : vector<64x10xf32>
    %896 = math.exp %895 : vector<64x10xf32>
    %cst_300 = arith.constant 1.000000e+00 : f32
    %897 = vector.broadcast %cst_300 : f32 to vector<64x10xf32>
    %898 = arith.subf %896, %897 : vector<64x10xf32>
    %899 = arith.select %893, %891, %898 : vector<64x10xi1>, vector<64x10xf32>
    %c2_301 = arith.constant 2 : index
    %c0_302 = arith.constant 0 : index
    %c0_303 = arith.constant 0 : index
    %900 = vector.load %arg9[%c2_301, %c0_302, %c0_303] : memref<3x64x10xf32, #tpu.memory_space<vmem>>, vector<1x64x10xf32>
    %901 = vector.shape_cast %900 : vector<1x64x10xf32> to vector<64x10xf32>
    %902 = vector.shape_cast %899 : vector<64x10xf32> to vector<1x64x10xf32>
    tpu.vector_store %arg9[%c2_301, %c0_302, %c0_303], %902 {strides = array<i32>} : memref<3x64x10xf32, #tpu.memory_space<vmem>>, vector<1x64x10xf32>,
    return
  }
  func.func @transform_0(%arg0: i32) -> (i32, i32) {
    %c0_i32 = arith.constant 0 : i32
    %c0_i32_0 = arith.constant 0 : i32
    %c0_i32_1 = arith.constant 0 : i32
    return %c0_i32, %c0_i32_0 : i32, i32
  }
  func.func @transform_1(%arg0: i32) -> (i32, i32, i32) {
    %c0_i32 = arith.constant 0 : i32
    %c0_i32_0 = arith.constant 0 : i32
    %c0_i32_1 = arith.constant 0 : i32
    return %c0_i32, %arg0, %c0_i32_0 : i32, i32, i32
  }
  func.func @transform_2(%arg0: i32) -> (i32, i32) {
    %c0_i32 = arith.constant 0 : i32
    %c0_i32_0 = arith.constant 0 : i32
    return %arg0, %c0_i32 : i32, i32
  }
  func.func @transform_3(%arg0: i32) -> (i32, i32) {
    %c0_i32 = arith.constant 0 : i32
    %c0_i32_0 = arith.constant 0 : i32
    %c0_i32_1 = arith.constant 0 : i32
    return %c0_i32, %c0_i32_0 : i32, i32
  }
  func.func @transform_4(%arg0: i32) -> (i32, i32) {
    %c0_i32 = arith.constant 0 : i32
    %c0_i32_0 = arith.constant 0 : i32
    %c0_i32_1 = arith.constant 0 : i32
    return %c0_i32, %c0_i32_0 : i32, i32
  }
  func.func @transform_5(%arg0: i32) -> (i32, i32) {
    %c0_i32 = arith.constant 0 : i32
    %c0_i32_0 = arith.constant 0 : i32
    %c0_i32_1 = arith.constant 0 : i32
    return %c0_i32, %c0_i32_0 : i32, i32
  }
  func.func @transform_6(%arg0: i32) -> (i32, i32) {
    %c0_i32 = arith.constant 0 : i32
    %c0_i32_0 = arith.constant 0 : i32
    %c0_i32_1 = arith.constant 0 : i32
    return %c0_i32, %c0_i32_0 : i32, i32
  }
  func.func @transform_7(%arg0: i32) -> i32 {
    %c0_i32 = arith.constant 0 : i32
    %c0_i32_0 = arith.constant 0 : i32
    return %c0_i32 : i32
  }
  func.func @transform_8(%arg0: i32) -> (i32, i32, i32) {
    %c0_i32 = arith.constant 0 : i32
    %c0_i32_0 = arith.constant 0 : i32
    %c0_i32_1 = arith.constant 0 : i32
    return %c0_i32, %arg0, %c0_i32_0 : i32, i32, i32
  }
}

</mosaic_0001>

<llo_original>
// kernel: gat_model_forward.3
$region0: #{gat_model_forward.3}
  #allocation0 [shape = 'u32[]', space=smem, size = 0x4, offset = 0x4, fixed_abs, tag = 'smem constant byte address 0x4 - core index']
  #allocation1 [shape = 'u32[144,128]{1,0:T(1,128)}', space=vmem, size = 0x12000, scoped, tag = 'internal scratch']
  %s0 = inlined_call_operand.vmem [shape: f32[3,128,10], index: 0, kind: input, shape index: {}, may-alias: {0,1}]
  %s1 = inlined_call_operand.vmem [shape: f32[3,128,10], index: 1, kind: input, shape index: {}, may-alias: {0,1}]
  %s2 = inlined_call_operand.vmem [shape: f32[3,128,128], index: 2, kind: input, shape index: {}]
  %s3 = inlined_call_operand.vmem [shape: f32[128,128], index: 3, kind: input, shape index: {}]
  %s4 = inlined_call_operand.vmem [shape: f32[30,2], index: 4, kind: input, shape index: {}]
  %s5 = inlined_call_operand.vmem [shape: f32[7], index: 5, kind: input, shape index: {}]
  %s6 = inlined_call_operand.vmem [shape: f32[128,1], index: 6, kind: output, shape index: {}]
  %s7 = sld [smem:[#allocation0]]
  $region137: #{gat_model_forward.3} parent=0
    _
  %s9 = ssub.s32 1, %s7
  %s10 = scalar_select 0, %s9, %s7
  $region1: #{gat_model_forward.3} parent=0
    #allocation2 [shape = 'u8[196608]{0}', space=vmem, size = 0x30000, scoped, tag = 'input window, operand 1']
    #allocation3 [shape = 'u8[196608]{0}', space=vmem, size = 0x30000, scoped, tag = 'input window, operand 2']
    #allocation4 [shape = 'u8[512]{0}', space=smem, size = 0x200, scoped, tag = 'input window, operand 5, single buffered']
    #allocation5 [shape = 's32[2]{0}', space=sflag, size = 0x8, scoped, tag = 'scoped memory for gat_model_forward.3']
    %11 = vsyncpa [#allocation5], 0
    loop: start=0, step=1, limit=4
    $region2: #{gat_model_forward.3} parent=1 // loop_pre_header
      _
    $region3: #{gat_model_forward.3} parent=1 // loop_header
      %s13 = sphi 0, %s17
      %p14 = scmp.ge.s32.totalorder %s13, 4
      %s21 = sphi 0, %s21
      %s23 = sphi 0, %s21
      %s24 = sphi 0, %s23
      %s38 = sphi 0, %s24
      %s44 = sphi 0, %s46
      %s47 = sphi 0, %s44
      %s48 = sphi 0, %s47
      %s64 = sphi 0, %s48
      %s70 = sphi 0, %s72
      %s73 = sphi 0, %s70
      %s74 = sphi 0, %s73
      %s90 = sphi 0, %s74
      %s96 = sphi 0, %s98
      %s99 = sphi 0, %s96
      %s100 = sphi 0, %s99
      %s116 = sphi 0, %s100
      %s120 = sphi 0, %s120
      %s122 = sphi 0, %s120
      %s123 = sphi 0, %s122
      %s137 = sphi 0, %s123
      %s141 = sphi 0, %s141
      %s143 = sphi 0, %s141
      %s144 = sphi 0, %s143
      %s158 = sphi 0, %s144
      %s164 = sphi 0, %s166
      %s167 = sphi 0, %s164
      %s168 = sphi 0, %s167
      %s184 = sphi 0, %s168
    $region4: #{gat_model_forward.3} parent=1 // loop_header_branch
      %16 = sbr.rel (%p14) target = $region8
    $region5: #{gat_model_forward.3} parent=1 // loop_body
      %s18 = ssub.s32 %s13, 1
      %s19 = ssub.s32 %s13, 2
      %s20 = sadd.s32 %s13, 1
      %s22 = sadd.s32 %s21, 1
      %p25 = scmp.eq.s32.totalorder %s13, 1
      %p26 = scmp.ne.s32.totalorder %s21, %s23
      %p27 = scmp.eq.s32.totalorder %s13, 0
      %p28 = por %p26, %p27
      %p29 = scmp.ne.s32.totalorder %s21, %s23
      %p30 = scmp.eq.s32.totalorder %s18, 1
      %p31 = por %p29, %p30
      %p32 = scmp.ne.s32.totalorder %s23, %s24
      %p33 = scmp.eq.s32.totalorder %s18, 0
      %p34 = por %p32, %p33
      %p35 = scmp.ne.s32.totalorder %s23, %s24
      %p36 = scmp.eq.s32.totalorder %s19, 1
      %p37 = por %p35, %p36
      %p39 = scmp.ne.s32.totalorder %s24, %s38
      %p40 = scmp.eq.s32.totalorder %s19, 0
      %p41 = por %p39, %p40
      %s42 = ssub.s32 %s13, %s20
      %p43 = scmp.eq.s32.totalorder %s42, 0
      %s45 = sadd.s32 %s44, 1
      %s46 = scalar_select %p43, %s44, %s45
      %p49 = pneg %p43
      %p50 = scmp.eq.s32.totalorder %s13, 1
      %p51 = por %p49, %p50
      %p52 = scmp.ne.s32.totalorder %s44, %s47
      %p53 = scmp.eq.s32.totalorder %s13, 0
      %p54 = por %p52, %p53
      %p55 = scmp.ne.s32.totalorder %s44, %s47
      %p56 = scmp.eq.s32.totalorder %s18, 1
      %p57 = por %p55, %p56
      %p58 = scmp.ne.s32.totalorder %s47, %s48
      %p59 = scmp.eq.s32.totalorder %s18, 0
      %p60 = por %p58, %p59
      %p61 = scmp.ne.s32.totalorder %s47, %s48
      %p62 = scmp.eq.s32.totalorder %s19, 1
      %p63 = por %p61, %p62
      %p65 = scmp.ne.s32.totalorder %s48, %s64
      %p66 = scmp.eq.s32.totalorder %s19, 0
      %p67 = por %p65, %p66
      %s68 = ssub.s32 %s13, %s20
      %p69 = scmp.eq.s32.totalorder %s68, 0
      %s71 = sadd.s32 %s70, 1
      %s72 = scalar_select %p69, %s70, %s71
      %p75 = pneg %p69
      %p76 = scmp.eq.s32.totalorder %s13, 1
      %p77 = por %p75, %p76
      %p78 = scmp.ne.s32.totalorder %s70, %s73
      %p79 = scmp.eq.s32.totalorder %s13, 0
      %p80 = por %p78, %p79
      %p81 = scmp.ne.s32.totalorder %s70, %s73
      %p82 = scmp.eq.s32.totalorder %s18, 1
      %p83 = por %p81, %p82
      %p84 = scmp.ne.s32.totalorder %s73, %s74
      %p85 = scmp.eq.s32.totalorder %s18, 0
      %p86 = por %p84, %p85
      %p87 = scmp.ne.s32.totalorder %s73, %s74
      %p88 = scmp.eq.s32.totalorder %s19, 1
      %p89 = por %p87, %p88
      %p91 = scmp.ne.s32.totalorder %s74, %s90
      %p92 = scmp.eq.s32.totalorder %s19, 0
      %p93 = por %p91, %p92
      %s94 = ssub.s32 %s13, %s20
      %p95 = scmp.eq.s32.totalorder %s94, 0
      %s97 = sadd.s32 %s96, 1
      %s98 = scalar_select %p95, %s96, %s97
      %p101 = pneg %p95
      %p102 = scmp.eq.s32.totalorder %s13, 1
      %p103 = por %p101, %p102
      %p104 = scmp.ne.s32.totalorder %s96, %s99
      %p105 = scmp.eq.s32.totalorder %s13, 0
      %p106 = por %p104, %p105
      %p107 = scmp.ne.s32.totalorder %s96, %s99
      %p108 = scmp.eq.s32.totalorder %s18, 1
      %p109 = por %p107, %p108
      %p110 = scmp.ne.s32.totalorder %s99, %s100
      %p111 = scmp.eq.s32.totalorder %s18, 0
      %p112 = por %p110, %p111
      %p113 = scmp.ne.s32.totalorder %s99, %s100
      %p114 = scmp.eq.s32.totalorder %s19, 1
      %p115 = por %p113, %p114
      %p117 = scmp.ne.s32.totalorder %s100, %s116
      %p118 = scmp.eq.s32.totalorder %s19, 0
      %p119 = por %p117, %p118
      %s121 = sadd.s32 %s120, 1
      %p124 = scmp.eq.s32.totalorder %s13, 1
      %p125 = scmp.ne.s32.totalorder %s120, %s122
      %p126 = scmp.eq.s32.totalorder %s13, 0
      %p127 = por %p125, %p126
      %p128 = scmp.ne.s32.totalorder %s120, %s122
      %p129 = scmp.eq.s32.totalorder %s18, 1
      %p130 = por %p128, %p129
      %p131 = scmp.ne.s32.totalorder %s122, %s123
      %p132 = scmp.eq.s32.totalorder %s18, 0
      %p133 = por %p131, %p132
      %p134 = scmp.ne.s32.totalorder %s122, %s123
      %p135 = scmp.eq.s32.totalorder %s19, 1
      %p136 = por %p134, %p135
      %p138 = scmp.ne.s32.totalorder %s123, %s137
      %p139 = scmp.eq.s32.totalorder %s19, 0
      %p140 = por %p138, %p139
      %s142 = sadd.s32 %s141, 1
      %p145 = scmp.eq.s32.totalorder %s13, 1
      %p146 = scmp.ne.s32.totalorder %s141, %s143
      %p147 = scmp.eq.s32.totalorder %s13, 0
      %p148 = por %p146, %p147
      %p149 = scmp.ne.s32.totalorder %s141, %s143
      %p150 = scmp.eq.s32.totalorder %s18, 1
      %p151 = por %p149, %p150
      %p152 = scmp.ne.s32.totalorder %s143, %s144
      %p153 = scmp.eq.s32.totalorder %s18, 0
      %p154 = por %p152, %p153
      %p155 = scmp.ne.s32.totalorder %s143, %s144
      %p156 = scmp.eq.s32.totalorder %s19, 1
      %p157 = por %p155, %p156
      %p159 = scmp.ne.s32.totalorder %s144, %s158
      %p160 = scmp.eq.s32.totalorder %s19, 0
      %p161 = por %p159, %p160
      %s162 = ssub.s32 %s13, %s20
      %p163 = scmp.eq.s32.totalorder %s162, 0
      %s165 = sadd.s32 %s164, 1
      %s166 = scalar_select %p163, %s164, %s165
      %p169 = pneg %p163
      %p170 = scmp.eq.s32.totalorder %s13, 1
      %p171 = por %p169, %p170
      %p172 = scmp.ne.s32.totalorder %s164, %s167
      %p173 = scmp.eq.s32.totalorder %s13, 0
      %p174 = por %p172, %p173
      %p175 = scmp.ne.s32.totalorder %s164, %s167
      %p176 = scmp.eq.s32.totalorder %s18, 1
      %p177 = por %p175, %p176
      %p178 = scmp.ne.s32.totalorder %s167, %s168
      %p179 = scmp.eq.s32.totalorder %s18, 0
      %p180 = por %p178, %p179
      %p181 = scmp.ne.s32.totalorder %s167, %s168
      %p182 = scmp.eq.s32.totalorder %s19, 1
      %p183 = por %p181, %p182
      %p185 = scmp.ne.s32.totalorder %s168, %s184
      %p186 = scmp.eq.s32.totalorder %s19, 0
      %p187 = por %p185, %p186
      %p188 = scmp.le.s32.totalorder 1, %s13
      %p189 = scmp.lt.s32.totalorder %s13, 3
      %p190 = pnand %p188, %p189
      %p191 = pneg %p190
      // Predicated region
      $region9: #{gat_model_forward.3} parent=5 // pred_check
        _
      $region10: #{gat_model_forward.3} parent=5 // pred_check_branch
        %193 = sbr.rel (%p190) target = $region12
      $region11: #{gat_model_forward.3} parent=5 // pred_region
        %s194 = ssub.s32 %s13, 1
        // Predicated region
        $region13: #{gat_model_forward.3} parent=11 // pred_check
          %p195 = pneg %p34
        $region14: #{gat_model_forward.3} parent=11 // pred_check_branch
          %197 = sbr.rel (%p195) target = $region16
        $region15: #{gat_model_forward.3} parent=11 // pred_region
          _
        $region16: #{gat_model_forward.3} parent=11 // pred_fallthru
          _
        // Predicated region
        $region17: #{gat_model_forward.3} parent=11 // pred_check
          %p198 = pneg %p133
        $region18: #{gat_model_forward.3} parent=11 // pred_check_branch
          %200 = sbr.rel (%p198) target = $region20
        $region19: #{gat_model_forward.3} parent=11 // pred_region
          _
        $region20: #{gat_model_forward.3} parent=11 // pred_fallthru
          _
        // Predicated region
        $region21: #{gat_model_forward.3} parent=11 // pred_check
          %p201 = pneg %p154
        $region22: #{gat_model_forward.3} parent=11 // pred_check_branch
          %203 = sbr.rel (%p201) target = $region24
        $region23: #{gat_model_forward.3} parent=11 // pred_region
          %s205 = ssub.s32 16, 16
          %206 = vsyncadd [#allocation5], %s205
          %s208 = sshll.u32 %s5, 4
          %s209 = int_to_ptr.vmem [resolvable:$true] %s208
          %211 = dma.vmem_to_smem %s209, 16, [#allocation4], [#allocation5]
        $region24: #{gat_model_forward.3} parent=11 // pred_fallthru
          _
      $region12: #{gat_model_forward.3} parent=5 // pred_fallthru
        _
      %p212 = scmp.lt.s32.totalorder %s13, 2
      // Predicated region
      $region25: #{gat_model_forward.3} parent=5 // pred_check
        %p213 = pneg %p212
      $region26: #{gat_model_forward.3} parent=5 // pred_check_branch
        %215 = sbr.rel (%p213) target = $region28
      $region27: #{gat_model_forward.3} parent=5 // pred_region
        // Predicated region
        $region29: #{gat_model_forward.3} parent=27 // pred_check
          %p216 = pneg %p54
        $region30: #{gat_model_forward.3} parent=27 // pred_check_branch
          %218 = sbr.rel (%p216) target = $region32
        $region31: #{gat_model_forward.3} parent=27 // pred_region
          %s219 = sand.u32 %s44, 1
          %s220 = sand.u32 %s44, 1
          %s221 = smul.addr %s220, 192
          %s222 = scalar_lea.vmem [#allocation2], %s221
          %s223 = smul.u32 8, %s13
          %s224 = smul.addr %s223, 8
          %s225 = scalar_lea.vmem %s1, %s224
          // Predicated region
          $region33: #{gat_model_forward.3} parent=31 // pred_check
            _
          $region34: #{gat_model_forward.3} parent=31 // pred_check_branch
            %227 = sbr.rel (0) target = $region36
          $region35: #{gat_model_forward.3} parent=31 // pred_region
            // Predicated region
            $region37: #{gat_model_forward.3} parent=35 // pred_check
              _
            $region38: #{gat_model_forward.3} parent=35 // pred_check_branch
              %229 = sbr.rel (0) target = $region40
            $region39: #{gat_model_forward.3} parent=35 // pred_region
              // Predicated region
              $region52: #{gat_model_forward.3} parent=39 // pred_check
                _
              $region53: #{gat_model_forward.3} parent=39 // pred_check_branch
                %291 = sbr.rel (0) target = $region55
              $region54: #{gat_model_forward.3} parent=39 // pred_region
                loop: start=0, step=1, limit=1
                $region56: #{gat_model_forward.3} parent=54 // loop_pre_header
                  _
                $region57: #{gat_model_forward.3} parent=54 // loop_header
                  %s293 = sphi 0, %s297
                  %p294 = scmp.ge.s32.totalorder %s293, 1
                  %s298 = sphi %s225, %s225
                  %s299 = sphi %s222, %s222
                $region58: #{gat_model_forward.3} parent=54 // loop_header_branch
                  %296 = sbr.rel (%p294) target = $region62
                $region59: #{gat_model_forward.3} parent=54 // loop_body
                  %v300 = vld [vmem:[%s298] sm:$0xff]
                  %301 = vst [vmem:[%s299] sm:$0xff] %v300
                  %v302 = vld [vmem:[%s298 + $0x8] sm:$0xff]
                  %303 = vst [vmem:[%s299 + $0x8] sm:$0xff] %v302
                  %v304 = vld [vmem:[%s298 + $0x10] sm:$0xff]
                  %305 = vst [vmem:[%s299 + $0x10] sm:$0xff] %v304
                  %v306 = vld [vmem:[%s298 + $0x18] sm:$0xff]
                  %307 = vst [vmem:[%s299 + $0x18] sm:$0xff] %v306
                  %v308 = vld [vmem:[%s298 + $0x20] sm:$0xff]
                  %309 = vst [vmem:[%s299 + $0x20] sm:$0xff] %v308
                  %v310 = vld [vmem:[%s298 + $0x28] sm:$0xff]
                  %311 = vst [vmem:[%s299 + $0x28] sm:$0xff] %v310
                  %v312 = vld [vmem:[%s298 + $0x30] sm:$0xff]
                  %313 = vst [vmem:[%s299 + $0x30] sm:$0xff] %v312
                  %v314 = vld [vmem:[%s298 + $0x38] sm:$0xff]
                  %315 = vst [vmem:[%s299 + $0x38] sm:$0xff] %v314
                  %v316 = vld [vmem:[%s298 + $0x80] sm:$0xff]
                  %317 = vst [vmem:[%s299 + $0x40] sm:$0xff] %v316
                  %v318 = vld [vmem:[%s298 + $0x88] sm:$0xff]
                  %319 = vst [vmem:[%s299 + $0x48] sm:$0xff] %v318
                  %v320 = vld [vmem:[%s298 + $0x90] sm:$0xff]
                  %321 = vst [vmem:[%s299 + $0x50] sm:$0xff] %v320
                  %v322 = vld [vmem:[%s298 + $0x98] sm:$0xff]
                  %323 = vst [vmem:[%s299 + $0x58] sm:$0xff] %v322
                  %v324 = vld [vmem:[%s298 + $0xa0] sm:$0xff]
                  %325 = vst [vmem:[%s299 + $0x60] sm:$0xff] %v324
                  %v326 = vld [vmem:[%s298 + $0xa8] sm:$0xff]
                  %327 = vst [vmem:[%s299 + $0x68] sm:$0xff] %v326
                  %v328 = vld [vmem:[%s298 + $0xb0] sm:$0xff]
                  %329 = vst [vmem:[%s299 + $0x70] sm:$0xff] %v328
                  %v330 = vld [vmem:[%s298 + $0xb8] sm:$0xff]
                  %331 = vst [vmem:[%s299 + $0x78] sm:$0xff] %v330
                  %v332 = vld [vmem:[%s298 + $0x100] sm:$0xff]
                  %333 = vst [vmem:[%s299 + $0x80] sm:$0xff] %v332
                  %v334 = vld [vmem:[%s298 + $0x108] sm:$0xff]
                  %335 = vst [vmem:[%s299 + $0x88] sm:$0xff] %v334
                  %v336 = vld [vmem:[%s298 + $0x110] sm:$0xff]
                  %337 = vst [vmem:[%s299 + $0x90] sm:$0xff] %v336
                  %v338 = vld [vmem:[%s298 + $0x118] sm:$0xff]
                  %339 = vst [vmem:[%s299 + $0x98] sm:$0xff] %v338
                  %v340 = vld [vmem:[%s298 + $0x120] sm:$0xff]
                  %341 = vst [vmem:[%s299 + $0xa0] sm:$0xff] %v340
                  %v342 = vld [vmem:[%s298 + $0x128] sm:$0xff]
                  %343 = vst [vmem:[%s299 + $0xa8] sm:$0xff] %v342
                  %v344 = vld [vmem:[%s298 + $0x130] sm:$0xff]
                  %345 = vst [vmem:[%s299 + $0xb0] sm:$0xff] %v344
                  %v346 = vld [vmem:[%s298 + $0x138] sm:$0xff]
                  %347 = vst [vmem:[%s299 + $0xb8] sm:$0xff] %v346
                $region60: #{gat_model_forward.3} parent=54 // loop_footer
                  %s297 = sadd.s32 1, %s293
                $region61: #{gat_model_forward.3} parent=54 // loop_footer_branch
                  %292 = sbr.rel target = $region57
                $region62: #{gat_model_forward.3} parent=54 // loop_exit
                  _
              $region55: #{gat_model_forward.3} parent=39 // pred_fallthru
                _
              // Predicated region
              $region63: #{gat_model_forward.3} parent=39 // pred_check
                _
              $region64: #{gat_model_forward.3} parent=39 // pred_check_branch
                %349 = sbr.rel target = $region66
              $region65: #{gat_model_forward.3} parent=39 // pred_region
                _
              $region66: #{gat_model_forward.3} parent=39 // pred_fallthru
                _
            $region40: #{gat_model_forward.3} parent=35 // pred_fallthru
              _
            // Predicated region
            $region41: #{gat_model_forward.3} parent=35 // pred_check
              _
            $region42: #{gat_model_forward.3} parent=35 // pred_check_branch
              %231 = sbr.rel target = $region44
            $region43: #{gat_model_forward.3} parent=35 // pred_region
              %s233 = ssub.s32 256, 1
              loop: start=0, step=1, limit=1
              $region45: #{gat_model_forward.3} parent=43 // loop_pre_header
                _
              $region46: #{gat_model_forward.3} parent=43 // loop_header
                %s235 = sphi 0, %s239
                %p236 = scmp.ge.s32.totalorder %s235, 1
                %s240 = sphi %s225, %s225
                %s241 = sphi %s222, %s222
              $region47: #{gat_model_forward.3} parent=43 // loop_header_branch
                %238 = sbr.rel (%p236) target = $region51
              $region48: #{gat_model_forward.3} parent=43 // loop_body
                %v242 = vld [vmem:[%s240] sm:%s233]
                %243 = vst [vmem:[%s241] sm:%s233] %v242
                %v244 = vld [vmem:[%s240 + $0x8] sm:%s233]
                %245 = vst [vmem:[%s241 + $0x8] sm:%s233] %v244
                %v246 = vld [vmem:[%s240 + $0x10] sm:%s233]
                %247 = vst [vmem:[%s241 + $0x10] sm:%s233] %v246
                %v248 = vld [vmem:[%s240 + $0x18] sm:%s233]
                %249 = vst [vmem:[%s241 + $0x18] sm:%s233] %v248
                %v250 = vld [vmem:[%s240 + $0x20] sm:%s233]
                %251 = vst [vmem:[%s241 + $0x20] sm:%s233] %v250
                %v252 = vld [vmem:[%s240 + $0x28] sm:%s233]
                %253 = vst [vmem:[%s241 + $0x28] sm:%s233] %v252
                %v254 = vld [vmem:[%s240 + $0x30] sm:%s233]
                %255 = vst [vmem:[%s241 + $0x30] sm:%s233] %v254
                %v256 = vld [vmem:[%s240 + $0x38] sm:%s233]
                %257 = vst [vmem:[%s241 + $0x38] sm:%s233] %v256
                %v258 = vld [vmem:[%s240 + $0x80] sm:%s233]
                %259 = vst [vmem:[%s241 + $0x40] sm:%s233] %v258
                %v260 = vld [vmem:[%s240 + $0x88] sm:%s233]
                %261 = vst [vmem:[%s241 + $0x48] sm:%s233] %v260
                %v262 = vld [vmem:[%s240 + $0x90] sm:%s233]
                %263 = vst [vmem:[%s241 + $0x50] sm:%s233] %v262
                %v264 = vld [vmem:[%s240 + $0x98] sm:%s233]
                %265 = vst [vmem:[%s241 + $0x58] sm:%s233] %v264
                %v266 = vld [vmem:[%s240 + $0xa0] sm:%s233]
                %267 = vst [vmem:[%s241 + $0x60] sm:%s233] %v266
                %v268 = vld [vmem:[%s240 + $0xa8] sm:%s233]
                %269 = vst [vmem:[%s241 + $0x68] sm:%s233] %v268
                %v270 = vld [vmem:[%s240 + $0xb0] sm:%s233]
                %271 = vst [vmem:[%s241 + $0x70] sm:%s233] %v270
                %v272 = vld [vmem:[%s240 + $0xb8] sm:%s233]
                %273 = vst [vmem:[%s241 + $0x78] sm:%s233] %v272
                %v274 = vld [vmem:[%s240 + $0x100] sm:%s233]
                %275 = vst [vmem:[%s241 + $0x80] sm:%s233] %v274
                %v276 = vld [vmem:[%s240 + $0x108] sm:%s233]
                %277 = vst [vmem:[%s241 + $0x88] sm:%s233] %v276
                %v278 = vld [vmem:[%s240 + $0x110] sm:%s233]
                %279 = vst [vmem:[%s241 + $0x90] sm:%s233] %v278
                %v280 = vld [vmem:[%s240 + $0x118] sm:%s233]
                %281 = vst [vmem:[%s241 + $0x98] sm:%s233] %v280
                %v282 = vld [vmem:[%s240 + $0x120] sm:%s233]
                %283 = vst [vmem:[%s241 + $0xa0] sm:%s233] %v282
                %v284 = vld [vmem:[%s240 + $0x128] sm:%s233]
                %285 = vst [vmem:[%s241 + $0xa8] sm:%s233] %v284
                %v286 = vld [vmem:[%s240 + $0x130] sm:%s233]
                %287 = vst [vmem:[%s241 + $0xb0] sm:%s233] %v286
                %v288 = vld [vmem:[%s240 + $0x138] sm:%s233]
                %289 = vst [vmem:[%s241 + $0xb8] sm:%s233] %v288
              $region49: #{gat_model_forward.3} parent=43 // loop_footer
                %s239 = sadd.s32 1, %s235
              $region50: #{gat_model_forward.3} parent=43 // loop_footer_branch
                %234 = sbr.rel target = $region46
              $region51: #{gat_model_forward.3} parent=43 // loop_exit
                _
            $region44: #{gat_model_forward.3} parent=35 // pred_fallthru
              _
          $region36: #{gat_model_forward.3} parent=31 // pred_fallthru
            _
          %350 = vnop
        $region32: #{gat_model_forward.3} parent=27 // pred_fallthru
          _
        // Predicated region
        $region67: #{gat_model_forward.3} parent=27 // pred_check
          %p351 = pneg %p80
        $region68: #{gat_model_forward.3} parent=27 // pred_check_branch
          %353 = sbr.rel (%p351) target = $region70
        $region69: #{gat_model_forward.3} parent=27 // pred_region
          %s354 = sand.u32 %s70, 1
          %s355 = sand.u32 %s70, 1
          %s356 = smul.addr %s355, 192
          %s357 = scalar_lea.vmem [#allocation3], %s356
          %s358 = smul.u32 8, %s13
          %s359 = smul.addr %s358, 8
          %s360 = scalar_lea.vmem %s2, %s359
          // Predicated region
          $region71: #{gat_model_forward.3} parent=69 // pred_check
            _
          $region72: #{gat_model_forward.3} parent=69 // pred_check_branch
            %362 = sbr.rel (0) target = $region74
          $region73: #{gat_model_forward.3} parent=69 // pred_region
            // Predicated region
            $region75: #{gat_model_forward.3} parent=73 // pred_check
              _
            $region76: #{gat_model_forward.3} parent=73 // pred_check_branch
              %364 = sbr.rel (0) target = $region78
            $region77: #{gat_model_forward.3} parent=73 // pred_region
              // Predicated region
              $region90: #{gat_model_forward.3} parent=77 // pred_check
                _
              $region91: #{gat_model_forward.3} parent=77 // pred_check_branch
                %426 = sbr.rel (0) target = $region93
              $region92: #{gat_model_forward.3} parent=77 // pred_region
                loop: start=0, step=1, limit=1
                $region94: #{gat_model_forward.3} parent=92 // loop_pre_header
                  _
                $region95: #{gat_model_forward.3} parent=92 // loop_header
                  %s428 = sphi 0, %s432
                  %p429 = scmp.ge.s32.totalorder %s428, 1
                  %s433 = sphi %s360, %s360
                  %s434 = sphi %s357, %s357
                $region96: #{gat_model_forward.3} parent=92 // loop_header_branch
                  %431 = sbr.rel (%p429) target = $region100
                $region97: #{gat_model_forward.3} parent=92 // loop_body
                  %v435 = vld [vmem:[%s433] sm:$0xff]
                  %436 = vst [vmem:[%s434] sm:$0xff] %v435
                  %v437 = vld [vmem:[%s433 + $0x8] sm:$0xff]
                  %438 = vst [vmem:[%s434 + $0x8] sm:$0xff] %v437
                  %v439 = vld [vmem:[%s433 + $0x10] sm:$0xff]
                  %440 = vst [vmem:[%s434 + $0x10] sm:$0xff] %v439
                  %v441 = vld [vmem:[%s433 + $0x18] sm:$0xff]
                  %442 = vst [vmem:[%s434 + $0x18] sm:$0xff] %v441
                  %v443 = vld [vmem:[%s433 + $0x20] sm:$0xff]
                  %444 = vst [vmem:[%s434 + $0x20] sm:$0xff] %v443
                  %v445 = vld [vmem:[%s433 + $0x28] sm:$0xff]
                  %446 = vst [vmem:[%s434 + $0x28] sm:$0xff] %v445
                  %v447 = vld [vmem:[%s433 + $0x30] sm:$0xff]
                  %448 = vst [vmem:[%s434 + $0x30] sm:$0xff] %v447
                  %v449 = vld [vmem:[%s433 + $0x38] sm:$0xff]
                  %450 = vst [vmem:[%s434 + $0x38] sm:$0xff] %v449
                  %v451 = vld [vmem:[%s433 + $0x80] sm:$0xff]
                  %452 = vst [vmem:[%s434 + $0x40] sm:$0xff] %v451
                  %v453 = vld [vmem:[%s433 + $0x88] sm:$0xff]
                  %454 = vst [vmem:[%s434 + $0x48] sm:$0xff] %v453
                  %v455 = vld [vmem:[%s433 + $0x90] sm:$0xff]
                  %456 = vst [vmem:[%s434 + $0x50] sm:$0xff] %v455
                  %v457 = vld [vmem:[%s433 + $0x98] sm:$0xff]
                  %458 = vst [vmem:[%s434 + $0x58] sm:$0xff] %v457
                  %v459 = vld [vmem:[%s433 + $0xa0] sm:$0xff]
                  %460 = vst [vmem:[%s434 + $0x60] sm:$0xff] %v459
                  %v461 = vld [vmem:[%s433 + $0xa8] sm:$0xff]
                  %462 = vst [vmem:[%s434 + $0x68] sm:$0xff] %v461
                  %v463 = vld [vmem:[%s433 + $0xb0] sm:$0xff]
                  %464 = vst [vmem:[%s434 + $0x70] sm:$0xff] %v463
                  %v465 = vld [vmem:[%s433 + $0xb8] sm:$0xff]
                  %466 = vst [vmem:[%s434 + $0x78] sm:$0xff] %v465
                  %v467 = vld [vmem:[%s433 + $0x100] sm:$0xff]
                  %468 = vst [vmem:[%s434 + $0x80] sm:$0xff] %v467
                  %v469 = vld [vmem:[%s433 + $0x108] sm:$0xff]
                  %470 = vst [vmem:[%s434 + $0x88] sm:$0xff] %v469
                  %v471 = vld [vmem:[%s433 + $0x110] sm:$0xff]
                  %472 = vst [vmem:[%s434 + $0x90] sm:$0xff] %v471
                  %v473 = vld [vmem:[%s433 + $0x118] sm:$0xff]
                  %474 = vst [vmem:[%s434 + $0x98] sm:$0xff] %v473
                  %v475 = vld [vmem:[%s433 + $0x120] sm:$0xff]
                  %476 = vst [vmem:[%s434 + $0xa0] sm:$0xff] %v475
                  %v477 = vld [vmem:[%s433 + $0x128] sm:$0xff]
                  %478 = vst [vmem:[%s434 + $0xa8] sm:$0xff] %v477
                  %v479 = vld [vmem:[%s433 + $0x130] sm:$0xff]
                  %480 = vst [vmem:[%s434 + $0xb0] sm:$0xff] %v479
                  %v481 = vld [vmem:[%s433 + $0x138] sm:$0xff]
                  %482 = vst [vmem:[%s434 + $0xb8] sm:$0xff] %v481
                $region98: #{gat_model_forward.3} parent=92 // loop_footer
                  %s432 = sadd.s32 1, %s428
                $region99: #{gat_model_forward.3} parent=92 // loop_footer_branch
                  %427 = sbr.rel target = $region95
                $region100: #{gat_model_forward.3} parent=92 // loop_exit
                  _
              $region93: #{gat_model_forward.3} parent=77 // pred_fallthru
                _
              // Predicated region
              $region101: #{gat_model_forward.3} parent=77 // pred_check
                _
              $region102: #{gat_model_forward.3} parent=77 // pred_check_branch
                %484 = sbr.rel target = $region104
              $region103: #{gat_model_forward.3} parent=77 // pred_region
                _
              $region104: #{gat_model_forward.3} parent=77 // pred_fallthru
                _
            $region78: #{gat_model_forward.3} parent=73 // pred_fallthru
              _
            // Predicated region
            $region79: #{gat_model_forward.3} parent=73 // pred_check
              _
            $region80: #{gat_model_forward.3} parent=73 // pred_check_branch
              %366 = sbr.rel target = $region82
            $region81: #{gat_model_forward.3} parent=73 // pred_region
              %s368 = ssub.s32 256, 1
              loop: start=0, step=1, limit=1
              $region83: #{gat_model_forward.3} parent=81 // loop_pre_header
                _
              $region84: #{gat_model_forward.3} parent=81 // loop_header
                %s370 = sphi 0, %s374
                %p371 = scmp.ge.s32.totalorder %s370, 1
                %s375 = sphi %s360, %s360
                %s376 = sphi %s357, %s357
              $region85: #{gat_model_forward.3} parent=81 // loop_header_branch
                %373 = sbr.rel (%p371) target = $region89
              $region86: #{gat_model_forward.3} parent=81 // loop_body
                %v377 = vld [vmem:[%s375] sm:%s368]
                %378 = vst [vmem:[%s376] sm:%s368] %v377
                %v379 = vld [vmem:[%s375 + $0x8] sm:%s368]
                %380 = vst [vmem:[%s376 + $0x8] sm:%s368] %v379
                %v381 = vld [vmem:[%s375 + $0x10] sm:%s368]
                %382 = vst [vmem:[%s376 + $0x10] sm:%s368] %v381
                %v383 = vld [vmem:[%s375 + $0x18] sm:%s368]
                %384 = vst [vmem:[%s376 + $0x18] sm:%s368] %v383
                %v385 = vld [vmem:[%s375 + $0x20] sm:%s368]
                %386 = vst [vmem:[%s376 + $0x20] sm:%s368] %v385
                %v387 = vld [vmem:[%s375 + $0x28] sm:%s368]
                %388 = vst [vmem:[%s376 + $0x28] sm:%s368] %v387
                %v389 = vld [vmem:[%s375 + $0x30] sm:%s368]
                %390 = vst [vmem:[%s376 + $0x30] sm:%s368] %v389
                %v391 = vld [vmem:[%s375 + $0x38] sm:%s368]
                %392 = vst [vmem:[%s376 + $0x38] sm:%s368] %v391
                %v393 = vld [vmem:[%s375 + $0x80] sm:%s368]
                %394 = vst [vmem:[%s376 + $0x40] sm:%s368] %v393
                %v395 = vld [vmem:[%s375 + $0x88] sm:%s368]
                %396 = vst [vmem:[%s376 + $0x48] sm:%s368] %v395
                %v397 = vld [vmem:[%s375 + $0x90] sm:%s368]
                %398 = vst [vmem:[%s376 + $0x50] sm:%s368] %v397
                %v399 = vld [vmem:[%s375 + $0x98] sm:%s368]
                %400 = vst [vmem:[%s376 + $0x58] sm:%s368] %v399
                %v401 = vld [vmem:[%s375 + $0xa0] sm:%s368]
                %402 = vst [vmem:[%s376 + $0x60] sm:%s368] %v401
                %v403 = vld [vmem:[%s375 + $0xa8] sm:%s368]
                %404 = vst [vmem:[%s376 + $0x68] sm:%s368] %v403
                %v405 = vld [vmem:[%s375 + $0xb0] sm:%s368]
                %406 = vst [vmem:[%s376 + $0x70] sm:%s368] %v405
                %v407 = vld [vmem:[%s375 + $0xb8] sm:%s368]
                %408 = vst [vmem:[%s376 + $0x78] sm:%s368] %v407
                %v409 = vld [vmem:[%s375 + $0x100] sm:%s368]
                %410 = vst [vmem:[%s376 + $0x80] sm:%s368] %v409
                %v411 = vld [vmem:[%s375 + $0x108] sm:%s368]
                %412 = vst [vmem:[%s376 + $0x88] sm:%s368] %v411
                %v413 = vld [vmem:[%s375 + $0x110] sm:%s368]
                %414 = vst [vmem:[%s376 + $0x90] sm:%s368] %v413
                %v415 = vld [vmem:[%s375 + $0x118] sm:%s368]
                %416 = vst [vmem:[%s376 + $0x98] sm:%s368] %v415
                %v417 = vld [vmem:[%s375 + $0x120] sm:%s368]
                %418 = vst [vmem:[%s376 + $0xa0] sm:%s368] %v417
                %v419 = vld [vmem:[%s375 + $0x128] sm:%s368]
                %420 = vst [vmem:[%s376 + $0xa8] sm:%s368] %v419
                %v421 = vld [vmem:[%s375 + $0x130] sm:%s368]
                %422 = vst [vmem:[%s376 + $0xb0] sm:%s368] %v421
                %v423 = vld [vmem:[%s375 + $0x138] sm:%s368]
                %424 = vst [vmem:[%s376 + $0xb8] sm:%s368] %v423
              $region87: #{gat_model_forward.3} parent=81 // loop_footer
                %s374 = sadd.s32 1, %s370
              $region88: #{gat_model_forward.3} parent=81 // loop_footer_branch
                %369 = sbr.rel target = $region84
              $region89: #{gat_model_forward.3} parent=81 // loop_exit
                _
            $region82: #{gat_model_forward.3} parent=73 // pred_fallthru
              _
          $region74: #{gat_model_forward.3} parent=69 // pred_fallthru
            _
          %485 = vnop
        $region70: #{gat_model_forward.3} parent=27 // pred_fallthru
          _
        // Predicated region
        $region105: #{gat_model_forward.3} parent=27 // pred_check
          %p486 = pneg %p106
        $region106: #{gat_model_forward.3} parent=27 // pred_check_branch
          %488 = sbr.rel (%p486) target = $region108
        $region107: #{gat_model_forward.3} parent=27 // pred_region
          %s489 = smul.u32 8, %s13
          %p490 = scmp.lt.s32.totalorder %s489, 15
          %s491 = scalar_select %p490, %s489, 15
          %s492 = smul.addr %s491, 8
          %s493 = scalar_lea.vmem %s3, %s492
          %s494 = smul.u32 8, %s13
        $region108: #{gat_model_forward.3} parent=27 // pred_fallthru
          _
      $region28: #{gat_model_forward.3} parent=5 // pred_fallthru
        _
      %p495 = scmp.le.s32.totalorder 1, %s13
      %p496 = scmp.lt.s32.totalorder %s13, 3
      %p497 = pnand %p495, %p496
      %p498 = pneg %p497
      // Predicated region
      $region109: #{gat_model_forward.3} parent=5 // pred_check
        _
      $region110: #{gat_model_forward.3} parent=5 // pred_check_branch
        %500 = sbr.rel (%p497) target = $region112
      $region111: #{gat_model_forward.3} parent=5 // pred_region
        %s501 = ssub.s32 %s13, 1
        %s502 = sand.u32 %s47, 1
        %s503 = sand.u32 %s47, 1
        %s504 = smul.addr %s503, 192
        %s505 = scalar_lea.vmem [#allocation2], %s504
        // Predicated region
        $region113: #{gat_model_forward.3} parent=111 // pred_check
          %p506 = pneg %p60
        $region114: #{gat_model_forward.3} parent=111 // pred_check_branch
          %508 = sbr.rel (%p506) target = $region116
        $region115: #{gat_model_forward.3} parent=111 // pred_region
          _
        $region116: #{gat_model_forward.3} parent=111 // pred_fallthru
          _
        %s509 = sand.u32 %s73, 1
        %s510 = sand.u32 %s73, 1
        %s511 = smul.addr %s510, 192
        %s512 = scalar_lea.vmem [#allocation3], %s511
        // Predicated region
        $region117: #{gat_model_forward.3} parent=111 // pred_check
          %p513 = pneg %p86
        $region118: #{gat_model_forward.3} parent=111 // pred_check_branch
          %515 = sbr.rel (%p513) target = $region120
        $region119: #{gat_model_forward.3} parent=111 // pred_region
          _
        $region120: #{gat_model_forward.3} parent=111 // pred_fallthru
          _
        // Predicated region
        $region121: #{gat_model_forward.3} parent=111 // pred_check
          %p516 = pneg %p154
        $region122: #{gat_model_forward.3} parent=111 // pred_check_branch
          %518 = sbr.rel (%p516) target = $region124
        $region123: #{gat_model_forward.3} parent=111 // pred_region
          %519 = dma.done [#allocation5], 16
        $region124: #{gat_model_forward.3} parent=111 // pred_fallthru
          _
        %520 = sfence
        %p521 = pneg %p34
        %p522 = pneg %p31
        %s523 = sand.u32 %s47, 1
        %s524 = sand.u32 %s47, 1
        %s525 = smul.addr %s524, 192
        %s526 = scalar_lea.vmem [#allocation2], %s525
        %p527 = pneg %p60
        %p528 = pneg %p57
        %s529 = sand.u32 %s73, 1
        %s530 = sand.u32 %s73, 1
        %s531 = smul.addr %s530, 192
        %s532 = scalar_lea.vmem [#allocation3], %s531
        %p533 = pneg %p86
        %p534 = pneg %p83
        %s535 = smul.u32 8, %s18
        %p536 = scmp.lt.s32.totalorder %s535, 15
        %s537 = scalar_select %p536, %s535, 15
        %s538 = smul.addr %s537, 8
        %s539 = scalar_lea.vmem %s3, %s538
        %p540 = pneg %p112
        %p541 = pneg %p109
        %p542 = pneg %p133
        %p543 = pneg %p130
        %p544 = pneg %p154
        %p545 = pneg %p151
        %p546 = pneg %p180
        %p547 = pneg %p177
        %s548 = smul.u32 8, %s18
        %p549 = scmp.lt.s32.totalorder %s548, 15
        %s550 = scalar_select %p549, %s548, 15
        %s551 = smul.addr %s550, 8
        %s552 = scalar_lea.vmem %s6, %s551
        %s553 = smul.u32 8, %s18
        %s554 = smul.u32 8, %s18
        %s555 = smul.u32 8, %s18
        %p556 = scmp.lt.s32.totalorder %s555, 15
        %s557 = scalar_select %p556, %s555, 15
        %s558 = smul.addr %s557, 8
        %s559 = scalar_lea.vmem %s3, %s558
        %s560 = smul.u32 8, %s18
        %s561 = smul.u32 8, %s18
        %p562 = scmp.lt.s32.totalorder %s561, 15
        %s563 = scalar_select %p562, %s561, 15
        %s564 = smul.addr %s563, 8
        %s565 = scalar_lea.vmem %s6, %s564
        %s566 = smul.u32 8, %s18
        %v567 = vld [vmem:[%s4] sm:$0xff]
        %v568 = vld [vmem:[%s4 + $0x8] sm:$0xff]
        %v569 = vld [vmem:[%s4 + $0x10] sm:$0xff]
        %v570 = vld [vmem:[%s4 + $0x18] sm:$0x3f]
        %v571 = vld [vmem:[%s0] sm:$0xff]
        %v572 = vld [vmem:[%s0 + $0x8] sm:$0xff]
        %v573 = vld [vmem:[%s0 + $0x10] sm:$0xff]
        %v574 = vld [vmem:[%s0 + $0x18] sm:$0xff]
        %v575 = vld [vmem:[%s0 + $0x20] sm:$0xff]
        %v576 = vld [vmem:[%s0 + $0x28] sm:$0xff]
        %v577 = vld [vmem:[%s0 + $0x30] sm:$0xff]
        %v578 = vld [vmem:[%s0 + $0x38] sm:$0xff]
        %v579 = vld [vmem:[%s0 + $0x40] sm:$0xff]
        %v580 = vld [vmem:[%s0 + $0x48] sm:$0xff]
        %v581 = vld [vmem:[%s0 + $0x50] sm:$0xff]
        %v582 = vld [vmem:[%s0 + $0x58] sm:$0xff]
        %v583 = vld [vmem:[%s0 + $0x60] sm:$0xff]
        %v584 = vld [vmem:[%s0 + $0x68] sm:$0xff]
        %v585 = vld [vmem:[%s0 + $0x70] sm:$0xff]
        %v586 = vld [vmem:[%s0 + $0x78] sm:$0xff]
        %v587 = vld [vmem:[%s505] sm:$0xff]
        %v588 = vld [vmem:[%s505 + $0x8] sm:$0xff]
        %v589 = vld [vmem:[%s505 + $0x10] sm:$0xff]
        %v590 = vld [vmem:[%s505 + $0x18] sm:$0xff]
        %v591 = vld [vmem:[%s505 + $0x20] sm:$0xff]
        %v592 = vld [vmem:[%s505 + $0x28] sm:$0xff]
        %v593 = vld [vmem:[%s505 + $0x30] sm:$0xff]
        %v594 = vld [vmem:[%s505 + $0x38] sm:$0xff]
        %s595 = scalar_lea.vmem %s0, 128
        %v596 = vld [vmem:[%s595] sm:$0xff]
        %v597 = vld [vmem:[%s595 + $0x8] sm:$0xff]
        %v598 = vld [vmem:[%s595 + $0x10] sm:$0xff]
        %v599 = vld [vmem:[%s595 + $0x18] sm:$0xff]
        %v600 = vld [vmem:[%s595 + $0x20] sm:$0xff]
        %v601 = vld [vmem:[%s595 + $0x28] sm:$0xff]
        %v602 = vld [vmem:[%s595 + $0x30] sm:$0xff]
        %v603 = vld [vmem:[%s595 + $0x38] sm:$0xff]
        %v604 = vld [vmem:[%s595 + $0x40] sm:$0xff]
        %v605 = vld [vmem:[%s595 + $0x48] sm:$0xff]
        %v606 = vld [vmem:[%s595 + $0x50] sm:$0xff]
        %v607 = vld [vmem:[%s595 + $0x58] sm:$0xff]
        %v608 = vld [vmem:[%s595 + $0x60] sm:$0xff]
        %v609 = vld [vmem:[%s595 + $0x68] sm:$0xff]
        %v610 = vld [vmem:[%s595 + $0x70] sm:$0xff]
        %v611 = vld [vmem:[%s595 + $0x78] sm:$0xff]
        %vm614 = vcmask 1045504
        %v615 = vrot.slane %v568, 2
        %v616 = vrot.slane %v569, 2
        %v617 = vsel %vm614, %v615, %v616
        %vm619 = vcmask 80896
        %v621 = vsel %vm619, %v596, 0
        %v624 = vsel %vm619, %v597, 0
        %v627 = vsel %vm619, %v598, 0
        %v630 = vsel %vm619, %v599, 0
        %v633 = vsel %vm619, %v600, 0
        %v636 = vsel %vm619, %v601, 0
        %v639 = vsel %vm619, %v602, 0
        %v642 = vsel %vm619, %v603, 0
        %v645 = vsel %vm619, %v604, 0
        %v648 = vsel %vm619, %v605, 0
        %v651 = vsel %vm619, %v606, 0
        %v654 = vsel %vm619, %v607, 0
        %v657 = vsel %vm619, %v608, 0
        %v660 = vsel %vm619, %v609, 0
        %v663 = vsel %vm619, %v610, 0
        %v666 = vsel %vm619, %v611, 0
        %vm668 = vcmask 1041408
        %v669 = vsel %vm668, %v616, 0
        %671 = vmatprep.subr.mxu0 0.0
        %672 = vmatpush1.msra.mxu0 0.0
        %673 = vmatprep.subr.mxu0 0.0
        %674 = vmatpush1.msra.mxu0 0.0
        %675 = vmatprep.subr.mxu0 0.0
        %676 = vmatpush1.msra.mxu0 0.0
        %677 = vmatprep.subr.mxu0 0.0
        %678 = vmatpush1.msra.mxu0 0.0
        %679 = vmatprep.subr.mxu0 0.0
        %680 = vmatpush1.msra.mxu0 0.0
        %681 = vmatprep.subr.mxu0 0.0
        %682 = vmatpush1.msra.mxu0 0.0
        %683 = vmatprep.subr.mxu0 0.0
        %684 = vmatpush1.msra.mxu0 0.0
        %685 = vmatprep.subr.mxu0 0.0
        %686 = vmatpush1.msra.mxu0 0.0
        %687 = vmatprep.subr.mxu0 0.0
        %688 = vmatpush1.msra.mxu0 0.0
        %689 = vmatprep.subr.mxu0 0.0
        %690 = vmatpush1.msra.mxu0 0.0
        %691 = vmatprep.subr.mxu0 0.0
        %692 = vmatpush1.msra.mxu0 0.0
        %693 = vmatprep.subr.mxu0 0.0
        %694 = vmatpush1.msra.mxu0 0.0
        %695 = vmatprep.subr.mxu0 0.0
        %696 = vmatpush1.msra.mxu0 0.0
        %697 = vmatprep.subr.mxu0 0.0
        %698 = vmatpush1.msra.mxu0 0.0
        %699 = vmatprep.subr.mxu0 0.0
        %700 = vmatpush1.msra.mxu0 %v669
        %701 = vmatprep.subr.mxu0 0.0
        %702 = vmatpush1.msra.mxu0 %v617
        %703 = vmatprep.subr.mxu0 0.0
        %704 = vmatpush2.msra.mxu0 0.0
        %705 = vmatprep.subr.mxu0 0.0
        %706 = vmatpush2.msra.mxu0 0.0
        %707 = vmatprep.subr.mxu0 0.0
        %708 = vmatpush2.msra.mxu0 0.0
        %709 = vmatprep.subr.mxu0 0.0
        %710 = vmatpush2.msra.mxu0 0.0
        %711 = vmatprep.subr.mxu0 0.0
        %712 = vmatpush2.msra.mxu0 0.0
        %713 = vmatprep.subr.mxu0 0.0
        %714 = vmatpush2.msra.mxu0 0.0
        %715 = vmatprep.subr.mxu0 0.0
        %716 = vmatpush2.msra.mxu0 0.0
        %717 = vmatprep.subr.mxu0 0.0
        %718 = vmatpush2.msra.mxu0 0.0
        %719 = vmatprep.subr.mxu0 0.0
        %720 = vmatpush2.msra.mxu0 0.0
        %721 = vmatprep.subr.mxu0 0.0
        %722 = vmatpush2.msra.mxu0 0.0
        %723 = vmatprep.subr.mxu0 0.0
        %724 = vmatpush2.msra.mxu0 0.0
        %725 = vmatprep.subr.mxu0 0.0
        %726 = vmatpush2.msra.mxu0 0.0
        %727 = vmatprep.subr.mxu0 0.0
        %728 = vmatpush2.msra.mxu0 0.0
        %729 = vmatprep.subr.mxu0 0.0
        %730 = vmatpush2.msra.mxu0 0.0
        %731 = vmatprep.subr.mxu0 0.0
        %732 = vmatpush2.msra.mxu0 0.0
        %733 = vmatprep.subr.mxu0 0.0
        %734 = vmatpush2.msra.mxu0 0.0
        %735 = vmatprep.mubr.f32.mxu0 0.0
        %736 = vmatmul.mubr.f32.gmra.mxu0 %v621
        %v737 = vpop.f32.mrf.mxu0
        %v738 = vadd.f32 0.0, %v737
        %v739 = vpop.f32.mrf.mxu0
        %740 = vmatprep.mubr.f32.mxu0 0.0
        %741 = vmatmul.mubr.f32.gmra.mxu0 %v624
        %v742 = vpop.f32.mrf.mxu0
        %v743 = vadd.f32 0.0, %v742
        %v744 = vpop.f32.mrf.mxu0
        %745 = vmatprep.mubr.f32.mxu0 0.0
        %746 = vmatmul.mubr.f32.gmra.mxu0 %v627
        %v747 = vpop.f32.mrf.mxu0
        %v748 = vadd.f32 0.0, %v747
        %v749 = vpop.f32.mrf.mxu0
        %750 = vmatprep.mubr.f32.mxu0 0.0
        %751 = vmatmul.mubr.f32.gmra.mxu0 %v630
        %v752 = vpop.f32.mrf.mxu0
        %v753 = vadd.f32 0.0, %v752
        %v754 = vpop.f32.mrf.mxu0
        %755 = vmatprep.mubr.f32.mxu0 0.0
        %756 = vmatmul.mubr.f32.gmra.mxu0 %v633
        %v757 = vpop.f32.mrf.mxu0
        %v758 = vadd.f32 0.0, %v757
        %v759 = vpop.f32.mrf.mxu0
        %760 = vmatprep.mubr.f32.mxu0 0.0
        %761 = vmatmul.mubr.f32.gmra.mxu0 %v636
        %v762 = vpop.f32.mrf.mxu0
        %v763 = vadd.f32 0.0, %v762
        %v764 = vpop.f32.mrf.mxu0
        %765 = vmatprep.mubr.f32.mxu0 0.0
        %766 = vmatmul.mubr.f32.gmra.mxu0 %v639
        %v767 = vpop.f32.mrf.mxu0
        %v768 = vadd.f32 0.0, %v767
        %v769 = vpop.f32.mrf.mxu0
        %770 = vmatprep.mubr.f32.mxu0 0.0
        %771 = vmatmul.mubr.f32.gmra.mxu0 %v642
        %v772 = vpop.f32.mrf.mxu0
        %v773 = vadd.f32 0.0, %v772
        %v774 = vpop.f32.mrf.mxu0
        %775 = vmatprep.mubr.f32.mxu0 0.0
        %776 = vmatmul.mubr.f32.gmra.mxu0 %v645
        %v777 = vpop.f32.mrf.mxu0
        %v778 = vadd.f32 0.0, %v777
        %v779 = vpop.f32.mrf.mxu0
        %780 = vmatprep.mubr.f32.mxu0 0.0
        %781 = vmatmul.mubr.f32.gmra.mxu0 %v648
        %v782 = vpop.f32.mrf.mxu0
        %v783 = vadd.f32 0.0, %v782
        %v784 = vpop.f32.mrf.mxu0
        %785 = vmatprep.mubr.f32.mxu0 0.0
        %786 = vmatmul.mubr.f32.gmra.mxu0 %v651
        %v787 = vpop.f32.mrf.mxu0
        %v788 = vadd.f32 0.0, %v787
        %v789 = vpop.f32.mrf.mxu0
        %790 = vmatprep.mubr.f32.mxu0 0.0
        %791 = vmatmul.mubr.f32.gmra.mxu0 %v654
        %v792 = vpop.f32.mrf.mxu0
        %v793 = vadd.f32 0.0, %v792
        %v794 = vpop.f32.mrf.mxu0
        %795 = vmatprep.mubr.f32.mxu0 0.0
        %796 = vmatmul.mubr.f32.gmra.mxu0 %v657
        %v797 = vpop.f32.mrf.mxu0
        %v798 = vadd.f32 0.0, %v797
        %v799 = vpop.f32.mrf.mxu0
        %800 = vmatprep.mubr.f32.mxu0 0.0
        %801 = vmatmul.mubr.f32.gmra.mxu0 %v660
        %v802 = vpop.f32.mrf.mxu0
        %v803 = vadd.f32 0.0, %v802
        %v804 = vpop.f32.mrf.mxu0
        %805 = vmatprep.mubr.f32.mxu0 0.0
        %806 = vmatmul.mubr.f32.gmra.mxu0 %v663
        %v807 = vpop.f32.mrf.mxu0
        %v808 = vadd.f32 0.0, %v807
        %v809 = vpop.f32.mrf.mxu0
        %810 = vmatprep.mubr.f32.mxu0 0.0
        %811 = vmatmul.mubr.f32.gmra.mxu0 %v666
        %v812 = vpop.f32.mrf.mxu0
        %v813 = vadd.f32 0.0, %v812
        %v814 = vpop.f32.mrf.mxu0
        %815 = vdwg.mxu0
        %v817 = vsel %vm619, %v571, 0
        %v820 = vsel %vm619, %v572, 0
        %v823 = vsel %vm619, %v573, 0
        %v826 = vsel %vm619, %v574, 0
        %v829 = vsel %vm619, %v575, 0
        %v832 = vsel %vm619, %v576, 0
        %v835 = vsel %vm619, %v577, 0
        %v838 = vsel %vm619, %v578, 0
        %v841 = vsel %vm619, %v579, 0
        %v844 = vsel %vm619, %v580, 0
        %v847 = vsel %vm619, %v581, 0
        %v850 = vsel %vm619, %v582, 0
        %v853 = vsel %vm619, %v583, 0
        %v856 = vsel %vm619, %v584, 0
        %v859 = vsel %vm619, %v585, 0
        %v862 = vsel %vm619, %v586, 0
        %v864 = vsel %vm668, %v568, 0
        %866 = vmatprep.subr.mxu0 0.0
        %867 = vmatpush1.msra.mxu0 0.0
        %868 = vmatprep.subr.mxu0 0.0
        %869 = vmatpush1.msra.mxu0 0.0
        %870 = vmatprep.subr.mxu0 0.0
        %871 = vmatpush1.msra.mxu0 0.0
        %872 = vmatprep.subr.mxu0 0.0
        %873 = vmatpush1.msra.mxu0 0.0
        %874 = vmatprep.subr.mxu0 0.0
        %875 = vmatpush1.msra.mxu0 0.0
        %876 = vmatprep.subr.mxu0 0.0
        %877 = vmatpush1.msra.mxu0 0.0
        %878 = vmatprep.subr.mxu0 0.0
        %879 = vmatpush1.msra.mxu0 0.0
        %880 = vmatprep.subr.mxu0 0.0
        %881 = vmatpush1.msra.mxu0 0.0
        %882 = vmatprep.subr.mxu0 0.0
        %883 = vmatpush1.msra.mxu0 0.0
        %884 = vmatprep.subr.mxu0 0.0
        %885 = vmatpush1.msra.mxu0 0.0
        %886 = vmatprep.subr.mxu0 0.0
        %887 = vmatpush1.msra.mxu0 0.0
        %888 = vmatprep.subr.mxu0 0.0
        %889 = vmatpush1.msra.mxu0 0.0
        %890 = vmatprep.subr.mxu0 0.0
        %891 = vmatpush1.msra.mxu0 0.0
        %892 = vmatprep.subr.mxu0 0.0
        %893 = vmatpush1.msra.mxu0 0.0
        %894 = vmatprep.subr.mxu0 0.0
        %895 = vmatpush1.msra.mxu0 %v864
        %896 = vmatprep.subr.mxu0 0.0
        %897 = vmatpush1.msra.mxu0 %v567
        %898 = vmatprep.subr.mxu0 0.0
        %899 = vmatpush2.msra.mxu0 0.0
        %900 = vmatprep.subr.mxu0 0.0
        %901 = vmatpush2.msra.mxu0 0.0
        %902 = vmatprep.subr.mxu0 0.0
        %903 = vmatpush2.msra.mxu0 0.0
        %904 = vmatprep.subr.mxu0 0.0
        %905 = vmatpush2.msra.mxu0 0.0
        %906 = vmatprep.subr.mxu0 0.0
        %907 = vmatpush2.msra.mxu0 0.0
        %908 = vmatprep.subr.mxu0 0.0
        %909 = vmatpush2.msra.mxu0 0.0
        %910 = vmatprep.subr.mxu0 0.0
        %911 = vmatpush2.msra.mxu0 0.0
        %912 = vmatprep.subr.mxu0 0.0
        %913 = vmatpush2.msra.mxu0 0.0
        %914 = vmatprep.subr.mxu0 0.0
        %915 = vmatpush2.msra.mxu0 0.0
        %916 = vmatprep.subr.mxu0 0.0
        %917 = vmatpush2.msra.mxu0 0.0
        %918 = vmatprep.subr.mxu0 0.0
        %919 = vmatpush2.msra.mxu0 0.0
        %920 = vmatprep.subr.mxu0 0.0
        %921 = vmatpush2.msra.mxu0 0.0
        %922 = vmatprep.subr.mxu0 0.0
        %923 = vmatpush2.msra.mxu0 0.0
        %924 = vmatprep.subr.mxu0 0.0
        %925 = vmatpush2.msra.mxu0 0.0
        %926 = vmatprep.subr.mxu0 0.0
        %927 = vmatpush2.msra.mxu0 0.0
        %928 = vmatprep.subr.mxu0 0.0
        %929 = vmatpush2.msra.mxu0 0.0
        %930 = vmatprep.mubr.f32.mxu0 0.0
        %931 = vmatmul.mubr.f32.gmra.mxu0 %v817
        %v932 = vpop.f32.mrf.mxu0
        %v933 = vadd.f32 %v738, %v932
        %v934 = vpop.f32.mrf.mxu0
        %935 = vmatprep.mubr.f32.mxu0 0.0
        %936 = vmatmul.mubr.f32.gmra.mxu0 %v820
        %v937 = vpop.f32.mrf.mxu0
        %v938 = vadd.f32 %v743, %v937
        %v939 = vpop.f32.mrf.mxu0
        %940 = vmatprep.mubr.f32.mxu0 0.0
        %941 = vmatmul.mubr.f32.gmra.mxu0 %v823
        %v942 = vpop.f32.mrf.mxu0
        %v943 = vadd.f32 %v748, %v942
        %v944 = vpop.f32.mrf.mxu0
        %945 = vmatprep.mubr.f32.mxu0 0.0
        %946 = vmatmul.mubr.f32.gmra.mxu0 %v826
        %v947 = vpop.f32.mrf.mxu0
        %v948 = vadd.f32 %v753, %v947
        %v949 = vpop.f32.mrf.mxu0
        %950 = vmatprep.mubr.f32.mxu0 0.0
        %951 = vmatmul.mubr.f32.gmra.mxu0 %v829
        %v952 = vpop.f32.mrf.mxu0
        %v953 = vadd.f32 %v758, %v952
        %v954 = vpop.f32.mrf.mxu0
        %955 = vmatprep.mubr.f32.mxu0 0.0
        %956 = vmatmul.mubr.f32.gmra.mxu0 %v832
        %v957 = vpop.f32.mrf.mxu0
        %v958 = vadd.f32 %v763, %v957
        %v959 = vpop.f32.mrf.mxu0
        %960 = vmatprep.mubr.f32.mxu0 0.0
        %961 = vmatmul.mubr.f32.gmra.mxu0 %v835
        %v962 = vpop.f32.mrf.mxu0
        %v963 = vadd.f32 %v768, %v962
        %v964 = vpop.f32.mrf.mxu0
        %965 = vmatprep.mubr.f32.mxu0 0.0
        %966 = vmatmul.mubr.f32.gmra.mxu0 %v838
        %v967 = vpop.f32.mrf.mxu0
        %v968 = vadd.f32 %v773, %v967
        %v969 = vpop.f32.mrf.mxu0
        %970 = vmatprep.mubr.f32.mxu0 0.0
        %971 = vmatmul.mubr.f32.gmra.mxu0 %v841
        %v972 = vpop.f32.mrf.mxu0
        %v973 = vadd.f32 %v778, %v972
        %v974 = vpop.f32.mrf.mxu0
        %975 = vmatprep.mubr.f32.mxu0 0.0
        %976 = vmatmul.mubr.f32.gmra.mxu0 %v844
        %v977 = vpop.f32.mrf.mxu0
        %v978 = vadd.f32 %v783, %v977
        %v979 = vpop.f32.mrf.mxu0
        %980 = vmatprep.mubr.f32.mxu0 0.0
        %981 = vmatmul.mubr.f32.gmra.mxu0 %v847
        %v982 = vpop.f32.mrf.mxu0
        %v983 = vadd.f32 %v788, %v982
        %v984 = vpop.f32.mrf.mxu0
        %985 = vmatprep.mubr.f32.mxu0 0.0
        %986 = vmatmul.mubr.f32.gmra.mxu0 %v850
        %v987 = vpop.f32.mrf.mxu0
        %v988 = vadd.f32 %v793, %v987
        %v989 = vpop.f32.mrf.mxu0
        %990 = vmatprep.mubr.f32.mxu0 0.0
        %991 = vmatmul.mubr.f32.gmra.mxu0 %v853
        %v992 = vpop.f32.mrf.mxu0
        %v993 = vadd.f32 %v798, %v992
        %v994 = vpop.f32.mrf.mxu0
        %995 = vmatprep.mubr.f32.mxu0 0.0
        %996 = vmatmul.mubr.f32.gmra.mxu0 %v856
        %v997 = vpop.f32.mrf.mxu0
        %v998 = vadd.f32 %v803, %v997
        %v999 = vpop.f32.mrf.mxu0
        %1000 = vmatprep.mubr.f32.mxu0 0.0
        %1001 = vmatmul.mubr.f32.gmra.mxu0 %v859
        %v1002 = vpop.f32.mrf.mxu0
        %v1003 = vadd.f32 %v808, %v1002
        %v1004 = vpop.f32.mrf.mxu0
        %1005 = vmatprep.mubr.f32.mxu0 0.0
        %1006 = vmatmul.mubr.f32.gmra.mxu0 %v862
        %v1007 = vpop.f32.mrf.mxu0
        %v1008 = vadd.f32 %v813, %v1007
        %v1009 = vpop.f32.mrf.mxu0
        %1010 = vdwg.mxu0
        %s1011 = scalar_lea.vmem %s505, 64 [#allocation2]
        %v1012 = vld [vmem:[%s1011] sm:$0xff]
        %v1013 = vld [vmem:[%s1011 + $0x8] sm:$0xff]
        %v1014 = vld [vmem:[%s1011 + $0x10] sm:$0xff]
        %v1015 = vld [vmem:[%s1011 + $0x18] sm:$0xff]
        %v1016 = vld [vmem:[%s1011 + $0x20] sm:$0xff]
        %v1017 = vld [vmem:[%s1011 + $0x28] sm:$0xff]
        %v1018 = vld [vmem:[%s1011 + $0x30] sm:$0xff]
        %v1019 = vld [vmem:[%s1011 + $0x38] sm:$0xff]
        %v1021 = vsel %vm619, %v1012, 0
        %v1024 = vsel %vm619, %v1013, 0
        %v1027 = vsel %vm619, %v1014, 0
        %v1030 = vsel %vm619, %v1015, 0
        %v1033 = vsel %vm619, %v1016, 0
        %v1036 = vsel %vm619, %v1017, 0
        %v1039 = vsel %vm619, %v1018, 0
        %v1042 = vsel %vm619, %v1019, 0
        %1044 = vmatprep.subr.mxu0 0.0
        %1045 = vmatpush1.msra.mxu0 0.0
        %1046 = vmatprep.subr.mxu0 0.0
        %1047 = vmatpush1.msra.mxu0 0.0
        %1048 = vmatprep.subr.mxu0 0.0
        %1049 = vmatpush1.msra.mxu0 0.0
        %1050 = vmatprep.subr.mxu0 0.0
        %1051 = vmatpush1.msra.mxu0 0.0
        %1052 = vmatprep.subr.mxu0 0.0
        %1053 = vmatpush1.msra.mxu0 0.0
        %1054 = vmatprep.subr.mxu0 0.0
        %1055 = vmatpush1.msra.mxu0 0.0
        %1056 = vmatprep.subr.mxu0 0.0
        %1057 = vmatpush1.msra.mxu0 0.0
        %1058 = vmatprep.subr.mxu0 0.0
        %1059 = vmatpush1.msra.mxu0 0.0
        %1060 = vmatprep.subr.mxu0 0.0
        %1061 = vmatpush1.msra.mxu0 0.0
        %1062 = vmatprep.subr.mxu0 0.0
        %1063 = vmatpush1.msra.mxu0 0.0
        %1064 = vmatprep.subr.mxu0 0.0
        %1065 = vmatpush1.msra.mxu0 0.0
        %1066 = vmatprep.subr.mxu0 0.0
        %1067 = vmatpush1.msra.mxu0 0.0
        %1068 = vmatprep.subr.mxu0 0.0
        %1069 = vmatpush1.msra.mxu0 0.0
        %1070 = vmatprep.subr.mxu0 0.0
        %1071 = vmatpush1.msra.mxu0 0.0
        %1072 = vmatprep.subr.mxu0 0.0
        %1073 = vmatpush1.msra.mxu0 %v669
        %1074 = vmatprep.subr.mxu0 0.0
        %1075 = vmatpush1.msra.mxu0 %v617
        %1076 = vmatprep.subr.mxu0 0.0
        %1077 = vmatpush2.msra.mxu0 0.0
        %1078 = vmatprep.subr.mxu0 0.0
        %1079 = vmatpush2.msra.mxu0 0.0
        %1080 = vmatprep.subr.mxu0 0.0
        %1081 = vmatpush2.msra.mxu0 0.0
        %1082 = vmatprep.subr.mxu0 0.0
        %1083 = vmatpush2.msra.mxu0 0.0
        %1084 = vmatprep.subr.mxu0 0.0
        %1085 = vmatpush2.msra.mxu0 0.0
        %1086 = vmatprep.subr.mxu0 0.0
        %1087 = vmatpush2.msra.mxu0 0.0
        %1088 = vmatprep.subr.mxu0 0.0
        %1089 = vmatpush2.msra.mxu0 0.0
        %1090 = vmatprep.subr.mxu0 0.0
        %1091 = vmatpush2.msra.mxu0 0.0
        %1092 = vmatprep.subr.mxu0 0.0
        %1093 = vmatpush2.msra.mxu0 0.0
        %1094 = vmatprep.subr.mxu0 0.0
        %1095 = vmatpush2.msra.mxu0 0.0
        %1096 = vmatprep.subr.mxu0 0.0
        %1097 = vmatpush2.msra.mxu0 0.0
        %1098 = vmatprep.subr.mxu0 0.0
        %1099 = vmatpush2.msra.mxu0 0.0
        %1100 = vmatprep.subr.mxu0 0.0
        %1101 = vmatpush2.msra.mxu0 0.0
        %1102 = vmatprep.subr.mxu0 0.0
        %1103 = vmatpush2.msra.mxu0 0.0
        %1104 = vmatprep.subr.mxu0 0.0
        %1105 = vmatpush2.msra.mxu0 0.0
        %1106 = vmatprep.subr.mxu0 0.0
        %1107 = vmatpush2.msra.mxu0 0.0
        %1108 = vmatprep.mubr.f32.mxu0 0.0
        %1109 = vmatmul.mubr.f32.gmra.mxu0 %v1021
        %v1110 = vpop.f32.mrf.mxu0
        %v1111 = vadd.f32 0.0, %v1110
        %v1112 = vpop.f32.mrf.mxu0
        %1113 = vmatprep.mubr.f32.mxu0 0.0
        %1114 = vmatmul.mubr.f32.gmra.mxu0 %v1024
        %v1115 = vpop.f32.mrf.mxu0
        %v1116 = vadd.f32 0.0, %v1115
        %v1117 = vpop.f32.mrf.mxu0
        %1118 = vmatprep.mubr.f32.mxu0 0.0
        %1119 = vmatmul.mubr.f32.gmra.mxu0 %v1027
        %v1120 = vpop.f32.mrf.mxu0
        %v1121 = vadd.f32 0.0, %v1120
        %v1122 = vpop.f32.mrf.mxu0
        %1123 = vmatprep.mubr.f32.mxu0 0.0
        %1124 = vmatmul.mubr.f32.gmra.mxu0 %v1030
        %v1125 = vpop.f32.mrf.mxu0
        %v1126 = vadd.f32 0.0, %v1125
        %v1127 = vpop.f32.mrf.mxu0
        %1128 = vmatprep.mubr.f32.mxu0 0.0
        %1129 = vmatmul.mubr.f32.gmra.mxu0 %v1033
        %v1130 = vpop.f32.mrf.mxu0
        %v1131 = vadd.f32 0.0, %v1130
        %v1132 = vpop.f32.mrf.mxu0
        %1133 = vmatprep.mubr.f32.mxu0 0.0
        %1134 = vmatmul.mubr.f32.gmra.mxu0 %v1036
        %v1135 = vpop.f32.mrf.mxu0
        %v1136 = vadd.f32 0.0, %v1135
        %v1137 = vpop.f32.mrf.mxu0
        %1138 = vmatprep.mubr.f32.mxu0 0.0
        %1139 = vmatmul.mubr.f32.gmra.mxu0 %v1039
        %v1140 = vpop.f32.mrf.mxu0
        %v1141 = vadd.f32 0.0, %v1140
        %v1142 = vpop.f32.mrf.mxu0
        %1143 = vmatprep.mubr.f32.mxu0 0.0
        %1144 = vmatmul.mubr.f32.gmra.mxu0 %v1042
        %v1145 = vpop.f32.mrf.mxu0
        %v1146 = vadd.f32 0.0, %v1145
        %v1147 = vpop.f32.mrf.mxu0
        %1148 = vdwg.mxu0
        %v1150 = vsel %vm619, %v587, 0
        %v1153 = vsel %vm619, %v588, 0
        %v1156 = vsel %vm619, %v589, 0
        %v1159 = vsel %vm619, %v590, 0
        %v1162 = vsel %vm619, %v591, 0
        %v1165 = vsel %vm619, %v592, 0
        %v1168 = vsel %vm619, %v593, 0
        %v1171 = vsel %vm619, %v594, 0
        %1173 = vmatprep.subr.mxu0 0.0
        %1174 = vmatpush1.msra.mxu0 0.0
        %1175 = vmatprep.subr.mxu0 0.0
        %1176 = vmatpush1.msra.mxu0 0.0
        %1177 = vmatprep.subr.mxu0 0.0
        %1178 = vmatpush1.msra.mxu0 0.0
        %1179 = vmatprep.subr.mxu0 0.0
        %1180 = vmatpush1.msra.mxu0 0.0
        %1181 = vmatprep.subr.mxu0 0.0
        %1182 = vmatpush1.msra.mxu0 0.0
        %1183 = vmatprep.subr.mxu0 0.0
        %1184 = vmatpush1.msra.mxu0 0.0
        %1185 = vmatprep.subr.mxu0 0.0
        %1186 = vmatpush1.msra.mxu0 0.0
        %1187 = vmatprep.subr.mxu0 0.0
        %1188 = vmatpush1.msra.mxu0 0.0
        %1189 = vmatprep.subr.mxu0 0.0
        %1190 = vmatpush1.msra.mxu0 0.0
        %1191 = vmatprep.subr.mxu0 0.0
        %1192 = vmatpush1.msra.mxu0 0.0
        %1193 = vmatprep.subr.mxu0 0.0
        %1194 = vmatpush1.msra.mxu0 0.0
        %1195 = vmatprep.subr.mxu0 0.0
        %1196 = vmatpush1.msra.mxu0 0.0
        %1197 = vmatprep.subr.mxu0 0.0
        %1198 = vmatpush1.msra.mxu0 0.0
        %1199 = vmatprep.subr.mxu0 0.0
        %1200 = vmatpush1.msra.mxu0 0.0
        %1201 = vmatprep.subr.mxu0 0.0
        %1202 = vmatpush1.msra.mxu0 %v864
        %1203 = vmatprep.subr.mxu0 0.0
        %1204 = vmatpush1.msra.mxu0 %v567
        %1205 = vmatprep.subr.mxu0 0.0
        %1206 = vmatpush2.msra.mxu0 0.0
        %1207 = vmatprep.subr.mxu0 0.0
        %1208 = vmatpush2.msra.mxu0 0.0
        %1209 = vmatprep.subr.mxu0 0.0
        %1210 = vmatpush2.msra.mxu0 0.0
        %1211 = vmatprep.subr.mxu0 0.0
        %1212 = vmatpush2.msra.mxu0 0.0
        %1213 = vmatprep.subr.mxu0 0.0
        %1214 = vmatpush2.msra.mxu0 0.0
        %1215 = vmatprep.subr.mxu0 0.0
        %1216 = vmatpush2.msra.mxu0 0.0
        %1217 = vmatprep.subr.mxu0 0.0
        %1218 = vmatpush2.msra.mxu0 0.0
        %1219 = vmatprep.subr.mxu0 0.0
        %1220 = vmatpush2.msra.mxu0 0.0
        %1221 = vmatprep.subr.mxu0 0.0
        %1222 = vmatpush2.msra.mxu0 0.0
        %1223 = vmatprep.subr.mxu0 0.0
        %1224 = vmatpush2.msra.mxu0 0.0
        %1225 = vmatprep.subr.mxu0 0.0
        %1226 = vmatpush2.msra.mxu0 0.0
        %1227 = vmatprep.subr.mxu0 0.0
        %1228 = vmatpush2.msra.mxu0 0.0
        %1229 = vmatprep.subr.mxu0 0.0
        %1230 = vmatpush2.msra.mxu0 0.0
        %1231 = vmatprep.subr.mxu0 0.0
        %1232 = vmatpush2.msra.mxu0 0.0
        %1233 = vmatprep.subr.mxu0 0.0
        %1234 = vmatpush2.msra.mxu0 0.0
        %1235 = vmatprep.subr.mxu0 0.0
        %1236 = vmatpush2.msra.mxu0 0.0
        %1237 = vmatprep.mubr.f32.mxu0 0.0
        %1238 = vmatmul.mubr.f32.gmra.mxu0 %v1150
        %v1239 = vpop.f32.mrf.mxu0
        %v1240 = vadd.f32 %v1111, %v1239
        %v1241 = vpop.f32.mrf.mxu0
        %1242 = vmatprep.mubr.f32.mxu0 0.0
        %1243 = vmatmul.mubr.f32.gmra.mxu0 %v1153
        %v1244 = vpop.f32.mrf.mxu0
        %v1245 = vadd.f32 %v1116, %v1244
        %v1246 = vpop.f32.mrf.mxu0
        %1247 = vmatprep.mubr.f32.mxu0 0.0
        %1248 = vmatmul.mubr.f32.gmra.mxu0 %v1156
        %v1249 = vpop.f32.mrf.mxu0
        %v1250 = vadd.f32 %v1121, %v1249
        %v1251 = vpop.f32.mrf.mxu0
        %1252 = vmatprep.mubr.f32.mxu0 0.0
        %1253 = vmatmul.mubr.f32.gmra.mxu0 %v1159
        %v1254 = vpop.f32.mrf.mxu0
        %v1255 = vadd.f32 %v1126, %v1254
        %v1256 = vpop.f32.mrf.mxu0
        %1257 = vmatprep.mubr.f32.mxu0 0.0
        %1258 = vmatmul.mubr.f32.gmra.mxu0 %v1162
        %v1259 = vpop.f32.mrf.mxu0
        %v1260 = vadd.f32 %v1131, %v1259
        %v1261 = vpop.f32.mrf.mxu0
        %1262 = vmatprep.mubr.f32.mxu0 0.0
        %1263 = vmatmul.mubr.f32.gmra.mxu0 %v1165
        %v1264 = vpop.f32.mrf.mxu0
        %v1265 = vadd.f32 %v1136, %v1264
        %v1266 = vpop.f32.mrf.mxu0
        %1267 = vmatprep.mubr.f32.mxu0 0.0
        %1268 = vmatmul.mubr.f32.gmra.mxu0 %v1168
        %v1269 = vpop.f32.mrf.mxu0
        %v1270 = vadd.f32 %v1141, %v1269
        %v1271 = vpop.f32.mrf.mxu0
        %1272 = vmatprep.mubr.f32.mxu0 0.0
        %1273 = vmatmul.mubr.f32.gmra.mxu0 %v1171
        %v1274 = vpop.f32.mrf.mxu0
        %v1275 = vadd.f32 %v1146, %v1274
        %v1276 = vpop.f32.mrf.mxu0
        %1277 = vdwg.mxu0
        %s1278 = scalar_lea.vmem %s0, 256
        %v1279 = vld [vmem:[%s1278] sm:$0xff]
        %v1280 = vld [vmem:[%s1278 + $0x8] sm:$0xff]
        %v1281 = vld [vmem:[%s1278 + $0x10] sm:$0xff]
        %v1282 = vld [vmem:[%s1278 + $0x18] sm:$0xff]
        %v1283 = vld [vmem:[%s1278 + $0x20] sm:$0xff]
        %v1284 = vld [vmem:[%s1278 + $0x28] sm:$0xff]
        %v1285 = vld [vmem:[%s1278 + $0x30] sm:$0xff]
        %v1286 = vld [vmem:[%s1278 + $0x38] sm:$0xff]
        %v1287 = vld [vmem:[%s1278 + $0x40] sm:$0xff]
        %v1288 = vld [vmem:[%s1278 + $0x48] sm:$0xff]
        %v1289 = vld [vmem:[%s1278 + $0x50] sm:$0xff]
        %v1290 = vld [vmem:[%s1278 + $0x58] sm:$0xff]
        %v1291 = vld [vmem:[%s1278 + $0x60] sm:$0xff]
        %v1292 = vld [vmem:[%s1278 + $0x68] sm:$0xff]
        %v1293 = vld [vmem:[%s1278 + $0x70] sm:$0xff]
        %v1294 = vld [vmem:[%s1278 + $0x78] sm:$0xff]
        %vm1296 = vcmask 1043456
        %v1297 = vrot.slane %v569, 4
        %v1298 = vrot.slane %v570, 4
        %v1299 = vsel %vm1296, %v1297, %v1298
        %v1302 = vsel %vm619, %v1279, 0
        %v1305 = vsel %vm619, %v1280, 0
        %v1308 = vsel %vm619, %v1281, 0
        %v1311 = vsel %vm619, %v1282, 0
        %v1314 = vsel %vm619, %v1283, 0
        %v1317 = vsel %vm619, %v1284, 0
        %v1320 = vsel %vm619, %v1285, 0
        %v1323 = vsel %vm619, %v1286, 0
        %v1326 = vsel %vm619, %v1287, 0
        %v1329 = vsel %vm619, %v1288, 0
        %v1332 = vsel %vm619, %v1289, 0
        %v1335 = vsel %vm619, %v1290, 0
        %v1338 = vsel %vm619, %v1291, 0
        %v1341 = vsel %vm619, %v1292, 0
        %v1344 = vsel %vm619, %v1293, 0
        %v1347 = vsel %vm619, %v1294, 0
        %v1349 = vsel %vm668, %v1298, 0
        %1351 = vmatprep.subr.mxu0 0.0
        %1352 = vmatpush1.msra.mxu0 0.0
        %1353 = vmatprep.subr.mxu0 0.0
        %1354 = vmatpush1.msra.mxu0 0.0
        %1355 = vmatprep.subr.mxu0 0.0
        %1356 = vmatpush1.msra.mxu0 0.0
        %1357 = vmatprep.subr.mxu0 0.0
        %1358 = vmatpush1.msra.mxu0 0.0
        %1359 = vmatprep.subr.mxu0 0.0
        %1360 = vmatpush1.msra.mxu0 0.0
        %1361 = vmatprep.subr.mxu0 0.0
        %1362 = vmatpush1.msra.mxu0 0.0
        %1363 = vmatprep.subr.mxu0 0.0
        %1364 = vmatpush1.msra.mxu0 0.0
        %1365 = vmatprep.subr.mxu0 0.0
        %1366 = vmatpush1.msra.mxu0 0.0
        %1367 = vmatprep.subr.mxu0 0.0
        %1368 = vmatpush1.msra.mxu0 0.0
        %1369 = vmatprep.subr.mxu0 0.0
        %1370 = vmatpush1.msra.mxu0 0.0
        %1371 = vmatprep.subr.mxu0 0.0
        %1372 = vmatpush1.msra.mxu0 0.0
        %1373 = vmatprep.subr.mxu0 0.0
        %1374 = vmatpush1.msra.mxu0 0.0
        %1375 = vmatprep.subr.mxu0 0.0
        %1376 = vmatpush1.msra.mxu0 0.0
        %1377 = vmatprep.subr.mxu0 0.0
        %1378 = vmatpush1.msra.mxu0 0.0
        %1379 = vmatprep.subr.mxu0 0.0
        %1380 = vmatpush1.msra.mxu0 %v1349
        %1381 = vmatprep.subr.mxu0 0.0
        %1382 = vmatpush1.msra.mxu0 %v1299
        %1383 = vmatprep.subr.mxu0 0.0
        %1384 = vmatpush2.msra.mxu0 0.0
        %1385 = vmatprep.subr.mxu0 0.0
        %1386 = vmatpush2.msra.mxu0 0.0
        %1387 = vmatprep.subr.mxu0 0.0
        %1388 = vmatpush2.msra.mxu0 0.0
        %1389 = vmatprep.subr.mxu0 0.0
        %1390 = vmatpush2.msra.mxu0 0.0
        %1391 = vmatprep.subr.mxu0 0.0
        %1392 = vmatpush2.msra.mxu0 0.0
        %1393 = vmatprep.subr.mxu0 0.0
        %1394 = vmatpush2.msra.mxu0 0.0
        %1395 = vmatprep.subr.mxu0 0.0
        %1396 = vmatpush2.msra.mxu0 0.0
        %1397 = vmatprep.subr.mxu0 0.0
        %1398 = vmatpush2.msra.mxu0 0.0
        %1399 = vmatprep.subr.mxu0 0.0
        %1400 = vmatpush2.msra.mxu0 0.0
        %1401 = vmatprep.subr.mxu0 0.0
        %1402 = vmatpush2.msra.mxu0 0.0
        %1403 = vmatprep.subr.mxu0 0.0
        %1404 = vmatpush2.msra.mxu0 0.0
        %1405 = vmatprep.subr.mxu0 0.0
        %1406 = vmatpush2.msra.mxu0 0.0
        %1407 = vmatprep.subr.mxu0 0.0
        %1408 = vmatpush2.msra.mxu0 0.0
        %1409 = vmatprep.subr.mxu0 0.0
        %1410 = vmatpush2.msra.mxu0 0.0
        %1411 = vmatprep.subr.mxu0 0.0
        %1412 = vmatpush2.msra.mxu0 0.0
        %1413 = vmatprep.subr.mxu0 0.0
        %1414 = vmatpush2.msra.mxu0 0.0
        %1415 = vmatprep.mubr.f32.mxu0 0.0
        %1416 = vmatmul.mubr.f32.gmra.mxu0 %v1302
        %v1417 = vpop.f32.mrf.mxu0
        %v1418 = vadd.f32 0.0, %v1417
        %v1419 = vpop.f32.mrf.mxu0
        %1420 = vmatprep.mubr.f32.mxu0 0.0
        %1421 = vmatmul.mubr.f32.gmra.mxu0 %v1305
        %v1422 = vpop.f32.mrf.mxu0
        %v1423 = vadd.f32 0.0, %v1422
        %v1424 = vpop.f32.mrf.mxu0
        %1425 = vmatprep.mubr.f32.mxu0 0.0
        %1426 = vmatmul.mubr.f32.gmra.mxu0 %v1308
        %v1427 = vpop.f32.mrf.mxu0
        %v1428 = vadd.f32 0.0, %v1427
        %v1429 = vpop.f32.mrf.mxu0
        %1430 = vmatprep.mubr.f32.mxu0 0.0
        %1431 = vmatmul.mubr.f32.gmra.mxu0 %v1311
        %v1432 = vpop.f32.mrf.mxu0
        %v1433 = vadd.f32 0.0, %v1432
        %v1434 = vpop.f32.mrf.mxu0
        %1435 = vmatprep.mubr.f32.mxu0 0.0
        %1436 = vmatmul.mubr.f32.gmra.mxu0 %v1314
        %v1437 = vpop.f32.mrf.mxu0
        %v1438 = vadd.f32 0.0, %v1437
        %v1439 = vpop.f32.mrf.mxu0
        %1440 = vmatprep.mubr.f32.mxu0 0.0
        %1441 = vmatmul.mubr.f32.gmra.mxu0 %v1317
        %v1442 = vpop.f32.mrf.mxu0
        %v1443 = vadd.f32 0.0, %v1442
        %v1444 = vpop.f32.mrf.mxu0
        %1445 = vmatprep.mubr.f32.mxu0 0.0
        %1446 = vmatmul.mubr.f32.gmra.mxu0 %v1320
        %v1447 = vpop.f32.mrf.mxu0
        %v1448 = vadd.f32 0.0, %v1447
        %v1449 = vpop.f32.mrf.mxu0
        %1450 = vmatprep.mubr.f32.mxu0 0.0
        %1451 = vmatmul.mubr.f32.gmra.mxu0 %v1323
        %v1452 = vpop.f32.mrf.mxu0
        %v1453 = vadd.f32 0.0, %v1452
        %v1454 = vpop.f32.mrf.mxu0
        %1455 = vmatprep.mubr.f32.mxu0 0.0
        %1456 = vmatmul.mubr.f32.gmra.mxu0 %v1326
        %v1457 = vpop.f32.mrf.mxu0
        %v1458 = vadd.f32 0.0, %v1457
        %v1459 = vpop.f32.mrf.mxu0
        %1460 = vmatprep.mubr.f32.mxu0 0.0
        %1461 = vmatmul.mubr.f32.gmra.mxu0 %v1329
        %v1462 = vpop.f32.mrf.mxu0
        %v1463 = vadd.f32 0.0, %v1462
        %v1464 = vpop.f32.mrf.mxu0
        %1465 = vmatprep.mubr.f32.mxu0 0.0
        %1466 = vmatmul.mubr.f32.gmra.mxu0 %v1332
        %v1467 = vpop.f32.mrf.mxu0
        %v1468 = vadd.f32 0.0, %v1467
        %v1469 = vpop.f32.mrf.mxu0
        %1470 = vmatprep.mubr.f32.mxu0 0.0
        %1471 = vmatmul.mubr.f32.gmra.mxu0 %v1335
        %v1472 = vpop.f32.mrf.mxu0
        %v1473 = vadd.f32 0.0, %v1472
        %v1474 = vpop.f32.mrf.mxu0
        %1475 = vmatprep.mubr.f32.mxu0 0.0
        %1476 = vmatmul.mubr.f32.gmra.mxu0 %v1338
        %v1477 = vpop.f32.mrf.mxu0
        %v1478 = vadd.f32 0.0, %v1477
        %v1479 = vpop.f32.mrf.mxu0
        %1480 = vmatprep.mubr.f32.mxu0 0.0
        %1481 = vmatmul.mubr.f32.gmra.mxu0 %v1341
        %v1482 = vpop.f32.mrf.mxu0
        %v1483 = vadd.f32 0.0, %v1482
        %v1484 = vpop.f32.mrf.mxu0
        %1485 = vmatprep.mubr.f32.mxu0 0.0
        %1486 = vmatmul.mubr.f32.gmra.mxu0 %v1344
        %v1487 = vpop.f32.mrf.mxu0
        %v1488 = vadd.f32 0.0, %v1487
        %v1489 = vpop.f32.mrf.mxu0
        %1490 = vmatprep.mubr.f32.mxu0 0.0
        %1491 = vmatmul.mubr.f32.gmra.mxu0 %v1347
        %v1492 = vpop.f32.mrf.mxu0
        %v1493 = vadd.f32 0.0, %v1492
        %v1494 = vpop.f32.mrf.mxu0
        %1495 = vdwg.mxu0
        %v1496 = vadd.f32 %v933, %v1418
        %v1497 = vadd.f32 %v938, %v1423
        %v1498 = vadd.f32 %v943, %v1428
        %v1499 = vadd.f32 %v948, %v1433
        %v1500 = vadd.f32 %v953, %v1438
        %v1501 = vadd.f32 %v958, %v1443
        %v1502 = vadd.f32 %v963, %v1448
        %v1503 = vadd.f32 %v968, %v1453
        %v1504 = vadd.f32 %v973, %v1458
        %v1505 = vadd.f32 %v978, %v1463
        %v1506 = vadd.f32 %v983, %v1468
        %v1507 = vadd.f32 %v988, %v1473
        %v1508 = vadd.f32 %v993, %v1478
        %v1509 = vadd.f32 %v998, %v1483
        %v1510 = vadd.f32 %v1003, %v1488
        %v1511 = vadd.f32 %v1008, %v1493
        %s1512 = scalar_lea.vmem %s505, 128 [#allocation2]
        %v1513 = vld [vmem:[%s1512] sm:$0xff]
        %v1514 = vld [vmem:[%s1512 + $0x8] sm:$0xff]
        %v1515 = vld [vmem:[%s1512 + $0x10] sm:$0xff]
        %v1516 = vld [vmem:[%s1512 + $0x18] sm:$0xff]
        %v1517 = vld [vmem:[%s1512 + $0x20] sm:$0xff]
        %v1518 = vld [vmem:[%s1512 + $0x28] sm:$0xff]
        %v1519 = vld [vmem:[%s1512 + $0x30] sm:$0xff]
        %v1520 = vld [vmem:[%s1512 + $0x38] sm:$0xff]
        %v1522 = vsel %vm619, %v1513, 0
        %v1525 = vsel %vm619, %v1514, 0
        %v1528 = vsel %vm619, %v1515, 0
        %v1531 = vsel %vm619, %v1516, 0
        %v1534 = vsel %vm619, %v1517, 0
        %v1537 = vsel %vm619, %v1518, 0
        %v1540 = vsel %vm619, %v1519, 0
        %v1543 = vsel %vm619, %v1520, 0
        %1545 = vmatprep.subr.mxu0 0.0
        %1546 = vmatpush1.msra.mxu0 0.0
        %1547 = vmatprep.subr.mxu0 0.0
        %1548 = vmatpush1.msra.mxu0 0.0
        %1549 = vmatprep.subr.mxu0 0.0
        %1550 = vmatpush1.msra.mxu0 0.0
        %1551 = vmatprep.subr.mxu0 0.0
        %1552 = vmatpush1.msra.mxu0 0.0
        %1553 = vmatprep.subr.mxu0 0.0
        %1554 = vmatpush1.msra.mxu0 0.0
        %1555 = vmatprep.subr.mxu0 0.0
        %1556 = vmatpush1.msra.mxu0 0.0
        %1557 = vmatprep.subr.mxu0 0.0
        %1558 = vmatpush1.msra.mxu0 0.0
        %1559 = vmatprep.subr.mxu0 0.0
        %1560 = vmatpush1.msra.mxu0 0.0
        %1561 = vmatprep.subr.mxu0 0.0
        %1562 = vmatpush1.msra.mxu0 0.0
        %1563 = vmatprep.subr.mxu0 0.0
        %1564 = vmatpush1.msra.mxu0 0.0
        %1565 = vmatprep.subr.mxu0 0.0
        %1566 = vmatpush1.msra.mxu0 0.0
        %1567 = vmatprep.subr.mxu0 0.0
        %1568 = vmatpush1.msra.mxu0 0.0
        %1569 = vmatprep.subr.mxu0 0.0
        %1570 = vmatpush1.msra.mxu0 0.0
        %1571 = vmatprep.subr.mxu0 0.0
        %1572 = vmatpush1.msra.mxu0 0.0
        %1573 = vmatprep.subr.mxu0 0.0
        %1574 = vmatpush1.msra.mxu0 %v1349
        %1575 = vmatprep.subr.mxu0 0.0
        %1576 = vmatpush1.msra.mxu0 %v1299
        %1577 = vmatprep.subr.mxu0 0.0
        %1578 = vmatpush2.msra.mxu0 0.0
        %1579 = vmatprep.subr.mxu0 0.0
        %1580 = vmatpush2.msra.mxu0 0.0
        %1581 = vmatprep.subr.mxu0 0.0
        %1582 = vmatpush2.msra.mxu0 0.0
        %1583 = vmatprep.subr.mxu0 0.0
        %1584 = vmatpush2.msra.mxu0 0.0
        %1585 = vmatprep.subr.mxu0 0.0
        %1586 = vmatpush2.msra.mxu0 0.0
        %1587 = vmatprep.subr.mxu0 0.0
        %1588 = vmatpush2.msra.mxu0 0.0
        %1589 = vmatprep.subr.mxu0 0.0
        %1590 = vmatpush2.msra.mxu0 0.0
        %1591 = vmatprep.subr.mxu0 0.0
        %1592 = vmatpush2.msra.mxu0 0.0
        %1593 = vmatprep.subr.mxu0 0.0
        %1594 = vmatpush2.msra.mxu0 0.0
        %1595 = vmatprep.subr.mxu0 0.0
        %1596 = vmatpush2.msra.mxu0 0.0
        %1597 = vmatprep.subr.mxu0 0.0
        %1598 = vmatpush2.msra.mxu0 0.0
        %1599 = vmatprep.subr.mxu0 0.0
        %1600 = vmatpush2.msra.mxu0 0.0
        %1601 = vmatprep.subr.mxu0 0.0
        %1602 = vmatpush2.msra.mxu0 0.0
        %1603 = vmatprep.subr.mxu0 0.0
        %1604 = vmatpush2.msra.mxu0 0.0
        %1605 = vmatprep.subr.mxu0 0.0
        %1606 = vmatpush2.msra.mxu0 0.0
        %1607 = vmatprep.subr.mxu0 0.0
        %1608 = vmatpush2.msra.mxu0 0.0
        %1609 = vmatprep.mubr.f32.mxu0 0.0
        %1610 = vmatmul.mubr.f32.gmra.mxu0 %v1522
        %v1611 = vpop.f32.mrf.mxu0
        %v1612 = vadd.f32 0.0, %v1611
        %v1613 = vpop.f32.mrf.mxu0
        %1614 = vmatprep.mubr.f32.mxu0 0.0
        %1615 = vmatmul.mubr.f32.gmra.mxu0 %v1525
        %v1616 = vpop.f32.mrf.mxu0
        %v1617 = vadd.f32 0.0, %v1616
        %v1618 = vpop.f32.mrf.mxu0
        %1619 = vmatprep.mubr.f32.mxu0 0.0
        %1620 = vmatmul.mubr.f32.gmra.mxu0 %v1528
        %v1621 = vpop.f32.mrf.mxu0
        %v1622 = vadd.f32 0.0, %v1621
        %v1623 = vpop.f32.mrf.mxu0
        %1624 = vmatprep.mubr.f32.mxu0 0.0
        %1625 = vmatmul.mubr.f32.gmra.mxu0 %v1531
        %v1626 = vpop.f32.mrf.mxu0
        %v1627 = vadd.f32 0.0, %v1626
        %v1628 = vpop.f32.mrf.mxu0
        %1629 = vmatprep.mubr.f32.mxu0 0.0
        %1630 = vmatmul.mubr.f32.gmra.mxu0 %v1534
        %v1631 = vpop.f32.mrf.mxu0
        %v1632 = vadd.f32 0.0, %v1631
        %v1633 = vpop.f32.mrf.mxu0
        %1634 = vmatprep.mubr.f32.mxu0 0.0
        %1635 = vmatmul.mubr.f32.gmra.mxu0 %v1537
        %v1636 = vpop.f32.mrf.mxu0
        %v1637 = vadd.f32 0.0, %v1636
        %v1638 = vpop.f32.mrf.mxu0
        %1639 = vmatprep.mubr.f32.mxu0 0.0
        %1640 = vmatmul.mubr.f32.gmra.mxu0 %v1540
        %v1641 = vpop.f32.mrf.mxu0
        %v1642 = vadd.f32 0.0, %v1641
        %v1643 = vpop.f32.mrf.mxu0
        %1644 = vmatprep.mubr.f32.mxu0 0.0
        %1645 = vmatmul.mubr.f32.gmra.mxu0 %v1543
        %v1646 = vpop.f32.mrf.mxu0
        %v1647 = vadd.f32 0.0, %v1646
        %v1648 = vpop.f32.mrf.mxu0
        %1649 = vdwg.mxu0
        %v1650 = vadd.f32 %v1240, %v1612
        %v1651 = vadd.f32 %v1245, %v1617
        %v1652 = vadd.f32 %v1250, %v1622
        %v1653 = vadd.f32 %v1255, %v1627
        %v1654 = vadd.f32 %v1260, %v1632
        %v1655 = vadd.f32 %v1265, %v1637
        %v1656 = vadd.f32 %v1270, %v1642
        %v1657 = vadd.f32 %v1275, %v1647
        %s1658 = sld [smem:[#allocation4 + $0x5]]
        %v1659 = vstv %s1658
        %v1660 = vadd.f32 %v1496, %v1659
        %v1661 = vadd.f32 %v1497, %v1659
        %v1662 = vadd.f32 %v1498, %v1659
        %v1663 = vadd.f32 %v1499, %v1659
        %v1664 = vadd.f32 %v1500, %v1659
        %v1665 = vadd.f32 %v1501, %v1659
        %v1666 = vadd.f32 %v1502, %v1659
        %v1667 = vadd.f32 %v1503, %v1659
        %v1668 = vadd.f32 %v1504, %v1659
        %v1669 = vadd.f32 %v1505, %v1659
        %v1670 = vadd.f32 %v1506, %v1659
        %v1671 = vadd.f32 %v1507, %v1659
        %v1672 = vadd.f32 %v1508, %v1659
        %v1673 = vadd.f32 %v1509, %v1659
        %v1674 = vadd.f32 %v1510, %v1659
        %v1675 = vadd.f32 %v1511, %v1659
        %1676 = vxpose.xlu0.b32.start [1/16] %v1660, 128
        %1677 = vxpose.xlu0.b32.cont [2/16] %v1661, 128
        %1678 = vxpose.xlu0.b32.cont [3/16] %v1662, 128
        %1679 = vxpose.xlu0.b32.cont [4/16] %v1663, 128
        %1680 = vxpose.xlu0.b32.cont [5/16] %v1664, 128
        %1681 = vxpose.xlu0.b32.cont [6/16] %v1665, 128
        %1682 = vxpose.xlu0.b32.cont [7/16] %v1666, 128
        %1683 = vxpose.xlu0.b32.cont [8/16] %v1667, 128
        %1684 = vxpose.xlu0.b32.cont [9/16] %v1668, 128
        %1685 = vxpose.xlu0.b32.cont [10/16] %v1669, 128
        %1686 = vxpose.xlu0.b32.cont [11/16] %v1670, 128
        %1687 = vxpose.xlu0.b32.cont [12/16] %v1671, 128
        %1688 = vxpose.xlu0.b32.cont [13/16] %v1672, 128
        %1689 = vxpose.xlu0.b32.cont [14/16] %v1673, 128
        %1690 = vxpose.xlu0.b32.cont [15/16] %v1674, 128
        %1691 = vxpose.xlu0.b32.end [16/16] %v1675, 128
        %v1692 = vpop.trf.xlu0
        %v1693 = vpop.trf.xlu0
        %v1694 = vpop.trf.xlu0
        %v1695 = vpop.trf.xlu0
        %v1696 = vpop.trf.xlu0
        %v1697 = vpop.trf.xlu0
        %v1698 = vpop.trf.xlu0
        %v1699 = vpop.trf.xlu0
        %v1700 = vpop.trf.xlu0
        %v1701 = vpop.trf.xlu0
        %v1702 = vpop.trf.xlu0
        %v1703 = vpop.trf.xlu0
        %v1704 = vpop.trf.xlu0
        %v1705 = vpop.trf.xlu0
        %v1706 = vpop.trf.xlu0
        %v1707 = vpop.trf.xlu0
        %s1708 = sld [smem:[#allocation4 + $0x6]]
        %v1709 = vstv %s1708
        %v1710 = vadd.f32 %v1650, %v1709
        %v1711 = vadd.f32 %v1651, %v1709
        %v1712 = vadd.f32 %v1652, %v1709
        %v1713 = vadd.f32 %v1653, %v1709
        %v1714 = vadd.f32 %v1654, %v1709
        %v1715 = vadd.f32 %v1655, %v1709
        %v1716 = vadd.f32 %v1656, %v1709
        %v1717 = vadd.f32 %v1657, %v1709
        %s1718 = sld [smem:[#allocation4]]
        %v1719 = vld [vmem:[%s512] sm:$0xff]
        %v1720 = vld [vmem:[%s512 + $0x8] sm:$0xff]
        %v1721 = vld [vmem:[%s512 + $0x10] sm:$0xff]
        %v1722 = vld [vmem:[%s512 + $0x18] sm:$0xff]
        %v1723 = vld [vmem:[%s512 + $0x20] sm:$0xff]
        %v1724 = vld [vmem:[%s512 + $0x28] sm:$0xff]
        %v1725 = vld [vmem:[%s512 + $0x30] sm:$0xff]
        %v1726 = vld [vmem:[%s512 + $0x38] sm:$0xff]
        %v1727 = vstv %s1718
        %v1728 = vmul.f32 %v1727, %v1719
        %v1729 = vmul.f32 %v1727, %v1720
        %v1730 = vmul.f32 %v1727, %v1721
        %v1731 = vmul.f32 %v1727, %v1722
        %v1732 = vmul.f32 %v1727, %v1723
        %v1733 = vmul.f32 %v1727, %v1724
        %v1734 = vmul.f32 %v1727, %v1725
        %v1735 = vmul.f32 %v1727, %v1726
        %s1736 = sld [smem:[#allocation4 + $0x1]]
        %s1737 = scalar_lea.vmem %s512, 64 [#allocation3]
        %v1738 = vld [vmem:[%s1737] sm:$0xff]
        %v1739 = vld [vmem:[%s1737 + $0x8] sm:$0xff]
        %v1740 = vld [vmem:[%s1737 + $0x10] sm:$0xff]
        %v1741 = vld [vmem:[%s1737 + $0x18] sm:$0xff]
        %v1742 = vld [vmem:[%s1737 + $0x20] sm:$0xff]
        %v1743 = vld [vmem:[%s1737 + $0x28] sm:$0xff]
        %v1744 = vld [vmem:[%s1737 + $0x30] sm:$0xff]
        %v1745 = vld [vmem:[%s1737 + $0x38] sm:$0xff]
        %v1746 = vstv %s1736
        %v1747 = vmul.f32 %v1746, %v1738
        %v1748 = vmul.f32 %v1746, %v1739
        %v1749 = vmul.f32 %v1746, %v1740
        %v1750 = vmul.f32 %v1746, %v1741
        %v1751 = vmul.f32 %v1746, %v1742
        %v1752 = vmul.f32 %v1746, %v1743
        %v1753 = vmul.f32 %v1746, %v1744
        %v1754 = vmul.f32 %v1746, %v1745
        %v1755 = vadd.f32 %v1728, %v1747
        %v1756 = vadd.f32 %v1729, %v1748
        %v1757 = vadd.f32 %v1730, %v1749
        %v1758 = vadd.f32 %v1731, %v1750
        %v1759 = vadd.f32 %v1732, %v1751
        %v1760 = vadd.f32 %v1733, %v1752
        %v1761 = vadd.f32 %v1734, %v1753
        %v1762 = vadd.f32 %v1735, %v1754
        %s1763 = sld [smem:[#allocation4 + $0x2]]
        %s1764 = scalar_lea.vmem %s512, 128 [#allocation3]
        %v1765 = vld [vmem:[%s1764] sm:$0xff]
        %v1766 = vld [vmem:[%s1764 + $0x8] sm:$0xff]
        %v1767 = vld [vmem:[%s1764 + $0x10] sm:$0xff]
        %v1768 = vld [vmem:[%s1764 + $0x18] sm:$0xff]
        %v1769 = vld [vmem:[%s1764 + $0x20] sm:$0xff]
        %v1770 = vld [vmem:[%s1764 + $0x28] sm:$0xff]
        %v1771 = vld [vmem:[%s1764 + $0x30] sm:$0xff]
        %v1772 = vld [vmem:[%s1764 + $0x38] sm:$0xff]
        %v1773 = vstv %s1763
        %v1774 = vmul.f32 %v1773, %v1765
        %v1775 = vmul.f32 %v1773, %v1766
        %v1776 = vmul.f32 %v1773, %v1767
        %v1777 = vmul.f32 %v1773, %v1768
        %v1778 = vmul.f32 %v1773, %v1769
        %v1779 = vmul.f32 %v1773, %v1770
        %v1780 = vmul.f32 %v1773, %v1771
        %v1781 = vmul.f32 %v1773, %v1772
        %v1782 = vadd.f32 %v1755, %v1774
        %v1783 = vadd.f32 %v1756, %v1775
        %v1784 = vadd.f32 %v1757, %v1776
        %v1785 = vadd.f32 %v1758, %v1777
        %v1786 = vadd.f32 %v1759, %v1778
        %v1787 = vadd.f32 %v1760, %v1779
        %v1788 = vadd.f32 %v1761, %v1780
        %v1789 = vadd.f32 %v1762, %v1781
        %1791 = vset.pattern.permute.xlu0 1
        %1792 = vperm.xlu0 %1791, %v1710
        %v1793 = vpop.permute.xlu0 %1792
        %1796 = vset.pattern.permute.xlu0 1
        %1797 = vperm.xlu0 %1796, %v1711
        %v1798 = vpop.permute.xlu0 %1797
        %1801 = vset.pattern.permute.xlu0 1
        %1802 = vperm.xlu0 %1801, %v1712
        %v1803 = vpop.permute.xlu0 %1802
        %1806 = vset.pattern.permute.xlu0 1
        %1807 = vperm.xlu0 %1806, %v1713
        %v1808 = vpop.permute.xlu0 %1807
        %1811 = vset.pattern.permute.xlu0 1
        %1812 = vperm.xlu0 %1811, %v1714
        %v1813 = vpop.permute.xlu0 %1812
        %1816 = vset.pattern.permute.xlu0 1
        %1817 = vperm.xlu0 %1816, %v1715
        %v1818 = vpop.permute.xlu0 %1817
        %1821 = vset.pattern.permute.xlu0 1
        %1822 = vperm.xlu0 %1821, %v1716
        %v1823 = vpop.permute.xlu0 %1822
        %1826 = vset.pattern.permute.xlu0 1
        %1827 = vperm.xlu0 %1826, %v1717
        %v1828 = vpop.permute.xlu0 %1827
        %v1830 = vlaneseq
        %v1831 = vshrl.u32 %v1830, 7
        %v1832 = vsub.s32 0, %v1831
        %v1833 = vrot.slane %v1692, %v1832
        %v1834 = vadd.f32 %v1793, %v1833
        %v1835 = vadd.f32 %v1798, %v1833
        %v1836 = vadd.f32 %v1803, %v1833
        %v1837 = vadd.f32 %v1808, %v1833
        %v1838 = vadd.f32 %v1813, %v1833
        %v1839 = vadd.f32 %v1818, %v1833
        %v1840 = vadd.f32 %v1823, %v1833
        %v1841 = vadd.f32 %v1828, %v1833
        %v1842 = vadd.f32 %v1834, %v1782
        %v1843 = vadd.f32 %v1835, %v1783
        %v1844 = vadd.f32 %v1836, %v1784
        %v1845 = vadd.f32 %v1837, %v1785
        %v1846 = vadd.f32 %v1838, %v1786
        %v1847 = vadd.f32 %v1839, %v1787
        %v1848 = vadd.f32 %v1840, %v1788
        %v1849 = vadd.f32 %v1841, %v1789
        %vm1850 = vcmp.gt.f32.partialorder %v1842, 0.0
        %vm1851 = vcmp.gt.f32.partialorder %v1843, 0.0
        %vm1852 = vcmp.gt.f32.partialorder %v1844, 0.0
        %vm1853 = vcmp.gt.f32.partialorder %v1845, 0.0
        %vm1854 = vcmp.gt.f32.partialorder %v1846, 0.0
        %vm1855 = vcmp.gt.f32.partialorder %v1847, 0.0
        %vm1856 = vcmp.gt.f32.partialorder %v1848, 0.0
        %vm1857 = vcmp.gt.f32.partialorder %v1849, 0.0
        %v1858 = vmul.f32 %v1842, 0.2
        %v1859 = vmul.f32 %v1843, 0.2
        %v1860 = vmul.f32 %v1844, 0.2
        %v1861 = vmul.f32 %v1845, 0.2
        %v1862 = vmul.f32 %v1846, 0.2
        %v1863 = vmul.f32 %v1847, 0.2
        %v1864 = vmul.f32 %v1848, 0.2
        %v1865 = vmul.f32 %v1849, 0.2
        %v1866 = vsel %vm1850, %v1842, %v1858
        %v1867 = vsel %vm1851, %v1843, %v1859
        %v1868 = vsel %vm1852, %v1844, %v1860
        %v1869 = vsel %vm1853, %v1845, %v1861
        %v1870 = vsel %vm1854, %v1846, %v1862
        %v1871 = vsel %vm1855, %v1847, %v1863
        %v1872 = vsel %vm1856, %v1848, %v1864
        %v1873 = vsel %vm1857, %v1849, %v1865
        %s1874 = sld [smem:[#allocation4 + $0x3]]
        %v1875 = vstv %s1874
        %v1876 = vmul.f32 %v1875, %v1866
        %v1877 = vmul.f32 %v1875, %v1867
        %v1878 = vmul.f32 %v1875, %v1868
        %v1879 = vmul.f32 %v1875, %v1869
        %v1880 = vmul.f32 %v1875, %v1870
        %v1881 = vmul.f32 %v1875, %v1871
        %v1882 = vmul.f32 %v1875, %v1872
        %v1883 = vmul.f32 %v1875, %v1873
        %v1884 = vld [vmem:[%s559] sm:$0xff]
        %v1885 = vld [vmem:[%s559 + $0x8] sm:$0xff]
        %v1886 = vld [vmem:[%s559 + $0x10] sm:$0xff]
        %v1887 = vld [vmem:[%s559 + $0x18] sm:$0xff]
        %v1888 = vld [vmem:[%s559 + $0x20] sm:$0xff]
        %v1889 = vld [vmem:[%s559 + $0x28] sm:$0xff]
        %v1890 = vld [vmem:[%s559 + $0x30] sm:$0xff]
        %v1891 = vld [vmem:[%s559 + $0x38] sm:$0xff]
        %vm1892 = vcmp.gt.f32.partialorder %v1884, 0.0
        %vm1893 = vcmp.gt.f32.partialorder %v1885, 0.0
        %vm1894 = vcmp.gt.f32.partialorder %v1886, 0.0
        %vm1895 = vcmp.gt.f32.partialorder %v1887, 0.0
        %vm1896 = vcmp.gt.f32.partialorder %v1888, 0.0
        %vm1897 = vcmp.gt.f32.partialorder %v1889, 0.0
        %vm1898 = vcmp.gt.f32.partialorder %v1890, 0.0
        %vm1899 = vcmp.gt.f32.partialorder %v1891, 0.0
        %v1900 = vsel %vm1892, %v1876, -1e+30
        %v1901 = vsel %vm1893, %v1877, -1e+30
        %v1902 = vsel %vm1894, %v1878, -1e+30
        %v1903 = vsel %vm1895, %v1879, -1e+30
        %v1904 = vsel %vm1896, %v1880, -1e+30
        %v1905 = vsel %vm1897, %v1881, -1e+30
        %v1906 = vsel %vm1898, %v1882, -1e+30
        %v1907 = vsel %vm1899, %v1883, -1e+30
        %1908 = vmax.xlane.f32.xlu0 %v1900
        %v1909 = vpop.xlane.xlu0 %1908
        %1910 = vmax.xlane.f32.xlu0 %v1901
        %v1911 = vpop.xlane.xlu0 %1910
        %1912 = vmax.xlane.f32.xlu0 %v1902
        %v1913 = vpop.xlane.xlu0 %1912
        %1914 = vmax.xlane.f32.xlu0 %v1903
        %v1915 = vpop.xlane.xlu0 %1914
        %1916 = vmax.xlane.f32.xlu0 %v1904
        %v1917 = vpop.xlane.xlu0 %1916
        %1918 = vmax.xlane.f32.xlu0 %v1905
        %v1919 = vpop.xlane.xlu0 %1918
        %1920 = vmax.xlane.f32.xlu0 %v1906
        %v1921 = vpop.xlane.xlu0 %1920
        %1922 = vmax.xlane.f32.xlu0 %v1907
        %v1923 = vpop.xlane.xlu0 %1922
        %v1924 = vsub.f32 %v1900, %v1909
        %v1925 = vsub.f32 %v1901, %v1911
        %v1926 = vsub.f32 %v1902, %v1913
        %v1927 = vsub.f32 %v1903, %v1915
        %v1928 = vsub.f32 %v1904, %v1917
        %v1929 = vsub.f32 %v1905, %v1919
        %v1930 = vsub.f32 %v1906, %v1921
        %v1931 = vsub.f32 %v1907, %v1923
        %v1932 = vmul.f32 %v1924, 1.442695
        %v1933 = vpow.pop %v1932
        %v1934 = vmul.f32 %v1925, 1.442695
        %v1935 = vpow.pop %v1934
        %v1936 = vmul.f32 %v1926, 1.442695
        %v1937 = vpow.pop %v1936
        %v1938 = vmul.f32 %v1927, 1.442695
        %v1939 = vpow.pop %v1938
        %v1940 = vmul.f32 %v1928, 1.442695
        %v1941 = vpow.pop %v1940
        %v1942 = vmul.f32 %v1929, 1.442695
        %v1943 = vpow.pop %v1942
        %v1944 = vmul.f32 %v1930, 1.442695
        %v1945 = vpow.pop %v1944
        %v1946 = vmul.f32 %v1931, 1.442695
        %v1947 = vpow.pop %v1946
        %v1948 = vmul.f32 %v1933, %v1884
        %v1949 = vmul.f32 %v1935, %v1885
        %v1950 = vmul.f32 %v1937, %v1886
        %v1951 = vmul.f32 %v1939, %v1887
        %v1952 = vmul.f32 %v1941, %v1888
        %v1953 = vmul.f32 %v1943, %v1889
        %v1954 = vmul.f32 %v1945, %v1890
        %v1955 = vmul.f32 %v1947, %v1891
        %1956 = vadd.xlane.f32.xlu0 %v1948
        %v1957 = vpop.xlane.xlu0 %1956
        %1958 = vadd.xlane.f32.xlu0 %v1949
        %v1959 = vpop.xlane.xlu0 %1958
        %1960 = vadd.xlane.f32.xlu0 %v1950
        %v1961 = vpop.xlane.xlu0 %1960
        %1962 = vadd.xlane.f32.xlu0 %v1951
        %v1963 = vpop.xlane.xlu0 %1962
        %1964 = vadd.xlane.f32.xlu0 %v1952
        %v1965 = vpop.xlane.xlu0 %1964
        %1966 = vadd.xlane.f32.xlu0 %v1953
        %v1967 = vpop.xlane.xlu0 %1966
        %1968 = vadd.xlane.f32.xlu0 %v1954
        %v1969 = vpop.xlane.xlu0 %1968
        %1970 = vadd.xlane.f32.xlu0 %v1955
        %v1971 = vpop.xlane.xlu0 %1970
        %v1972 = vmax.f32 %v1957, 1e-20
        %v1973 = vmax.f32 %v1959, 1e-20
        %v1974 = vmax.f32 %v1961, 1e-20
        %v1975 = vmax.f32 %v1963, 1e-20
        %v1976 = vmax.f32 %v1965, 1e-20
        %v1977 = vmax.f32 %v1967, 1e-20
        %v1978 = vmax.f32 %v1969, 1e-20
        %v1979 = vmax.f32 %v1971, 1e-20
        %v1980 = vrcp.pop %v1972
        %v1981 = vmul.f32 %v1948, %v1980
        %v1982 = vrcp.pop %v1973
        %v1983 = vmul.f32 %v1949, %v1982
        %v1984 = vrcp.pop %v1974
        %v1985 = vmul.f32 %v1950, %v1984
        %v1986 = vrcp.pop %v1975
        %v1987 = vmul.f32 %v1951, %v1986
        %v1988 = vrcp.pop %v1976
        %v1989 = vmul.f32 %v1952, %v1988
        %v1990 = vrcp.pop %v1977
        %v1991 = vmul.f32 %v1953, %v1990
        %v1992 = vrcp.pop %v1978
        %v1993 = vmul.f32 %v1954, %v1992
        %v1994 = vrcp.pop %v1979
        %v1995 = vmul.f32 %v1955, %v1994
        %s1996 = sld [smem:[#allocation4 + $0x4]]
        %v1997 = vstv %s1996
        %1998 = vmatprep.subr.mxu0 0.0
        %1999 = vmatpush1.msra.mxu0 %v1675
        %2000 = vmatprep.subr.mxu0 0.0
        %2001 = vmatpush1.msra.mxu0 %v1674
        %2002 = vmatprep.subr.mxu0 0.0
        %2003 = vmatpush1.msra.mxu0 %v1673
        %2004 = vmatprep.subr.mxu0 0.0
        %2005 = vmatpush1.msra.mxu0 %v1672
        %2006 = vmatprep.subr.mxu0 0.0
        %2007 = vmatpush1.msra.mxu0 %v1671
        %2008 = vmatprep.subr.mxu0 0.0
        %2009 = vmatpush1.msra.mxu0 %v1670
        %2010 = vmatprep.subr.mxu0 0.0
        %2011 = vmatpush1.msra.mxu0 %v1669
        %2012 = vmatprep.subr.mxu0 0.0
        %2013 = vmatpush1.msra.mxu0 %v1668
        %2014 = vmatprep.subr.mxu0 0.0
        %2015 = vmatpush1.msra.mxu0 %v1667
        %2016 = vmatprep.subr.mxu0 0.0
        %2017 = vmatpush1.msra.mxu0 %v1666
        %2018 = vmatprep.subr.mxu0 0.0
        %2019 = vmatpush1.msra.mxu0 %v1665
        %2020 = vmatprep.subr.mxu0 0.0
        %2021 = vmatpush1.msra.mxu0 %v1664
        %2022 = vmatprep.subr.mxu0 0.0
        %2023 = vmatpush1.msra.mxu0 %v1663
        %2024 = vmatprep.subr.mxu0 0.0
        %2025 = vmatpush1.msra.mxu0 %v1662
        %2026 = vmatprep.subr.mxu0 0.0
        %2027 = vmatpush1.msra.mxu0 %v1661
        %2028 = vmatprep.subr.mxu0 0.0
        %2029 = vmatpush1.msra.mxu0 %v1660
        %2030 = vmatprep.subr.mxu0 0.0
        %2031 = vmatpush2.msra.mxu0 0.0
        %2032 = vmatprep.subr.mxu0 0.0
        %2033 = vmatpush2.msra.mxu0 0.0
        %2034 = vmatprep.subr.mxu0 0.0
        %2035 = vmatpush2.msra.mxu0 0.0
        %2036 = vmatprep.subr.mxu0 0.0
        %2037 = vmatpush2.msra.mxu0 0.0
        %2038 = vmatprep.subr.mxu0 0.0
        %2039 = vmatpush2.msra.mxu0 0.0
        %2040 = vmatprep.subr.mxu0 0.0
        %2041 = vmatpush2.msra.mxu0 0.0
        %2042 = vmatprep.subr.mxu0 0.0
        %2043 = vmatpush2.msra.mxu0 0.0
        %2044 = vmatprep.subr.mxu0 0.0
        %2045 = vmatpush2.msra.mxu0 0.0
        %2046 = vmatprep.subr.mxu0 0.0
        %2047 = vmatpush2.msra.mxu0 0.0
        %2048 = vmatprep.subr.mxu0 0.0
        %2049 = vmatpush2.msra.mxu0 0.0
        %2050 = vmatprep.subr.mxu0 0.0
        %2051 = vmatpush2.msra.mxu0 0.0
        %2052 = vmatprep.subr.mxu0 0.0
        %2053 = vmatpush2.msra.mxu0 0.0
        %2054 = vmatprep.subr.mxu0 0.0
        %2055 = vmatpush2.msra.mxu0 0.0
        %2056 = vmatprep.subr.mxu0 0.0
        %2057 = vmatpush2.msra.mxu0 0.0
        %2058 = vmatprep.subr.mxu0 0.0
        %2059 = vmatpush2.msra.mxu0 0.0
        %2060 = vmatprep.subr.mxu0 0.0
        %2061 = vmatpush2.msra.mxu0 0.0
        %2062 = vmatprep.mubr.f32.mxu0 0.0
        %2063 = vmatmul.mubr.f32.gmra.mxu0 %v1981
        %v2064 = vpop.f32.mrf.mxu0
        %v2065 = vadd.f32 %v1997, %v2064
        %v2066 = vpop.f32.mrf.mxu0
        %2067 = vmatprep.mubr.f32.mxu0 0.0
        %2068 = vmatmul.mubr.f32.gmra.mxu0 %v1983
        %v2069 = vpop.f32.mrf.mxu0
        %v2070 = vadd.f32 %v1997, %v2069
        %v2071 = vpop.f32.mrf.mxu0
        %2072 = vmatprep.mubr.f32.mxu0 0.0
        %2073 = vmatmul.mubr.f32.gmra.mxu0 %v1985
        %v2074 = vpop.f32.mrf.mxu0
        %v2075 = vadd.f32 %v1997, %v2074
        %v2076 = vpop.f32.mrf.mxu0
        %2077 = vmatprep.mubr.f32.mxu0 0.0
        %2078 = vmatmul.mubr.f32.gmra.mxu0 %v1987
        %v2079 = vpop.f32.mrf.mxu0
        %v2080 = vadd.f32 %v1997, %v2079
        %v2081 = vpop.f32.mrf.mxu0
        %2082 = vmatprep.mubr.f32.mxu0 0.0
        %2083 = vmatmul.mubr.f32.gmra.mxu0 %v1989
        %v2084 = vpop.f32.mrf.mxu0
        %v2085 = vadd.f32 %v1997, %v2084
        %v2086 = vpop.f32.mrf.mxu0
        %2087 = vmatprep.mubr.f32.mxu0 0.0
        %2088 = vmatmul.mubr.f32.gmra.mxu0 %v1991
        %v2089 = vpop.f32.mrf.mxu0
        %v2090 = vadd.f32 %v1997, %v2089
        %v2091 = vpop.f32.mrf.mxu0
        %2092 = vmatprep.mubr.f32.mxu0 0.0
        %2093 = vmatmul.mubr.f32.gmra.mxu0 %v1993
        %v2094 = vpop.f32.mrf.mxu0
        %v2095 = vadd.f32 %v1997, %v2094
        %v2096 = vpop.f32.mrf.mxu0
        %2097 = vmatprep.mubr.f32.mxu0 0.0
        %2098 = vmatmul.mubr.f32.gmra.mxu0 %v1995
        %v2099 = vpop.f32.mrf.mxu0
        %v2100 = vadd.f32 %v1997, %v2099
        %v2101 = vpop.f32.mrf.mxu0
        %2102 = vdwg.mxu0
        %vm2103 = vcmask 7168
        %2104 = vst.msk [vmem:[%s565] sm:$0xff] %vm2103, %v2065
        %2105 = vst.msk [vmem:[%s565 + $0x8] sm:$0xff] %vm2103, %v2070
        %2106 = vst.msk [vmem:[%s565 + $0x10] sm:$0xff] %vm2103, %v2075
        %2107 = vst.msk [vmem:[%s565 + $0x18] sm:$0xff] %vm2103, %v2080
        %2108 = vst.msk [vmem:[%s565 + $0x20] sm:$0xff] %vm2103, %v2085
        %2109 = vst.msk [vmem:[%s565 + $0x28] sm:$0xff] %vm2103, %v2090
        %2110 = vst.msk [vmem:[%s565 + $0x30] sm:$0xff] %vm2103, %v2095
        %2111 = vst.msk [vmem:[%s565 + $0x38] sm:$0xff] %vm2103, %v2100
        %s2112 = smul.u32 8, %s18
        %p2113 = scmp.lt.s32.totalorder %s2112, 15
        %s2114 = scalar_select %p2113, %s2112, 15
        %s2115 = smul.addr %s2114, 8
        %s2116 = scalar_lea.vmem %s6, %s2115
        // Predicated region
        $region125: #{gat_model_forward.3} parent=111 // pred_check
          %p2117 = pneg %p177
        $region126: #{gat_model_forward.3} parent=111 // pred_check_branch
          %2119 = sbr.rel (%p2117) target = $region128
        $region127: #{gat_model_forward.3} parent=111 // pred_region
          %s2120 = smul.u32 8, %s18
        $region128: #{gat_model_forward.3} parent=111 // pred_fallthru
          _
      $region112: #{gat_model_forward.3} parent=5 // pred_fallthru
        _
      %p2121 = scmp.le.s32.totalorder 2, %s13
      // Predicated region
      $region129: #{gat_model_forward.3} parent=5 // pred_check
        %p2122 = pneg %p2121
      $region130: #{gat_model_forward.3} parent=5 // pred_check_branch
        %2124 = sbr.rel (%p2122) target = $region132
      $region131: #{gat_model_forward.3} parent=5 // pred_region
        %s2125 = ssub.s32 %s13, 2
        // Predicated region
        $region133: #{gat_model_forward.3} parent=131 // pred_check
          %p2126 = pneg %p183
        $region134: #{gat_model_forward.3} parent=131 // pred_check_branch
          %2128 = sbr.rel (%p2126) target = $region136
        $region135: #{gat_model_forward.3} parent=131 // pred_region
          %s2129 = smul.u32 8, %s19
          %p2130 = scmp.lt.s32.totalorder %s2129, 15
          %s2131 = scalar_select %p2130, %s2129, 15
          %s2132 = smul.addr %s2131, 8
          %s2133 = scalar_lea.vmem %s6, %s2132
        $region136: #{gat_model_forward.3} parent=131 // pred_fallthru
          _
      $region132: #{gat_model_forward.3} parent=5 // pred_fallthru
        _
    $region6: #{gat_model_forward.3} parent=1 // loop_footer
      %s17 = sadd.s32 1, %s13
    $region7: #{gat_model_forward.3} parent=1 // loop_footer_branch
      %12 = sbr.rel target = $region3
    $region8: #{gat_model_forward.3} parent=1 // loop_exit
      _
    %2134 = vsyncpa [#allocation5], 1
    %s2135 = scalar_lea.sflag [#allocation5], 1
    %2136 = vsyncpa %s2135, 1

// kernel: gat_model_forward.2
$region0: #{gat_model_forward.2}
  #allocation0 [shape = 'u32[]', space=smem, size = 0x4, offset = 0x4, fixed_abs, tag = 'smem constant byte address 0x4 - core index']
  #allocation1 [shape = 'u32[144,128]{1,0:T(1,128)}', space=vmem, size = 0x12000, scoped, tag = 'internal scratch']
  %s0 = inlined_call_operand.vmem [shape: f32[128,4], index: 0, kind: input, shape index: {}]
  %s1 = inlined_call_operand.vmem [shape: f32[3,128,128], index: 1, kind: input, shape index: {}]
  %s2 = inlined_call_operand.vmem [shape: f32[128,128], index: 2, kind: input, shape index: {}]
  %s3 = inlined_call_operand.vmem [shape: f32[4,30], index: 3, kind: input, shape index: {}]
  %s4 = inlined_call_operand.vmem [shape: f32[4,30], index: 4, kind: input, shape index: {}]
  %s5 = inlined_call_operand.vmem [shape: f32[3,30], index: 5, kind: input, shape index: {}]
  %s6 = inlined_call_operand.vmem [shape: f32[3,30], index: 6, kind: input, shape index: {}]
  %s7 = inlined_call_operand.vmem [shape: f32[30], index: 7, kind: input, shape index: {}]
  %s8 = inlined_call_operand.vmem [shape: f32[3,128,10], index: 8, kind: output, shape index: {}]
  %s9 = sld [smem:[#allocation0]]
  $region145: #{gat_model_forward.2} parent=0
    _
  %s11 = ssub.s32 1, %s9
  %s12 = scalar_select 0, %s11, %s9
  $region1: #{gat_model_forward.2} parent=0
    #allocation2 [shape = 'u8[196608]{0}', space=vmem, size = 0x30000, scoped, tag = 'input window, operand 1']
    #allocation3 [shape = 'u8[2048]{0}', space=smem, size = 0x800, scoped, tag = 'input window, operand 6, single buffered']
    #allocation4 [shape = 's32[2]{0}', space=sflag, size = 0x8, scoped, tag = 'scoped memory for gat_model_forward.2']
    #allocation5 [shape = 'u8[512]{0}', space=smem, size = 0x200, scoped, tag = 'input window, operand 7, single buffered']
    #allocation6 [shape = 's32[1]{0}', space=sflag, size = 0x4, scoped, tag = 'scoped memory for gat_model_forward.2']
    #allocation7 [shape = 'u8[196608]{0}', space=vmem, size = 0x30000, scoped, tag = 'output window, operand 0']
    %13 = vsyncpa [#allocation4], 0
    %14 = vsyncpa [#allocation6], 0
    loop: start=0, step=1, limit=4
    $region2: #{gat_model_forward.2} parent=1 // loop_pre_header
      _
    $region3: #{gat_model_forward.2} parent=1 // loop_header
      %s16 = sphi 0, %s20
      %p17 = scmp.ge.s32.totalorder %s16, 4
      %s24 = sphi 0, %s24
      %s26 = sphi 0, %s24
      %s27 = sphi 0, %s26
      %s41 = sphi 0, %s27
      %s47 = sphi 0, %s49
      %s50 = sphi 0, %s47
      %s51 = sphi 0, %s50
      %s67 = sphi 0, %s51
      %s73 = sphi 0, %s75
      %s76 = sphi 0, %s73
      %s77 = sphi 0, %s76
      %s93 = sphi 0, %s77
      %s97 = sphi 0, %s97
      %s99 = sphi 0, %s97
      %s100 = sphi 0, %s99
      %s114 = sphi 0, %s100
      %s118 = sphi 0, %s118
      %s120 = sphi 0, %s118
      %s121 = sphi 0, %s120
      %s135 = sphi 0, %s121
      %s139 = sphi 0, %s139
      %s141 = sphi 0, %s139
      %s142 = sphi 0, %s141
      %s156 = sphi 0, %s142
      %s160 = sphi 0, %s160
      %s162 = sphi 0, %s160
      %s163 = sphi 0, %s162
      %s177 = sphi 0, %s163
      %s181 = sphi 0, %s181
      %s183 = sphi 0, %s181
      %s184 = sphi 0, %s183
      %s198 = sphi 0, %s184
      %s204 = sphi 0, %s206
      %s207 = sphi 0, %s204
      %s208 = sphi 0, %s207
      %s224 = sphi 0, %s208
    $region4: #{gat_model_forward.2} parent=1 // loop_header_branch
      %19 = sbr.rel (%p17) target = $region8
    $region5: #{gat_model_forward.2} parent=1 // loop_body
      %s21 = ssub.s32 %s16, 1
      %s22 = ssub.s32 %s16, 2
      %s23 = sadd.s32 %s16, 1
      %s25 = sadd.s32 %s24, 1
      %p28 = scmp.eq.s32.totalorder %s16, 1
      %p29 = scmp.ne.s32.totalorder %s24, %s26
      %p30 = scmp.eq.s32.totalorder %s16, 0
      %p31 = por %p29, %p30
      %p32 = scmp.ne.s32.totalorder %s24, %s26
      %p33 = scmp.eq.s32.totalorder %s21, 1
      %p34 = por %p32, %p33
      %p35 = scmp.ne.s32.totalorder %s26, %s27
      %p36 = scmp.eq.s32.totalorder %s21, 0
      %p37 = por %p35, %p36
      %p38 = scmp.ne.s32.totalorder %s26, %s27
      %p39 = scmp.eq.s32.totalorder %s22, 1
      %p40 = por %p38, %p39
      %p42 = scmp.ne.s32.totalorder %s27, %s41
      %p43 = scmp.eq.s32.totalorder %s22, 0
      %p44 = por %p42, %p43
      %s45 = ssub.s32 %s16, %s23
      %p46 = scmp.eq.s32.totalorder %s45, 0
      %s48 = sadd.s32 %s47, 1
      %s49 = scalar_select %p46, %s47, %s48
      %p52 = pneg %p46
      %p53 = scmp.eq.s32.totalorder %s16, 1
      %p54 = por %p52, %p53
      %p55 = scmp.ne.s32.totalorder %s47, %s50
      %p56 = scmp.eq.s32.totalorder %s16, 0
      %p57 = por %p55, %p56
      %p58 = scmp.ne.s32.totalorder %s47, %s50
      %p59 = scmp.eq.s32.totalorder %s21, 1
      %p60 = por %p58, %p59
      %p61 = scmp.ne.s32.totalorder %s50, %s51
      %p62 = scmp.eq.s32.totalorder %s21, 0
      %p63 = por %p61, %p62
      %p64 = scmp.ne.s32.totalorder %s50, %s51
      %p65 = scmp.eq.s32.totalorder %s22, 1
      %p66 = por %p64, %p65
      %p68 = scmp.ne.s32.totalorder %s51, %s67
      %p69 = scmp.eq.s32.totalorder %s22, 0
      %p70 = por %p68, %p69
      %s71 = ssub.s32 %s16, %s23
      %p72 = scmp.eq.s32.totalorder %s71, 0
      %s74 = sadd.s32 %s73, 1
      %s75 = scalar_select %p72, %s73, %s74
      %p78 = pneg %p72
      %p79 = scmp.eq.s32.totalorder %s16, 1
      %p80 = por %p78, %p79
      %p81 = scmp.ne.s32.totalorder %s73, %s76
      %p82 = scmp.eq.s32.totalorder %s16, 0
      %p83 = por %p81, %p82
      %p84 = scmp.ne.s32.totalorder %s73, %s76
      %p85 = scmp.eq.s32.totalorder %s21, 1
      %p86 = por %p84, %p85
      %p87 = scmp.ne.s32.totalorder %s76, %s77
      %p88 = scmp.eq.s32.totalorder %s21, 0
      %p89 = por %p87, %p88
      %p90 = scmp.ne.s32.totalorder %s76, %s77
      %p91 = scmp.eq.s32.totalorder %s22, 1
      %p92 = por %p90, %p91
      %p94 = scmp.ne.s32.totalorder %s77, %s93
      %p95 = scmp.eq.s32.totalorder %s22, 0
      %p96 = por %p94, %p95
      %s98 = sadd.s32 %s97, 1
      %p101 = scmp.eq.s32.totalorder %s16, 1
      %p102 = scmp.ne.s32.totalorder %s97, %s99
      %p103 = scmp.eq.s32.totalorder %s16, 0
      %p104 = por %p102, %p103
      %p105 = scmp.ne.s32.totalorder %s97, %s99
      %p106 = scmp.eq.s32.totalorder %s21, 1
      %p107 = por %p105, %p106
      %p108 = scmp.ne.s32.totalorder %s99, %s100
      %p109 = scmp.eq.s32.totalorder %s21, 0
      %p110 = por %p108, %p109
      %p111 = scmp.ne.s32.totalorder %s99, %s100
      %p112 = scmp.eq.s32.totalorder %s22, 1
      %p113 = por %p111, %p112
      %p115 = scmp.ne.s32.totalorder %s100, %s114
      %p116 = scmp.eq.s32.totalorder %s22, 0
      %p117 = por %p115, %p116
      %s119 = sadd.s32 %s118, 1
      %p122 = scmp.eq.s32.totalorder %s16, 1
      %p123 = scmp.ne.s32.totalorder %s118, %s120
      %p124 = scmp.eq.s32.totalorder %s16, 0
      %p125 = por %p123, %p124
      %p126 = scmp.ne.s32.totalorder %s118, %s120
      %p127 = scmp.eq.s32.totalorder %s21, 1
      %p128 = por %p126, %p127
      %p129 = scmp.ne.s32.totalorder %s120, %s121
      %p130 = scmp.eq.s32.totalorder %s21, 0
      %p131 = por %p129, %p130
      %p132 = scmp.ne.s32.totalorder %s120, %s121
      %p133 = scmp.eq.s32.totalorder %s22, 1
      %p134 = por %p132, %p133
      %p136 = scmp.ne.s32.totalorder %s121, %s135
      %p137 = scmp.eq.s32.totalorder %s22, 0
      %p138 = por %p136, %p137
      %s140 = sadd.s32 %s139, 1
      %p143 = scmp.eq.s32.totalorder %s16, 1
      %p144 = scmp.ne.s32.totalorder %s139, %s141
      %p145 = scmp.eq.s32.totalorder %s16, 0
      %p146 = por %p144, %p145
      %p147 = scmp.ne.s32.totalorder %s139, %s141
      %p148 = scmp.eq.s32.totalorder %s21, 1
      %p149 = por %p147, %p148
      %p150 = scmp.ne.s32.totalorder %s141, %s142
      %p151 = scmp.eq.s32.totalorder %s21, 0
      %p152 = por %p150, %p151
      %p153 = scmp.ne.s32.totalorder %s141, %s142
      %p154 = scmp.eq.s32.totalorder %s22, 1
      %p155 = por %p153, %p154
      %p157 = scmp.ne.s32.totalorder %s142, %s156
      %p158 = scmp.eq.s32.totalorder %s22, 0
      %p159 = por %p157, %p158
      %s161 = sadd.s32 %s160, 1
      %p164 = scmp.eq.s32.totalorder %s16, 1
      %p165 = scmp.ne.s32.totalorder %s160, %s162
      %p166 = scmp.eq.s32.totalorder %s16, 0
      %p167 = por %p165, %p166
      %p168 = scmp.ne.s32.totalorder %s160, %s162
      %p169 = scmp.eq.s32.totalorder %s21, 1
      %p170 = por %p168, %p169
      %p171 = scmp.ne.s32.totalorder %s162, %s163
      %p172 = scmp.eq.s32.totalorder %s21, 0
      %p173 = por %p171, %p172
      %p174 = scmp.ne.s32.totalorder %s162, %s163
      %p175 = scmp.eq.s32.totalorder %s22, 1
      %p176 = por %p174, %p175
      %p178 = scmp.ne.s32.totalorder %s163, %s177
      %p179 = scmp.eq.s32.totalorder %s22, 0
      %p180 = por %p178, %p179
      %s182 = sadd.s32 %s181, 1
      %p185 = scmp.eq.s32.totalorder %s16, 1
      %p186 = scmp.ne.s32.totalorder %s181, %s183
      %p187 = scmp.eq.s32.totalorder %s16, 0
      %p188 = por %p186, %p187
      %p189 = scmp.ne.s32.totalorder %s181, %s183
      %p190 = scmp.eq.s32.totalorder %s21, 1
      %p191 = por %p189, %p190
      %p192 = scmp.ne.s32.totalorder %s183, %s184
      %p193 = scmp.eq.s32.totalorder %s21, 0
      %p194 = por %p192, %p193
      %p195 = scmp.ne.s32.totalorder %s183, %s184
      %p196 = scmp.eq.s32.totalorder %s22, 1
      %p197 = por %p195, %p196
      %p199 = scmp.ne.s32.totalorder %s184, %s198
      %p200 = scmp.eq.s32.totalorder %s22, 0
      %p201 = por %p199, %p200
      %s202 = ssub.s32 %s16, %s23
      %p203 = scmp.eq.s32.totalorder %s202, 0
      %s205 = sadd.s32 %s204, 1
      %s206 = scalar_select %p203, %s204, %s205
      %p209 = pneg %p203
      %p210 = scmp.eq.s32.totalorder %s16, 1
      %p211 = por %p209, %p210
      %p212 = scmp.ne.s32.totalorder %s204, %s207
      %p213 = scmp.eq.s32.totalorder %s16, 0
      %p214 = por %p212, %p213
      %p215 = scmp.ne.s32.totalorder %s204, %s207
      %p216 = scmp.eq.s32.totalorder %s21, 1
      %p217 = por %p215, %p216
      %p218 = scmp.ne.s32.totalorder %s207, %s208
      %p219 = scmp.eq.s32.totalorder %s21, 0
      %p220 = por %p218, %p219
      %p221 = scmp.ne.s32.totalorder %s207, %s208
      %p222 = scmp.eq.s32.totalorder %s22, 1
      %p223 = por %p221, %p222
      %p225 = scmp.ne.s32.totalorder %s208, %s224
      %p226 = scmp.eq.s32.totalorder %s22, 0
      %p227 = por %p225, %p226
      %p228 = scmp.le.s32.totalorder 1, %s16
      %p229 = scmp.lt.s32.totalorder %s16, 3
      %p230 = pnand %p228, %p229
      %p231 = pneg %p230
      // Predicated region
      $region9: #{gat_model_forward.2} parent=5 // pred_check
        _
      $region10: #{gat_model_forward.2} parent=5 // pred_check_branch
        %233 = sbr.rel (%p230) target = $region12
      $region11: #{gat_model_forward.2} parent=5 // pred_region
        %s234 = ssub.s32 %s16, 1
        // Predicated region
        $region13: #{gat_model_forward.2} parent=11 // pred_check
          %p235 = pneg %p37
        $region14: #{gat_model_forward.2} parent=11 // pred_check_branch
          %237 = sbr.rel (%p235) target = $region16
        $region15: #{gat_model_forward.2} parent=11 // pred_region
          _
        $region16: #{gat_model_forward.2} parent=11 // pred_fallthru
          _
        // Predicated region
        $region17: #{gat_model_forward.2} parent=11 // pred_check
          %p238 = pneg %p110
        $region18: #{gat_model_forward.2} parent=11 // pred_check_branch
          %240 = sbr.rel (%p238) target = $region20
        $region19: #{gat_model_forward.2} parent=11 // pred_region
          _
        $region20: #{gat_model_forward.2} parent=11 // pred_fallthru
          _
        // Predicated region
        $region21: #{gat_model_forward.2} parent=11 // pred_check
          %p241 = pneg %p131
        $region22: #{gat_model_forward.2} parent=11 // pred_check_branch
          %243 = sbr.rel (%p241) target = $region24
        $region23: #{gat_model_forward.2} parent=11 // pred_region
          _
        $region24: #{gat_model_forward.2} parent=11 // pred_fallthru
          _
        // Predicated region
        $region25: #{gat_model_forward.2} parent=11 // pred_check
          %p244 = pneg %p152
        $region26: #{gat_model_forward.2} parent=11 // pred_check_branch
          %246 = sbr.rel (%p244) target = $region28
        $region27: #{gat_model_forward.2} parent=11 // pred_region
          _
        $region28: #{gat_model_forward.2} parent=11 // pred_fallthru
          _
        // Predicated region
        $region29: #{gat_model_forward.2} parent=11 // pred_check
          %p247 = pneg %p173
        $region30: #{gat_model_forward.2} parent=11 // pred_check_branch
          %249 = sbr.rel (%p247) target = $region32
        $region31: #{gat_model_forward.2} parent=11 // pred_region
          %s251 = ssub.s32 64, 64
          %252 = vsyncadd [#allocation4], %s251
          %s254 = sshll.u32 %s6, 4
          %s255 = int_to_ptr.vmem [resolvable:$true] %s254
          %257 = dma.vmem_to_smem %s255, 64, [#allocation3], [#allocation4]
        $region32: #{gat_model_forward.2} parent=11 // pred_fallthru
          _
        // Predicated region
        $region33: #{gat_model_forward.2} parent=11 // pred_check
          %p258 = pneg %p194
        $region34: #{gat_model_forward.2} parent=11 // pred_check_branch
          %260 = sbr.rel (%p258) target = $region36
        $region35: #{gat_model_forward.2} parent=11 // pred_region
          %s262 = ssub.s32 16, 16
          %263 = vsyncadd [#allocation6], %s262
          %s265 = sshll.u32 %s7, 4
          %s266 = int_to_ptr.vmem [resolvable:$true] %s265
          %268 = dma.vmem_to_smem %s266, 16, [#allocation5], [#allocation6]
        $region36: #{gat_model_forward.2} parent=11 // pred_fallthru
          _
      $region12: #{gat_model_forward.2} parent=5 // pred_fallthru
        _
      %p269 = scmp.lt.s32.totalorder %s16, 2
      // Predicated region
      $region37: #{gat_model_forward.2} parent=5 // pred_check
        %p270 = pneg %p269
      $region38: #{gat_model_forward.2} parent=5 // pred_check_branch
        %272 = sbr.rel (%p270) target = $region40
      $region39: #{gat_model_forward.2} parent=5 // pred_region
        // Predicated region
        $region41: #{gat_model_forward.2} parent=39 // pred_check
          %p273 = pneg %p57
        $region42: #{gat_model_forward.2} parent=39 // pred_check_branch
          %275 = sbr.rel (%p273) target = $region44
        $region43: #{gat_model_forward.2} parent=39 // pred_region
          %s276 = sand.u32 %s47, 1
          %s277 = sand.u32 %s47, 1
          %s278 = smul.addr %s277, 192
          %s279 = scalar_lea.vmem [#allocation2], %s278
          %s280 = smul.u32 8, %s16
          %s281 = smul.addr %s280, 8
          %s282 = scalar_lea.vmem %s1, %s281
          // Predicated region
          $region45: #{gat_model_forward.2} parent=43 // pred_check
            _
          $region46: #{gat_model_forward.2} parent=43 // pred_check_branch
            %284 = sbr.rel (0) target = $region48
          $region47: #{gat_model_forward.2} parent=43 // pred_region
            // Predicated region
            $region49: #{gat_model_forward.2} parent=47 // pred_check
              _
            $region50: #{gat_model_forward.2} parent=47 // pred_check_branch
              %286 = sbr.rel (0) target = $region52
            $region51: #{gat_model_forward.2} parent=47 // pred_region
              // Predicated region
              $region64: #{gat_model_forward.2} parent=51 // pred_check
                _
              $region65: #{gat_model_forward.2} parent=51 // pred_check_branch
                %348 = sbr.rel (0) target = $region67
              $region66: #{gat_model_forward.2} parent=51 // pred_region
                loop: start=0, step=1, limit=1
                $region68: #{gat_model_forward.2} parent=66 // loop_pre_header
                  _
                $region69: #{gat_model_forward.2} parent=66 // loop_header
                  %s350 = sphi 0, %s354
                  %p351 = scmp.ge.s32.totalorder %s350, 1
                  %s355 = sphi %s282, %s282
                  %s356 = sphi %s279, %s279
                $region70: #{gat_model_forward.2} parent=66 // loop_header_branch
                  %353 = sbr.rel (%p351) target = $region74
                $region71: #{gat_model_forward.2} parent=66 // loop_body
                  %v357 = vld [vmem:[%s355] sm:$0xff]
                  %358 = vst [vmem:[%s356] sm:$0xff] %v357
                  %v359 = vld [vmem:[%s355 + $0x8] sm:$0xff]
                  %360 = vst [vmem:[%s356 + $0x8] sm:$0xff] %v359
                  %v361 = vld [vmem:[%s355 + $0x10] sm:$0xff]
                  %362 = vst [vmem:[%s356 + $0x10] sm:$0xff] %v361
                  %v363 = vld [vmem:[%s355 + $0x18] sm:$0xff]
                  %364 = vst [vmem:[%s356 + $0x18] sm:$0xff] %v363
                  %v365 = vld [vmem:[%s355 + $0x20] sm:$0xff]
                  %366 = vst [vmem:[%s356 + $0x20] sm:$0xff] %v365
                  %v367 = vld [vmem:[%s355 + $0x28] sm:$0xff]
                  %368 = vst [vmem:[%s356 + $0x28] sm:$0xff] %v367
                  %v369 = vld [vmem:[%s355 + $0x30] sm:$0xff]
                  %370 = vst [vmem:[%s356 + $0x30] sm:$0xff] %v369
                  %v371 = vld [vmem:[%s355 + $0x38] sm:$0xff]
                  %372 = vst [vmem:[%s356 + $0x38] sm:$0xff] %v371
                  %v373 = vld [vmem:[%s355 + $0x80] sm:$0xff]
                  %374 = vst [vmem:[%s356 + $0x40] sm:$0xff] %v373
                  %v375 = vld [vmem:[%s355 + $0x88] sm:$0xff]
                  %376 = vst [vmem:[%s356 + $0x48] sm:$0xff] %v375
                  %v377 = vld [vmem:[%s355 + $0x90] sm:$0xff]
                  %378 = vst [vmem:[%s356 + $0x50] sm:$0xff] %v377
                  %v379 = vld [vmem:[%s355 + $0x98] sm:$0xff]
                  %380 = vst [vmem:[%s356 + $0x58] sm:$0xff] %v379
                  %v381 = vld [vmem:[%s355 + $0xa0] sm:$0xff]
                  %382 = vst [vmem:[%s356 + $0x60] sm:$0xff] %v381
                  %v383 = vld [vmem:[%s355 + $0xa8] sm:$0xff]
                  %384 = vst [vmem:[%s356 + $0x68] sm:$0xff] %v383
                  %v385 = vld [vmem:[%s355 + $0xb0] sm:$0xff]
                  %386 = vst [vmem:[%s356 + $0x70] sm:$0xff] %v385
                  %v387 = vld [vmem:[%s355 + $0xb8] sm:$0xff]
                  %388 = vst [vmem:[%s356 + $0x78] sm:$0xff] %v387
                  %v389 = vld [vmem:[%s355 + $0x100] sm:$0xff]
                  %390 = vst [vmem:[%s356 + $0x80] sm:$0xff] %v389
                  %v391 = vld [vmem:[%s355 + $0x108] sm:$0xff]
                  %392 = vst [vmem:[%s356 + $0x88] sm:$0xff] %v391
                  %v393 = vld [vmem:[%s355 + $0x110] sm:$0xff]
                  %394 = vst [vmem:[%s356 + $0x90] sm:$0xff] %v393
                  %v395 = vld [vmem:[%s355 + $0x118] sm:$0xff]
                  %396 = vst [vmem:[%s356 + $0x98] sm:$0xff] %v395
                  %v397 = vld [vmem:[%s355 + $0x120] sm:$0xff]
                  %398 = vst [vmem:[%s356 + $0xa0] sm:$0xff] %v397
                  %v399 = vld [vmem:[%s355 + $0x128] sm:$0xff]
                  %400 = vst [vmem:[%s356 + $0xa8] sm:$0xff] %v399
                  %v401 = vld [vmem:[%s355 + $0x130] sm:$0xff]
                  %402 = vst [vmem:[%s356 + $0xb0] sm:$0xff] %v401
                  %v403 = vld [vmem:[%s355 + $0x138] sm:$0xff]
                  %404 = vst [vmem:[%s356 + $0xb8] sm:$0xff] %v403
                $region72: #{gat_model_forward.2} parent=66 // loop_footer
                  %s354 = sadd.s32 1, %s350
                $region73: #{gat_model_forward.2} parent=66 // loop_footer_branch
                  %349 = sbr.rel target = $region69
                $region74: #{gat_model_forward.2} parent=66 // loop_exit
                  _
              $region67: #{gat_model_forward.2} parent=51 // pred_fallthru
                _
              // Predicated region
              $region75: #{gat_model_forward.2} parent=51 // pred_check
                _
              $region76: #{gat_model_forward.2} parent=51 // pred_check_branch
                %406 = sbr.rel target = $region78
              $region77: #{gat_model_forward.2} parent=51 // pred_region
                _
              $region78: #{gat_model_forward.2} parent=51 // pred_fallthru
                _
            $region52: #{gat_model_forward.2} parent=47 // pred_fallthru
              _
            // Predicated region
            $region53: #{gat_model_forward.2} parent=47 // pred_check
              _
            $region54: #{gat_model_forward.2} parent=47 // pred_check_branch
              %288 = sbr.rel target = $region56
            $region55: #{gat_model_forward.2} parent=47 // pred_region
              %s290 = ssub.s32 256, 1
              loop: start=0, step=1, limit=1
              $region57: #{gat_model_forward.2} parent=55 // loop_pre_header
                _
              $region58: #{gat_model_forward.2} parent=55 // loop_header
                %s292 = sphi 0, %s296
                %p293 = scmp.ge.s32.totalorder %s292, 1
                %s297 = sphi %s282, %s282
                %s298 = sphi %s279, %s279
              $region59: #{gat_model_forward.2} parent=55 // loop_header_branch
                %295 = sbr.rel (%p293) target = $region63
              $region60: #{gat_model_forward.2} parent=55 // loop_body
                %v299 = vld [vmem:[%s297] sm:%s290]
                %300 = vst [vmem:[%s298] sm:%s290] %v299
                %v301 = vld [vmem:[%s297 + $0x8] sm:%s290]
                %302 = vst [vmem:[%s298 + $0x8] sm:%s290] %v301
                %v303 = vld [vmem:[%s297 + $0x10] sm:%s290]
                %304 = vst [vmem:[%s298 + $0x10] sm:%s290] %v303
                %v305 = vld [vmem:[%s297 + $0x18] sm:%s290]
                %306 = vst [vmem:[%s298 + $0x18] sm:%s290] %v305
                %v307 = vld [vmem:[%s297 + $0x20] sm:%s290]
                %308 = vst [vmem:[%s298 + $0x20] sm:%s290] %v307
                %v309 = vld [vmem:[%s297 + $0x28] sm:%s290]
                %310 = vst [vmem:[%s298 + $0x28] sm:%s290] %v309
                %v311 = vld [vmem:[%s297 + $0x30] sm:%s290]
                %312 = vst [vmem:[%s298 + $0x30] sm:%s290] %v311
                %v313 = vld [vmem:[%s297 + $0x38] sm:%s290]
                %314 = vst [vmem:[%s298 + $0x38] sm:%s290] %v313
                %v315 = vld [vmem:[%s297 + $0x80] sm:%s290]
                %316 = vst [vmem:[%s298 + $0x40] sm:%s290] %v315
                %v317 = vld [vmem:[%s297 + $0x88] sm:%s290]
                %318 = vst [vmem:[%s298 + $0x48] sm:%s290] %v317
                %v319 = vld [vmem:[%s297 + $0x90] sm:%s290]
                %320 = vst [vmem:[%s298 + $0x50] sm:%s290] %v319
                %v321 = vld [vmem:[%s297 + $0x98] sm:%s290]
                %322 = vst [vmem:[%s298 + $0x58] sm:%s290] %v321
                %v323 = vld [vmem:[%s297 + $0xa0] sm:%s290]
                %324 = vst [vmem:[%s298 + $0x60] sm:%s290] %v323
                %v325 = vld [vmem:[%s297 + $0xa8] sm:%s290]
                %326 = vst [vmem:[%s298 + $0x68] sm:%s290] %v325
                %v327 = vld [vmem:[%s297 + $0xb0] sm:%s290]
                %328 = vst [vmem:[%s298 + $0x70] sm:%s290] %v327
                %v329 = vld [vmem:[%s297 + $0xb8] sm:%s290]
                %330 = vst [vmem:[%s298 + $0x78] sm:%s290] %v329
                %v331 = vld [vmem:[%s297 + $0x100] sm:%s290]
                %332 = vst [vmem:[%s298 + $0x80] sm:%s290] %v331
                %v333 = vld [vmem:[%s297 + $0x108] sm:%s290]
                %334 = vst [vmem:[%s298 + $0x88] sm:%s290] %v333
                %v335 = vld [vmem:[%s297 + $0x110] sm:%s290]
                %336 = vst [vmem:[%s298 + $0x90] sm:%s290] %v335
                %v337 = vld [vmem:[%s297 + $0x118] sm:%s290]
                %338 = vst [vmem:[%s298 + $0x98] sm:%s290] %v337
                %v339 = vld [vmem:[%s297 + $0x120] sm:%s290]
                %340 = vst [vmem:[%s298 + $0xa0] sm:%s290] %v339
                %v341 = vld [vmem:[%s297 + $0x128] sm:%s290]
                %342 = vst [vmem:[%s298 + $0xa8] sm:%s290] %v341
                %v343 = vld [vmem:[%s297 + $0x130] sm:%s290]
                %344 = vst [vmem:[%s298 + $0xb0] sm:%s290] %v343
                %v345 = vld [vmem:[%s297 + $0x138] sm:%s290]
                %346 = vst [vmem:[%s298 + $0xb8] sm:%s290] %v345
              $region61: #{gat_model_forward.2} parent=55 // loop_footer
                %s296 = sadd.s32 1, %s292
              $region62: #{gat_model_forward.2} parent=55 // loop_footer_branch
                %291 = sbr.rel target = $region58
              $region63: #{gat_model_forward.2} parent=55 // loop_exit
                _
            $region56: #{gat_model_forward.2} parent=47 // pred_fallthru
              _
          $region48: #{gat_model_forward.2} parent=43 // pred_fallthru
            _
          %407 = vnop
        $region44: #{gat_model_forward.2} parent=39 // pred_fallthru
          _
        // Predicated region
        $region79: #{gat_model_forward.2} parent=39 // pred_check
          %p408 = pneg %p83
        $region80: #{gat_model_forward.2} parent=39 // pred_check_branch
          %410 = sbr.rel (%p408) target = $region82
        $region81: #{gat_model_forward.2} parent=39 // pred_region
          %s411 = smul.u32 8, %s16
          %p412 = scmp.lt.s32.totalorder %s411, 15
          %s413 = scalar_select %p412, %s411, 15
          %s414 = smul.addr %s413, 8
          %s415 = scalar_lea.vmem %s2, %s414
          %s416 = smul.u32 8, %s16
        $region82: #{gat_model_forward.2} parent=39 // pred_fallthru
          _
      $region40: #{gat_model_forward.2} parent=5 // pred_fallthru
        _
      %p417 = scmp.le.s32.totalorder 1, %s16
      %p418 = scmp.lt.s32.totalorder %s16, 3
      %p419 = pnand %p417, %p418
      %p420 = pneg %p419
      // Predicated region
      $region83: #{gat_model_forward.2} parent=5 // pred_check
        _
      $region84: #{gat_model_forward.2} parent=5 // pred_check_branch
        %422 = sbr.rel (%p419) target = $region86
      $region85: #{gat_model_forward.2} parent=5 // pred_region
        %s423 = ssub.s32 %s16, 1
        %s424 = sand.u32 %s50, 1
        %s425 = sand.u32 %s50, 1
        %s426 = smul.addr %s425, 192
        %s427 = scalar_lea.vmem [#allocation2], %s426
        // Predicated region
        $region87: #{gat_model_forward.2} parent=85 // pred_check
          %p428 = pneg %p63
        $region88: #{gat_model_forward.2} parent=85 // pred_check_branch
          %430 = sbr.rel (%p428) target = $region90
        $region89: #{gat_model_forward.2} parent=85 // pred_region
          _
        $region90: #{gat_model_forward.2} parent=85 // pred_fallthru
          _
        // Predicated region
        $region91: #{gat_model_forward.2} parent=85 // pred_check
          %p431 = pneg %p173
        $region92: #{gat_model_forward.2} parent=85 // pred_check_branch
          %433 = sbr.rel (%p431) target = $region94
        $region93: #{gat_model_forward.2} parent=85 // pred_region
          %434 = dma.done [#allocation4], 64
        $region94: #{gat_model_forward.2} parent=85 // pred_fallthru
          _
        // Predicated region
        $region95: #{gat_model_forward.2} parent=85 // pred_check
          %p435 = pneg %p194
        $region96: #{gat_model_forward.2} parent=85 // pred_check_branch
          %437 = sbr.rel (%p435) target = $region98
        $region97: #{gat_model_forward.2} parent=85 // pred_region
          %438 = dma.done [#allocation6], 16
        $region98: #{gat_model_forward.2} parent=85 // pred_fallthru
          _
        %439 = sfence
        %p440 = pneg %p37
        %p441 = pneg %p34
        %s442 = sand.u32 %s50, 1
        %s443 = sand.u32 %s50, 1
        %s444 = smul.addr %s443, 192
        %s445 = scalar_lea.vmem [#allocation2], %s444
        %p446 = pneg %p63
        %p447 = pneg %p60
        %s448 = smul.u32 8, %s21
        %p449 = scmp.lt.s32.totalorder %s448, 15
        %s450 = scalar_select %p449, %s448, 15
        %s451 = smul.addr %s450, 8
        %s452 = scalar_lea.vmem %s2, %s451
        %p453 = pneg %p89
        %p454 = pneg %p86
        %p455 = pneg %p110
        %p456 = pneg %p107
        %p457 = pneg %p131
        %p458 = pneg %p128
        %p459 = pneg %p152
        %p460 = pneg %p149
        %p461 = pneg %p173
        %p462 = pneg %p170
        %p463 = pneg %p194
        %p464 = pneg %p191
        %p465 = pneg %p220
        %p466 = pneg %p217
        %s467 = sand.u32 %s207, 1
        %s468 = sand.u32 %s207, 1
        %s469 = smul.addr %s468, 192
        %s470 = scalar_lea.vmem [#allocation7], %s469
        %s471 = smul.u32 8, %s21
        %s472 = smul.u32 8, %s21
        %p473 = scmp.lt.s32.totalorder %s472, 15
        %s474 = scalar_select %p473, %s472, 15
        %s475 = smul.addr %s474, 8
        %s476 = scalar_lea.vmem %s2, %s475
        %s477 = smul.u32 8, %s21
        %s478 = smul.u32 8, %s21
        %s479 = smul.u32 %s21, 64
        %v480 = vld [vmem:[%s0] sm:$0xff]
        %v481 = vld [vmem:[%s0 + $0x8] sm:$0xff]
        %v482 = vld [vmem:[%s0 + $0x10] sm:$0xff]
        %v483 = vld [vmem:[%s0 + $0x18] sm:$0xff]
        %v484 = vld [vmem:[%s0 + $0x20] sm:$0xff]
        %v485 = vld [vmem:[%s0 + $0x28] sm:$0xff]
        %v486 = vld [vmem:[%s0 + $0x30] sm:$0xff]
        %v487 = vld [vmem:[%s0 + $0x38] sm:$0xff]
        %v488 = vld [vmem:[%s0 + $0x40] sm:$0xff]
        %v489 = vld [vmem:[%s0 + $0x48] sm:$0xff]
        %v490 = vld [vmem:[%s0 + $0x50] sm:$0xff]
        %v491 = vld [vmem:[%s0 + $0x58] sm:$0xff]
        %v492 = vld [vmem:[%s0 + $0x60] sm:$0xff]
        %v493 = vld [vmem:[%s0 + $0x68] sm:$0xff]
        %v494 = vld [vmem:[%s0 + $0x70] sm:$0xff]
        %v495 = vld [vmem:[%s0 + $0x78] sm:$0xff]
        %v496 = vld [vmem:[%s5] sm:$0x1]
        %v497 = vld [vmem:[%s5 + $0x1] sm:$0x1]
        %v498 = vld [vmem:[%s5 + $0x2] sm:$0x1]
        %v499 = vld [vmem:[%s3] sm:$0xf]
        %v500 = vlaneseq
        %v501 = vshrl.u32 %v500, 7
        %v502 = vsub.s32 0, %v501
        %v503 = vrot.slane %v496, %v502
        %vm504 = vcmask 31744
        %v506 = vsel %vm504, %v480, 0
        %v509 = vsel %vm504, %v481, 0
        %v512 = vsel %vm504, %v482, 0
        %v515 = vsel %vm504, %v483, 0
        %v518 = vsel %vm504, %v484, 0
        %v521 = vsel %vm504, %v485, 0
        %v524 = vsel %vm504, %v486, 0
        %v527 = vsel %vm504, %v487, 0
        %v530 = vsel %vm504, %v488, 0
        %v533 = vsel %vm504, %v489, 0
        %v536 = vsel %vm504, %v490, 0
        %v539 = vsel %vm504, %v491, 0
        %v542 = vsel %vm504, %v492, 0
        %v545 = vsel %vm504, %v493, 0
        %v548 = vsel %vm504, %v494, 0
        %v551 = vsel %vm504, %v495, 0
        %vm553 = vcmask 1043456
        %v555 = vsel %vm553, %v499, 0
        %557 = vmatprep.subr.mxu0 0.0
        %558 = vmatpush1.msra.mxu0 0.0
        %559 = vmatprep.subr.mxu0 0.0
        %560 = vmatpush1.msra.mxu0 0.0
        %561 = vmatprep.subr.mxu0 0.0
        %562 = vmatpush1.msra.mxu0 0.0
        %563 = vmatprep.subr.mxu0 0.0
        %564 = vmatpush1.msra.mxu0 0.0
        %565 = vmatprep.subr.mxu0 0.0
        %566 = vmatpush1.msra.mxu0 0.0
        %567 = vmatprep.subr.mxu0 0.0
        %568 = vmatpush1.msra.mxu0 0.0
        %569 = vmatprep.subr.mxu0 0.0
        %570 = vmatpush1.msra.mxu0 0.0
        %571 = vmatprep.subr.mxu0 0.0
        %572 = vmatpush1.msra.mxu0 0.0
        %573 = vmatprep.subr.mxu0 0.0
        %574 = vmatpush1.msra.mxu0 0.0
        %575 = vmatprep.subr.mxu0 0.0
        %576 = vmatpush1.msra.mxu0 0.0
        %577 = vmatprep.subr.mxu0 0.0
        %578 = vmatpush1.msra.mxu0 0.0
        %579 = vmatprep.subr.mxu0 0.0
        %580 = vmatpush1.msra.mxu0 0.0
        %581 = vmatprep.subr.mxu0 0.0
        %582 = vmatpush1.msra.mxu0 0.0
        %583 = vmatprep.subr.mxu0 0.0
        %584 = vmatpush1.msra.mxu0 0.0
        %585 = vmatprep.subr.mxu0 0.0
        %586 = vmatpush1.msra.mxu0 0.0
        %587 = vmatprep.subr.mxu0 0.0
        %588 = vmatpush1.msra.mxu0 %v555
        %589 = vmatprep.subr.mxu0 0.0
        %590 = vmatpush2.msra.mxu0 0.0
        %591 = vmatprep.subr.mxu0 0.0
        %592 = vmatpush2.msra.mxu0 0.0
        %593 = vmatprep.subr.mxu0 0.0
        %594 = vmatpush2.msra.mxu0 0.0
        %595 = vmatprep.subr.mxu0 0.0
        %596 = vmatpush2.msra.mxu0 0.0
        %597 = vmatprep.subr.mxu0 0.0
        %598 = vmatpush2.msra.mxu0 0.0
        %599 = vmatprep.subr.mxu0 0.0
        %600 = vmatpush2.msra.mxu0 0.0
        %601 = vmatprep.subr.mxu0 0.0
        %602 = vmatpush2.msra.mxu0 0.0
        %603 = vmatprep.subr.mxu0 0.0
        %604 = vmatpush2.msra.mxu0 0.0
        %605 = vmatprep.subr.mxu0 0.0
        %606 = vmatpush2.msra.mxu0 0.0
        %607 = vmatprep.subr.mxu0 0.0
        %608 = vmatpush2.msra.mxu0 0.0
        %609 = vmatprep.subr.mxu0 0.0
        %610 = vmatpush2.msra.mxu0 0.0
        %611 = vmatprep.subr.mxu0 0.0
        %612 = vmatpush2.msra.mxu0 0.0
        %613 = vmatprep.subr.mxu0 0.0
        %614 = vmatpush2.msra.mxu0 0.0
        %615 = vmatprep.subr.mxu0 0.0
        %616 = vmatpush2.msra.mxu0 0.0
        %617 = vmatprep.subr.mxu0 0.0
        %618 = vmatpush2.msra.mxu0 0.0
        %619 = vmatprep.subr.mxu0 0.0
        %620 = vmatpush2.msra.mxu0 0.0
        %621 = vmatprep.mubr.f32.mxu0 0.0
        %622 = vmatmul.mubr.f32.gmra.mxu0 %v506
        %v623 = vpop.f32.mrf.mxu0
        %v624 = vadd.f32 %v503, %v623
        %v625 = vpop.f32.mrf.mxu0
        %626 = vmatprep.mubr.f32.mxu0 0.0
        %627 = vmatmul.mubr.f32.gmra.mxu0 %v509
        %v628 = vpop.f32.mrf.mxu0
        %v629 = vadd.f32 %v503, %v628
        %v630 = vpop.f32.mrf.mxu0
        %631 = vmatprep.mubr.f32.mxu0 0.0
        %632 = vmatmul.mubr.f32.gmra.mxu0 %v512
        %v633 = vpop.f32.mrf.mxu0
        %v634 = vadd.f32 %v503, %v633
        %v635 = vpop.f32.mrf.mxu0
        %636 = vmatprep.mubr.f32.mxu0 0.0
        %637 = vmatmul.mubr.f32.gmra.mxu0 %v515
        %v638 = vpop.f32.mrf.mxu0
        %v639 = vadd.f32 %v503, %v638
        %v640 = vpop.f32.mrf.mxu0
        %641 = vmatprep.mubr.f32.mxu0 0.0
        %642 = vmatmul.mubr.f32.gmra.mxu0 %v518
        %v643 = vpop.f32.mrf.mxu0
        %v644 = vadd.f32 %v503, %v643
        %v645 = vpop.f32.mrf.mxu0
        %646 = vmatprep.mubr.f32.mxu0 0.0
        %647 = vmatmul.mubr.f32.gmra.mxu0 %v521
        %v648 = vpop.f32.mrf.mxu0
        %v649 = vadd.f32 %v503, %v648
        %v650 = vpop.f32.mrf.mxu0
        %651 = vmatprep.mubr.f32.mxu0 0.0
        %652 = vmatmul.mubr.f32.gmra.mxu0 %v524
        %v653 = vpop.f32.mrf.mxu0
        %v654 = vadd.f32 %v503, %v653
        %v655 = vpop.f32.mrf.mxu0
        %656 = vmatprep.mubr.f32.mxu0 0.0
        %657 = vmatmul.mubr.f32.gmra.mxu0 %v527
        %v658 = vpop.f32.mrf.mxu0
        %v659 = vadd.f32 %v503, %v658
        %v660 = vpop.f32.mrf.mxu0
        %661 = vmatprep.mubr.f32.mxu0 0.0
        %662 = vmatmul.mubr.f32.gmra.mxu0 %v530
        %v663 = vpop.f32.mrf.mxu0
        %v664 = vadd.f32 %v503, %v663
        %v665 = vpop.f32.mrf.mxu0
        %666 = vmatprep.mubr.f32.mxu0 0.0
        %667 = vmatmul.mubr.f32.gmra.mxu0 %v533
        %v668 = vpop.f32.mrf.mxu0
        %v669 = vadd.f32 %v503, %v668
        %v670 = vpop.f32.mrf.mxu0
        %671 = vmatprep.mubr.f32.mxu0 0.0
        %672 = vmatmul.mubr.f32.gmra.mxu0 %v536
        %v673 = vpop.f32.mrf.mxu0
        %v674 = vadd.f32 %v503, %v673
        %v675 = vpop.f32.mrf.mxu0
        %676 = vmatprep.mubr.f32.mxu0 0.0
        %677 = vmatmul.mubr.f32.gmra.mxu0 %v539
        %v678 = vpop.f32.mrf.mxu0
        %v679 = vadd.f32 %v503, %v678
        %v680 = vpop.f32.mrf.mxu0
        %681 = vmatprep.mubr.f32.mxu0 0.0
        %682 = vmatmul.mubr.f32.gmra.mxu0 %v542
        %v683 = vpop.f32.mrf.mxu0
        %v684 = vadd.f32 %v503, %v683
        %v685 = vpop.f32.mrf.mxu0
        %686 = vmatprep.mubr.f32.mxu0 0.0
        %687 = vmatmul.mubr.f32.gmra.mxu0 %v545
        %v688 = vpop.f32.mrf.mxu0
        %v689 = vadd.f32 %v503, %v688
        %v690 = vpop.f32.mrf.mxu0
        %691 = vmatprep.mubr.f32.mxu0 0.0
        %692 = vmatmul.mubr.f32.gmra.mxu0 %v548
        %v693 = vpop.f32.mrf.mxu0
        %v694 = vadd.f32 %v503, %v693
        %v695 = vpop.f32.mrf.mxu0
        %696 = vmatprep.mubr.f32.mxu0 0.0
        %697 = vmatmul.mubr.f32.gmra.mxu0 %v551
        %v698 = vpop.f32.mrf.mxu0
        %v699 = vadd.f32 %v503, %v698
        %v700 = vpop.f32.mrf.mxu0
        %701 = vdwg.mxu0
        %702 = vxpose.xlu0.b32.start [1/16] %v624, 128
        %703 = vxpose.xlu0.b32.cont [2/16] %v629, 128
        %704 = vxpose.xlu0.b32.cont [3/16] %v634, 128
        %705 = vxpose.xlu0.b32.cont [4/16] %v639, 128
        %706 = vxpose.xlu0.b32.cont [5/16] %v644, 128
        %707 = vxpose.xlu0.b32.cont [6/16] %v649, 128
        %708 = vxpose.xlu0.b32.cont [7/16] %v654, 128
        %709 = vxpose.xlu0.b32.cont [8/16] %v659, 128
        %710 = vxpose.xlu0.b32.cont [9/16] %v664, 128
        %711 = vxpose.xlu0.b32.cont [10/16] %v669, 128
        %712 = vxpose.xlu0.b32.cont [11/16] %v674, 128
        %713 = vxpose.xlu0.b32.cont [12/16] %v679, 128
        %714 = vxpose.xlu0.b32.cont [13/16] %v684, 128
        %715 = vxpose.xlu0.b32.cont [14/16] %v689, 128
        %716 = vxpose.xlu0.b32.cont [15/16] %v694, 128
        %717 = vxpose.xlu0.b32.end [16/16] %v699, 128
        %v718 = vpop.trf.xlu0
        %v719 = vpop.trf.xlu0
        %v720 = vpop.trf.xlu0
        %v721 = vpop.trf.xlu0
        %v722 = vpop.trf.xlu0
        %v723 = vpop.trf.xlu0
        %v724 = vpop.trf.xlu0
        %v725 = vpop.trf.xlu0
        %v726 = vpop.trf.xlu0
        %v727 = vpop.trf.xlu0
        %v728 = vpop.trf.xlu0
        %v729 = vpop.trf.xlu0
        %v730 = vpop.trf.xlu0
        %v731 = vpop.trf.xlu0
        %v732 = vpop.trf.xlu0
        %v733 = vpop.trf.xlu0
        %s734 = scalar_lea.vmem %s0, %s479
        %v735 = vld [vmem:[%s734] sm:$0xff]
        %v736 = vld [vmem:[%s734 + $0x8] sm:$0xff]
        %v737 = vld [vmem:[%s734 + $0x10] sm:$0xff]
        %v738 = vld [vmem:[%s734 + $0x18] sm:$0xff]
        %v739 = vld [vmem:[%s734 + $0x20] sm:$0xff]
        %v740 = vld [vmem:[%s734 + $0x28] sm:$0xff]
        %v741 = vld [vmem:[%s734 + $0x30] sm:$0xff]
        %v742 = vld [vmem:[%s734 + $0x38] sm:$0xff]
        %v743 = vld [vmem:[%s4] sm:$0xf]
        %v744 = vlaneseq
        %v745 = vshrl.u32 %v744, 7
        %v746 = vsub.s32 0, %v745
        %v747 = vrot.slane %v497, %v746
        %v749 = vsel %vm504, %v735, 0
        %v752 = vsel %vm504, %v736, 0
        %v755 = vsel %vm504, %v737, 0
        %v758 = vsel %vm504, %v738, 0
        %v761 = vsel %vm504, %v739, 0
        %v764 = vsel %vm504, %v740, 0
        %v767 = vsel %vm504, %v741, 0
        %v770 = vsel %vm504, %v742, 0
        %v773 = vsel %vm553, %v743, 0
        %775 = vmatprep.subr.mxu0 0.0
        %776 = vmatpush1.msra.mxu0 0.0
        %777 = vmatprep.subr.mxu0 0.0
        %778 = vmatpush1.msra.mxu0 0.0
        %779 = vmatprep.subr.mxu0 0.0
        %780 = vmatpush1.msra.mxu0 0.0
        %781 = vmatprep.subr.mxu0 0.0
        %782 = vmatpush1.msra.mxu0 0.0
        %783 = vmatprep.subr.mxu0 0.0
        %784 = vmatpush1.msra.mxu0 0.0
        %785 = vmatprep.subr.mxu0 0.0
        %786 = vmatpush1.msra.mxu0 0.0
        %787 = vmatprep.subr.mxu0 0.0
        %788 = vmatpush1.msra.mxu0 0.0
        %789 = vmatprep.subr.mxu0 0.0
        %790 = vmatpush1.msra.mxu0 0.0
        %791 = vmatprep.subr.mxu0 0.0
        %792 = vmatpush1.msra.mxu0 0.0
        %793 = vmatprep.subr.mxu0 0.0
        %794 = vmatpush1.msra.mxu0 0.0
        %795 = vmatprep.subr.mxu0 0.0
        %796 = vmatpush1.msra.mxu0 0.0
        %797 = vmatprep.subr.mxu0 0.0
        %798 = vmatpush1.msra.mxu0 0.0
        %799 = vmatprep.subr.mxu0 0.0
        %800 = vmatpush1.msra.mxu0 0.0
        %801 = vmatprep.subr.mxu0 0.0
        %802 = vmatpush1.msra.mxu0 0.0
        %803 = vmatprep.subr.mxu0 0.0
        %804 = vmatpush1.msra.mxu0 0.0
        %805 = vmatprep.subr.mxu0 0.0
        %806 = vmatpush1.msra.mxu0 %v773
        %807 = vmatprep.subr.mxu0 0.0
        %808 = vmatpush2.msra.mxu0 0.0
        %809 = vmatprep.subr.mxu0 0.0
        %810 = vmatpush2.msra.mxu0 0.0
        %811 = vmatprep.subr.mxu0 0.0
        %812 = vmatpush2.msra.mxu0 0.0
        %813 = vmatprep.subr.mxu0 0.0
        %814 = vmatpush2.msra.mxu0 0.0
        %815 = vmatprep.subr.mxu0 0.0
        %816 = vmatpush2.msra.mxu0 0.0
        %817 = vmatprep.subr.mxu0 0.0
        %818 = vmatpush2.msra.mxu0 0.0
        %819 = vmatprep.subr.mxu0 0.0
        %820 = vmatpush2.msra.mxu0 0.0
        %821 = vmatprep.subr.mxu0 0.0
        %822 = vmatpush2.msra.mxu0 0.0
        %823 = vmatprep.subr.mxu0 0.0
        %824 = vmatpush2.msra.mxu0 0.0
        %825 = vmatprep.subr.mxu0 0.0
        %826 = vmatpush2.msra.mxu0 0.0
        %827 = vmatprep.subr.mxu0 0.0
        %828 = vmatpush2.msra.mxu0 0.0
        %829 = vmatprep.subr.mxu0 0.0
        %830 = vmatpush2.msra.mxu0 0.0
        %831 = vmatprep.subr.mxu0 0.0
        %832 = vmatpush2.msra.mxu0 0.0
        %833 = vmatprep.subr.mxu0 0.0
        %834 = vmatpush2.msra.mxu0 0.0
        %835 = vmatprep.subr.mxu0 0.0
        %836 = vmatpush2.msra.mxu0 0.0
        %837 = vmatprep.subr.mxu0 0.0
        %838 = vmatpush2.msra.mxu0 0.0
        %839 = vmatprep.mubr.f32.mxu0 0.0
        %840 = vmatmul.mubr.f32.gmra.mxu0 %v749
        %v841 = vpop.f32.mrf.mxu0
        %v842 = vadd.f32 %v747, %v841
        %v843 = vpop.f32.mrf.mxu0
        %844 = vmatprep.mubr.f32.mxu0 0.0
        %845 = vmatmul.mubr.f32.gmra.mxu0 %v752
        %v846 = vpop.f32.mrf.mxu0
        %v847 = vadd.f32 %v747, %v846
        %v848 = vpop.f32.mrf.mxu0
        %849 = vmatprep.mubr.f32.mxu0 0.0
        %850 = vmatmul.mubr.f32.gmra.mxu0 %v755
        %v851 = vpop.f32.mrf.mxu0
        %v852 = vadd.f32 %v747, %v851
        %v853 = vpop.f32.mrf.mxu0
        %854 = vmatprep.mubr.f32.mxu0 0.0
        %855 = vmatmul.mubr.f32.gmra.mxu0 %v758
        %v856 = vpop.f32.mrf.mxu0
        %v857 = vadd.f32 %v747, %v856
        %v858 = vpop.f32.mrf.mxu0
        %859 = vmatprep.mubr.f32.mxu0 0.0
        %860 = vmatmul.mubr.f32.gmra.mxu0 %v761
        %v861 = vpop.f32.mrf.mxu0
        %v862 = vadd.f32 %v747, %v861
        %v863 = vpop.f32.mrf.mxu0
        %864 = vmatprep.mubr.f32.mxu0 0.0
        %865 = vmatmul.mubr.f32.gmra.mxu0 %v764
        %v866 = vpop.f32.mrf.mxu0
        %v867 = vadd.f32 %v747, %v866
        %v868 = vpop.f32.mrf.mxu0
        %869 = vmatprep.mubr.f32.mxu0 0.0
        %870 = vmatmul.mubr.f32.gmra.mxu0 %v767
        %v871 = vpop.f32.mrf.mxu0
        %v872 = vadd.f32 %v747, %v871
        %v873 = vpop.f32.mrf.mxu0
        %874 = vmatprep.mubr.f32.mxu0 0.0
        %875 = vmatmul.mubr.f32.gmra.mxu0 %v770
        %v876 = vpop.f32.mrf.mxu0
        %v877 = vadd.f32 %v747, %v876
        %v878 = vpop.f32.mrf.mxu0
        %879 = vdwg.mxu0
        %v880 = vld [vmem:[%s476] sm:$0xff]
        %v881 = vld [vmem:[%s476 + $0x8] sm:$0xff]
        %v882 = vld [vmem:[%s476 + $0x10] sm:$0xff]
        %v883 = vld [vmem:[%s476 + $0x18] sm:$0xff]
        %v884 = vld [vmem:[%s476 + $0x20] sm:$0xff]
        %v885 = vld [vmem:[%s476 + $0x28] sm:$0xff]
        %v886 = vld [vmem:[%s476 + $0x30] sm:$0xff]
        %v887 = vld [vmem:[%s476 + $0x38] sm:$0xff]
        %v888 = vld [vmem:[%s427] sm:$0xff]
        %v889 = vld [vmem:[%s427 + $0x8] sm:$0xff]
        %v890 = vld [vmem:[%s427 + $0x10] sm:$0xff]
        %v891 = vld [vmem:[%s427 + $0x18] sm:$0xff]
        %v892 = vld [vmem:[%s427 + $0x20] sm:$0xff]
        %v893 = vld [vmem:[%s427 + $0x28] sm:$0xff]
        %v894 = vld [vmem:[%s427 + $0x30] sm:$0xff]
        %v895 = vld [vmem:[%s427 + $0x38] sm:$0xff]
        %s896 = scalar_lea.vmem %s427, 64 [#allocation2]
        %v897 = vld [vmem:[%s896] sm:$0xff]
        %v898 = vld [vmem:[%s896 + $0x8] sm:$0xff]
        %v899 = vld [vmem:[%s896 + $0x10] sm:$0xff]
        %v900 = vld [vmem:[%s896 + $0x18] sm:$0xff]
        %v901 = vld [vmem:[%s896 + $0x20] sm:$0xff]
        %v902 = vld [vmem:[%s896 + $0x28] sm:$0xff]
        %v903 = vld [vmem:[%s896 + $0x30] sm:$0xff]
        %v904 = vld [vmem:[%s896 + $0x38] sm:$0xff]
        %s905 = scalar_lea.vmem %s427, 128 [#allocation2]
        %v906 = vld [vmem:[%s905] sm:$0xff]
        %v907 = vld [vmem:[%s905 + $0x8] sm:$0xff]
        %v908 = vld [vmem:[%s905 + $0x10] sm:$0xff]
        %v909 = vld [vmem:[%s905 + $0x18] sm:$0xff]
        %v910 = vld [vmem:[%s905 + $0x20] sm:$0xff]
        %v911 = vld [vmem:[%s905 + $0x28] sm:$0xff]
        %v912 = vld [vmem:[%s905 + $0x30] sm:$0xff]
        %v913 = vld [vmem:[%s905 + $0x38] sm:$0xff]
        %s914 = sld [smem:[#allocation3]]
        %v915 = vstv %s914
        %v916 = vmul.f32 %v915, %v888
        %v917 = vmul.f32 %v915, %v889
        %v918 = vmul.f32 %v915, %v890
        %v919 = vmul.f32 %v915, %v891
        %v920 = vmul.f32 %v915, %v892
        %v921 = vmul.f32 %v915, %v893
        %v922 = vmul.f32 %v915, %v894
        %v923 = vmul.f32 %v915, %v895
        %s924 = sld [smem:[#allocation3 + $0x80]]
        %v925 = vstv %s924
        %v926 = vmul.f32 %v925, %v897
        %v927 = vmul.f32 %v925, %v898
        %v928 = vmul.f32 %v925, %v899
        %v929 = vmul.f32 %v925, %v900
        %v930 = vmul.f32 %v925, %v901
        %v931 = vmul.f32 %v925, %v902
        %v932 = vmul.f32 %v925, %v903
        %v933 = vmul.f32 %v925, %v904
        %v934 = vadd.f32 %v916, %v926
        %v935 = vadd.f32 %v917, %v927
        %v936 = vadd.f32 %v918, %v928
        %v937 = vadd.f32 %v919, %v929
        %v938 = vadd.f32 %v920, %v930
        %v939 = vadd.f32 %v921, %v931
        %v940 = vadd.f32 %v922, %v932
        %v941 = vadd.f32 %v923, %v933
        %s942 = sld [smem:[#allocation3 + $0x100]]
        %v943 = vstv %s942
        %v944 = vmul.f32 %v943, %v906
        %v945 = vmul.f32 %v943, %v907
        %v946 = vmul.f32 %v943, %v908
        %v947 = vmul.f32 %v943, %v909
        %v948 = vmul.f32 %v943, %v910
        %v949 = vmul.f32 %v943, %v911
        %v950 = vmul.f32 %v943, %v912
        %v951 = vmul.f32 %v943, %v913
        %v952 = vadd.f32 %v934, %v944
        %v953 = vadd.f32 %v935, %v945
        %v954 = vadd.f32 %v936, %v946
        %v955 = vadd.f32 %v937, %v947
        %v956 = vadd.f32 %v938, %v948
        %v957 = vadd.f32 %v939, %v949
        %v958 = vadd.f32 %v940, %v950
        %v959 = vadd.f32 %v941, %v951
        %961 = vset.pattern.permute.xlu0 0
        %962 = vperm.xlu0 %961, %v842
        %v963 = vpop.permute.xlu0 %962
        %966 = vset.pattern.permute.xlu0 0
        %967 = vperm.xlu0 %966, %v847
        %v968 = vpop.permute.xlu0 %967
        %971 = vset.pattern.permute.xlu0 0
        %972 = vperm.xlu0 %971, %v852
        %v973 = vpop.permute.xlu0 %972
        %976 = vset.pattern.permute.xlu0 0
        %977 = vperm.xlu0 %976, %v857
        %v978 = vpop.permute.xlu0 %977
        %981 = vset.pattern.permute.xlu0 0
        %982 = vperm.xlu0 %981, %v862
        %v983 = vpop.permute.xlu0 %982
        %986 = vset.pattern.permute.xlu0 0
        %987 = vperm.xlu0 %986, %v867
        %v988 = vpop.permute.xlu0 %987
        %991 = vset.pattern.permute.xlu0 0
        %992 = vperm.xlu0 %991, %v872
        %v993 = vpop.permute.xlu0 %992
        %996 = vset.pattern.permute.xlu0 0
        %997 = vperm.xlu0 %996, %v877
        %v998 = vpop.permute.xlu0 %997
        %v1000 = vlaneseq
        %v1001 = vshrl.u32 %v1000, 7
        %v1002 = vsub.s32 0, %v1001
        %v1003 = vrot.slane %v718, %v1002
        %v1004 = vadd.f32 %v963, %v1003
        %v1005 = vadd.f32 %v968, %v1003
        %v1006 = vadd.f32 %v973, %v1003
        %v1007 = vadd.f32 %v978, %v1003
        %v1008 = vadd.f32 %v983, %v1003
        %v1009 = vadd.f32 %v988, %v1003
        %v1010 = vadd.f32 %v993, %v1003
        %v1011 = vadd.f32 %v998, %v1003
        %v1012 = vadd.f32 %v1004, %v952
        %v1013 = vadd.f32 %v1005, %v953
        %v1014 = vadd.f32 %v1006, %v954
        %v1015 = vadd.f32 %v1007, %v955
        %v1016 = vadd.f32 %v1008, %v956
        %v1017 = vadd.f32 %v1009, %v957
        %v1018 = vadd.f32 %v1010, %v958
        %v1019 = vadd.f32 %v1011, %v959
        %vm1020 = vcmp.gt.f32.partialorder %v1012, 0.0
        %vm1021 = vcmp.gt.f32.partialorder %v1013, 0.0
        %vm1022 = vcmp.gt.f32.partialorder %v1014, 0.0
        %vm1023 = vcmp.gt.f32.partialorder %v1015, 0.0
        %vm1024 = vcmp.gt.f32.partialorder %v1016, 0.0
        %vm1025 = vcmp.gt.f32.partialorder %v1017, 0.0
        %vm1026 = vcmp.gt.f32.partialorder %v1018, 0.0
        %vm1027 = vcmp.gt.f32.partialorder %v1019, 0.0
        %v1028 = vmul.f32 %v1012, 0.2
        %v1029 = vmul.f32 %v1013, 0.2
        %v1030 = vmul.f32 %v1014, 0.2
        %v1031 = vmul.f32 %v1015, 0.2
        %v1032 = vmul.f32 %v1016, 0.2
        %v1033 = vmul.f32 %v1017, 0.2
        %v1034 = vmul.f32 %v1018, 0.2
        %v1035 = vmul.f32 %v1019, 0.2
        %v1036 = vsel %vm1020, %v1012, %v1028
        %v1037 = vsel %vm1021, %v1013, %v1029
        %v1038 = vsel %vm1022, %v1014, %v1030
        %v1039 = vsel %vm1023, %v1015, %v1031
        %v1040 = vsel %vm1024, %v1016, %v1032
        %v1041 = vsel %vm1025, %v1017, %v1033
        %v1042 = vsel %vm1026, %v1018, %v1034
        %v1043 = vsel %vm1027, %v1019, %v1035
        %s1044 = sld [smem:[#allocation5]]
        %v1045 = vstv %s1044
        %v1046 = vmul.f32 %v1045, %v1036
        %v1047 = vmul.f32 %v1045, %v1037
        %v1048 = vmul.f32 %v1045, %v1038
        %v1049 = vmul.f32 %v1045, %v1039
        %v1050 = vmul.f32 %v1045, %v1040
        %v1051 = vmul.f32 %v1045, %v1041
        %v1052 = vmul.f32 %v1045, %v1042
        %v1053 = vmul.f32 %v1045, %v1043
        %v1054 = vadd.f32 %v1046, 0.0
        %v1055 = vadd.f32 %v1047, 0.0
        %v1056 = vadd.f32 %v1048, 0.0
        %v1057 = vadd.f32 %v1049, 0.0
        %v1058 = vadd.f32 %v1050, 0.0
        %v1059 = vadd.f32 %v1051, 0.0
        %v1060 = vadd.f32 %v1052, 0.0
        %v1061 = vadd.f32 %v1053, 0.0
        %s1062 = sld [smem:[#allocation3 + $0x1]]
        %v1063 = vstv %s1062
        %v1064 = vmul.f32 %v1063, %v888
        %v1065 = vmul.f32 %v1063, %v889
        %v1066 = vmul.f32 %v1063, %v890
        %v1067 = vmul.f32 %v1063, %v891
        %v1068 = vmul.f32 %v1063, %v892
        %v1069 = vmul.f32 %v1063, %v893
        %v1070 = vmul.f32 %v1063, %v894
        %v1071 = vmul.f32 %v1063, %v895
        %s1072 = sld [smem:[#allocation3 + $0x81]]
        %v1073 = vstv %s1072
        %v1074 = vmul.f32 %v1073, %v897
        %v1075 = vmul.f32 %v1073, %v898
        %v1076 = vmul.f32 %v1073, %v899
        %v1077 = vmul.f32 %v1073, %v900
        %v1078 = vmul.f32 %v1073, %v901
        %v1079 = vmul.f32 %v1073, %v902
        %v1080 = vmul.f32 %v1073, %v903
        %v1081 = vmul.f32 %v1073, %v904
        %v1082 = vadd.f32 %v1064, %v1074
        %v1083 = vadd.f32 %v1065, %v1075
        %v1084 = vadd.f32 %v1066, %v1076
        %v1085 = vadd.f32 %v1067, %v1077
        %v1086 = vadd.f32 %v1068, %v1078
        %v1087 = vadd.f32 %v1069, %v1079
        %v1088 = vadd.f32 %v1070, %v1080
        %v1089 = vadd.f32 %v1071, %v1081
        %s1090 = sld [smem:[#allocation3 + $0x101]]
        %v1091 = vstv %s1090
        %v1092 = vmul.f32 %v1091, %v906
        %v1093 = vmul.f32 %v1091, %v907
        %v1094 = vmul.f32 %v1091, %v908
        %v1095 = vmul.f32 %v1091, %v909
        %v1096 = vmul.f32 %v1091, %v910
        %v1097 = vmul.f32 %v1091, %v911
        %v1098 = vmul.f32 %v1091, %v912
        %v1099 = vmul.f32 %v1091, %v913
        %v1100 = vadd.f32 %v1082, %v1092
        %v1101 = vadd.f32 %v1083, %v1093
        %v1102 = vadd.f32 %v1084, %v1094
        %v1103 = vadd.f32 %v1085, %v1095
        %v1104 = vadd.f32 %v1086, %v1096
        %v1105 = vadd.f32 %v1087, %v1097
        %v1106 = vadd.f32 %v1088, %v1098
        %v1107 = vadd.f32 %v1089, %v1099
        %1108 = vset.pattern.permute.xlu0 1
        %1109 = vperm.xlu0 %1108, %v842
        %v1110 = vpop.permute.xlu0 %1109
        %1112 = vset.pattern.permute.xlu0 1
        %1113 = vperm.xlu0 %1112, %v847
        %v1114 = vpop.permute.xlu0 %1113
        %1116 = vset.pattern.permute.xlu0 1
        %1117 = vperm.xlu0 %1116, %v852
        %v1118 = vpop.permute.xlu0 %1117
        %1120 = vset.pattern.permute.xlu0 1
        %1121 = vperm.xlu0 %1120, %v857
        %v1122 = vpop.permute.xlu0 %1121
        %1124 = vset.pattern.permute.xlu0 1
        %1125 = vperm.xlu0 %1124, %v862
        %v1126 = vpop.permute.xlu0 %1125
        %1128 = vset.pattern.permute.xlu0 1
        %1129 = vperm.xlu0 %1128, %v867
        %v1130 = vpop.permute.xlu0 %1129
        %1132 = vset.pattern.permute.xlu0 1
        %1133 = vperm.xlu0 %1132, %v872
        %v1134 = vpop.permute.xlu0 %1133
        %1136 = vset.pattern.permute.xlu0 1
        %1137 = vperm.xlu0 %1136, %v877
        %v1138 = vpop.permute.xlu0 %1137
        %v1140 = vlaneseq
        %v1141 = vshrl.u32 %v1140, 7
        %v1142 = vsub.s32 1, %v1141
        %v1143 = vrot.slane %v718, %v1142
        %v1144 = vadd.f32 %v1110, %v1143
        %v1145 = vadd.f32 %v1114, %v1143
        %v1146 = vadd.f32 %v1118, %v1143
        %v1147 = vadd.f32 %v1122, %v1143
        %v1148 = vadd.f32 %v1126, %v1143
        %v1149 = vadd.f32 %v1130, %v1143
        %v1150 = vadd.f32 %v1134, %v1143
        %v1151 = vadd.f32 %v1138, %v1143
        %v1152 = vadd.f32 %v1144, %v1100
        %v1153 = vadd.f32 %v1145, %v1101
        %v1154 = vadd.f32 %v1146, %v1102
        %v1155 = vadd.f32 %v1147, %v1103
        %v1156 = vadd.f32 %v1148, %v1104
        %v1157 = vadd.f32 %v1149, %v1105
        %v1158 = vadd.f32 %v1150, %v1106
        %v1159 = vadd.f32 %v1151, %v1107
        %vm1160 = vcmp.gt.f32.partialorder %v1152, 0.0
        %vm1161 = vcmp.gt.f32.partialorder %v1153, 0.0
        %vm1162 = vcmp.gt.f32.partialorder %v1154, 0.0
        %vm1163 = vcmp.gt.f32.partialorder %v1155, 0.0
        %vm1164 = vcmp.gt.f32.partialorder %v1156, 0.0
        %vm1165 = vcmp.gt.f32.partialorder %v1157, 0.0
        %vm1166 = vcmp.gt.f32.partialorder %v1158, 0.0
        %vm1167 = vcmp.gt.f32.partialorder %v1159, 0.0
        %v1168 = vmul.f32 %v1152, 0.2
        %v1169 = vmul.f32 %v1153, 0.2
        %v1170 = vmul.f32 %v1154, 0.2
        %v1171 = vmul.f32 %v1155, 0.2
        %v1172 = vmul.f32 %v1156, 0.2
        %v1173 = vmul.f32 %v1157, 0.2
        %v1174 = vmul.f32 %v1158, 0.2
        %v1175 = vmul.f32 %v1159, 0.2
        %v1176 = vsel %vm1160, %v1152, %v1168
        %v1177 = vsel %vm1161, %v1153, %v1169
        %v1178 = vsel %vm1162, %v1154, %v1170
        %v1179 = vsel %vm1163, %v1155, %v1171
        %v1180 = vsel %vm1164, %v1156, %v1172
        %v1181 = vsel %vm1165, %v1157, %v1173
        %v1182 = vsel %vm1166, %v1158, %v1174
        %v1183 = vsel %vm1167, %v1159, %v1175
        %s1184 = sld [smem:[#allocation5 + $0x1]]
        %v1185 = vstv %s1184
        %v1186 = vmul.f32 %v1185, %v1176
        %v1187 = vmul.f32 %v1185, %v1177
        %v1188 = vmul.f32 %v1185, %v1178
        %v1189 = vmul.f32 %v1185, %v1179
        %v1190 = vmul.f32 %v1185, %v1180
        %v1191 = vmul.f32 %v1185, %v1181
        %v1192 = vmul.f32 %v1185, %v1182
        %v1193 = vmul.f32 %v1185, %v1183
        %v1194 = vadd.f32 %v1054, %v1186
        %v1195 = vadd.f32 %v1055, %v1187
        %v1196 = vadd.f32 %v1056, %v1188
        %v1197 = vadd.f32 %v1057, %v1189
        %v1198 = vadd.f32 %v1058, %v1190
        %v1199 = vadd.f32 %v1059, %v1191
        %v1200 = vadd.f32 %v1060, %v1192
        %v1201 = vadd.f32 %v1061, %v1193
        %s1202 = sld [smem:[#allocation3 + $0x2]]
        %v1203 = vstv %s1202
        %v1204 = vmul.f32 %v1203, %v888
        %v1205 = vmul.f32 %v1203, %v889
        %v1206 = vmul.f32 %v1203, %v890
        %v1207 = vmul.f32 %v1203, %v891
        %v1208 = vmul.f32 %v1203, %v892
        %v1209 = vmul.f32 %v1203, %v893
        %v1210 = vmul.f32 %v1203, %v894
        %v1211 = vmul.f32 %v1203, %v895
        %s1212 = sld [smem:[#allocation3 + $0x82]]
        %v1213 = vstv %s1212
        %v1214 = vmul.f32 %v1213, %v897
        %v1215 = vmul.f32 %v1213, %v898
        %v1216 = vmul.f32 %v1213, %v899
        %v1217 = vmul.f32 %v1213, %v900
        %v1218 = vmul.f32 %v1213, %v901
        %v1219 = vmul.f32 %v1213, %v902
        %v1220 = vmul.f32 %v1213, %v903
        %v1221 = vmul.f32 %v1213, %v904
        %v1222 = vadd.f32 %v1204, %v1214
        %v1223 = vadd.f32 %v1205, %v1215
        %v1224 = vadd.f32 %v1206, %v1216
        %v1225 = vadd.f32 %v1207, %v1217
        %v1226 = vadd.f32 %v1208, %v1218
        %v1227 = vadd.f32 %v1209, %v1219
        %v1228 = vadd.f32 %v1210, %v1220
        %v1229 = vadd.f32 %v1211, %v1221
        %s1230 = sld [smem:[#allocation3 + $0x102]]
        %v1231 = vstv %s1230
        %v1232 = vmul.f32 %v1231, %v906
        %v1233 = vmul.f32 %v1231, %v907
        %v1234 = vmul.f32 %v1231, %v908
        %v1235 = vmul.f32 %v1231, %v909
        %v1236 = vmul.f32 %v1231, %v910
        %v1237 = vmul.f32 %v1231, %v911
        %v1238 = vmul.f32 %v1231, %v912
        %v1239 = vmul.f32 %v1231, %v913
        %v1240 = vadd.f32 %v1222, %v1232
        %v1241 = vadd.f32 %v1223, %v1233
        %v1242 = vadd.f32 %v1224, %v1234
        %v1243 = vadd.f32 %v1225, %v1235
        %v1244 = vadd.f32 %v1226, %v1236
        %v1245 = vadd.f32 %v1227, %v1237
        %v1246 = vadd.f32 %v1228, %v1238
        %v1247 = vadd.f32 %v1229, %v1239
        %1248 = vset.pattern.permute.xlu0 2
        %1249 = vperm.xlu0 %1248, %v842
        %v1250 = vpop.permute.xlu0 %1249
        %1252 = vset.pattern.permute.xlu0 2
        %1253 = vperm.xlu0 %1252, %v847
        %v1254 = vpop.permute.xlu0 %1253
        %1256 = vset.pattern.permute.xlu0 2
        %1257 = vperm.xlu0 %1256, %v852
        %v1258 = vpop.permute.xlu0 %1257
        %1260 = vset.pattern.permute.xlu0 2
        %1261 = vperm.xlu0 %1260, %v857
        %v1262 = vpop.permute.xlu0 %1261
        %1264 = vset.pattern.permute.xlu0 2
        %1265 = vperm.xlu0 %1264, %v862
        %v1266 = vpop.permute.xlu0 %1265
        %1268 = vset.pattern.permute.xlu0 2
        %1269 = vperm.xlu0 %1268, %v867
        %v1270 = vpop.permute.xlu0 %1269
        %1272 = vset.pattern.permute.xlu0 2
        %1273 = vperm.xlu0 %1272, %v872
        %v1274 = vpop.permute.xlu0 %1273
        %1276 = vset.pattern.permute.xlu0 2
        %1277 = vperm.xlu0 %1276, %v877
        %v1278 = vpop.permute.xlu0 %1277
        %v1280 = vlaneseq
        %v1281 = vshrl.u32 %v1280, 7
        %v1282 = vsub.s32 2, %v1281
        %v1283 = vrot.slane %v718, %v1282
        %v1284 = vadd.f32 %v1250, %v1283
        %v1285 = vadd.f32 %v1254, %v1283
        %v1286 = vadd.f32 %v1258, %v1283
        %v1287 = vadd.f32 %v1262, %v1283
        %v1288 = vadd.f32 %v1266, %v1283
        %v1289 = vadd.f32 %v1270, %v1283
        %v1290 = vadd.f32 %v1274, %v1283
        %v1291 = vadd.f32 %v1278, %v1283
        %v1292 = vadd.f32 %v1284, %v1240
        %v1293 = vadd.f32 %v1285, %v1241
        %v1294 = vadd.f32 %v1286, %v1242
        %v1295 = vadd.f32 %v1287, %v1243
        %v1296 = vadd.f32 %v1288, %v1244
        %v1297 = vadd.f32 %v1289, %v1245
        %v1298 = vadd.f32 %v1290, %v1246
        %v1299 = vadd.f32 %v1291, %v1247
        %vm1300 = vcmp.gt.f32.partialorder %v1292, 0.0
        %vm1301 = vcmp.gt.f32.partialorder %v1293, 0.0
        %vm1302 = vcmp.gt.f32.partialorder %v1294, 0.0
        %vm1303 = vcmp.gt.f32.partialorder %v1295, 0.0
        %vm1304 = vcmp.gt.f32.partialorder %v1296, 0.0
        %vm1305 = vcmp.gt.f32.partialorder %v1297, 0.0
        %vm1306 = vcmp.gt.f32.partialorder %v1298, 0.0
        %vm1307 = vcmp.gt.f32.partialorder %v1299, 0.0
        %v1308 = vmul.f32 %v1292, 0.2
        %v1309 = vmul.f32 %v1293, 0.2
        %v1310 = vmul.f32 %v1294, 0.2
        %v1311 = vmul.f32 %v1295, 0.2
        %v1312 = vmul.f32 %v1296, 0.2
        %v1313 = vmul.f32 %v1297, 0.2
        %v1314 = vmul.f32 %v1298, 0.2
        %v1315 = vmul.f32 %v1299, 0.2
        %v1316 = vsel %vm1300, %v1292, %v1308
        %v1317 = vsel %vm1301, %v1293, %v1309
        %v1318 = vsel %vm1302, %v1294, %v1310
        %v1319 = vsel %vm1303, %v1295, %v1311
        %v1320 = vsel %vm1304, %v1296, %v1312
        %v1321 = vsel %vm1305, %v1297, %v1313
        %v1322 = vsel %vm1306, %v1298, %v1314
        %v1323 = vsel %vm1307, %v1299, %v1315
        %s1324 = sld [smem:[#allocation5 + $0x2]]
        %v1325 = vstv %s1324
        %v1326 = vmul.f32 %v1325, %v1316
        %v1327 = vmul.f32 %v1325, %v1317
        %v1328 = vmul.f32 %v1325, %v1318
        %v1329 = vmul.f32 %v1325, %v1319
        %v1330 = vmul.f32 %v1325, %v1320
        %v1331 = vmul.f32 %v1325, %v1321
        %v1332 = vmul.f32 %v1325, %v1322
        %v1333 = vmul.f32 %v1325, %v1323
        %v1334 = vadd.f32 %v1194, %v1326
        %v1335 = vadd.f32 %v1195, %v1327
        %v1336 = vadd.f32 %v1196, %v1328
        %v1337 = vadd.f32 %v1197, %v1329
        %v1338 = vadd.f32 %v1198, %v1330
        %v1339 = vadd.f32 %v1199, %v1331
        %v1340 = vadd.f32 %v1200, %v1332
        %v1341 = vadd.f32 %v1201, %v1333
        %s1342 = sld [smem:[#allocation3 + $0x3]]
        %v1343 = vstv %s1342
        %v1344 = vmul.f32 %v1343, %v888
        %v1345 = vmul.f32 %v1343, %v889
        %v1346 = vmul.f32 %v1343, %v890
        %v1347 = vmul.f32 %v1343, %v891
        %v1348 = vmul.f32 %v1343, %v892
        %v1349 = vmul.f32 %v1343, %v893
        %v1350 = vmul.f32 %v1343, %v894
        %v1351 = vmul.f32 %v1343, %v895
        %s1352 = sld [smem:[#allocation3 + $0x83]]
        %v1353 = vstv %s1352
        %v1354 = vmul.f32 %v1353, %v897
        %v1355 = vmul.f32 %v1353, %v898
        %v1356 = vmul.f32 %v1353, %v899
        %v1357 = vmul.f32 %v1353, %v900
        %v1358 = vmul.f32 %v1353, %v901
        %v1359 = vmul.f32 %v1353, %v902
        %v1360 = vmul.f32 %v1353, %v903
        %v1361 = vmul.f32 %v1353, %v904
        %v1362 = vadd.f32 %v1344, %v1354
        %v1363 = vadd.f32 %v1345, %v1355
        %v1364 = vadd.f32 %v1346, %v1356
        %v1365 = vadd.f32 %v1347, %v1357
        %v1366 = vadd.f32 %v1348, %v1358
        %v1367 = vadd.f32 %v1349, %v1359
        %v1368 = vadd.f32 %v1350, %v1360
        %v1369 = vadd.f32 %v1351, %v1361
        %s1370 = sld [smem:[#allocation3 + $0x103]]
        %v1371 = vstv %s1370
        %v1372 = vmul.f32 %v1371, %v906
        %v1373 = vmul.f32 %v1371, %v907
        %v1374 = vmul.f32 %v1371, %v908
        %v1375 = vmul.f32 %v1371, %v909
        %v1376 = vmul.f32 %v1371, %v910
        %v1377 = vmul.f32 %v1371, %v911
        %v1378 = vmul.f32 %v1371, %v912
        %v1379 = vmul.f32 %v1371, %v913
        %v1380 = vadd.f32 %v1362, %v1372
        %v1381 = vadd.f32 %v1363, %v1373
        %v1382 = vadd.f32 %v1364, %v1374
        %v1383 = vadd.f32 %v1365, %v1375
        %v1384 = vadd.f32 %v1366, %v1376
        %v1385 = vadd.f32 %v1367, %v1377
        %v1386 = vadd.f32 %v1368, %v1378
        %v1387 = vadd.f32 %v1369, %v1379
        %1388 = vset.pattern.permute.xlu0 3
        %1389 = vperm.xlu0 %1388, %v842
        %v1390 = vpop.permute.xlu0 %1389
        %1392 = vset.pattern.permute.xlu0 3
        %1393 = vperm.xlu0 %1392, %v847
        %v1394 = vpop.permute.xlu0 %1393
        %1396 = vset.pattern.permute.xlu0 3
        %1397 = vperm.xlu0 %1396, %v852
        %v1398 = vpop.permute.xlu0 %1397
        %1400 = vset.pattern.permute.xlu0 3
        %1401 = vperm.xlu0 %1400, %v857
        %v1402 = vpop.permute.xlu0 %1401
        %1404 = vset.pattern.permute.xlu0 3
        %1405 = vperm.xlu0 %1404, %v862
        %v1406 = vpop.permute.xlu0 %1405
        %1408 = vset.pattern.permute.xlu0 3
        %1409 = vperm.xlu0 %1408, %v867
        %v1410 = vpop.permute.xlu0 %1409
        %1412 = vset.pattern.permute.xlu0 3
        %1413 = vperm.xlu0 %1412, %v872
        %v1414 = vpop.permute.xlu0 %1413
        %1416 = vset.pattern.permute.xlu0 3
        %1417 = vperm.xlu0 %1416, %v877
        %v1418 = vpop.permute.xlu0 %1417
        %v1420 = vlaneseq
        %v1421 = vshrl.u32 %v1420, 7
        %v1422 = vsub.s32 3, %v1421
        %v1423 = vrot.slane %v718, %v1422
        %v1424 = vadd.f32 %v1390, %v1423
        %v1425 = vadd.f32 %v1394, %v1423
        %v1426 = vadd.f32 %v1398, %v1423
        %v1427 = vadd.f32 %v1402, %v1423
        %v1428 = vadd.f32 %v1406, %v1423
        %v1429 = vadd.f32 %v1410, %v1423
        %v1430 = vadd.f32 %v1414, %v1423
        %v1431 = vadd.f32 %v1418, %v1423
        %v1432 = vadd.f32 %v1424, %v1380
        %v1433 = vadd.f32 %v1425, %v1381
        %v1434 = vadd.f32 %v1426, %v1382
        %v1435 = vadd.f32 %v1427, %v1383
        %v1436 = vadd.f32 %v1428, %v1384
        %v1437 = vadd.f32 %v1429, %v1385
        %v1438 = vadd.f32 %v1430, %v1386
        %v1439 = vadd.f32 %v1431, %v1387
        %vm1440 = vcmp.gt.f32.partialorder %v1432, 0.0
        %vm1441 = vcmp.gt.f32.partialorder %v1433, 0.0
        %vm1442 = vcmp.gt.f32.partialorder %v1434, 0.0
        %vm1443 = vcmp.gt.f32.partialorder %v1435, 0.0
        %vm1444 = vcmp.gt.f32.partialorder %v1436, 0.0
        %vm1445 = vcmp.gt.f32.partialorder %v1437, 0.0
        %vm1446 = vcmp.gt.f32.partialorder %v1438, 0.0
        %vm1447 = vcmp.gt.f32.partialorder %v1439, 0.0
        %v1448 = vmul.f32 %v1432, 0.2
        %v1449 = vmul.f32 %v1433, 0.2
        %v1450 = vmul.f32 %v1434, 0.2
        %v1451 = vmul.f32 %v1435, 0.2
        %v1452 = vmul.f32 %v1436, 0.2
        %v1453 = vmul.f32 %v1437, 0.2
        %v1454 = vmul.f32 %v1438, 0.2
        %v1455 = vmul.f32 %v1439, 0.2
        %v1456 = vsel %vm1440, %v1432, %v1448
        %v1457 = vsel %vm1441, %v1433, %v1449
        %v1458 = vsel %vm1442, %v1434, %v1450
        %v1459 = vsel %vm1443, %v1435, %v1451
        %v1460 = vsel %vm1444, %v1436, %v1452
        %v1461 = vsel %vm1445, %v1437, %v1453
        %v1462 = vsel %vm1446, %v1438, %v1454
        %v1463 = vsel %vm1447, %v1439, %v1455
        %s1464 = sld [smem:[#allocation5 + $0x3]]
        %v1465 = vstv %s1464
        %v1466 = vmul.f32 %v1465, %v1456
        %v1467 = vmul.f32 %v1465, %v1457
        %v1468 = vmul.f32 %v1465, %v1458
        %v1469 = vmul.f32 %v1465, %v1459
        %v1470 = vmul.f32 %v1465, %v1460
        %v1471 = vmul.f32 %v1465, %v1461
        %v1472 = vmul.f32 %v1465, %v1462
        %v1473 = vmul.f32 %v1465, %v1463
        %v1474 = vadd.f32 %v1334, %v1466
        %v1475 = vadd.f32 %v1335, %v1467
        %v1476 = vadd.f32 %v1336, %v1468
        %v1477 = vadd.f32 %v1337, %v1469
        %v1478 = vadd.f32 %v1338, %v1470
        %v1479 = vadd.f32 %v1339, %v1471
        %v1480 = vadd.f32 %v1340, %v1472
        %v1481 = vadd.f32 %v1341, %v1473
        %s1482 = sld [smem:[#allocation3 + $0x4]]
        %v1483 = vstv %s1482
        %v1484 = vmul.f32 %v1483, %v888
        %v1485 = vmul.f32 %v1483, %v889
        %v1486 = vmul.f32 %v1483, %v890
        %v1487 = vmul.f32 %v1483, %v891
        %v1488 = vmul.f32 %v1483, %v892
        %v1489 = vmul.f32 %v1483, %v893
        %v1490 = vmul.f32 %v1483, %v894
        %v1491 = vmul.f32 %v1483, %v895
        %s1492 = sld [smem:[#allocation3 + $0x84]]
        %v1493 = vstv %s1492
        %v1494 = vmul.f32 %v1493, %v897
        %v1495 = vmul.f32 %v1493, %v898
        %v1496 = vmul.f32 %v1493, %v899
        %v1497 = vmul.f32 %v1493, %v900
        %v1498 = vmul.f32 %v1493, %v901
        %v1499 = vmul.f32 %v1493, %v902
        %v1500 = vmul.f32 %v1493, %v903
        %v1501 = vmul.f32 %v1493, %v904
        %v1502 = vadd.f32 %v1484, %v1494
        %v1503 = vadd.f32 %v1485, %v1495
        %v1504 = vadd.f32 %v1486, %v1496
        %v1505 = vadd.f32 %v1487, %v1497
        %v1506 = vadd.f32 %v1488, %v1498
        %v1507 = vadd.f32 %v1489, %v1499
        %v1508 = vadd.f32 %v1490, %v1500
        %v1509 = vadd.f32 %v1491, %v1501
        %s1510 = sld [smem:[#allocation3 + $0x104]]
        %v1511 = vstv %s1510
        %v1512 = vmul.f32 %v1511, %v906
        %v1513 = vmul.f32 %v1511, %v907
        %v1514 = vmul.f32 %v1511, %v908
        %v1515 = vmul.f32 %v1511, %v909
        %v1516 = vmul.f32 %v1511, %v910
        %v1517 = vmul.f32 %v1511, %v911
        %v1518 = vmul.f32 %v1511, %v912
        %v1519 = vmul.f32 %v1511, %v913
        %v1520 = vadd.f32 %v1502, %v1512
        %v1521 = vadd.f32 %v1503, %v1513
        %v1522 = vadd.f32 %v1504, %v1514
        %v1523 = vadd.f32 %v1505, %v1515
        %v1524 = vadd.f32 %v1506, %v1516
        %v1525 = vadd.f32 %v1507, %v1517
        %v1526 = vadd.f32 %v1508, %v1518
        %v1527 = vadd.f32 %v1509, %v1519
        %1528 = vset.pattern.permute.xlu0 4
        %1529 = vperm.xlu0 %1528, %v842
        %v1530 = vpop.permute.xlu0 %1529
        %1532 = vset.pattern.permute.xlu0 4
        %1533 = vperm.xlu0 %1532, %v847
        %v1534 = vpop.permute.xlu0 %1533
        %1536 = vset.pattern.permute.xlu0 4
        %1537 = vperm.xlu0 %1536, %v852
        %v1538 = vpop.permute.xlu0 %1537
        %1540 = vset.pattern.permute.xlu0 4
        %1541 = vperm.xlu0 %1540, %v857
        %v1542 = vpop.permute.xlu0 %1541
        %1544 = vset.pattern.permute.xlu0 4
        %1545 = vperm.xlu0 %1544, %v862
        %v1546 = vpop.permute.xlu0 %1545
        %1548 = vset.pattern.permute.xlu0 4
        %1549 = vperm.xlu0 %1548, %v867
        %v1550 = vpop.permute.xlu0 %1549
        %1552 = vset.pattern.permute.xlu0 4
        %1553 = vperm.xlu0 %1552, %v872
        %v1554 = vpop.permute.xlu0 %1553
        %1556 = vset.pattern.permute.xlu0 4
        %1557 = vperm.xlu0 %1556, %v877
        %v1558 = vpop.permute.xlu0 %1557
        %v1560 = vlaneseq
        %v1561 = vshrl.u32 %v1560, 7
        %v1562 = vsub.s32 4, %v1561
        %v1563 = vrot.slane %v718, %v1562
        %v1564 = vadd.f32 %v1530, %v1563
        %v1565 = vadd.f32 %v1534, %v1563
        %v1566 = vadd.f32 %v1538, %v1563
        %v1567 = vadd.f32 %v1542, %v1563
        %v1568 = vadd.f32 %v1546, %v1563
        %v1569 = vadd.f32 %v1550, %v1563
        %v1570 = vadd.f32 %v1554, %v1563
        %v1571 = vadd.f32 %v1558, %v1563
        %v1572 = vadd.f32 %v1564, %v1520
        %v1573 = vadd.f32 %v1565, %v1521
        %v1574 = vadd.f32 %v1566, %v1522
        %v1575 = vadd.f32 %v1567, %v1523
        %v1576 = vadd.f32 %v1568, %v1524
        %v1577 = vadd.f32 %v1569, %v1525
        %v1578 = vadd.f32 %v1570, %v1526
        %v1579 = vadd.f32 %v1571, %v1527
        %vm1580 = vcmp.gt.f32.partialorder %v1572, 0.0
        %vm1581 = vcmp.gt.f32.partialorder %v1573, 0.0
        %vm1582 = vcmp.gt.f32.partialorder %v1574, 0.0
        %vm1583 = vcmp.gt.f32.partialorder %v1575, 0.0
        %vm1584 = vcmp.gt.f32.partialorder %v1576, 0.0
        %vm1585 = vcmp.gt.f32.partialorder %v1577, 0.0
        %vm1586 = vcmp.gt.f32.partialorder %v1578, 0.0
        %vm1587 = vcmp.gt.f32.partialorder %v1579, 0.0
        %v1588 = vmul.f32 %v1572, 0.2
        %v1589 = vmul.f32 %v1573, 0.2
        %v1590 = vmul.f32 %v1574, 0.2
        %v1591 = vmul.f32 %v1575, 0.2
        %v1592 = vmul.f32 %v1576, 0.2
        %v1593 = vmul.f32 %v1577, 0.2
        %v1594 = vmul.f32 %v1578, 0.2
        %v1595 = vmul.f32 %v1579, 0.2
        %v1596 = vsel %vm1580, %v1572, %v1588
        %v1597 = vsel %vm1581, %v1573, %v1589
        %v1598 = vsel %vm1582, %v1574, %v1590
        %v1599 = vsel %vm1583, %v1575, %v1591
        %v1600 = vsel %vm1584, %v1576, %v1592
        %v1601 = vsel %vm1585, %v1577, %v1593
        %v1602 = vsel %vm1586, %v1578, %v1594
        %v1603 = vsel %vm1587, %v1579, %v1595
        %s1604 = sld [smem:[#allocation5 + $0x4]]
        %v1605 = vstv %s1604
        %v1606 = vmul.f32 %v1605, %v1596
        %v1607 = vmul.f32 %v1605, %v1597
        %v1608 = vmul.f32 %v1605, %v1598
        %v1609 = vmul.f32 %v1605, %v1599
        %v1610 = vmul.f32 %v1605, %v1600
        %v1611 = vmul.f32 %v1605, %v1601
        %v1612 = vmul.f32 %v1605, %v1602
        %v1613 = vmul.f32 %v1605, %v1603
        %v1614 = vadd.f32 %v1474, %v1606
        %v1615 = vadd.f32 %v1475, %v1607
        %v1616 = vadd.f32 %v1476, %v1608
        %v1617 = vadd.f32 %v1477, %v1609
        %v1618 = vadd.f32 %v1478, %v1610
        %v1619 = vadd.f32 %v1479, %v1611
        %v1620 = vadd.f32 %v1480, %v1612
        %v1621 = vadd.f32 %v1481, %v1613
        %s1622 = sld [smem:[#allocation3 + $0x5]]
        %v1623 = vstv %s1622
        %v1624 = vmul.f32 %v1623, %v888
        %v1625 = vmul.f32 %v1623, %v889
        %v1626 = vmul.f32 %v1623, %v890
        %v1627 = vmul.f32 %v1623, %v891
        %v1628 = vmul.f32 %v1623, %v892
        %v1629 = vmul.f32 %v1623, %v893
        %v1630 = vmul.f32 %v1623, %v894
        %v1631 = vmul.f32 %v1623, %v895
        %s1632 = sld [smem:[#allocation3 + $0x85]]
        %v1633 = vstv %s1632
        %v1634 = vmul.f32 %v1633, %v897
        %v1635 = vmul.f32 %v1633, %v898
        %v1636 = vmul.f32 %v1633, %v899
        %v1637 = vmul.f32 %v1633, %v900
        %v1638 = vmul.f32 %v1633, %v901
        %v1639 = vmul.f32 %v1633, %v902
        %v1640 = vmul.f32 %v1633, %v903
        %v1641 = vmul.f32 %v1633, %v904
        %v1642 = vadd.f32 %v1624, %v1634
        %v1643 = vadd.f32 %v1625, %v1635
        %v1644 = vadd.f32 %v1626, %v1636
        %v1645 = vadd.f32 %v1627, %v1637
        %v1646 = vadd.f32 %v1628, %v1638
        %v1647 = vadd.f32 %v1629, %v1639
        %v1648 = vadd.f32 %v1630, %v1640
        %v1649 = vadd.f32 %v1631, %v1641
        %s1650 = sld [smem:[#allocation3 + $0x105]]
        %v1651 = vstv %s1650
        %v1652 = vmul.f32 %v1651, %v906
        %v1653 = vmul.f32 %v1651, %v907
        %v1654 = vmul.f32 %v1651, %v908
        %v1655 = vmul.f32 %v1651, %v909
        %v1656 = vmul.f32 %v1651, %v910
        %v1657 = vmul.f32 %v1651, %v911
        %v1658 = vmul.f32 %v1651, %v912
        %v1659 = vmul.f32 %v1651, %v913
        %v1660 = vadd.f32 %v1642, %v1652
        %v1661 = vadd.f32 %v1643, %v1653
        %v1662 = vadd.f32 %v1644, %v1654
        %v1663 = vadd.f32 %v1645, %v1655
        %v1664 = vadd.f32 %v1646, %v1656
        %v1665 = vadd.f32 %v1647, %v1657
        %v1666 = vadd.f32 %v1648, %v1658
        %v1667 = vadd.f32 %v1649, %v1659
        %1668 = vset.pattern.permute.xlu0 5
        %1669 = vperm.xlu0 %1668, %v842
        %v1670 = vpop.permute.xlu0 %1669
        %1672 = vset.pattern.permute.xlu0 5
        %1673 = vperm.xlu0 %1672, %v847
        %v1674 = vpop.permute.xlu0 %1673
        %1676 = vset.pattern.permute.xlu0 5
        %1677 = vperm.xlu0 %1676, %v852
        %v1678 = vpop.permute.xlu0 %1677
        %1680 = vset.pattern.permute.xlu0 5
        %1681 = vperm.xlu0 %1680, %v857
        %v1682 = vpop.permute.xlu0 %1681
        %1684 = vset.pattern.permute.xlu0 5
        %1685 = vperm.xlu0 %1684, %v862
        %v1686 = vpop.permute.xlu0 %1685
        %1688 = vset.pattern.permute.xlu0 5
        %1689 = vperm.xlu0 %1688, %v867
        %v1690 = vpop.permute.xlu0 %1689
        %1692 = vset.pattern.permute.xlu0 5
        %1693 = vperm.xlu0 %1692, %v872
        %v1694 = vpop.permute.xlu0 %1693
        %1696 = vset.pattern.permute.xlu0 5
        %1697 = vperm.xlu0 %1696, %v877
        %v1698 = vpop.permute.xlu0 %1697
        %v1700 = vlaneseq
        %v1701 = vshrl.u32 %v1700, 7
        %v1702 = vsub.s32 5, %v1701
        %v1703 = vrot.slane %v718, %v1702
        %v1704 = vadd.f32 %v1670, %v1703
        %v1705 = vadd.f32 %v1674, %v1703
        %v1706 = vadd.f32 %v1678, %v1703
        %v1707 = vadd.f32 %v1682, %v1703
        %v1708 = vadd.f32 %v1686, %v1703
        %v1709 = vadd.f32 %v1690, %v1703
        %v1710 = vadd.f32 %v1694, %v1703
        %v1711 = vadd.f32 %v1698, %v1703
        %v1712 = vadd.f32 %v1704, %v1660
        %v1713 = vadd.f32 %v1705, %v1661
        %v1714 = vadd.f32 %v1706, %v1662
        %v1715 = vadd.f32 %v1707, %v1663
        %v1716 = vadd.f32 %v1708, %v1664
        %v1717 = vadd.f32 %v1709, %v1665
        %v1718 = vadd.f32 %v1710, %v1666
        %v1719 = vadd.f32 %v1711, %v1667
        %vm1720 = vcmp.gt.f32.partialorder %v1712, 0.0
        %vm1721 = vcmp.gt.f32.partialorder %v1713, 0.0
        %vm1722 = vcmp.gt.f32.partialorder %v1714, 0.0
        %vm1723 = vcmp.gt.f32.partialorder %v1715, 0.0
        %vm1724 = vcmp.gt.f32.partialorder %v1716, 0.0
        %vm1725 = vcmp.gt.f32.partialorder %v1717, 0.0
        %vm1726 = vcmp.gt.f32.partialorder %v1718, 0.0
        %vm1727 = vcmp.gt.f32.partialorder %v1719, 0.0
        %v1728 = vmul.f32 %v1712, 0.2
        %v1729 = vmul.f32 %v1713, 0.2
        %v1730 = vmul.f32 %v1714, 0.2
        %v1731 = vmul.f32 %v1715, 0.2
        %v1732 = vmul.f32 %v1716, 0.2
        %v1733 = vmul.f32 %v1717, 0.2
        %v1734 = vmul.f32 %v1718, 0.2
        %v1735 = vmul.f32 %v1719, 0.2
        %v1736 = vsel %vm1720, %v1712, %v1728
        %v1737 = vsel %vm1721, %v1713, %v1729
        %v1738 = vsel %vm1722, %v1714, %v1730
        %v1739 = vsel %vm1723, %v1715, %v1731
        %v1740 = vsel %vm1724, %v1716, %v1732
        %v1741 = vsel %vm1725, %v1717, %v1733
        %v1742 = vsel %vm1726, %v1718, %v1734
        %v1743 = vsel %vm1727, %v1719, %v1735
        %s1744 = sld [smem:[#allocation5 + $0x5]]
        %v1745 = vstv %s1744
        %v1746 = vmul.f32 %v1745, %v1736
        %v1747 = vmul.f32 %v1745, %v1737
        %v1748 = vmul.f32 %v1745, %v1738
        %v1749 = vmul.f32 %v1745, %v1739
        %v1750 = vmul.f32 %v1745, %v1740
        %v1751 = vmul.f32 %v1745, %v1741
        %v1752 = vmul.f32 %v1745, %v1742
        %v1753 = vmul.f32 %v1745, %v1743
        %v1754 = vadd.f32 %v1614, %v1746
        %v1755 = vadd.f32 %v1615, %v1747
        %v1756 = vadd.f32 %v1616, %v1748
        %v1757 = vadd.f32 %v1617, %v1749
        %v1758 = vadd.f32 %v1618, %v1750
        %v1759 = vadd.f32 %v1619, %v1751
        %v1760 = vadd.f32 %v1620, %v1752
        %v1761 = vadd.f32 %v1621, %v1753
        %s1762 = sld [smem:[#allocation3 + $0x6]]
        %v1763 = vstv %s1762
        %v1764 = vmul.f32 %v1763, %v888
        %v1765 = vmul.f32 %v1763, %v889
        %v1766 = vmul.f32 %v1763, %v890
        %v1767 = vmul.f32 %v1763, %v891
        %v1768 = vmul.f32 %v1763, %v892
        %v1769 = vmul.f32 %v1763, %v893
        %v1770 = vmul.f32 %v1763, %v894
        %v1771 = vmul.f32 %v1763, %v895
        %s1772 = sld [smem:[#allocation3 + $0x86]]
        %v1773 = vstv %s1772
        %v1774 = vmul.f32 %v1773, %v897
        %v1775 = vmul.f32 %v1773, %v898
        %v1776 = vmul.f32 %v1773, %v899
        %v1777 = vmul.f32 %v1773, %v900
        %v1778 = vmul.f32 %v1773, %v901
        %v1779 = vmul.f32 %v1773, %v902
        %v1780 = vmul.f32 %v1773, %v903
        %v1781 = vmul.f32 %v1773, %v904
        %v1782 = vadd.f32 %v1764, %v1774
        %v1783 = vadd.f32 %v1765, %v1775
        %v1784 = vadd.f32 %v1766, %v1776
        %v1785 = vadd.f32 %v1767, %v1777
        %v1786 = vadd.f32 %v1768, %v1778
        %v1787 = vadd.f32 %v1769, %v1779
        %v1788 = vadd.f32 %v1770, %v1780
        %v1789 = vadd.f32 %v1771, %v1781
        %s1790 = sld [smem:[#allocation3 + $0x106]]
        %v1791 = vstv %s1790
        %v1792 = vmul.f32 %v1791, %v906
        %v1793 = vmul.f32 %v1791, %v907
        %v1794 = vmul.f32 %v1791, %v908
        %v1795 = vmul.f32 %v1791, %v909
        %v1796 = vmul.f32 %v1791, %v910
        %v1797 = vmul.f32 %v1791, %v911
        %v1798 = vmul.f32 %v1791, %v912
        %v1799 = vmul.f32 %v1791, %v913
        %v1800 = vadd.f32 %v1782, %v1792
        %v1801 = vadd.f32 %v1783, %v1793
        %v1802 = vadd.f32 %v1784, %v1794
        %v1803 = vadd.f32 %v1785, %v1795
        %v1804 = vadd.f32 %v1786, %v1796
        %v1805 = vadd.f32 %v1787, %v1797
        %v1806 = vadd.f32 %v1788, %v1798
        %v1807 = vadd.f32 %v1789, %v1799
        %1808 = vset.pattern.permute.xlu0 6
        %1809 = vperm.xlu0 %1808, %v842
        %v1810 = vpop.permute.xlu0 %1809
        %1812 = vset.pattern.permute.xlu0 6
        %1813 = vperm.xlu0 %1812, %v847
        %v1814 = vpop.permute.xlu0 %1813
        %1816 = vset.pattern.permute.xlu0 6
        %1817 = vperm.xlu0 %1816, %v852
        %v1818 = vpop.permute.xlu0 %1817
        %1820 = vset.pattern.permute.xlu0 6
        %1821 = vperm.xlu0 %1820, %v857
        %v1822 = vpop.permute.xlu0 %1821
        %1824 = vset.pattern.permute.xlu0 6
        %1825 = vperm.xlu0 %1824, %v862
        %v1826 = vpop.permute.xlu0 %1825
        %1828 = vset.pattern.permute.xlu0 6
        %1829 = vperm.xlu0 %1828, %v867
        %v1830 = vpop.permute.xlu0 %1829
        %1832 = vset.pattern.permute.xlu0 6
        %1833 = vperm.xlu0 %1832, %v872
        %v1834 = vpop.permute.xlu0 %1833
        %1836 = vset.pattern.permute.xlu0 6
        %1837 = vperm.xlu0 %1836, %v877
        %v1838 = vpop.permute.xlu0 %1837
        %v1840 = vlaneseq
        %v1841 = vshrl.u32 %v1840, 7
        %v1842 = vsub.s32 6, %v1841
        %v1843 = vrot.slane %v718, %v1842
        %v1844 = vadd.f32 %v1810, %v1843
        %v1845 = vadd.f32 %v1814, %v1843
        %v1846 = vadd.f32 %v1818, %v1843
        %v1847 = vadd.f32 %v1822, %v1843
        %v1848 = vadd.f32 %v1826, %v1843
        %v1849 = vadd.f32 %v1830, %v1843
        %v1850 = vadd.f32 %v1834, %v1843
        %v1851 = vadd.f32 %v1838, %v1843
        %v1852 = vadd.f32 %v1844, %v1800
        %v1853 = vadd.f32 %v1845, %v1801
        %v1854 = vadd.f32 %v1846, %v1802
        %v1855 = vadd.f32 %v1847, %v1803
        %v1856 = vadd.f32 %v1848, %v1804
        %v1857 = vadd.f32 %v1849, %v1805
        %v1858 = vadd.f32 %v1850, %v1806
        %v1859 = vadd.f32 %v1851, %v1807
        %vm1860 = vcmp.gt.f32.partialorder %v1852, 0.0
        %vm1861 = vcmp.gt.f32.partialorder %v1853, 0.0
        %vm1862 = vcmp.gt.f32.partialorder %v1854, 0.0
        %vm1863 = vcmp.gt.f32.partialorder %v1855, 0.0
        %vm1864 = vcmp.gt.f32.partialorder %v1856, 0.0
        %vm1865 = vcmp.gt.f32.partialorder %v1857, 0.0
        %vm1866 = vcmp.gt.f32.partialorder %v1858, 0.0
        %vm1867 = vcmp.gt.f32.partialorder %v1859, 0.0
        %v1868 = vmul.f32 %v1852, 0.2
        %v1869 = vmul.f32 %v1853, 0.2
        %v1870 = vmul.f32 %v1854, 0.2
        %v1871 = vmul.f32 %v1855, 0.2
        %v1872 = vmul.f32 %v1856, 0.2
        %v1873 = vmul.f32 %v1857, 0.2
        %v1874 = vmul.f32 %v1858, 0.2
        %v1875 = vmul.f32 %v1859, 0.2
        %v1876 = vsel %vm1860, %v1852, %v1868
        %v1877 = vsel %vm1861, %v1853, %v1869
        %v1878 = vsel %vm1862, %v1854, %v1870
        %v1879 = vsel %vm1863, %v1855, %v1871
        %v1880 = vsel %vm1864, %v1856, %v1872
        %v1881 = vsel %vm1865, %v1857, %v1873
        %v1882 = vsel %vm1866, %v1858, %v1874
        %v1883 = vsel %vm1867, %v1859, %v1875
        %s1884 = sld [smem:[#allocation5 + $0x6]]
        %v1885 = vstv %s1884
        %v1886 = vmul.f32 %v1885, %v1876
        %v1887 = vmul.f32 %v1885, %v1877
        %v1888 = vmul.f32 %v1885, %v1878
        %v1889 = vmul.f32 %v1885, %v1879
        %v1890 = vmul.f32 %v1885, %v1880
        %v1891 = vmul.f32 %v1885, %v1881
        %v1892 = vmul.f32 %v1885, %v1882
        %v1893 = vmul.f32 %v1885, %v1883
        %v1894 = vadd.f32 %v1754, %v1886
        %v1895 = vadd.f32 %v1755, %v1887
        %v1896 = vadd.f32 %v1756, %v1888
        %v1897 = vadd.f32 %v1757, %v1889
        %v1898 = vadd.f32 %v1758, %v1890
        %v1899 = vadd.f32 %v1759, %v1891
        %v1900 = vadd.f32 %v1760, %v1892
        %v1901 = vadd.f32 %v1761, %v1893
        %s1902 = sld [smem:[#allocation3 + $0x7]]
        %v1903 = vstv %s1902
        %v1904 = vmul.f32 %v1903, %v888
        %v1905 = vmul.f32 %v1903, %v889
        %v1906 = vmul.f32 %v1903, %v890
        %v1907 = vmul.f32 %v1903, %v891
        %v1908 = vmul.f32 %v1903, %v892
        %v1909 = vmul.f32 %v1903, %v893
        %v1910 = vmul.f32 %v1903, %v894
        %v1911 = vmul.f32 %v1903, %v895
        %s1912 = sld [smem:[#allocation3 + $0x87]]
        %v1913 = vstv %s1912
        %v1914 = vmul.f32 %v1913, %v897
        %v1915 = vmul.f32 %v1913, %v898
        %v1916 = vmul.f32 %v1913, %v899
        %v1917 = vmul.f32 %v1913, %v900
        %v1918 = vmul.f32 %v1913, %v901
        %v1919 = vmul.f32 %v1913, %v902
        %v1920 = vmul.f32 %v1913, %v903
        %v1921 = vmul.f32 %v1913, %v904
        %v1922 = vadd.f32 %v1904, %v1914
        %v1923 = vadd.f32 %v1905, %v1915
        %v1924 = vadd.f32 %v1906, %v1916
        %v1925 = vadd.f32 %v1907, %v1917
        %v1926 = vadd.f32 %v1908, %v1918
        %v1927 = vadd.f32 %v1909, %v1919
        %v1928 = vadd.f32 %v1910, %v1920
        %v1929 = vadd.f32 %v1911, %v1921
        %s1930 = sld [smem:[#allocation3 + $0x107]]
        %v1931 = vstv %s1930
        %v1932 = vmul.f32 %v1931, %v906
        %v1933 = vmul.f32 %v1931, %v907
        %v1934 = vmul.f32 %v1931, %v908
        %v1935 = vmul.f32 %v1931, %v909
        %v1936 = vmul.f32 %v1931, %v910
        %v1937 = vmul.f32 %v1931, %v911
        %v1938 = vmul.f32 %v1931, %v912
        %v1939 = vmul.f32 %v1931, %v913
        %v1940 = vadd.f32 %v1922, %v1932
        %v1941 = vadd.f32 %v1923, %v1933
        %v1942 = vadd.f32 %v1924, %v1934
        %v1943 = vadd.f32 %v1925, %v1935
        %v1944 = vadd.f32 %v1926, %v1936
        %v1945 = vadd.f32 %v1927, %v1937
        %v1946 = vadd.f32 %v1928, %v1938
        %v1947 = vadd.f32 %v1929, %v1939
        %1948 = vset.pattern.permute.xlu0 7
        %1949 = vperm.xlu0 %1948, %v842
        %v1950 = vpop.permute.xlu0 %1949
        %1952 = vset.pattern.permute.xlu0 7
        %1953 = vperm.xlu0 %1952, %v847
        %v1954 = vpop.permute.xlu0 %1953
        %1956 = vset.pattern.permute.xlu0 7
        %1957 = vperm.xlu0 %1956, %v852
        %v1958 = vpop.permute.xlu0 %1957
        %1960 = vset.pattern.permute.xlu0 7
        %1961 = vperm.xlu0 %1960, %v857
        %v1962 = vpop.permute.xlu0 %1961
        %1964 = vset.pattern.permute.xlu0 7
        %1965 = vperm.xlu0 %1964, %v862
        %v1966 = vpop.permute.xlu0 %1965
        %1968 = vset.pattern.permute.xlu0 7
        %1969 = vperm.xlu0 %1968, %v867
        %v1970 = vpop.permute.xlu0 %1969
        %1972 = vset.pattern.permute.xlu0 7
        %1973 = vperm.xlu0 %1972, %v872
        %v1974 = vpop.permute.xlu0 %1973
        %1976 = vset.pattern.permute.xlu0 7
        %1977 = vperm.xlu0 %1976, %v877
        %v1978 = vpop.permute.xlu0 %1977
        %v1980 = vlaneseq
        %v1981 = vshrl.u32 %v1980, 7
        %v1982 = vsub.s32 7, %v1981
        %v1983 = vrot.slane %v718, %v1982
        %v1984 = vadd.f32 %v1950, %v1983
        %v1985 = vadd.f32 %v1954, %v1983
        %v1986 = vadd.f32 %v1958, %v1983
        %v1987 = vadd.f32 %v1962, %v1983
        %v1988 = vadd.f32 %v1966, %v1983
        %v1989 = vadd.f32 %v1970, %v1983
        %v1990 = vadd.f32 %v1974, %v1983
        %v1991 = vadd.f32 %v1978, %v1983
        %v1992 = vadd.f32 %v1984, %v1940
        %v1993 = vadd.f32 %v1985, %v1941
        %v1994 = vadd.f32 %v1986, %v1942
        %v1995 = vadd.f32 %v1987, %v1943
        %v1996 = vadd.f32 %v1988, %v1944
        %v1997 = vadd.f32 %v1989, %v1945
        %v1998 = vadd.f32 %v1990, %v1946
        %v1999 = vadd.f32 %v1991, %v1947
        %vm2000 = vcmp.gt.f32.partialorder %v1992, 0.0
        %vm2001 = vcmp.gt.f32.partialorder %v1993, 0.0
        %vm2002 = vcmp.gt.f32.partialorder %v1994, 0.0
        %vm2003 = vcmp.gt.f32.partialorder %v1995, 0.0
        %vm2004 = vcmp.gt.f32.partialorder %v1996, 0.0
        %vm2005 = vcmp.gt.f32.partialorder %v1997, 0.0
        %vm2006 = vcmp.gt.f32.partialorder %v1998, 0.0
        %vm2007 = vcmp.gt.f32.partialorder %v1999, 0.0
        %v2008 = vmul.f32 %v1992, 0.2
        %v2009 = vmul.f32 %v1993, 0.2
        %v2010 = vmul.f32 %v1994, 0.2
        %v2011 = vmul.f32 %v1995, 0.2
        %v2012 = vmul.f32 %v1996, 0.2
        %v2013 = vmul.f32 %v1997, 0.2
        %v2014 = vmul.f32 %v1998, 0.2
        %v2015 = vmul.f32 %v1999, 0.2
        %v2016 = vsel %vm2000, %v1992, %v2008
        %v2017 = vsel %vm2001, %v1993, %v2009
        %v2018 = vsel %vm2002, %v1994, %v2010
        %v2019 = vsel %vm2003, %v1995, %v2011
        %v2020 = vsel %vm2004, %v1996, %v2012
        %v2021 = vsel %vm2005, %v1997, %v2013
        %v2022 = vsel %vm2006, %v1998, %v2014
        %v2023 = vsel %vm2007, %v1999, %v2015
        %s2024 = sld [smem:[#allocation5 + $0x7]]
        %v2025 = vstv %s2024
        %v2026 = vmul.f32 %v2025, %v2016
        %v2027 = vmul.f32 %v2025, %v2017
        %v2028 = vmul.f32 %v2025, %v2018
        %v2029 = vmul.f32 %v2025, %v2019
        %v2030 = vmul.f32 %v2025, %v2020
        %v2031 = vmul.f32 %v2025, %v2021
        %v2032 = vmul.f32 %v2025, %v2022
        %v2033 = vmul.f32 %v2025, %v2023
        %v2034 = vadd.f32 %v1894, %v2026
        %v2035 = vadd.f32 %v1895, %v2027
        %v2036 = vadd.f32 %v1896, %v2028
        %v2037 = vadd.f32 %v1897, %v2029
        %v2038 = vadd.f32 %v1898, %v2030
        %v2039 = vadd.f32 %v1899, %v2031
        %v2040 = vadd.f32 %v1900, %v2032
        %v2041 = vadd.f32 %v1901, %v2033
        %s2042 = sld [smem:[#allocation3 + $0x8]]
        %v2043 = vstv %s2042
        %v2044 = vmul.f32 %v2043, %v888
        %v2045 = vmul.f32 %v2043, %v889
        %v2046 = vmul.f32 %v2043, %v890
        %v2047 = vmul.f32 %v2043, %v891
        %v2048 = vmul.f32 %v2043, %v892
        %v2049 = vmul.f32 %v2043, %v893
        %v2050 = vmul.f32 %v2043, %v894
        %v2051 = vmul.f32 %v2043, %v895
        %s2052 = sld [smem:[#allocation3 + $0x88]]
        %v2053 = vstv %s2052
        %v2054 = vmul.f32 %v2053, %v897
        %v2055 = vmul.f32 %v2053, %v898
        %v2056 = vmul.f32 %v2053, %v899
        %v2057 = vmul.f32 %v2053, %v900
        %v2058 = vmul.f32 %v2053, %v901
        %v2059 = vmul.f32 %v2053, %v902
        %v2060 = vmul.f32 %v2053, %v903
        %v2061 = vmul.f32 %v2053, %v904
        %v2062 = vadd.f32 %v2044, %v2054
        %v2063 = vadd.f32 %v2045, %v2055
        %v2064 = vadd.f32 %v2046, %v2056
        %v2065 = vadd.f32 %v2047, %v2057
        %v2066 = vadd.f32 %v2048, %v2058
        %v2067 = vadd.f32 %v2049, %v2059
        %v2068 = vadd.f32 %v2050, %v2060
        %v2069 = vadd.f32 %v2051, %v2061
        %s2070 = sld [smem:[#allocation3 + $0x108]]
        %v2071 = vstv %s2070
        %v2072 = vmul.f32 %v2071, %v906
        %v2073 = vmul.f32 %v2071, %v907
        %v2074 = vmul.f32 %v2071, %v908
        %v2075 = vmul.f32 %v2071, %v909
        %v2076 = vmul.f32 %v2071, %v910
        %v2077 = vmul.f32 %v2071, %v911
        %v2078 = vmul.f32 %v2071, %v912
        %v2079 = vmul.f32 %v2071, %v913
        %v2080 = vadd.f32 %v2062, %v2072
        %v2081 = vadd.f32 %v2063, %v2073
        %v2082 = vadd.f32 %v2064, %v2074
        %v2083 = vadd.f32 %v2065, %v2075
        %v2084 = vadd.f32 %v2066, %v2076
        %v2085 = vadd.f32 %v2067, %v2077
        %v2086 = vadd.f32 %v2068, %v2078
        %v2087 = vadd.f32 %v2069, %v2079
        %2088 = vset.pattern.permute.xlu0 8
        %2089 = vperm.xlu0 %2088, %v842
        %v2090 = vpop.permute.xlu0 %2089
        %2092 = vset.pattern.permute.xlu0 8
        %2093 = vperm.xlu0 %2092, %v847
        %v2094 = vpop.permute.xlu0 %2093
        %2096 = vset.pattern.permute.xlu0 8
        %2097 = vperm.xlu0 %2096, %v852
        %v2098 = vpop.permute.xlu0 %2097
        %2100 = vset.pattern.permute.xlu0 8
        %2101 = vperm.xlu0 %2100, %v857
        %v2102 = vpop.permute.xlu0 %2101
        %2104 = vset.pattern.permute.xlu0 8
        %2105 = vperm.xlu0 %2104, %v862
        %v2106 = vpop.permute.xlu0 %2105
        %2108 = vset.pattern.permute.xlu0 8
        %2109 = vperm.xlu0 %2108, %v867
        %v2110 = vpop.permute.xlu0 %2109
        %2112 = vset.pattern.permute.xlu0 8
        %2113 = vperm.xlu0 %2112, %v872
        %v2114 = vpop.permute.xlu0 %2113
        %2116 = vset.pattern.permute.xlu0 8
        %2117 = vperm.xlu0 %2116, %v877
        %v2118 = vpop.permute.xlu0 %2117
        %v2120 = vlaneseq
        %v2121 = vshrl.u32 %v2120, 7
        %v2122 = vsub.s32 0, %v2121
        %v2123 = vrot.slane %v719, %v2122
        %v2124 = vadd.f32 %v2090, %v2123
        %v2125 = vadd.f32 %v2094, %v2123
        %v2126 = vadd.f32 %v2098, %v2123
        %v2127 = vadd.f32 %v2102, %v2123
        %v2128 = vadd.f32 %v2106, %v2123
        %v2129 = vadd.f32 %v2110, %v2123
        %v2130 = vadd.f32 %v2114, %v2123
        %v2131 = vadd.f32 %v2118, %v2123
        %v2132 = vadd.f32 %v2124, %v2080
        %v2133 = vadd.f32 %v2125, %v2081
        %v2134 = vadd.f32 %v2126, %v2082
        %v2135 = vadd.f32 %v2127, %v2083
        %v2136 = vadd.f32 %v2128, %v2084
        %v2137 = vadd.f32 %v2129, %v2085
        %v2138 = vadd.f32 %v2130, %v2086
        %v2139 = vadd.f32 %v2131, %v2087
        %vm2140 = vcmp.gt.f32.partialorder %v2132, 0.0
        %vm2141 = vcmp.gt.f32.partialorder %v2133, 0.0
        %vm2142 = vcmp.gt.f32.partialorder %v2134, 0.0
        %vm2143 = vcmp.gt.f32.partialorder %v2135, 0.0
        %vm2144 = vcmp.gt.f32.partialorder %v2136, 0.0
        %vm2145 = vcmp.gt.f32.partialorder %v2137, 0.0
        %vm2146 = vcmp.gt.f32.partialorder %v2138, 0.0
        %vm2147 = vcmp.gt.f32.partialorder %v2139, 0.0
        %v2148 = vmul.f32 %v2132, 0.2
        %v2149 = vmul.f32 %v2133, 0.2
        %v2150 = vmul.f32 %v2134, 0.2
        %v2151 = vmul.f32 %v2135, 0.2
        %v2152 = vmul.f32 %v2136, 0.2
        %v2153 = vmul.f32 %v2137, 0.2
        %v2154 = vmul.f32 %v2138, 0.2
        %v2155 = vmul.f32 %v2139, 0.2
        %v2156 = vsel %vm2140, %v2132, %v2148
        %v2157 = vsel %vm2141, %v2133, %v2149
        %v2158 = vsel %vm2142, %v2134, %v2150
        %v2159 = vsel %vm2143, %v2135, %v2151
        %v2160 = vsel %vm2144, %v2136, %v2152
        %v2161 = vsel %vm2145, %v2137, %v2153
        %v2162 = vsel %vm2146, %v2138, %v2154
        %v2163 = vsel %vm2147, %v2139, %v2155
        %s2164 = sld [smem:[#allocation5 + $0x8]]
        %v2165 = vstv %s2164
        %v2166 = vmul.f32 %v2165, %v2156
        %v2167 = vmul.f32 %v2165, %v2157
        %v2168 = vmul.f32 %v2165, %v2158
        %v2169 = vmul.f32 %v2165, %v2159
        %v2170 = vmul.f32 %v2165, %v2160
        %v2171 = vmul.f32 %v2165, %v2161
        %v2172 = vmul.f32 %v2165, %v2162
        %v2173 = vmul.f32 %v2165, %v2163
        %v2174 = vadd.f32 %v2034, %v2166
        %v2175 = vadd.f32 %v2035, %v2167
        %v2176 = vadd.f32 %v2036, %v2168
        %v2177 = vadd.f32 %v2037, %v2169
        %v2178 = vadd.f32 %v2038, %v2170
        %v2179 = vadd.f32 %v2039, %v2171
        %v2180 = vadd.f32 %v2040, %v2172
        %v2181 = vadd.f32 %v2041, %v2173
        %s2182 = sld [smem:[#allocation3 + $0x9]]
        %v2183 = vstv %s2182
        %v2184 = vmul.f32 %v2183, %v888
        %v2185 = vmul.f32 %v2183, %v889
        %v2186 = vmul.f32 %v2183, %v890
        %v2187 = vmul.f32 %v2183, %v891
        %v2188 = vmul.f32 %v2183, %v892
        %v2189 = vmul.f32 %v2183, %v893
        %v2190 = vmul.f32 %v2183, %v894
        %v2191 = vmul.f32 %v2183, %v895
        %s2192 = sld [smem:[#allocation3 + $0x89]]
        %v2193 = vstv %s2192
        %v2194 = vmul.f32 %v2193, %v897
        %v2195 = vmul.f32 %v2193, %v898
        %v2196 = vmul.f32 %v2193, %v899
        %v2197 = vmul.f32 %v2193, %v900
        %v2198 = vmul.f32 %v2193, %v901
        %v2199 = vmul.f32 %v2193, %v902
        %v2200 = vmul.f32 %v2193, %v903
        %v2201 = vmul.f32 %v2193, %v904
        %v2202 = vadd.f32 %v2184, %v2194
        %v2203 = vadd.f32 %v2185, %v2195
        %v2204 = vadd.f32 %v2186, %v2196
        %v2205 = vadd.f32 %v2187, %v2197
        %v2206 = vadd.f32 %v2188, %v2198
        %v2207 = vadd.f32 %v2189, %v2199
        %v2208 = vadd.f32 %v2190, %v2200
        %v2209 = vadd.f32 %v2191, %v2201
        %s2210 = sld [smem:[#allocation3 + $0x109]]
        %v2211 = vstv %s2210
        %v2212 = vmul.f32 %v2211, %v906
        %v2213 = vmul.f32 %v2211, %v907
        %v2214 = vmul.f32 %v2211, %v908
        %v2215 = vmul.f32 %v2211, %v909
        %v2216 = vmul.f32 %v2211, %v910
        %v2217 = vmul.f32 %v2211, %v911
        %v2218 = vmul.f32 %v2211, %v912
        %v2219 = vmul.f32 %v2211, %v913
        %v2220 = vadd.f32 %v2202, %v2212
        %v2221 = vadd.f32 %v2203, %v2213
        %v2222 = vadd.f32 %v2204, %v2214
        %v2223 = vadd.f32 %v2205, %v2215
        %v2224 = vadd.f32 %v2206, %v2216
        %v2225 = vadd.f32 %v2207, %v2217
        %v2226 = vadd.f32 %v2208, %v2218
        %v2227 = vadd.f32 %v2209, %v2219
        %2228 = vset.pattern.permute.xlu0 9
        %2229 = vperm.xlu0 %2228, %v842
        %v2230 = vpop.permute.xlu0 %2229
        %2232 = vset.pattern.permute.xlu0 9
        %2233 = vperm.xlu0 %2232, %v847
        %v2234 = vpop.permute.xlu0 %2233
        %2236 = vset.pattern.permute.xlu0 9
        %2237 = vperm.xlu0 %2236, %v852
        %v2238 = vpop.permute.xlu0 %2237
        %2240 = vset.pattern.permute.xlu0 9
        %2241 = vperm.xlu0 %2240, %v857
        %v2242 = vpop.permute.xlu0 %2241
        %2244 = vset.pattern.permute.xlu0 9
        %2245 = vperm.xlu0 %2244, %v862
        %v2246 = vpop.permute.xlu0 %2245
        %2248 = vset.pattern.permute.xlu0 9
        %2249 = vperm.xlu0 %2248, %v867
        %v2250 = vpop.permute.xlu0 %2249
        %2252 = vset.pattern.permute.xlu0 9
        %2253 = vperm.xlu0 %2252, %v872
        %v2254 = vpop.permute.xlu0 %2253
        %2256 = vset.pattern.permute.xlu0 9
        %2257 = vperm.xlu0 %2256, %v877
        %v2258 = vpop.permute.xlu0 %2257
        %v2260 = vlaneseq
        %v2261 = vshrl.u32 %v2260, 7
        %v2262 = vsub.s32 1, %v2261
        %v2263 = vrot.slane %v719, %v2262
        %v2264 = vadd.f32 %v2230, %v2263
        %v2265 = vadd.f32 %v2234, %v2263
        %v2266 = vadd.f32 %v2238, %v2263
        %v2267 = vadd.f32 %v2242, %v2263
        %v2268 = vadd.f32 %v2246, %v2263
        %v2269 = vadd.f32 %v2250, %v2263
        %v2270 = vadd.f32 %v2254, %v2263
        %v2271 = vadd.f32 %v2258, %v2263
        %v2272 = vadd.f32 %v2264, %v2220
        %v2273 = vadd.f32 %v2265, %v2221
        %v2274 = vadd.f32 %v2266, %v2222
        %v2275 = vadd.f32 %v2267, %v2223
        %v2276 = vadd.f32 %v2268, %v2224
        %v2277 = vadd.f32 %v2269, %v2225
        %v2278 = vadd.f32 %v2270, %v2226
        %v2279 = vadd.f32 %v2271, %v2227
        %vm2280 = vcmp.gt.f32.partialorder %v2272, 0.0
        %vm2281 = vcmp.gt.f32.partialorder %v2273, 0.0
        %vm2282 = vcmp.gt.f32.partialorder %v2274, 0.0
        %vm2283 = vcmp.gt.f32.partialorder %v2275, 0.0
        %vm2284 = vcmp.gt.f32.partialorder %v2276, 0.0
        %vm2285 = vcmp.gt.f32.partialorder %v2277, 0.0
        %vm2286 = vcmp.gt.f32.partialorder %v2278, 0.0
        %vm2287 = vcmp.gt.f32.partialorder %v2279, 0.0
        %v2288 = vmul.f32 %v2272, 0.2
        %v2289 = vmul.f32 %v2273, 0.2
        %v2290 = vmul.f32 %v2274, 0.2
        %v2291 = vmul.f32 %v2275, 0.2
        %v2292 = vmul.f32 %v2276, 0.2
        %v2293 = vmul.f32 %v2277, 0.2
        %v2294 = vmul.f32 %v2278, 0.2
        %v2295 = vmul.f32 %v2279, 0.2
        %v2296 = vsel %vm2280, %v2272, %v2288
        %v2297 = vsel %vm2281, %v2273, %v2289
        %v2298 = vsel %vm2282, %v2274, %v2290
        %v2299 = vsel %vm2283, %v2275, %v2291
        %v2300 = vsel %vm2284, %v2276, %v2292
        %v2301 = vsel %vm2285, %v2277, %v2293
        %v2302 = vsel %vm2286, %v2278, %v2294
        %v2303 = vsel %vm2287, %v2279, %v2295
        %s2304 = sld [smem:[#allocation5 + $0x9]]
        %v2305 = vstv %s2304
        %v2306 = vmul.f32 %v2305, %v2296
        %v2307 = vmul.f32 %v2305, %v2297
        %v2308 = vmul.f32 %v2305, %v2298
        %v2309 = vmul.f32 %v2305, %v2299
        %v2310 = vmul.f32 %v2305, %v2300
        %v2311 = vmul.f32 %v2305, %v2301
        %v2312 = vmul.f32 %v2305, %v2302
        %v2313 = vmul.f32 %v2305, %v2303
        %v2314 = vadd.f32 %v2174, %v2306
        %v2315 = vadd.f32 %v2175, %v2307
        %v2316 = vadd.f32 %v2176, %v2308
        %v2317 = vadd.f32 %v2177, %v2309
        %v2318 = vadd.f32 %v2178, %v2310
        %v2319 = vadd.f32 %v2179, %v2311
        %v2320 = vadd.f32 %v2180, %v2312
        %v2321 = vadd.f32 %v2181, %v2313
        %vm2322 = vcmp.gt.f32.partialorder %v880, 0.0
        %vm2323 = vcmp.gt.f32.partialorder %v881, 0.0
        %vm2324 = vcmp.gt.f32.partialorder %v882, 0.0
        %vm2325 = vcmp.gt.f32.partialorder %v883, 0.0
        %vm2326 = vcmp.gt.f32.partialorder %v884, 0.0
        %vm2327 = vcmp.gt.f32.partialorder %v885, 0.0
        %vm2328 = vcmp.gt.f32.partialorder %v886, 0.0
        %vm2329 = vcmp.gt.f32.partialorder %v887, 0.0
        %v2330 = vsel %vm2322, %v2314, -1e+30
        %v2331 = vsel %vm2323, %v2315, -1e+30
        %v2332 = vsel %vm2324, %v2316, -1e+30
        %v2333 = vsel %vm2325, %v2317, -1e+30
        %v2334 = vsel %vm2326, %v2318, -1e+30
        %v2335 = vsel %vm2327, %v2319, -1e+30
        %v2336 = vsel %vm2328, %v2320, -1e+30
        %v2337 = vsel %vm2329, %v2321, -1e+30
        %2338 = vmax.xlane.f32.xlu0 %v2330
        %v2339 = vpop.xlane.xlu0 %2338
        %2340 = vmax.xlane.f32.xlu0 %v2331
        %v2341 = vpop.xlane.xlu0 %2340
        %2342 = vmax.xlane.f32.xlu0 %v2332
        %v2343 = vpop.xlane.xlu0 %2342
        %2344 = vmax.xlane.f32.xlu0 %v2333
        %v2345 = vpop.xlane.xlu0 %2344
        %2346 = vmax.xlane.f32.xlu0 %v2334
        %v2347 = vpop.xlane.xlu0 %2346
        %2348 = vmax.xlane.f32.xlu0 %v2335
        %v2349 = vpop.xlane.xlu0 %2348
        %2350 = vmax.xlane.f32.xlu0 %v2336
        %v2351 = vpop.xlane.xlu0 %2350
        %2352 = vmax.xlane.f32.xlu0 %v2337
        %v2353 = vpop.xlane.xlu0 %2352
        %v2354 = vsub.f32 %v2330, %v2339
        %v2355 = vsub.f32 %v2331, %v2341
        %v2356 = vsub.f32 %v2332, %v2343
        %v2357 = vsub.f32 %v2333, %v2345
        %v2358 = vsub.f32 %v2334, %v2347
        %v2359 = vsub.f32 %v2335, %v2349
        %v2360 = vsub.f32 %v2336, %v2351
        %v2361 = vsub.f32 %v2337, %v2353
        %v2362 = vmul.f32 %v2354, 1.442695
        %v2363 = vpow.pop %v2362
        %v2364 = vmul.f32 %v2355, 1.442695
        %v2365 = vpow.pop %v2364
        %v2366 = vmul.f32 %v2356, 1.442695
        %v2367 = vpow.pop %v2366
        %v2368 = vmul.f32 %v2357, 1.442695
        %v2369 = vpow.pop %v2368
        %v2370 = vmul.f32 %v2358, 1.442695
        %v2371 = vpow.pop %v2370
        %v2372 = vmul.f32 %v2359, 1.442695
        %v2373 = vpow.pop %v2372
        %v2374 = vmul.f32 %v2360, 1.442695
        %v2375 = vpow.pop %v2374
        %v2376 = vmul.f32 %v2361, 1.442695
        %v2377 = vpow.pop %v2376
        %v2378 = vmul.f32 %v2363, %v880
        %v2379 = vmul.f32 %v2365, %v881
        %v2380 = vmul.f32 %v2367, %v882
        %v2381 = vmul.f32 %v2369, %v883
        %v2382 = vmul.f32 %v2371, %v884
        %v2383 = vmul.f32 %v2373, %v885
        %v2384 = vmul.f32 %v2375, %v886
        %v2385 = vmul.f32 %v2377, %v887
        %2386 = vadd.xlane.f32.xlu0 %v2378
        %v2387 = vpop.xlane.xlu0 %2386
        %2388 = vadd.xlane.f32.xlu0 %v2379
        %v2389 = vpop.xlane.xlu0 %2388
        %2390 = vadd.xlane.f32.xlu0 %v2380
        %v2391 = vpop.xlane.xlu0 %2390
        %2392 = vadd.xlane.f32.xlu0 %v2381
        %v2393 = vpop.xlane.xlu0 %2392
        %2394 = vadd.xlane.f32.xlu0 %v2382
        %v2395 = vpop.xlane.xlu0 %2394
        %2396 = vadd.xlane.f32.xlu0 %v2383
        %v2397 = vpop.xlane.xlu0 %2396
        %2398 = vadd.xlane.f32.xlu0 %v2384
        %v2399 = vpop.xlane.xlu0 %2398
        %2400 = vadd.xlane.f32.xlu0 %v2385
        %v2401 = vpop.xlane.xlu0 %2400
        %v2402 = vmax.f32 %v2387, 1e-20
        %v2403 = vmax.f32 %v2389, 1e-20
        %v2404 = vmax.f32 %v2391, 1e-20
        %v2405 = vmax.f32 %v2393, 1e-20
        %v2406 = vmax.f32 %v2395, 1e-20
        %v2407 = vmax.f32 %v2397, 1e-20
        %v2408 = vmax.f32 %v2399, 1e-20
        %v2409 = vmax.f32 %v2401, 1e-20
        %v2410 = vrcp.pop %v2402
        %v2411 = vmul.f32 %v2378, %v2410
        %v2412 = vrcp.pop %v2403
        %v2413 = vmul.f32 %v2379, %v2412
        %v2414 = vrcp.pop %v2404
        %v2415 = vmul.f32 %v2380, %v2414
        %v2416 = vrcp.pop %v2405
        %v2417 = vmul.f32 %v2381, %v2416
        %v2418 = vrcp.pop %v2406
        %v2419 = vmul.f32 %v2382, %v2418
        %v2420 = vrcp.pop %v2407
        %v2421 = vmul.f32 %v2383, %v2420
        %v2422 = vrcp.pop %v2408
        %v2423 = vmul.f32 %v2384, %v2422
        %v2424 = vrcp.pop %v2409
        %v2425 = vmul.f32 %v2385, %v2424
        %v2426 = vlaneseq
        %v2427 = vshrl.u32 %v2426, 7
        %v2428 = vsub.s32 0, %v2427
        %v2429 = vrot.slane %v498, %v2428
        %2430 = vmatprep.subr.mxu0 0.0
        %2431 = vmatpush1.msra.mxu0 %v699
        %2432 = vmatprep.subr.mxu0 0.0
        %2433 = vmatpush1.msra.mxu0 %v694
        %2434 = vmatprep.subr.mxu0 0.0
        %2435 = vmatpush1.msra.mxu0 %v689
        %2436 = vmatprep.subr.mxu0 0.0
        %2437 = vmatpush1.msra.mxu0 %v684
        %2438 = vmatprep.subr.mxu0 0.0
        %2439 = vmatpush1.msra.mxu0 %v679
        %2440 = vmatprep.subr.mxu0 0.0
        %2441 = vmatpush1.msra.mxu0 %v674
        %2442 = vmatprep.subr.mxu0 0.0
        %2443 = vmatpush1.msra.mxu0 %v669
        %2444 = vmatprep.subr.mxu0 0.0
        %2445 = vmatpush1.msra.mxu0 %v664
        %2446 = vmatprep.subr.mxu0 0.0
        %2447 = vmatpush1.msra.mxu0 %v659
        %2448 = vmatprep.subr.mxu0 0.0
        %2449 = vmatpush1.msra.mxu0 %v654
        %2450 = vmatprep.subr.mxu0 0.0
        %2451 = vmatpush1.msra.mxu0 %v649
        %2452 = vmatprep.subr.mxu0 0.0
        %2453 = vmatpush1.msra.mxu0 %v644
        %2454 = vmatprep.subr.mxu0 0.0
        %2455 = vmatpush1.msra.mxu0 %v639
        %2456 = vmatprep.subr.mxu0 0.0
        %2457 = vmatpush1.msra.mxu0 %v634
        %2458 = vmatprep.subr.mxu0 0.0
        %2459 = vmatpush1.msra.mxu0 %v629
        %2460 = vmatprep.subr.mxu0 0.0
        %2461 = vmatpush1.msra.mxu0 %v624
        %2462 = vmatprep.subr.mxu0 0.0
        %2463 = vmatpush2.msra.mxu0 0.0
        %2464 = vmatprep.subr.mxu0 0.0
        %2465 = vmatpush2.msra.mxu0 0.0
        %2466 = vmatprep.subr.mxu0 0.0
        %2467 = vmatpush2.msra.mxu0 0.0
        %2468 = vmatprep.subr.mxu0 0.0
        %2469 = vmatpush2.msra.mxu0 0.0
        %2470 = vmatprep.subr.mxu0 0.0
        %2471 = vmatpush2.msra.mxu0 0.0
        %2472 = vmatprep.subr.mxu0 0.0
        %2473 = vmatpush2.msra.mxu0 0.0
        %2474 = vmatprep.subr.mxu0 0.0
        %2475 = vmatpush2.msra.mxu0 0.0
        %2476 = vmatprep.subr.mxu0 0.0
        %2477 = vmatpush2.msra.mxu0 0.0
        %2478 = vmatprep.subr.mxu0 0.0
        %2479 = vmatpush2.msra.mxu0 0.0
        %2480 = vmatprep.subr.mxu0 0.0
        %2481 = vmatpush2.msra.mxu0 0.0
        %2482 = vmatprep.subr.mxu0 0.0
        %2483 = vmatpush2.msra.mxu0 0.0
        %2484 = vmatprep.subr.mxu0 0.0
        %2485 = vmatpush2.msra.mxu0 0.0
        %2486 = vmatprep.subr.mxu0 0.0
        %2487 = vmatpush2.msra.mxu0 0.0
        %2488 = vmatprep.subr.mxu0 0.0
        %2489 = vmatpush2.msra.mxu0 0.0
        %2490 = vmatprep.subr.mxu0 0.0
        %2491 = vmatpush2.msra.mxu0 0.0
        %2492 = vmatprep.subr.mxu0 0.0
        %2493 = vmatpush2.msra.mxu0 0.0
        %2494 = vmatprep.mubr.f32.mxu0 0.0
        %2495 = vmatmul.mubr.f32.gmra.mxu0 %v2411
        %v2496 = vpop.f32.mrf.mxu0
        %v2497 = vadd.f32 %v2429, %v2496
        %v2498 = vpop.f32.mrf.mxu0
        %2499 = vmatprep.mubr.f32.mxu0 0.0
        %2500 = vmatmul.mubr.f32.gmra.mxu0 %v2413
        %v2501 = vpop.f32.mrf.mxu0
        %v2502 = vadd.f32 %v2429, %v2501
        %v2503 = vpop.f32.mrf.mxu0
        %2504 = vmatprep.mubr.f32.mxu0 0.0
        %2505 = vmatmul.mubr.f32.gmra.mxu0 %v2415
        %v2506 = vpop.f32.mrf.mxu0
        %v2507 = vadd.f32 %v2429, %v2506
        %v2508 = vpop.f32.mrf.mxu0
        %2509 = vmatprep.mubr.f32.mxu0 0.0
        %2510 = vmatmul.mubr.f32.gmra.mxu0 %v2417
        %v2511 = vpop.f32.mrf.mxu0
        %v2512 = vadd.f32 %v2429, %v2511
        %v2513 = vpop.f32.mrf.mxu0
        %2514 = vmatprep.mubr.f32.mxu0 0.0
        %2515 = vmatmul.mubr.f32.gmra.mxu0 %v2419
        %v2516 = vpop.f32.mrf.mxu0
        %v2517 = vadd.f32 %v2429, %v2516
        %v2518 = vpop.f32.mrf.mxu0
        %2519 = vmatprep.mubr.f32.mxu0 0.0
        %2520 = vmatmul.mubr.f32.gmra.mxu0 %v2421
        %v2521 = vpop.f32.mrf.mxu0
        %v2522 = vadd.f32 %v2429, %v2521
        %v2523 = vpop.f32.mrf.mxu0
        %2524 = vmatprep.mubr.f32.mxu0 0.0
        %2525 = vmatmul.mubr.f32.gmra.mxu0 %v2423
        %v2526 = vpop.f32.mrf.mxu0
        %v2527 = vadd.f32 %v2429, %v2526
        %v2528 = vpop.f32.mrf.mxu0
        %2529 = vmatprep.mubr.f32.mxu0 0.0
        %2530 = vmatmul.mubr.f32.gmra.mxu0 %v2425
        %v2531 = vpop.f32.mrf.mxu0
        %v2532 = vadd.f32 %v2429, %v2531
        %v2533 = vpop.f32.mrf.mxu0
        %2534 = vdwg.mxu0
        %vm2535 = vcmp.gt.f32.partialorder %v2497, 0.0
        %vm2536 = vcmp.gt.f32.partialorder %v2502, 0.0
        %vm2537 = vcmp.gt.f32.partialorder %v2507, 0.0
        %vm2538 = vcmp.gt.f32.partialorder %v2512, 0.0
        %vm2539 = vcmp.gt.f32.partialorder %v2517, 0.0
        %vm2540 = vcmp.gt.f32.partialorder %v2522, 0.0
        %vm2541 = vcmp.gt.f32.partialorder %v2527, 0.0
        %vm2542 = vcmp.gt.f32.partialorder %v2532, 0.0
        %v2543 = vmin.f32 %v2497, 0.0
        %v2544 = vmin.f32 %v2502, 0.0
        %v2545 = vmin.f32 %v2507, 0.0
        %v2546 = vmin.f32 %v2512, 0.0
        %v2547 = vmin.f32 %v2517, 0.0
        %v2548 = vmin.f32 %v2522, 0.0
        %v2549 = vmin.f32 %v2527, 0.0
        %v2550 = vmin.f32 %v2532, 0.0
        %v2551 = vmul.f32 %v2543, 1.442695
        %v2552 = vpow.pop %v2551
        %v2553 = vmul.f32 %v2544, 1.442695
        %v2554 = vpow.pop %v2553
        %v2555 = vmul.f32 %v2545, 1.442695
        %v2556 = vpow.pop %v2555
        %v2557 = vmul.f32 %v2546, 1.442695
        %v2558 = vpow.pop %v2557
        %v2559 = vmul.f32 %v2547, 1.442695
        %v2560 = vpow.pop %v2559
        %v2561 = vmul.f32 %v2548, 1.442695
        %v2562 = vpow.pop %v2561
        %v2563 = vmul.f32 %v2549, 1.442695
        %v2564 = vpow.pop %v2563
        %v2565 = vmul.f32 %v2550, 1.442695
        %v2566 = vpow.pop %v2565
        %v2567 = vsub.f32 %v2552, 1.0
        %v2568 = vsub.f32 %v2554, 1.0
        %v2569 = vsub.f32 %v2556, 1.0
        %v2570 = vsub.f32 %v2558, 1.0
        %v2571 = vsub.f32 %v2560, 1.0
        %v2572 = vsub.f32 %v2562, 1.0
        %v2573 = vsub.f32 %v2564, 1.0
        %v2574 = vsub.f32 %v2566, 1.0
        %v2575 = vsel %vm2535, %v2497, %v2567
        %v2576 = vsel %vm2536, %v2502, %v2568
        %v2577 = vsel %vm2537, %v2507, %v2569
        %v2578 = vsel %vm2538, %v2512, %v2570
        %v2579 = vsel %vm2539, %v2517, %v2571
        %v2580 = vsel %vm2540, %v2522, %v2572
        %v2581 = vsel %vm2541, %v2527, %v2573
        %v2582 = vsel %vm2542, %v2532, %v2574
        %vm2583 = vcmask 80896
        %2584 = vst.msk [vmem:[%s470] sm:$0xff] %vm2583, %v2575
        %2585 = vst.msk [vmem:[%s470 + $0x8] sm:$0xff] %vm2583, %v2576
        %2586 = vst.msk [vmem:[%s470 + $0x10] sm:$0xff] %vm2583, %v2577
        %2587 = vst.msk [vmem:[%s470 + $0x18] sm:$0xff] %vm2583, %v2578
        %2588 = vst.msk [vmem:[%s470 + $0x20] sm:$0xff] %vm2583, %v2579
        %2589 = vst.msk [vmem:[%s470 + $0x28] sm:$0xff] %vm2583, %v2580
        %2590 = vst.msk [vmem:[%s470 + $0x30] sm:$0xff] %vm2583, %v2581
        %2591 = vst.msk [vmem:[%s470 + $0x38] sm:$0xff] %vm2583, %v2582
        %s2592 = sld [smem:[#allocation3 + $0xa]]
        %v2593 = vstv %s2592
        %v2594 = vmul.f32 %v2593, %v888
        %v2595 = vmul.f32 %v2593, %v889
        %v2596 = vmul.f32 %v2593, %v890
        %v2597 = vmul.f32 %v2593, %v891
        %v2598 = vmul.f32 %v2593, %v892
        %v2599 = vmul.f32 %v2593, %v893
        %v2600 = vmul.f32 %v2593, %v894
        %v2601 = vmul.f32 %v2593, %v895
        %s2602 = sld [smem:[#allocation3 + $0x8a]]
        %v2603 = vstv %s2602
        %v2604 = vmul.f32 %v2603, %v897
        %v2605 = vmul.f32 %v2603, %v898
        %v2606 = vmul.f32 %v2603, %v899
        %v2607 = vmul.f32 %v2603, %v900
        %v2608 = vmul.f32 %v2603, %v901
        %v2609 = vmul.f32 %v2603, %v902
        %v2610 = vmul.f32 %v2603, %v903
        %v2611 = vmul.f32 %v2603, %v904
        %v2612 = vadd.f32 %v2594, %v2604
        %v2613 = vadd.f32 %v2595, %v2605
        %v2614 = vadd.f32 %v2596, %v2606
        %v2615 = vadd.f32 %v2597, %v2607
        %v2616 = vadd.f32 %v2598, %v2608
        %v2617 = vadd.f32 %v2599, %v2609
        %v2618 = vadd.f32 %v2600, %v2610
        %v2619 = vadd.f32 %v2601, %v2611
        %s2620 = sld [smem:[#allocation3 + $0x10a]]
        %v2621 = vstv %s2620
        %v2622 = vmul.f32 %v2621, %v906
        %v2623 = vmul.f32 %v2621, %v907
        %v2624 = vmul.f32 %v2621, %v908
        %v2625 = vmul.f32 %v2621, %v909
        %v2626 = vmul.f32 %v2621, %v910
        %v2627 = vmul.f32 %v2621, %v911
        %v2628 = vmul.f32 %v2621, %v912
        %v2629 = vmul.f32 %v2621, %v913
        %v2630 = vadd.f32 %v2612, %v2622
        %v2631 = vadd.f32 %v2613, %v2623
        %v2632 = vadd.f32 %v2614, %v2624
        %v2633 = vadd.f32 %v2615, %v2625
        %v2634 = vadd.f32 %v2616, %v2626
        %v2635 = vadd.f32 %v2617, %v2627
        %v2636 = vadd.f32 %v2618, %v2628
        %v2637 = vadd.f32 %v2619, %v2629
        %2638 = vset.pattern.permute.xlu0 10
        %2639 = vperm.xlu0 %2638, %v842
        %v2640 = vpop.permute.xlu0 %2639
        %2642 = vset.pattern.permute.xlu0 10
        %2643 = vperm.xlu0 %2642, %v847
        %v2644 = vpop.permute.xlu0 %2643
        %2646 = vset.pattern.permute.xlu0 10
        %2647 = vperm.xlu0 %2646, %v852
        %v2648 = vpop.permute.xlu0 %2647
        %2650 = vset.pattern.permute.xlu0 10
        %2651 = vperm.xlu0 %2650, %v857
        %v2652 = vpop.permute.xlu0 %2651
        %2654 = vset.pattern.permute.xlu0 10
        %2655 = vperm.xlu0 %2654, %v862
        %v2656 = vpop.permute.xlu0 %2655
        %2658 = vset.pattern.permute.xlu0 10
        %2659 = vperm.xlu0 %2658, %v867
        %v2660 = vpop.permute.xlu0 %2659
        %2662 = vset.pattern.permute.xlu0 10
        %2663 = vperm.xlu0 %2662, %v872
        %v2664 = vpop.permute.xlu0 %2663
        %2666 = vset.pattern.permute.xlu0 10
        %2667 = vperm.xlu0 %2666, %v877
        %v2668 = vpop.permute.xlu0 %2667
        %v2670 = vlaneseq
        %v2671 = vshrl.u32 %v2670, 7
        %v2672 = vsub.s32 2, %v2671
        %v2673 = vrot.slane %v719, %v2672
        %v2674 = vadd.f32 %v2640, %v2673
        %v2675 = vadd.f32 %v2644, %v2673
        %v2676 = vadd.f32 %v2648, %v2673
        %v2677 = vadd.f32 %v2652, %v2673
        %v2678 = vadd.f32 %v2656, %v2673
        %v2679 = vadd.f32 %v2660, %v2673
        %v2680 = vadd.f32 %v2664, %v2673
        %v2681 = vadd.f32 %v2668, %v2673
        %v2682 = vadd.f32 %v2674, %v2630
        %v2683 = vadd.f32 %v2675, %v2631
        %v2684 = vadd.f32 %v2676, %v2632
        %v2685 = vadd.f32 %v2677, %v2633
        %v2686 = vadd.f32 %v2678, %v2634
        %v2687 = vadd.f32 %v2679, %v2635
        %v2688 = vadd.f32 %v2680, %v2636
        %v2689 = vadd.f32 %v2681, %v2637
        %vm2690 = vcmp.gt.f32.partialorder %v2682, 0.0
        %vm2691 = vcmp.gt.f32.partialorder %v2683, 0.0
        %vm2692 = vcmp.gt.f32.partialorder %v2684, 0.0
        %vm2693 = vcmp.gt.f32.partialorder %v2685, 0.0
        %vm2694 = vcmp.gt.f32.partialorder %v2686, 0.0
        %vm2695 = vcmp.gt.f32.partialorder %v2687, 0.0
        %vm2696 = vcmp.gt.f32.partialorder %v2688, 0.0
        %vm2697 = vcmp.gt.f32.partialorder %v2689, 0.0
        %v2698 = vmul.f32 %v2682, 0.2
        %v2699 = vmul.f32 %v2683, 0.2
        %v2700 = vmul.f32 %v2684, 0.2
        %v2701 = vmul.f32 %v2685, 0.2
        %v2702 = vmul.f32 %v2686, 0.2
        %v2703 = vmul.f32 %v2687, 0.2
        %v2704 = vmul.f32 %v2688, 0.2
        %v2705 = vmul.f32 %v2689, 0.2
        %v2706 = vsel %vm2690, %v2682, %v2698
        %v2707 = vsel %vm2691, %v2683, %v2699
        %v2708 = vsel %vm2692, %v2684, %v2700
        %v2709 = vsel %vm2693, %v2685, %v2701
        %v2710 = vsel %vm2694, %v2686, %v2702
        %v2711 = vsel %vm2695, %v2687, %v2703
        %v2712 = vsel %vm2696, %v2688, %v2704
        %v2713 = vsel %vm2697, %v2689, %v2705
        %s2714 = sld [smem:[#allocation5 + $0xa]]
        %v2715 = vstv %s2714
        %v2716 = vmul.f32 %v2715, %v2706
        %v2717 = vmul.f32 %v2715, %v2707
        %v2718 = vmul.f32 %v2715, %v2708
        %v2719 = vmul.f32 %v2715, %v2709
        %v2720 = vmul.f32 %v2715, %v2710
        %v2721 = vmul.f32 %v2715, %v2711
        %v2722 = vmul.f32 %v2715, %v2712
        %v2723 = vmul.f32 %v2715, %v2713
        %v2724 = vadd.f32 %v2716, 0.0
        %v2725 = vadd.f32 %v2717, 0.0
        %v2726 = vadd.f32 %v2718, 0.0
        %v2727 = vadd.f32 %v2719, 0.0
        %v2728 = vadd.f32 %v2720, 0.0
        %v2729 = vadd.f32 %v2721, 0.0
        %v2730 = vadd.f32 %v2722, 0.0
        %v2731 = vadd.f32 %v2723, 0.0
        %s2732 = sld [smem:[#allocation3 + $0xb]]
        %v2733 = vstv %s2732
        %v2734 = vmul.f32 %v2733, %v888
        %v2735 = vmul.f32 %v2733, %v889
        %v2736 = vmul.f32 %v2733, %v890
        %v2737 = vmul.f32 %v2733, %v891
        %v2738 = vmul.f32 %v2733, %v892
        %v2739 = vmul.f32 %v2733, %v893
        %v2740 = vmul.f32 %v2733, %v894
        %v2741 = vmul.f32 %v2733, %v895
        %s2742 = sld [smem:[#allocation3 + $0x8b]]
        %v2743 = vstv %s2742
        %v2744 = vmul.f32 %v2743, %v897
        %v2745 = vmul.f32 %v2743, %v898
        %v2746 = vmul.f32 %v2743, %v899
        %v2747 = vmul.f32 %v2743, %v900
        %v2748 = vmul.f32 %v2743, %v901
        %v2749 = vmul.f32 %v2743, %v902
        %v2750 = vmul.f32 %v2743, %v903
        %v2751 = vmul.f32 %v2743, %v904
        %v2752 = vadd.f32 %v2734, %v2744
        %v2753 = vadd.f32 %v2735, %v2745
        %v2754 = vadd.f32 %v2736, %v2746
        %v2755 = vadd.f32 %v2737, %v2747
        %v2756 = vadd.f32 %v2738, %v2748
        %v2757 = vadd.f32 %v2739, %v2749
        %v2758 = vadd.f32 %v2740, %v2750
        %v2759 = vadd.f32 %v2741, %v2751
        %s2760 = sld [smem:[#allocation3 + $0x10b]]
        %v2761 = vstv %s2760
        %v2762 = vmul.f32 %v2761, %v906
        %v2763 = vmul.f32 %v2761, %v907
        %v2764 = vmul.f32 %v2761, %v908
        %v2765 = vmul.f32 %v2761, %v909
        %v2766 = vmul.f32 %v2761, %v910
        %v2767 = vmul.f32 %v2761, %v911
        %v2768 = vmul.f32 %v2761, %v912
        %v2769 = vmul.f32 %v2761, %v913
        %v2770 = vadd.f32 %v2752, %v2762
        %v2771 = vadd.f32 %v2753, %v2763
        %v2772 = vadd.f32 %v2754, %v2764
        %v2773 = vadd.f32 %v2755, %v2765
        %v2774 = vadd.f32 %v2756, %v2766
        %v2775 = vadd.f32 %v2757, %v2767
        %v2776 = vadd.f32 %v2758, %v2768
        %v2777 = vadd.f32 %v2759, %v2769
        %2778 = vset.pattern.permute.xlu0 11
        %2779 = vperm.xlu0 %2778, %v842
        %v2780 = vpop.permute.xlu0 %2779
        %2782 = vset.pattern.permute.xlu0 11
        %2783 = vperm.xlu0 %2782, %v847
        %v2784 = vpop.permute.xlu0 %2783
        %2786 = vset.pattern.permute.xlu0 11
        %2787 = vperm.xlu0 %2786, %v852
        %v2788 = vpop.permute.xlu0 %2787
        %2790 = vset.pattern.permute.xlu0 11
        %2791 = vperm.xlu0 %2790, %v857
        %v2792 = vpop.permute.xlu0 %2791
        %2794 = vset.pattern.permute.xlu0 11
        %2795 = vperm.xlu0 %2794, %v862
        %v2796 = vpop.permute.xlu0 %2795
        %2798 = vset.pattern.permute.xlu0 11
        %2799 = vperm.xlu0 %2798, %v867
        %v2800 = vpop.permute.xlu0 %2799
        %2802 = vset.pattern.permute.xlu0 11
        %2803 = vperm.xlu0 %2802, %v872
        %v2804 = vpop.permute.xlu0 %2803
        %2806 = vset.pattern.permute.xlu0 11
        %2807 = vperm.xlu0 %2806, %v877
        %v2808 = vpop.permute.xlu0 %2807
        %v2810 = vlaneseq
        %v2811 = vshrl.u32 %v2810, 7
        %v2812 = vsub.s32 3, %v2811
        %v2813 = vrot.slane %v719, %v2812
        %v2814 = vadd.f32 %v2780, %v2813
        %v2815 = vadd.f32 %v2784, %v2813
        %v2816 = vadd.f32 %v2788, %v2813
        %v2817 = vadd.f32 %v2792, %v2813
        %v2818 = vadd.f32 %v2796, %v2813
        %v2819 = vadd.f32 %v2800, %v2813
        %v2820 = vadd.f32 %v2804, %v2813
        %v2821 = vadd.f32 %v2808, %v2813
        %v2822 = vadd.f32 %v2814, %v2770
        %v2823 = vadd.f32 %v2815, %v2771
        %v2824 = vadd.f32 %v2816, %v2772
        %v2825 = vadd.f32 %v2817, %v2773
        %v2826 = vadd.f32 %v2818, %v2774
        %v2827 = vadd.f32 %v2819, %v2775
        %v2828 = vadd.f32 %v2820, %v2776
        %v2829 = vadd.f32 %v2821, %v2777
        %vm2830 = vcmp.gt.f32.partialorder %v2822, 0.0
        %vm2831 = vcmp.gt.f32.partialorder %v2823, 0.0
        %vm2832 = vcmp.gt.f32.partialorder %v2824, 0.0
        %vm2833 = vcmp.gt.f32.partialorder %v2825, 0.0
        %vm2834 = vcmp.gt.f32.partialorder %v2826, 0.0
        %vm2835 = vcmp.gt.f32.partialorder %v2827, 0.0
        %vm2836 = vcmp.gt.f32.partialorder %v2828, 0.0
        %vm2837 = vcmp.gt.f32.partialorder %v2829, 0.0
        %v2838 = vmul.f32 %v2822, 0.2
        %v2839 = vmul.f32 %v2823, 0.2
        %v2840 = vmul.f32 %v2824, 0.2
        %v2841 = vmul.f32 %v2825, 0.2
        %v2842 = vmul.f32 %v2826, 0.2
        %v2843 = vmul.f32 %v2827, 0.2
        %v2844 = vmul.f32 %v2828, 0.2
        %v2845 = vmul.f32 %v2829, 0.2
        %v2846 = vsel %vm2830, %v2822, %v2838
        %v2847 = vsel %vm2831, %v2823, %v2839
        %v2848 = vsel %vm2832, %v2824, %v2840
        %v2849 = vsel %vm2833, %v2825, %v2841
        %v2850 = vsel %vm2834, %v2826, %v2842
        %v2851 = vsel %vm2835, %v2827, %v2843
        %v2852 = vsel %vm2836, %v2828, %v2844
        %v2853 = vsel %vm2837, %v2829, %v2845
        %s2854 = sld [smem:[#allocation5 + $0xb]]
        %v2855 = vstv %s2854
        %v2856 = vmul.f32 %v2855, %v2846
        %v2857 = vmul.f32 %v2855, %v2847
        %v2858 = vmul.f32 %v2855, %v2848
        %v2859 = vmul.f32 %v2855, %v2849
        %v2860 = vmul.f32 %v2855, %v2850
        %v2861 = vmul.f32 %v2855, %v2851
        %v2862 = vmul.f32 %v2855, %v2852
        %v2863 = vmul.f32 %v2855, %v2853
        %v2864 = vadd.f32 %v2724, %v2856
        %v2865 = vadd.f32 %v2725, %v2857
        %v2866 = vadd.f32 %v2726, %v2858
        %v2867 = vadd.f32 %v2727, %v2859
        %v2868 = vadd.f32 %v2728, %v2860
        %v2869 = vadd.f32 %v2729, %v2861
        %v2870 = vadd.f32 %v2730, %v2862
        %v2871 = vadd.f32 %v2731, %v2863
        %s2872 = sld [smem:[#allocation3 + $0xc]]
        %v2873 = vstv %s2872
        %v2874 = vmul.f32 %v2873, %v888
        %v2875 = vmul.f32 %v2873, %v889
        %v2876 = vmul.f32 %v2873, %v890
        %v2877 = vmul.f32 %v2873, %v891
        %v2878 = vmul.f32 %v2873, %v892
        %v2879 = vmul.f32 %v2873, %v893
        %v2880 = vmul.f32 %v2873, %v894
        %v2881 = vmul.f32 %v2873, %v895
        %s2882 = sld [smem:[#allocation3 + $0x8c]]
        %v2883 = vstv %s2882
        %v2884 = vmul.f32 %v2883, %v897
        %v2885 = vmul.f32 %v2883, %v898
        %v2886 = vmul.f32 %v2883, %v899
        %v2887 = vmul.f32 %v2883, %v900
        %v2888 = vmul.f32 %v2883, %v901
        %v2889 = vmul.f32 %v2883, %v902
        %v2890 = vmul.f32 %v2883, %v903
        %v2891 = vmul.f32 %v2883, %v904
        %v2892 = vadd.f32 %v2874, %v2884
        %v2893 = vadd.f32 %v2875, %v2885
        %v2894 = vadd.f32 %v2876, %v2886
        %v2895 = vadd.f32 %v2877, %v2887
        %v2896 = vadd.f32 %v2878, %v2888
        %v2897 = vadd.f32 %v2879, %v2889
        %v2898 = vadd.f32 %v2880, %v2890
        %v2899 = vadd.f32 %v2881, %v2891
        %s2900 = sld [smem:[#allocation3 + $0x10c]]
        %v2901 = vstv %s2900
        %v2902 = vmul.f32 %v2901, %v906
        %v2903 = vmul.f32 %v2901, %v907
        %v2904 = vmul.f32 %v2901, %v908
        %v2905 = vmul.f32 %v2901, %v909
        %v2906 = vmul.f32 %v2901, %v910
        %v2907 = vmul.f32 %v2901, %v911
        %v2908 = vmul.f32 %v2901, %v912
        %v2909 = vmul.f32 %v2901, %v913
        %v2910 = vadd.f32 %v2892, %v2902
        %v2911 = vadd.f32 %v2893, %v2903
        %v2912 = vadd.f32 %v2894, %v2904
        %v2913 = vadd.f32 %v2895, %v2905
        %v2914 = vadd.f32 %v2896, %v2906
        %v2915 = vadd.f32 %v2897, %v2907
        %v2916 = vadd.f32 %v2898, %v2908
        %v2917 = vadd.f32 %v2899, %v2909
        %2918 = vset.pattern.permute.xlu0 12
        %2919 = vperm.xlu0 %2918, %v842
        %v2920 = vpop.permute.xlu0 %2919
        %2922 = vset.pattern.permute.xlu0 12
        %2923 = vperm.xlu0 %2922, %v847
        %v2924 = vpop.permute.xlu0 %2923
        %2926 = vset.pattern.permute.xlu0 12
        %2927 = vperm.xlu0 %2926, %v852
        %v2928 = vpop.permute.xlu0 %2927
        %2930 = vset.pattern.permute.xlu0 12
        %2931 = vperm.xlu0 %2930, %v857
        %v2932 = vpop.permute.xlu0 %2931
        %2934 = vset.pattern.permute.xlu0 12
        %2935 = vperm.xlu0 %2934, %v862
        %v2936 = vpop.permute.xlu0 %2935
        %2938 = vset.pattern.permute.xlu0 12
        %2939 = vperm.xlu0 %2938, %v867
        %v2940 = vpop.permute.xlu0 %2939
        %2942 = vset.pattern.permute.xlu0 12
        %2943 = vperm.xlu0 %2942, %v872
        %v2944 = vpop.permute.xlu0 %2943
        %2946 = vset.pattern.permute.xlu0 12
        %2947 = vperm.xlu0 %2946, %v877
        %v2948 = vpop.permute.xlu0 %2947
        %v2950 = vlaneseq
        %v2951 = vshrl.u32 %v2950, 7
        %v2952 = vsub.s32 4, %v2951
        %v2953 = vrot.slane %v719, %v2952
        %v2954 = vadd.f32 %v2920, %v2953
        %v2955 = vadd.f32 %v2924, %v2953
        %v2956 = vadd.f32 %v2928, %v2953
        %v2957 = vadd.f32 %v2932, %v2953
        %v2958 = vadd.f32 %v2936, %v2953
        %v2959 = vadd.f32 %v2940, %v2953
        %v2960 = vadd.f32 %v2944, %v2953
        %v2961 = vadd.f32 %v2948, %v2953
        %v2962 = vadd.f32 %v2954, %v2910
        %v2963 = vadd.f32 %v2955, %v2911
        %v2964 = vadd.f32 %v2956, %v2912
        %v2965 = vadd.f32 %v2957, %v2913
        %v2966 = vadd.f32 %v2958, %v2914
        %v2967 = vadd.f32 %v2959, %v2915
        %v2968 = vadd.f32 %v2960, %v2916
        %v2969 = vadd.f32 %v2961, %v2917
        %vm2970 = vcmp.gt.f32.partialorder %v2962, 0.0
        %vm2971 = vcmp.gt.f32.partialorder %v2963, 0.0
        %vm2972 = vcmp.gt.f32.partialorder %v2964, 0.0
        %vm2973 = vcmp.gt.f32.partialorder %v2965, 0.0
        %vm2974 = vcmp.gt.f32.partialorder %v2966, 0.0
        %vm2975 = vcmp.gt.f32.partialorder %v2967, 0.0
        %vm2976 = vcmp.gt.f32.partialorder %v2968, 0.0
        %vm2977 = vcmp.gt.f32.partialorder %v2969, 0.0
        %v2978 = vmul.f32 %v2962, 0.2
        %v2979 = vmul.f32 %v2963, 0.2
        %v2980 = vmul.f32 %v2964, 0.2
        %v2981 = vmul.f32 %v2965, 0.2
        %v2982 = vmul.f32 %v2966, 0.2
        %v2983 = vmul.f32 %v2967, 0.2
        %v2984 = vmul.f32 %v2968, 0.2
        %v2985 = vmul.f32 %v2969, 0.2
        %v2986 = vsel %vm2970, %v2962, %v2978
        %v2987 = vsel %vm2971, %v2963, %v2979
        %v2988 = vsel %vm2972, %v2964, %v2980
        %v2989 = vsel %vm2973, %v2965, %v2981
        %v2990 = vsel %vm2974, %v2966, %v2982
        %v2991 = vsel %vm2975, %v2967, %v2983
        %v2992 = vsel %vm2976, %v2968, %v2984
        %v2993 = vsel %vm2977, %v2969, %v2985
        %s2994 = sld [smem:[#allocation5 + $0xc]]
        %v2995 = vstv %s2994
        %v2996 = vmul.f32 %v2995, %v2986
        %v2997 = vmul.f32 %v2995, %v2987
        %v2998 = vmul.f32 %v2995, %v2988
        %v2999 = vmul.f32 %v2995, %v2989
        %v3000 = vmul.f32 %v2995, %v2990
        %v3001 = vmul.f32 %v2995, %v2991
        %v3002 = vmul.f32 %v2995, %v2992
        %v3003 = vmul.f32 %v2995, %v2993
        %v3004 = vadd.f32 %v2864, %v2996
        %v3005 = vadd.f32 %v2865, %v2997
        %v3006 = vadd.f32 %v2866, %v2998
        %v3007 = vadd.f32 %v2867, %v2999
        %v3008 = vadd.f32 %v2868, %v3000
        %v3009 = vadd.f32 %v2869, %v3001
        %v3010 = vadd.f32 %v2870, %v3002
        %v3011 = vadd.f32 %v2871, %v3003
        %s3012 = sld [smem:[#allocation3 + $0xd]]
        %v3013 = vstv %s3012
        %v3014 = vmul.f32 %v3013, %v888
        %v3015 = vmul.f32 %v3013, %v889
        %v3016 = vmul.f32 %v3013, %v890
        %v3017 = vmul.f32 %v3013, %v891
        %v3018 = vmul.f32 %v3013, %v892
        %v3019 = vmul.f32 %v3013, %v893
        %v3020 = vmul.f32 %v3013, %v894
        %v3021 = vmul.f32 %v3013, %v895
        %s3022 = sld [smem:[#allocation3 + $0x8d]]
        %v3023 = vstv %s3022
        %v3024 = vmul.f32 %v3023, %v897
        %v3025 = vmul.f32 %v3023, %v898
        %v3026 = vmul.f32 %v3023, %v899
        %v3027 = vmul.f32 %v3023, %v900
        %v3028 = vmul.f32 %v3023, %v901
        %v3029 = vmul.f32 %v3023, %v902
        %v3030 = vmul.f32 %v3023, %v903
        %v3031 = vmul.f32 %v3023, %v904
        %v3032 = vadd.f32 %v3014, %v3024
        %v3033 = vadd.f32 %v3015, %v3025
        %v3034 = vadd.f32 %v3016, %v3026
        %v3035 = vadd.f32 %v3017, %v3027
        %v3036 = vadd.f32 %v3018, %v3028
        %v3037 = vadd.f32 %v3019, %v3029
        %v3038 = vadd.f32 %v3020, %v3030
        %v3039 = vadd.f32 %v3021, %v3031
        %s3040 = sld [smem:[#allocation3 + $0x10d]]
        %v3041 = vstv %s3040
        %v3042 = vmul.f32 %v3041, %v906
        %v3043 = vmul.f32 %v3041, %v907
        %v3044 = vmul.f32 %v3041, %v908
        %v3045 = vmul.f32 %v3041, %v909
        %v3046 = vmul.f32 %v3041, %v910
        %v3047 = vmul.f32 %v3041, %v911
        %v3048 = vmul.f32 %v3041, %v912
        %v3049 = vmul.f32 %v3041, %v913
        %v3050 = vadd.f32 %v3032, %v3042
        %v3051 = vadd.f32 %v3033, %v3043
        %v3052 = vadd.f32 %v3034, %v3044
        %v3053 = vadd.f32 %v3035, %v3045
        %v3054 = vadd.f32 %v3036, %v3046
        %v3055 = vadd.f32 %v3037, %v3047
        %v3056 = vadd.f32 %v3038, %v3048
        %v3057 = vadd.f32 %v3039, %v3049
        %3058 = vset.pattern.permute.xlu0 13
        %3059 = vperm.xlu0 %3058, %v842
        %v3060 = vpop.permute.xlu0 %3059
        %3062 = vset.pattern.permute.xlu0 13
        %3063 = vperm.xlu0 %3062, %v847
        %v3064 = vpop.permute.xlu0 %3063
        %3066 = vset.pattern.permute.xlu0 13
        %3067 = vperm.xlu0 %3066, %v852
        %v3068 = vpop.permute.xlu0 %3067
        %3070 = vset.pattern.permute.xlu0 13
        %3071 = vperm.xlu0 %3070, %v857
        %v3072 = vpop.permute.xlu0 %3071
        %3074 = vset.pattern.permute.xlu0 13
        %3075 = vperm.xlu0 %3074, %v862
        %v3076 = vpop.permute.xlu0 %3075
        %3078 = vset.pattern.permute.xlu0 13
        %3079 = vperm.xlu0 %3078, %v867
        %v3080 = vpop.permute.xlu0 %3079
        %3082 = vset.pattern.permute.xlu0 13
        %3083 = vperm.xlu0 %3082, %v872
        %v3084 = vpop.permute.xlu0 %3083
        %3086 = vset.pattern.permute.xlu0 13
        %3087 = vperm.xlu0 %3086, %v877
        %v3088 = vpop.permute.xlu0 %3087
        %v3090 = vlaneseq
        %v3091 = vshrl.u32 %v3090, 7
        %v3092 = vsub.s32 5, %v3091
        %v3093 = vrot.slane %v719, %v3092
        %v3094 = vadd.f32 %v3060, %v3093
        %v3095 = vadd.f32 %v3064, %v3093
        %v3096 = vadd.f32 %v3068, %v3093
        %v3097 = vadd.f32 %v3072, %v3093
        %v3098 = vadd.f32 %v3076, %v3093
        %v3099 = vadd.f32 %v3080, %v3093
        %v3100 = vadd.f32 %v3084, %v3093
        %v3101 = vadd.f32 %v3088, %v3093
        %v3102 = vadd.f32 %v3094, %v3050
        %v3103 = vadd.f32 %v3095, %v3051
        %v3104 = vadd.f32 %v3096, %v3052
        %v3105 = vadd.f32 %v3097, %v3053
        %v3106 = vadd.f32 %v3098, %v3054
        %v3107 = vadd.f32 %v3099, %v3055
        %v3108 = vadd.f32 %v3100, %v3056
        %v3109 = vadd.f32 %v3101, %v3057
        %vm3110 = vcmp.gt.f32.partialorder %v3102, 0.0
        %vm3111 = vcmp.gt.f32.partialorder %v3103, 0.0
        %vm3112 = vcmp.gt.f32.partialorder %v3104, 0.0
        %vm3113 = vcmp.gt.f32.partialorder %v3105, 0.0
        %vm3114 = vcmp.gt.f32.partialorder %v3106, 0.0
        %vm3115 = vcmp.gt.f32.partialorder %v3107, 0.0
        %vm3116 = vcmp.gt.f32.partialorder %v3108, 0.0
        %vm3117 = vcmp.gt.f32.partialorder %v3109, 0.0
        %v3118 = vmul.f32 %v3102, 0.2
        %v3119 = vmul.f32 %v3103, 0.2
        %v3120 = vmul.f32 %v3104, 0.2
        %v3121 = vmul.f32 %v3105, 0.2
        %v3122 = vmul.f32 %v3106, 0.2
        %v3123 = vmul.f32 %v3107, 0.2
        %v3124 = vmul.f32 %v3108, 0.2
        %v3125 = vmul.f32 %v3109, 0.2
        %v3126 = vsel %vm3110, %v3102, %v3118
        %v3127 = vsel %vm3111, %v3103, %v3119
        %v3128 = vsel %vm3112, %v3104, %v3120
        %v3129 = vsel %vm3113, %v3105, %v3121
        %v3130 = vsel %vm3114, %v3106, %v3122
        %v3131 = vsel %vm3115, %v3107, %v3123
        %v3132 = vsel %vm3116, %v3108, %v3124
        %v3133 = vsel %vm3117, %v3109, %v3125
        %s3134 = sld [smem:[#allocation5 + $0xd]]
        %v3135 = vstv %s3134
        %v3136 = vmul.f32 %v3135, %v3126
        %v3137 = vmul.f32 %v3135, %v3127
        %v3138 = vmul.f32 %v3135, %v3128
        %v3139 = vmul.f32 %v3135, %v3129
        %v3140 = vmul.f32 %v3135, %v3130
        %v3141 = vmul.f32 %v3135, %v3131
        %v3142 = vmul.f32 %v3135, %v3132
        %v3143 = vmul.f32 %v3135, %v3133
        %v3144 = vadd.f32 %v3004, %v3136
        %v3145 = vadd.f32 %v3005, %v3137
        %v3146 = vadd.f32 %v3006, %v3138
        %v3147 = vadd.f32 %v3007, %v3139
        %v3148 = vadd.f32 %v3008, %v3140
        %v3149 = vadd.f32 %v3009, %v3141
        %v3150 = vadd.f32 %v3010, %v3142
        %v3151 = vadd.f32 %v3011, %v3143
        %s3152 = sld [smem:[#allocation3 + $0xe]]
        %v3153 = vstv %s3152
        %v3154 = vmul.f32 %v3153, %v888
        %v3155 = vmul.f32 %v3153, %v889
        %v3156 = vmul.f32 %v3153, %v890
        %v3157 = vmul.f32 %v3153, %v891
        %v3158 = vmul.f32 %v3153, %v892
        %v3159 = vmul.f32 %v3153, %v893
        %v3160 = vmul.f32 %v3153, %v894
        %v3161 = vmul.f32 %v3153, %v895
        %s3162 = sld [smem:[#allocation3 + $0x8e]]
        %v3163 = vstv %s3162
        %v3164 = vmul.f32 %v3163, %v897
        %v3165 = vmul.f32 %v3163, %v898
        %v3166 = vmul.f32 %v3163, %v899
        %v3167 = vmul.f32 %v3163, %v900
        %v3168 = vmul.f32 %v3163, %v901
        %v3169 = vmul.f32 %v3163, %v902
        %v3170 = vmul.f32 %v3163, %v903
        %v3171 = vmul.f32 %v3163, %v904
        %v3172 = vadd.f32 %v3154, %v3164
        %v3173 = vadd.f32 %v3155, %v3165
        %v3174 = vadd.f32 %v3156, %v3166
        %v3175 = vadd.f32 %v3157, %v3167
        %v3176 = vadd.f32 %v3158, %v3168
        %v3177 = vadd.f32 %v3159, %v3169
        %v3178 = vadd.f32 %v3160, %v3170
        %v3179 = vadd.f32 %v3161, %v3171
        %s3180 = sld [smem:[#allocation3 + $0x10e]]
        %v3181 = vstv %s3180
        %v3182 = vmul.f32 %v3181, %v906
        %v3183 = vmul.f32 %v3181, %v907
        %v3184 = vmul.f32 %v3181, %v908
        %v3185 = vmul.f32 %v3181, %v909
        %v3186 = vmul.f32 %v3181, %v910
        %v3187 = vmul.f32 %v3181, %v911
        %v3188 = vmul.f32 %v3181, %v912
        %v3189 = vmul.f32 %v3181, %v913
        %v3190 = vadd.f32 %v3172, %v3182
        %v3191 = vadd.f32 %v3173, %v3183
        %v3192 = vadd.f32 %v3174, %v3184
        %v3193 = vadd.f32 %v3175, %v3185
        %v3194 = vadd.f32 %v3176, %v3186
        %v3195 = vadd.f32 %v3177, %v3187
        %v3196 = vadd.f32 %v3178, %v3188
        %v3197 = vadd.f32 %v3179, %v3189
        %3198 = vset.pattern.permute.xlu0 14
        %3199 = vperm.xlu0 %3198, %v842
        %v3200 = vpop.permute.xlu0 %3199
        %3202 = vset.pattern.permute.xlu0 14
        %3203 = vperm.xlu0 %3202, %v847
        %v3204 = vpop.permute.xlu0 %3203
        %3206 = vset.pattern.permute.xlu0 14
        %3207 = vperm.xlu0 %3206, %v852
        %v3208 = vpop.permute.xlu0 %3207
        %3210 = vset.pattern.permute.xlu0 14
        %3211 = vperm.xlu0 %3210, %v857
        %v3212 = vpop.permute.xlu0 %3211
        %3214 = vset.pattern.permute.xlu0 14
        %3215 = vperm.xlu0 %3214, %v862
        %v3216 = vpop.permute.xlu0 %3215
        %3218 = vset.pattern.permute.xlu0 14
        %3219 = vperm.xlu0 %3218, %v867
        %v3220 = vpop.permute.xlu0 %3219
        %3222 = vset.pattern.permute.xlu0 14
        %3223 = vperm.xlu0 %3222, %v872
        %v3224 = vpop.permute.xlu0 %3223
        %3226 = vset.pattern.permute.xlu0 14
        %3227 = vperm.xlu0 %3226, %v877
        %v3228 = vpop.permute.xlu0 %3227
        %v3230 = vlaneseq
        %v3231 = vshrl.u32 %v3230, 7
        %v3232 = vsub.s32 6, %v3231
        %v3233 = vrot.slane %v719, %v3232
        %v3234 = vadd.f32 %v3200, %v3233
        %v3235 = vadd.f32 %v3204, %v3233
        %v3236 = vadd.f32 %v3208, %v3233
        %v3237 = vadd.f32 %v3212, %v3233
        %v3238 = vadd.f32 %v3216, %v3233
        %v3239 = vadd.f32 %v3220, %v3233
        %v3240 = vadd.f32 %v3224, %v3233
        %v3241 = vadd.f32 %v3228, %v3233
        %v3242 = vadd.f32 %v3234, %v3190
        %v3243 = vadd.f32 %v3235, %v3191
        %v3244 = vadd.f32 %v3236, %v3192
        %v3245 = vadd.f32 %v3237, %v3193
        %v3246 = vadd.f32 %v3238, %v3194
        %v3247 = vadd.f32 %v3239, %v3195
        %v3248 = vadd.f32 %v3240, %v3196
        %v3249 = vadd.f32 %v3241, %v3197
        %vm3250 = vcmp.gt.f32.partialorder %v3242, 0.0
        %vm3251 = vcmp.gt.f32.partialorder %v3243, 0.0
        %vm3252 = vcmp.gt.f32.partialorder %v3244, 0.0
        %vm3253 = vcmp.gt.f32.partialorder %v3245, 0.0
        %vm3254 = vcmp.gt.f32.partialorder %v3246, 0.0
        %vm3255 = vcmp.gt.f32.partialorder %v3247, 0.0
        %vm3256 = vcmp.gt.f32.partialorder %v3248, 0.0
        %vm3257 = vcmp.gt.f32.partialorder %v3249, 0.0
        %v3258 = vmul.f32 %v3242, 0.2
        %v3259 = vmul.f32 %v3243, 0.2
        %v3260 = vmul.f32 %v3244, 0.2
        %v3261 = vmul.f32 %v3245, 0.2
        %v3262 = vmul.f32 %v3246, 0.2
        %v3263 = vmul.f32 %v3247, 0.2
        %v3264 = vmul.f32 %v3248, 0.2
        %v3265 = vmul.f32 %v3249, 0.2
        %v3266 = vsel %vm3250, %v3242, %v3258
        %v3267 = vsel %vm3251, %v3243, %v3259
        %v3268 = vsel %vm3252, %v3244, %v3260
        %v3269 = vsel %vm3253, %v3245, %v3261
        %v3270 = vsel %vm3254, %v3246, %v3262
        %v3271 = vsel %vm3255, %v3247, %v3263
        %v3272 = vsel %vm3256, %v3248, %v3264
        %v3273 = vsel %vm3257, %v3249, %v3265
        %s3274 = sld [smem:[#allocation5 + $0xe]]
        %v3275 = vstv %s3274
        %v3276 = vmul.f32 %v3275, %v3266
        %v3277 = vmul.f32 %v3275, %v3267
        %v3278 = vmul.f32 %v3275, %v3268
        %v3279 = vmul.f32 %v3275, %v3269
        %v3280 = vmul.f32 %v3275, %v3270
        %v3281 = vmul.f32 %v3275, %v3271
        %v3282 = vmul.f32 %v3275, %v3272
        %v3283 = vmul.f32 %v3275, %v3273
        %v3284 = vadd.f32 %v3144, %v3276
        %v3285 = vadd.f32 %v3145, %v3277
        %v3286 = vadd.f32 %v3146, %v3278
        %v3287 = vadd.f32 %v3147, %v3279
        %v3288 = vadd.f32 %v3148, %v3280
        %v3289 = vadd.f32 %v3149, %v3281
        %v3290 = vadd.f32 %v3150, %v3282
        %v3291 = vadd.f32 %v3151, %v3283
        %s3292 = sld [smem:[#allocation3 + $0xf]]
        %v3293 = vstv %s3292
        %v3294 = vmul.f32 %v3293, %v888
        %v3295 = vmul.f32 %v3293, %v889
        %v3296 = vmul.f32 %v3293, %v890
        %v3297 = vmul.f32 %v3293, %v891
        %v3298 = vmul.f32 %v3293, %v892
        %v3299 = vmul.f32 %v3293, %v893
        %v3300 = vmul.f32 %v3293, %v894
        %v3301 = vmul.f32 %v3293, %v895
        %s3302 = sld [smem:[#allocation3 + $0x8f]]
        %v3303 = vstv %s3302
        %v3304 = vmul.f32 %v3303, %v897
        %v3305 = vmul.f32 %v3303, %v898
        %v3306 = vmul.f32 %v3303, %v899
        %v3307 = vmul.f32 %v3303, %v900
        %v3308 = vmul.f32 %v3303, %v901
        %v3309 = vmul.f32 %v3303, %v902
        %v3310 = vmul.f32 %v3303, %v903
        %v3311 = vmul.f32 %v3303, %v904
        %v3312 = vadd.f32 %v3294, %v3304
        %v3313 = vadd.f32 %v3295, %v3305
        %v3314 = vadd.f32 %v3296, %v3306
        %v3315 = vadd.f32 %v3297, %v3307
        %v3316 = vadd.f32 %v3298, %v3308
        %v3317 = vadd.f32 %v3299, %v3309
        %v3318 = vadd.f32 %v3300, %v3310
        %v3319 = vadd.f32 %v3301, %v3311
        %s3320 = sld [smem:[#allocation3 + $0x10f]]
        %v3321 = vstv %s3320
        %v3322 = vmul.f32 %v3321, %v906
        %v3323 = vmul.f32 %v3321, %v907
        %v3324 = vmul.f32 %v3321, %v908
        %v3325 = vmul.f32 %v3321, %v909
        %v3326 = vmul.f32 %v3321, %v910
        %v3327 = vmul.f32 %v3321, %v911
        %v3328 = vmul.f32 %v3321, %v912
        %v3329 = vmul.f32 %v3321, %v913
        %v3330 = vadd.f32 %v3312, %v3322
        %v3331 = vadd.f32 %v3313, %v3323
        %v3332 = vadd.f32 %v3314, %v3324
        %v3333 = vadd.f32 %v3315, %v3325
        %v3334 = vadd.f32 %v3316, %v3326
        %v3335 = vadd.f32 %v3317, %v3327
        %v3336 = vadd.f32 %v3318, %v3328
        %v3337 = vadd.f32 %v3319, %v3329
        %3338 = vset.pattern.permute.xlu0 15
        %3339 = vperm.xlu0 %3338, %v842
        %v3340 = vpop.permute.xlu0 %3339
        %3342 = vset.pattern.permute.xlu0 15
        %3343 = vperm.xlu0 %3342, %v847
        %v3344 = vpop.permute.xlu0 %3343
        %3346 = vset.pattern.permute.xlu0 15
        %3347 = vperm.xlu0 %3346, %v852
        %v3348 = vpop.permute.xlu0 %3347
        %3350 = vset.pattern.permute.xlu0 15
        %3351 = vperm.xlu0 %3350, %v857
        %v3352 = vpop.permute.xlu0 %3351
        %3354 = vset.pattern.permute.xlu0 15
        %3355 = vperm.xlu0 %3354, %v862
        %v3356 = vpop.permute.xlu0 %3355
        %3358 = vset.pattern.permute.xlu0 15
        %3359 = vperm.xlu0 %3358, %v867
        %v3360 = vpop.permute.xlu0 %3359
        %3362 = vset.pattern.permute.xlu0 15
        %3363 = vperm.xlu0 %3362, %v872
        %v3364 = vpop.permute.xlu0 %3363
        %3366 = vset.pattern.permute.xlu0 15
        %3367 = vperm.xlu0 %3366, %v877
        %v3368 = vpop.permute.xlu0 %3367
        %v3370 = vlaneseq
        %v3371 = vshrl.u32 %v3370, 7
        %v3372 = vsub.s32 7, %v3371
        %v3373 = vrot.slane %v719, %v3372
        %v3374 = vadd.f32 %v3340, %v3373
        %v3375 = vadd.f32 %v3344, %v3373
        %v3376 = vadd.f32 %v3348, %v3373
        %v3377 = vadd.f32 %v3352, %v3373
        %v3378 = vadd.f32 %v3356, %v3373
        %v3379 = vadd.f32 %v3360, %v3373
        %v3380 = vadd.f32 %v3364, %v3373
        %v3381 = vadd.f32 %v3368, %v3373
        %v3382 = vadd.f32 %v3374, %v3330
        %v3383 = vadd.f32 %v3375, %v3331
        %v3384 = vadd.f32 %v3376, %v3332
        %v3385 = vadd.f32 %v3377, %v3333
        %v3386 = vadd.f32 %v3378, %v3334
        %v3387 = vadd.f32 %v3379, %v3335
        %v3388 = vadd.f32 %v3380, %v3336
        %v3389 = vadd.f32 %v3381, %v3337
        %vm3390 = vcmp.gt.f32.partialorder %v3382, 0.0
        %vm3391 = vcmp.gt.f32.partialorder %v3383, 0.0
        %vm3392 = vcmp.gt.f32.partialorder %v3384, 0.0
        %vm3393 = vcmp.gt.f32.partialorder %v3385, 0.0
        %vm3394 = vcmp.gt.f32.partialorder %v3386, 0.0
        %vm3395 = vcmp.gt.f32.partialorder %v3387, 0.0
        %vm3396 = vcmp.gt.f32.partialorder %v3388, 0.0
        %vm3397 = vcmp.gt.f32.partialorder %v3389, 0.0
        %v3398 = vmul.f32 %v3382, 0.2
        %v3399 = vmul.f32 %v3383, 0.2
        %v3400 = vmul.f32 %v3384, 0.2
        %v3401 = vmul.f32 %v3385, 0.2
        %v3402 = vmul.f32 %v3386, 0.2
        %v3403 = vmul.f32 %v3387, 0.2
        %v3404 = vmul.f32 %v3388, 0.2
        %v3405 = vmul.f32 %v3389, 0.2
        %v3406 = vsel %vm3390, %v3382, %v3398
        %v3407 = vsel %vm3391, %v3383, %v3399
        %v3408 = vsel %vm3392, %v3384, %v3400
        %v3409 = vsel %vm3393, %v3385, %v3401
        %v3410 = vsel %vm3394, %v3386, %v3402
        %v3411 = vsel %vm3395, %v3387, %v3403
        %v3412 = vsel %vm3396, %v3388, %v3404
        %v3413 = vsel %vm3397, %v3389, %v3405
        %s3414 = sld [smem:[#allocation5 + $0xf]]
        %v3415 = vstv %s3414
        %v3416 = vmul.f32 %v3415, %v3406
        %v3417 = vmul.f32 %v3415, %v3407
        %v3418 = vmul.f32 %v3415, %v3408
        %v3419 = vmul.f32 %v3415, %v3409
        %v3420 = vmul.f32 %v3415, %v3410
        %v3421 = vmul.f32 %v3415, %v3411
        %v3422 = vmul.f32 %v3415, %v3412
        %v3423 = vmul.f32 %v3415, %v3413
        %v3424 = vadd.f32 %v3284, %v3416
        %v3425 = vadd.f32 %v3285, %v3417
        %v3426 = vadd.f32 %v3286, %v3418
        %v3427 = vadd.f32 %v3287, %v3419
        %v3428 = vadd.f32 %v3288, %v3420
        %v3429 = vadd.f32 %v3289, %v3421
        %v3430 = vadd.f32 %v3290, %v3422
        %v3431 = vadd.f32 %v3291, %v3423
        %s3432 = sld [smem:[#allocation3 + $0x10]]
        %v3433 = vstv %s3432
        %v3434 = vmul.f32 %v3433, %v888
        %v3435 = vmul.f32 %v3433, %v889
        %v3436 = vmul.f32 %v3433, %v890
        %v3437 = vmul.f32 %v3433, %v891
        %v3438 = vmul.f32 %v3433, %v892
        %v3439 = vmul.f32 %v3433, %v893
        %v3440 = vmul.f32 %v3433, %v894
        %v3441 = vmul.f32 %v3433, %v895
        %s3442 = sld [smem:[#allocation3 + $0x90]]
        %v3443 = vstv %s3442
        %v3444 = vmul.f32 %v3443, %v897
        %v3445 = vmul.f32 %v3443, %v898
        %v3446 = vmul.f32 %v3443, %v899
        %v3447 = vmul.f32 %v3443, %v900
        %v3448 = vmul.f32 %v3443, %v901
        %v3449 = vmul.f32 %v3443, %v902
        %v3450 = vmul.f32 %v3443, %v903
        %v3451 = vmul.f32 %v3443, %v904
        %v3452 = vadd.f32 %v3434, %v3444
        %v3453 = vadd.f32 %v3435, %v3445
        %v3454 = vadd.f32 %v3436, %v3446
        %v3455 = vadd.f32 %v3437, %v3447
        %v3456 = vadd.f32 %v3438, %v3448
        %v3457 = vadd.f32 %v3439, %v3449
        %v3458 = vadd.f32 %v3440, %v3450
        %v3459 = vadd.f32 %v3441, %v3451
        %s3460 = sld [smem:[#allocation3 + $0x110]]
        %v3461 = vstv %s3460
        %v3462 = vmul.f32 %v3461, %v906
        %v3463 = vmul.f32 %v3461, %v907
        %v3464 = vmul.f32 %v3461, %v908
        %v3465 = vmul.f32 %v3461, %v909
        %v3466 = vmul.f32 %v3461, %v910
        %v3467 = vmul.f32 %v3461, %v911
        %v3468 = vmul.f32 %v3461, %v912
        %v3469 = vmul.f32 %v3461, %v913
        %v3470 = vadd.f32 %v3452, %v3462
        %v3471 = vadd.f32 %v3453, %v3463
        %v3472 = vadd.f32 %v3454, %v3464
        %v3473 = vadd.f32 %v3455, %v3465
        %v3474 = vadd.f32 %v3456, %v3466
        %v3475 = vadd.f32 %v3457, %v3467
        %v3476 = vadd.f32 %v3458, %v3468
        %v3477 = vadd.f32 %v3459, %v3469
        %3478 = vset.pattern.permute.xlu0 16
        %3479 = vperm.xlu0 %3478, %v842
        %v3480 = vpop.permute.xlu0 %3479
        %3482 = vset.pattern.permute.xlu0 16
        %3483 = vperm.xlu0 %3482, %v847
        %v3484 = vpop.permute.xlu0 %3483
        %3486 = vset.pattern.permute.xlu0 16
        %3487 = vperm.xlu0 %3486, %v852
        %v3488 = vpop.permute.xlu0 %3487
        %3490 = vset.pattern.permute.xlu0 16
        %3491 = vperm.xlu0 %3490, %v857
        %v3492 = vpop.permute.xlu0 %3491
        %3494 = vset.pattern.permute.xlu0 16
        %3495 = vperm.xlu0 %3494, %v862
        %v3496 = vpop.permute.xlu0 %3495
        %3498 = vset.pattern.permute.xlu0 16
        %3499 = vperm.xlu0 %3498, %v867
        %v3500 = vpop.permute.xlu0 %3499
        %3502 = vset.pattern.permute.xlu0 16
        %3503 = vperm.xlu0 %3502, %v872
        %v3504 = vpop.permute.xlu0 %3503
        %3506 = vset.pattern.permute.xlu0 16
        %3507 = vperm.xlu0 %3506, %v877
        %v3508 = vpop.permute.xlu0 %3507
        %v3510 = vlaneseq
        %v3511 = vshrl.u32 %v3510, 7
        %v3512 = vsub.s32 0, %v3511
        %v3513 = vrot.slane %v720, %v3512
        %v3514 = vadd.f32 %v3480, %v3513
        %v3515 = vadd.f32 %v3484, %v3513
        %v3516 = vadd.f32 %v3488, %v3513
        %v3517 = vadd.f32 %v3492, %v3513
        %v3518 = vadd.f32 %v3496, %v3513
        %v3519 = vadd.f32 %v3500, %v3513
        %v3520 = vadd.f32 %v3504, %v3513
        %v3521 = vadd.f32 %v3508, %v3513
        %v3522 = vadd.f32 %v3514, %v3470
        %v3523 = vadd.f32 %v3515, %v3471
        %v3524 = vadd.f32 %v3516, %v3472
        %v3525 = vadd.f32 %v3517, %v3473
        %v3526 = vadd.f32 %v3518, %v3474
        %v3527 = vadd.f32 %v3519, %v3475
        %v3528 = vadd.f32 %v3520, %v3476
        %v3529 = vadd.f32 %v3521, %v3477
        %vm3530 = vcmp.gt.f32.partialorder %v3522, 0.0
        %vm3531 = vcmp.gt.f32.partialorder %v3523, 0.0
        %vm3532 = vcmp.gt.f32.partialorder %v3524, 0.0
        %vm3533 = vcmp.gt.f32.partialorder %v3525, 0.0
        %vm3534 = vcmp.gt.f32.partialorder %v3526, 0.0
        %vm3535 = vcmp.gt.f32.partialorder %v3527, 0.0
        %vm3536 = vcmp.gt.f32.partialorder %v3528, 0.0
        %vm3537 = vcmp.gt.f32.partialorder %v3529, 0.0
        %v3538 = vmul.f32 %v3522, 0.2
        %v3539 = vmul.f32 %v3523, 0.2
        %v3540 = vmul.f32 %v3524, 0.2
        %v3541 = vmul.f32 %v3525, 0.2
        %v3542 = vmul.f32 %v3526, 0.2
        %v3543 = vmul.f32 %v3527, 0.2
        %v3544 = vmul.f32 %v3528, 0.2
        %v3545 = vmul.f32 %v3529, 0.2
        %v3546 = vsel %vm3530, %v3522, %v3538
        %v3547 = vsel %vm3531, %v3523, %v3539
        %v3548 = vsel %vm3532, %v3524, %v3540
        %v3549 = vsel %vm3533, %v3525, %v3541
        %v3550 = vsel %vm3534, %v3526, %v3542
        %v3551 = vsel %vm3535, %v3527, %v3543
        %v3552 = vsel %vm3536, %v3528, %v3544
        %v3553 = vsel %vm3537, %v3529, %v3545
        %s3554 = sld [smem:[#allocation5 + $0x10]]
        %v3555 = vstv %s3554
        %v3556 = vmul.f32 %v3555, %v3546
        %v3557 = vmul.f32 %v3555, %v3547
        %v3558 = vmul.f32 %v3555, %v3548
        %v3559 = vmul.f32 %v3555, %v3549
        %v3560 = vmul.f32 %v3555, %v3550
        %v3561 = vmul.f32 %v3555, %v3551
        %v3562 = vmul.f32 %v3555, %v3552
        %v3563 = vmul.f32 %v3555, %v3553
        %v3564 = vadd.f32 %v3424, %v3556
        %v3565 = vadd.f32 %v3425, %v3557
        %v3566 = vadd.f32 %v3426, %v3558
        %v3567 = vadd.f32 %v3427, %v3559
        %v3568 = vadd.f32 %v3428, %v3560
        %v3569 = vadd.f32 %v3429, %v3561
        %v3570 = vadd.f32 %v3430, %v3562
        %v3571 = vadd.f32 %v3431, %v3563
        %s3572 = sld [smem:[#allocation3 + $0x11]]
        %v3573 = vstv %s3572
        %v3574 = vmul.f32 %v3573, %v888
        %v3575 = vmul.f32 %v3573, %v889
        %v3576 = vmul.f32 %v3573, %v890
        %v3577 = vmul.f32 %v3573, %v891
        %v3578 = vmul.f32 %v3573, %v892
        %v3579 = vmul.f32 %v3573, %v893
        %v3580 = vmul.f32 %v3573, %v894
        %v3581 = vmul.f32 %v3573, %v895
        %s3582 = sld [smem:[#allocation3 + $0x91]]
        %v3583 = vstv %s3582
        %v3584 = vmul.f32 %v3583, %v897
        %v3585 = vmul.f32 %v3583, %v898
        %v3586 = vmul.f32 %v3583, %v899
        %v3587 = vmul.f32 %v3583, %v900
        %v3588 = vmul.f32 %v3583, %v901
        %v3589 = vmul.f32 %v3583, %v902
        %v3590 = vmul.f32 %v3583, %v903
        %v3591 = vmul.f32 %v3583, %v904
        %v3592 = vadd.f32 %v3574, %v3584
        %v3593 = vadd.f32 %v3575, %v3585
        %v3594 = vadd.f32 %v3576, %v3586
        %v3595 = vadd.f32 %v3577, %v3587
        %v3596 = vadd.f32 %v3578, %v3588
        %v3597 = vadd.f32 %v3579, %v3589
        %v3598 = vadd.f32 %v3580, %v3590
        %v3599 = vadd.f32 %v3581, %v3591
        %s3600 = sld [smem:[#allocation3 + $0x111]]
        %v3601 = vstv %s3600
        %v3602 = vmul.f32 %v3601, %v906
        %v3603 = vmul.f32 %v3601, %v907
        %v3604 = vmul.f32 %v3601, %v908
        %v3605 = vmul.f32 %v3601, %v909
        %v3606 = vmul.f32 %v3601, %v910
        %v3607 = vmul.f32 %v3601, %v911
        %v3608 = vmul.f32 %v3601, %v912
        %v3609 = vmul.f32 %v3601, %v913
        %v3610 = vadd.f32 %v3592, %v3602
        %v3611 = vadd.f32 %v3593, %v3603
        %v3612 = vadd.f32 %v3594, %v3604
        %v3613 = vadd.f32 %v3595, %v3605
        %v3614 = vadd.f32 %v3596, %v3606
        %v3615 = vadd.f32 %v3597, %v3607
        %v3616 = vadd.f32 %v3598, %v3608
        %v3617 = vadd.f32 %v3599, %v3609
        %3618 = vset.pattern.permute.xlu0 17
        %3619 = vperm.xlu0 %3618, %v842
        %v3620 = vpop.permute.xlu0 %3619
        %3622 = vset.pattern.permute.xlu0 17
        %3623 = vperm.xlu0 %3622, %v847
        %v3624 = vpop.permute.xlu0 %3623
        %3626 = vset.pattern.permute.xlu0 17
        %3627 = vperm.xlu0 %3626, %v852
        %v3628 = vpop.permute.xlu0 %3627
        %3630 = vset.pattern.permute.xlu0 17
        %3631 = vperm.xlu0 %3630, %v857
        %v3632 = vpop.permute.xlu0 %3631
        %3634 = vset.pattern.permute.xlu0 17
        %3635 = vperm.xlu0 %3634, %v862
        %v3636 = vpop.permute.xlu0 %3635
        %3638 = vset.pattern.permute.xlu0 17
        %3639 = vperm.xlu0 %3638, %v867
        %v3640 = vpop.permute.xlu0 %3639
        %3642 = vset.pattern.permute.xlu0 17
        %3643 = vperm.xlu0 %3642, %v872
        %v3644 = vpop.permute.xlu0 %3643
        %3646 = vset.pattern.permute.xlu0 17
        %3647 = vperm.xlu0 %3646, %v877
        %v3648 = vpop.permute.xlu0 %3647
        %v3650 = vlaneseq
        %v3651 = vshrl.u32 %v3650, 7
        %v3652 = vsub.s32 1, %v3651
        %v3653 = vrot.slane %v720, %v3652
        %v3654 = vadd.f32 %v3620, %v3653
        %v3655 = vadd.f32 %v3624, %v3653
        %v3656 = vadd.f32 %v3628, %v3653
        %v3657 = vadd.f32 %v3632, %v3653
        %v3658 = vadd.f32 %v3636, %v3653
        %v3659 = vadd.f32 %v3640, %v3653
        %v3660 = vadd.f32 %v3644, %v3653
        %v3661 = vadd.f32 %v3648, %v3653
        %v3662 = vadd.f32 %v3654, %v3610
        %v3663 = vadd.f32 %v3655, %v3611
        %v3664 = vadd.f32 %v3656, %v3612
        %v3665 = vadd.f32 %v3657, %v3613
        %v3666 = vadd.f32 %v3658, %v3614
        %v3667 = vadd.f32 %v3659, %v3615
        %v3668 = vadd.f32 %v3660, %v3616
        %v3669 = vadd.f32 %v3661, %v3617
        %vm3670 = vcmp.gt.f32.partialorder %v3662, 0.0
        %vm3671 = vcmp.gt.f32.partialorder %v3663, 0.0
        %vm3672 = vcmp.gt.f32.partialorder %v3664, 0.0
        %vm3673 = vcmp.gt.f32.partialorder %v3665, 0.0
        %vm3674 = vcmp.gt.f32.partialorder %v3666, 0.0
        %vm3675 = vcmp.gt.f32.partialorder %v3667, 0.0
        %vm3676 = vcmp.gt.f32.partialorder %v3668, 0.0
        %vm3677 = vcmp.gt.f32.partialorder %v3669, 0.0
        %v3678 = vmul.f32 %v3662, 0.2
        %v3679 = vmul.f32 %v3663, 0.2
        %v3680 = vmul.f32 %v3664, 0.2
        %v3681 = vmul.f32 %v3665, 0.2
        %v3682 = vmul.f32 %v3666, 0.2
        %v3683 = vmul.f32 %v3667, 0.2
        %v3684 = vmul.f32 %v3668, 0.2
        %v3685 = vmul.f32 %v3669, 0.2
        %v3686 = vsel %vm3670, %v3662, %v3678
        %v3687 = vsel %vm3671, %v3663, %v3679
        %v3688 = vsel %vm3672, %v3664, %v3680
        %v3689 = vsel %vm3673, %v3665, %v3681
        %v3690 = vsel %vm3674, %v3666, %v3682
        %v3691 = vsel %vm3675, %v3667, %v3683
        %v3692 = vsel %vm3676, %v3668, %v3684
        %v3693 = vsel %vm3677, %v3669, %v3685
        %s3694 = sld [smem:[#allocation5 + $0x11]]
        %v3695 = vstv %s3694
        %v3696 = vmul.f32 %v3695, %v3686
        %v3697 = vmul.f32 %v3695, %v3687
        %v3698 = vmul.f32 %v3695, %v3688
        %v3699 = vmul.f32 %v3695, %v3689
        %v3700 = vmul.f32 %v3695, %v3690
        %v3701 = vmul.f32 %v3695, %v3691
        %v3702 = vmul.f32 %v3695, %v3692
        %v3703 = vmul.f32 %v3695, %v3693
        %v3704 = vadd.f32 %v3564, %v3696
        %v3705 = vadd.f32 %v3565, %v3697
        %v3706 = vadd.f32 %v3566, %v3698
        %v3707 = vadd.f32 %v3567, %v3699
        %v3708 = vadd.f32 %v3568, %v3700
        %v3709 = vadd.f32 %v3569, %v3701
        %v3710 = vadd.f32 %v3570, %v3702
        %v3711 = vadd.f32 %v3571, %v3703
        %s3712 = sld [smem:[#allocation3 + $0x12]]
        %v3713 = vstv %s3712
        %v3714 = vmul.f32 %v3713, %v888
        %v3715 = vmul.f32 %v3713, %v889
        %v3716 = vmul.f32 %v3713, %v890
        %v3717 = vmul.f32 %v3713, %v891
        %v3718 = vmul.f32 %v3713, %v892
        %v3719 = vmul.f32 %v3713, %v893
        %v3720 = vmul.f32 %v3713, %v894
        %v3721 = vmul.f32 %v3713, %v895
        %s3722 = sld [smem:[#allocation3 + $0x92]]
        %v3723 = vstv %s3722
        %v3724 = vmul.f32 %v3723, %v897
        %v3725 = vmul.f32 %v3723, %v898
        %v3726 = vmul.f32 %v3723, %v899
        %v3727 = vmul.f32 %v3723, %v900
        %v3728 = vmul.f32 %v3723, %v901
        %v3729 = vmul.f32 %v3723, %v902
        %v3730 = vmul.f32 %v3723, %v903
        %v3731 = vmul.f32 %v3723, %v904
        %v3732 = vadd.f32 %v3714, %v3724
        %v3733 = vadd.f32 %v3715, %v3725
        %v3734 = vadd.f32 %v3716, %v3726
        %v3735 = vadd.f32 %v3717, %v3727
        %v3736 = vadd.f32 %v3718, %v3728
        %v3737 = vadd.f32 %v3719, %v3729
        %v3738 = vadd.f32 %v3720, %v3730
        %v3739 = vadd.f32 %v3721, %v3731
        %s3740 = sld [smem:[#allocation3 + $0x112]]
        %v3741 = vstv %s3740
        %v3742 = vmul.f32 %v3741, %v906
        %v3743 = vmul.f32 %v3741, %v907
        %v3744 = vmul.f32 %v3741, %v908
        %v3745 = vmul.f32 %v3741, %v909
        %v3746 = vmul.f32 %v3741, %v910
        %v3747 = vmul.f32 %v3741, %v911
        %v3748 = vmul.f32 %v3741, %v912
        %v3749 = vmul.f32 %v3741, %v913
        %v3750 = vadd.f32 %v3732, %v3742
        %v3751 = vadd.f32 %v3733, %v3743
        %v3752 = vadd.f32 %v3734, %v3744
        %v3753 = vadd.f32 %v3735, %v3745
        %v3754 = vadd.f32 %v3736, %v3746
        %v3755 = vadd.f32 %v3737, %v3747
        %v3756 = vadd.f32 %v3738, %v3748
        %v3757 = vadd.f32 %v3739, %v3749
        %3758 = vset.pattern.permute.xlu0 18
        %3759 = vperm.xlu0 %3758, %v842
        %v3760 = vpop.permute.xlu0 %3759
        %3762 = vset.pattern.permute.xlu0 18
        %3763 = vperm.xlu0 %3762, %v847
        %v3764 = vpop.permute.xlu0 %3763
        %3766 = vset.pattern.permute.xlu0 18
        %3767 = vperm.xlu0 %3766, %v852
        %v3768 = vpop.permute.xlu0 %3767
        %3770 = vset.pattern.permute.xlu0 18
        %3771 = vperm.xlu0 %3770, %v857
        %v3772 = vpop.permute.xlu0 %3771
        %3774 = vset.pattern.permute.xlu0 18
        %3775 = vperm.xlu0 %3774, %v862
        %v3776 = vpop.permute.xlu0 %3775
        %3778 = vset.pattern.permute.xlu0 18
        %3779 = vperm.xlu0 %3778, %v867
        %v3780 = vpop.permute.xlu0 %3779
        %3782 = vset.pattern.permute.xlu0 18
        %3783 = vperm.xlu0 %3782, %v872
        %v3784 = vpop.permute.xlu0 %3783
        %3786 = vset.pattern.permute.xlu0 18
        %3787 = vperm.xlu0 %3786, %v877
        %v3788 = vpop.permute.xlu0 %3787
        %v3790 = vlaneseq
        %v3791 = vshrl.u32 %v3790, 7
        %v3792 = vsub.s32 2, %v3791
        %v3793 = vrot.slane %v720, %v3792
        %v3794 = vadd.f32 %v3760, %v3793
        %v3795 = vadd.f32 %v3764, %v3793
        %v3796 = vadd.f32 %v3768, %v3793
        %v3797 = vadd.f32 %v3772, %v3793
        %v3798 = vadd.f32 %v3776, %v3793
        %v3799 = vadd.f32 %v3780, %v3793
        %v3800 = vadd.f32 %v3784, %v3793
        %v3801 = vadd.f32 %v3788, %v3793
        %v3802 = vadd.f32 %v3794, %v3750
        %v3803 = vadd.f32 %v3795, %v3751
        %v3804 = vadd.f32 %v3796, %v3752
        %v3805 = vadd.f32 %v3797, %v3753
        %v3806 = vadd.f32 %v3798, %v3754
        %v3807 = vadd.f32 %v3799, %v3755
        %v3808 = vadd.f32 %v3800, %v3756
        %v3809 = vadd.f32 %v3801, %v3757
        %vm3810 = vcmp.gt.f32.partialorder %v3802, 0.0
        %vm3811 = vcmp.gt.f32.partialorder %v3803, 0.0
        %vm3812 = vcmp.gt.f32.partialorder %v3804, 0.0
        %vm3813 = vcmp.gt.f32.partialorder %v3805, 0.0
        %vm3814 = vcmp.gt.f32.partialorder %v3806, 0.0
        %vm3815 = vcmp.gt.f32.partialorder %v3807, 0.0
        %vm3816 = vcmp.gt.f32.partialorder %v3808, 0.0
        %vm3817 = vcmp.gt.f32.partialorder %v3809, 0.0
        %v3818 = vmul.f32 %v3802, 0.2
        %v3819 = vmul.f32 %v3803, 0.2
        %v3820 = vmul.f32 %v3804, 0.2
        %v3821 = vmul.f32 %v3805, 0.2
        %v3822 = vmul.f32 %v3806, 0.2
        %v3823 = vmul.f32 %v3807, 0.2
        %v3824 = vmul.f32 %v3808, 0.2
        %v3825 = vmul.f32 %v3809, 0.2
        %v3826 = vsel %vm3810, %v3802, %v3818
        %v3827 = vsel %vm3811, %v3803, %v3819
        %v3828 = vsel %vm3812, %v3804, %v3820
        %v3829 = vsel %vm3813, %v3805, %v3821
        %v3830 = vsel %vm3814, %v3806, %v3822
        %v3831 = vsel %vm3815, %v3807, %v3823
        %v3832 = vsel %vm3816, %v3808, %v3824
        %v3833 = vsel %vm3817, %v3809, %v3825
        %s3834 = sld [smem:[#allocation5 + $0x12]]
        %v3835 = vstv %s3834
        %v3836 = vmul.f32 %v3835, %v3826
        %v3837 = vmul.f32 %v3835, %v3827
        %v3838 = vmul.f32 %v3835, %v3828
        %v3839 = vmul.f32 %v3835, %v3829
        %v3840 = vmul.f32 %v3835, %v3830
        %v3841 = vmul.f32 %v3835, %v3831
        %v3842 = vmul.f32 %v3835, %v3832
        %v3843 = vmul.f32 %v3835, %v3833
        %v3844 = vadd.f32 %v3704, %v3836
        %v3845 = vadd.f32 %v3705, %v3837
        %v3846 = vadd.f32 %v3706, %v3838
        %v3847 = vadd.f32 %v3707, %v3839
        %v3848 = vadd.f32 %v3708, %v3840
        %v3849 = vadd.f32 %v3709, %v3841
        %v3850 = vadd.f32 %v3710, %v3842
        %v3851 = vadd.f32 %v3711, %v3843
        %s3852 = sld [smem:[#allocation3 + $0x13]]
        %v3853 = vstv %s3852
        %v3854 = vmul.f32 %v3853, %v888
        %v3855 = vmul.f32 %v3853, %v889
        %v3856 = vmul.f32 %v3853, %v890
        %v3857 = vmul.f32 %v3853, %v891
        %v3858 = vmul.f32 %v3853, %v892
        %v3859 = vmul.f32 %v3853, %v893
        %v3860 = vmul.f32 %v3853, %v894
        %v3861 = vmul.f32 %v3853, %v895
        %s3862 = sld [smem:[#allocation3 + $0x93]]
        %v3863 = vstv %s3862
        %v3864 = vmul.f32 %v3863, %v897
        %v3865 = vmul.f32 %v3863, %v898
        %v3866 = vmul.f32 %v3863, %v899
        %v3867 = vmul.f32 %v3863, %v900
        %v3868 = vmul.f32 %v3863, %v901
        %v3869 = vmul.f32 %v3863, %v902
        %v3870 = vmul.f32 %v3863, %v903
        %v3871 = vmul.f32 %v3863, %v904
        %v3872 = vadd.f32 %v3854, %v3864
        %v3873 = vadd.f32 %v3855, %v3865
        %v3874 = vadd.f32 %v3856, %v3866
        %v3875 = vadd.f32 %v3857, %v3867
        %v3876 = vadd.f32 %v3858, %v3868
        %v3877 = vadd.f32 %v3859, %v3869
        %v3878 = vadd.f32 %v3860, %v3870
        %v3879 = vadd.f32 %v3861, %v3871
        %s3880 = sld [smem:[#allocation3 + $0x113]]
        %v3881 = vstv %s3880
        %v3882 = vmul.f32 %v3881, %v906
        %v3883 = vmul.f32 %v3881, %v907
        %v3884 = vmul.f32 %v3881, %v908
        %v3885 = vmul.f32 %v3881, %v909
        %v3886 = vmul.f32 %v3881, %v910
        %v3887 = vmul.f32 %v3881, %v911
        %v3888 = vmul.f32 %v3881, %v912
        %v3889 = vmul.f32 %v3881, %v913
        %v3890 = vadd.f32 %v3872, %v3882
        %v3891 = vadd.f32 %v3873, %v3883
        %v3892 = vadd.f32 %v3874, %v3884
        %v3893 = vadd.f32 %v3875, %v3885
        %v3894 = vadd.f32 %v3876, %v3886
        %v3895 = vadd.f32 %v3877, %v3887
        %v3896 = vadd.f32 %v3878, %v3888
        %v3897 = vadd.f32 %v3879, %v3889
        %3898 = vset.pattern.permute.xlu0 19
        %3899 = vperm.xlu0 %3898, %v842
        %v3900 = vpop.permute.xlu0 %3899
        %3902 = vset.pattern.permute.xlu0 19
        %3903 = vperm.xlu0 %3902, %v847
        %v3904 = vpop.permute.xlu0 %3903
        %3906 = vset.pattern.permute.xlu0 19
        %3907 = vperm.xlu0 %3906, %v852
        %v3908 = vpop.permute.xlu0 %3907
        %3910 = vset.pattern.permute.xlu0 19
        %3911 = vperm.xlu0 %3910, %v857
        %v3912 = vpop.permute.xlu0 %3911
        %3914 = vset.pattern.permute.xlu0 19
        %3915 = vperm.xlu0 %3914, %v862
        %v3916 = vpop.permute.xlu0 %3915
        %3918 = vset.pattern.permute.xlu0 19
        %3919 = vperm.xlu0 %3918, %v867
        %v3920 = vpop.permute.xlu0 %3919
        %3922 = vset.pattern.permute.xlu0 19
        %3923 = vperm.xlu0 %3922, %v872
        %v3924 = vpop.permute.xlu0 %3923
        %3926 = vset.pattern.permute.xlu0 19
        %3927 = vperm.xlu0 %3926, %v877
        %v3928 = vpop.permute.xlu0 %3927
        %v3930 = vlaneseq
        %v3931 = vshrl.u32 %v3930, 7
        %v3932 = vsub.s32 3, %v3931
        %v3933 = vrot.slane %v720, %v3932
        %v3934 = vadd.f32 %v3900, %v3933
        %v3935 = vadd.f32 %v3904, %v3933
        %v3936 = vadd.f32 %v3908, %v3933
        %v3937 = vadd.f32 %v3912, %v3933
        %v3938 = vadd.f32 %v3916, %v3933
        %v3939 = vadd.f32 %v3920, %v3933
        %v3940 = vadd.f32 %v3924, %v3933
        %v3941 = vadd.f32 %v3928, %v3933
        %v3942 = vadd.f32 %v3934, %v3890
        %v3943 = vadd.f32 %v3935, %v3891
        %v3944 = vadd.f32 %v3936, %v3892
        %v3945 = vadd.f32 %v3937, %v3893
        %v3946 = vadd.f32 %v3938, %v3894
        %v3947 = vadd.f32 %v3939, %v3895
        %v3948 = vadd.f32 %v3940, %v3896
        %v3949 = vadd.f32 %v3941, %v3897
        %vm3950 = vcmp.gt.f32.partialorder %v3942, 0.0
        %vm3951 = vcmp.gt.f32.partialorder %v3943, 0.0
        %vm3952 = vcmp.gt.f32.partialorder %v3944, 0.0
        %vm3953 = vcmp.gt.f32.partialorder %v3945, 0.0
        %vm3954 = vcmp.gt.f32.partialorder %v3946, 0.0
        %vm3955 = vcmp.gt.f32.partialorder %v3947, 0.0
        %vm3956 = vcmp.gt.f32.partialorder %v3948, 0.0
        %vm3957 = vcmp.gt.f32.partialorder %v3949, 0.0
        %v3958 = vmul.f32 %v3942, 0.2
        %v3959 = vmul.f32 %v3943, 0.2
        %v3960 = vmul.f32 %v3944, 0.2
        %v3961 = vmul.f32 %v3945, 0.2
        %v3962 = vmul.f32 %v3946, 0.2
        %v3963 = vmul.f32 %v3947, 0.2
        %v3964 = vmul.f32 %v3948, 0.2
        %v3965 = vmul.f32 %v3949, 0.2
        %v3966 = vsel %vm3950, %v3942, %v3958
        %v3967 = vsel %vm3951, %v3943, %v3959
        %v3968 = vsel %vm3952, %v3944, %v3960
        %v3969 = vsel %vm3953, %v3945, %v3961
        %v3970 = vsel %vm3954, %v3946, %v3962
        %v3971 = vsel %vm3955, %v3947, %v3963
        %v3972 = vsel %vm3956, %v3948, %v3964
        %v3973 = vsel %vm3957, %v3949, %v3965
        %s3974 = sld [smem:[#allocation5 + $0x13]]
        %v3975 = vstv %s3974
        %v3976 = vmul.f32 %v3975, %v3966
        %v3977 = vmul.f32 %v3975, %v3967
        %v3978 = vmul.f32 %v3975, %v3968
        %v3979 = vmul.f32 %v3975, %v3969
        %v3980 = vmul.f32 %v3975, %v3970
        %v3981 = vmul.f32 %v3975, %v3971
        %v3982 = vmul.f32 %v3975, %v3972
        %v3983 = vmul.f32 %v3975, %v3973
        %v3984 = vadd.f32 %v3844, %v3976
        %v3985 = vadd.f32 %v3845, %v3977
        %v3986 = vadd.f32 %v3846, %v3978
        %v3987 = vadd.f32 %v3847, %v3979
        %v3988 = vadd.f32 %v3848, %v3980
        %v3989 = vadd.f32 %v3849, %v3981
        %v3990 = vadd.f32 %v3850, %v3982
        %v3991 = vadd.f32 %v3851, %v3983
        %v3992 = vsel %vm2322, %v3984, -1e+30
        %v3993 = vsel %vm2323, %v3985, -1e+30
        %v3994 = vsel %vm2324, %v3986, -1e+30
        %v3995 = vsel %vm2325, %v3987, -1e+30
        %v3996 = vsel %vm2326, %v3988, -1e+30
        %v3997 = vsel %vm2327, %v3989, -1e+30
        %v3998 = vsel %vm2328, %v3990, -1e+30
        %v3999 = vsel %vm2329, %v3991, -1e+30
        %4000 = vmax.xlane.f32.xlu0 %v3992
        %v4001 = vpop.xlane.xlu0 %4000
        %4002 = vmax.xlane.f32.xlu0 %v3993
        %v4003 = vpop.xlane.xlu0 %4002
        %4004 = vmax.xlane.f32.xlu0 %v3994
        %v4005 = vpop.xlane.xlu0 %4004
        %4006 = vmax.xlane.f32.xlu0 %v3995
        %v4007 = vpop.xlane.xlu0 %4006
        %4008 = vmax.xlane.f32.xlu0 %v3996
        %v4009 = vpop.xlane.xlu0 %4008
        %4010 = vmax.xlane.f32.xlu0 %v3997
        %v4011 = vpop.xlane.xlu0 %4010
        %4012 = vmax.xlane.f32.xlu0 %v3998
        %v4013 = vpop.xlane.xlu0 %4012
        %4014 = vmax.xlane.f32.xlu0 %v3999
        %v4015 = vpop.xlane.xlu0 %4014
        %v4016 = vsub.f32 %v3992, %v4001
        %v4017 = vsub.f32 %v3993, %v4003
        %v4018 = vsub.f32 %v3994, %v4005
        %v4019 = vsub.f32 %v3995, %v4007
        %v4020 = vsub.f32 %v3996, %v4009
        %v4021 = vsub.f32 %v3997, %v4011
        %v4022 = vsub.f32 %v3998, %v4013
        %v4023 = vsub.f32 %v3999, %v4015
        %v4024 = vmul.f32 %v4016, 1.442695
        %v4025 = vpow.pop %v4024
        %v4026 = vmul.f32 %v4017, 1.442695
        %v4027 = vpow.pop %v4026
        %v4028 = vmul.f32 %v4018, 1.442695
        %v4029 = vpow.pop %v4028
        %v4030 = vmul.f32 %v4019, 1.442695
        %v4031 = vpow.pop %v4030
        %v4032 = vmul.f32 %v4020, 1.442695
        %v4033 = vpow.pop %v4032
        %v4034 = vmul.f32 %v4021, 1.442695
        %v4035 = vpow.pop %v4034
        %v4036 = vmul.f32 %v4022, 1.442695
        %v4037 = vpow.pop %v4036
        %v4038 = vmul.f32 %v4023, 1.442695
        %v4039 = vpow.pop %v4038
        %v4040 = vmul.f32 %v4025, %v880
        %v4041 = vmul.f32 %v4027, %v881
        %v4042 = vmul.f32 %v4029, %v882
        %v4043 = vmul.f32 %v4031, %v883
        %v4044 = vmul.f32 %v4033, %v884
        %v4045 = vmul.f32 %v4035, %v885
        %v4046 = vmul.f32 %v4037, %v886
        %v4047 = vmul.f32 %v4039, %v887
        %4048 = vadd.xlane.f32.xlu0 %v4040
        %v4049 = vpop.xlane.xlu0 %4048
        %4050 = vadd.xlane.f32.xlu0 %v4041
        %v4051 = vpop.xlane.xlu0 %4050
        %4052 = vadd.xlane.f32.xlu0 %v4042
        %v4053 = vpop.xlane.xlu0 %4052
        %4054 = vadd.xlane.f32.xlu0 %v4043
        %v4055 = vpop.xlane.xlu0 %4054
        %4056 = vadd.xlane.f32.xlu0 %v4044
        %v4057 = vpop.xlane.xlu0 %4056
        %4058 = vadd.xlane.f32.xlu0 %v4045
        %v4059 = vpop.xlane.xlu0 %4058
        %4060 = vadd.xlane.f32.xlu0 %v4046
        %v4061 = vpop.xlane.xlu0 %4060
        %4062 = vadd.xlane.f32.xlu0 %v4047
        %v4063 = vpop.xlane.xlu0 %4062
        %v4064 = vmax.f32 %v4049, 1e-20
        %v4065 = vmax.f32 %v4051, 1e-20
        %v4066 = vmax.f32 %v4053, 1e-20
        %v4067 = vmax.f32 %v4055, 1e-20
        %v4068 = vmax.f32 %v4057, 1e-20
        %v4069 = vmax.f32 %v4059, 1e-20
        %v4070 = vmax.f32 %v4061, 1e-20
        %v4071 = vmax.f32 %v4063, 1e-20
        %v4072 = vrcp.pop %v4064
        %v4073 = vmul.f32 %v4040, %v4072
        %v4074 = vrcp.pop %v4065
        %v4075 = vmul.f32 %v4041, %v4074
        %v4076 = vrcp.pop %v4066
        %v4077 = vmul.f32 %v4042, %v4076
        %v4078 = vrcp.pop %v4067
        %v4079 = vmul.f32 %v4043, %v4078
        %v4080 = vrcp.pop %v4068
        %v4081 = vmul.f32 %v4044, %v4080
        %v4082 = vrcp.pop %v4069
        %v4083 = vmul.f32 %v4045, %v4082
        %v4084 = vrcp.pop %v4070
        %v4085 = vmul.f32 %v4046, %v4084
        %v4086 = vrcp.pop %v4071
        %v4087 = vmul.f32 %v4047, %v4086
        %4104 = vrot.lane.b32.xlu0 %v624, 118
        %v4105 = vpop.permute.xlu0 %4104
        %4106 = vrot.lane.b32.xlu0 %v629, 118
        %v4107 = vpop.permute.xlu0 %4106
        %4108 = vrot.lane.b32.xlu0 %v634, 118
        %v4109 = vpop.permute.xlu0 %4108
        %4110 = vrot.lane.b32.xlu0 %v639, 118
        %v4111 = vpop.permute.xlu0 %4110
        %4112 = vrot.lane.b32.xlu0 %v644, 118
        %v4113 = vpop.permute.xlu0 %4112
        %4114 = vrot.lane.b32.xlu0 %v649, 118
        %v4115 = vpop.permute.xlu0 %4114
        %4116 = vrot.lane.b32.xlu0 %v654, 118
        %v4117 = vpop.permute.xlu0 %4116
        %4118 = vrot.lane.b32.xlu0 %v659, 118
        %v4119 = vpop.permute.xlu0 %4118
        %4120 = vrot.lane.b32.xlu0 %v664, 118
        %v4121 = vpop.permute.xlu0 %4120
        %4122 = vrot.lane.b32.xlu0 %v669, 118
        %v4123 = vpop.permute.xlu0 %4122
        %4124 = vrot.lane.b32.xlu0 %v674, 118
        %v4125 = vpop.permute.xlu0 %4124
        %4126 = vrot.lane.b32.xlu0 %v679, 118
        %v4127 = vpop.permute.xlu0 %4126
        %4128 = vrot.lane.b32.xlu0 %v684, 118
        %v4129 = vpop.permute.xlu0 %4128
        %4130 = vrot.lane.b32.xlu0 %v689, 118
        %v4131 = vpop.permute.xlu0 %4130
        %4132 = vrot.lane.b32.xlu0 %v694, 118
        %v4133 = vpop.permute.xlu0 %4132
        %4134 = vrot.lane.b32.xlu0 %v699, 118
        %v4135 = vpop.permute.xlu0 %4134
        %4153 = vrot.lane.b32.xlu0 %v2429, 118
        %v4154 = vpop.permute.xlu0 %4153
        %4156 = vmatprep.subr.mxu0 0.0
        %4157 = vmatpush1.msra.mxu0 %v4135
        %4158 = vmatprep.subr.mxu0 0.0
        %4159 = vmatpush1.msra.mxu0 %v4133
        %4160 = vmatprep.subr.mxu0 0.0
        %4161 = vmatpush1.msra.mxu0 %v4131
        %4162 = vmatprep.subr.mxu0 0.0
        %4163 = vmatpush1.msra.mxu0 %v4129
        %4164 = vmatprep.subr.mxu0 0.0
        %4165 = vmatpush1.msra.mxu0 %v4127
        %4166 = vmatprep.subr.mxu0 0.0
        %4167 = vmatpush1.msra.mxu0 %v4125
        %4168 = vmatprep.subr.mxu0 0.0
        %4169 = vmatpush1.msra.mxu0 %v4123
        %4170 = vmatprep.subr.mxu0 0.0
        %4171 = vmatpush1.msra.mxu0 %v4121
        %4172 = vmatprep.subr.mxu0 0.0
        %4173 = vmatpush1.msra.mxu0 %v4119
        %4174 = vmatprep.subr.mxu0 0.0
        %4175 = vmatpush1.msra.mxu0 %v4117
        %4176 = vmatprep.subr.mxu0 0.0
        %4177 = vmatpush1.msra.mxu0 %v4115
        %4178 = vmatprep.subr.mxu0 0.0
        %4179 = vmatpush1.msra.mxu0 %v4113
        %4180 = vmatprep.subr.mxu0 0.0
        %4181 = vmatpush1.msra.mxu0 %v4111
        %4182 = vmatprep.subr.mxu0 0.0
        %4183 = vmatpush1.msra.mxu0 %v4109
        %4184 = vmatprep.subr.mxu0 0.0
        %4185 = vmatpush1.msra.mxu0 %v4107
        %4186 = vmatprep.subr.mxu0 0.0
        %4187 = vmatpush1.msra.mxu0 %v4105
        %4188 = vmatprep.subr.mxu0 0.0
        %4189 = vmatpush2.msra.mxu0 0.0
        %4190 = vmatprep.subr.mxu0 0.0
        %4191 = vmatpush2.msra.mxu0 0.0
        %4192 = vmatprep.subr.mxu0 0.0
        %4193 = vmatpush2.msra.mxu0 0.0
        %4194 = vmatprep.subr.mxu0 0.0
        %4195 = vmatpush2.msra.mxu0 0.0
        %4196 = vmatprep.subr.mxu0 0.0
        %4197 = vmatpush2.msra.mxu0 0.0
        %4198 = vmatprep.subr.mxu0 0.0
        %4199 = vmatpush2.msra.mxu0 0.0
        %4200 = vmatprep.subr.mxu0 0.0
        %4201 = vmatpush2.msra.mxu0 0.0
        %4202 = vmatprep.subr.mxu0 0.0
        %4203 = vmatpush2.msra.mxu0 0.0
        %4204 = vmatprep.subr.mxu0 0.0
        %4205 = vmatpush2.msra.mxu0 0.0
        %4206 = vmatprep.subr.mxu0 0.0
        %4207 = vmatpush2.msra.mxu0 0.0
        %4208 = vmatprep.subr.mxu0 0.0
        %4209 = vmatpush2.msra.mxu0 0.0
        %4210 = vmatprep.subr.mxu0 0.0
        %4211 = vmatpush2.msra.mxu0 0.0
        %4212 = vmatprep.subr.mxu0 0.0
        %4213 = vmatpush2.msra.mxu0 0.0
        %4214 = vmatprep.subr.mxu0 0.0
        %4215 = vmatpush2.msra.mxu0 0.0
        %4216 = vmatprep.subr.mxu0 0.0
        %4217 = vmatpush2.msra.mxu0 0.0
        %4218 = vmatprep.subr.mxu0 0.0
        %4219 = vmatpush2.msra.mxu0 0.0
        %4220 = vmatprep.mubr.f32.mxu0 0.0
        %4221 = vmatmul.mubr.f32.gmra.mxu0 %v4073
        %v4222 = vpop.f32.mrf.mxu0
        %v4223 = vadd.f32 %v4154, %v4222
        %v4224 = vpop.f32.mrf.mxu0
        %4225 = vmatprep.mubr.f32.mxu0 0.0
        %4226 = vmatmul.mubr.f32.gmra.mxu0 %v4075
        %v4227 = vpop.f32.mrf.mxu0
        %v4228 = vadd.f32 %v4154, %v4227
        %v4229 = vpop.f32.mrf.mxu0
        %4230 = vmatprep.mubr.f32.mxu0 0.0
        %4231 = vmatmul.mubr.f32.gmra.mxu0 %v4077
        %v4232 = vpop.f32.mrf.mxu0
        %v4233 = vadd.f32 %v4154, %v4232
        %v4234 = vpop.f32.mrf.mxu0
        %4235 = vmatprep.mubr.f32.mxu0 0.0
        %4236 = vmatmul.mubr.f32.gmra.mxu0 %v4079
        %v4237 = vpop.f32.mrf.mxu0
        %v4238 = vadd.f32 %v4154, %v4237
        %v4239 = vpop.f32.mrf.mxu0
        %4240 = vmatprep.mubr.f32.mxu0 0.0
        %4241 = vmatmul.mubr.f32.gmra.mxu0 %v4081
        %v4242 = vpop.f32.mrf.mxu0
        %v4243 = vadd.f32 %v4154, %v4242
        %v4244 = vpop.f32.mrf.mxu0
        %4245 = vmatprep.mubr.f32.mxu0 0.0
        %4246 = vmatmul.mubr.f32.gmra.mxu0 %v4083
        %v4247 = vpop.f32.mrf.mxu0
        %v4248 = vadd.f32 %v4154, %v4247
        %v4249 = vpop.f32.mrf.mxu0
        %4250 = vmatprep.mubr.f32.mxu0 0.0
        %4251 = vmatmul.mubr.f32.gmra.mxu0 %v4085
        %v4252 = vpop.f32.mrf.mxu0
        %v4253 = vadd.f32 %v4154, %v4252
        %v4254 = vpop.f32.mrf.mxu0
        %4255 = vmatprep.mubr.f32.mxu0 0.0
        %4256 = vmatmul.mubr.f32.gmra.mxu0 %v4087
        %v4257 = vpop.f32.mrf.mxu0
        %v4258 = vadd.f32 %v4154, %v4257
        %v4259 = vpop.f32.mrf.mxu0
        %4260 = vdwg.mxu0
        %vm4261 = vcmp.gt.f32.partialorder %v4223, 0.0
        %vm4262 = vcmp.gt.f32.partialorder %v4228, 0.0
        %vm4263 = vcmp.gt.f32.partialorder %v4233, 0.0
        %vm4264 = vcmp.gt.f32.partialorder %v4238, 0.0
        %vm4265 = vcmp.gt.f32.partialorder %v4243, 0.0
        %vm4266 = vcmp.gt.f32.partialorder %v4248, 0.0
        %vm4267 = vcmp.gt.f32.partialorder %v4253, 0.0
        %vm4268 = vcmp.gt.f32.partialorder %v4258, 0.0
        %v4269 = vmin.f32 %v4223, 0.0
        %v4270 = vmin.f32 %v4228, 0.0
        %v4271 = vmin.f32 %v4233, 0.0
        %v4272 = vmin.f32 %v4238, 0.0
        %v4273 = vmin.f32 %v4243, 0.0
        %v4274 = vmin.f32 %v4248, 0.0
        %v4275 = vmin.f32 %v4253, 0.0
        %v4276 = vmin.f32 %v4258, 0.0
        %v4277 = vmul.f32 %v4269, 1.442695
        %v4278 = vpow.pop %v4277
        %v4279 = vmul.f32 %v4270, 1.442695
        %v4280 = vpow.pop %v4279
        %v4281 = vmul.f32 %v4271, 1.442695
        %v4282 = vpow.pop %v4281
        %v4283 = vmul.f32 %v4272, 1.442695
        %v4284 = vpow.pop %v4283
        %v4285 = vmul.f32 %v4273, 1.442695
        %v4286 = vpow.pop %v4285
        %v4287 = vmul.f32 %v4274, 1.442695
        %v4288 = vpow.pop %v4287
        %v4289 = vmul.f32 %v4275, 1.442695
        %v4290 = vpow.pop %v4289
        %v4291 = vmul.f32 %v4276, 1.442695
        %v4292 = vpow.pop %v4291
        %v4293 = vsub.f32 %v4278, 1.0
        %v4294 = vsub.f32 %v4280, 1.0
        %v4295 = vsub.f32 %v4282, 1.0
        %v4296 = vsub.f32 %v4284, 1.0
        %v4297 = vsub.f32 %v4286, 1.0
        %v4298 = vsub.f32 %v4288, 1.0
        %v4299 = vsub.f32 %v4290, 1.0
        %v4300 = vsub.f32 %v4292, 1.0
        %v4301 = vsel %vm4261, %v4223, %v4293
        %v4302 = vsel %vm4262, %v4228, %v4294
        %v4303 = vsel %vm4263, %v4233, %v4295
        %v4304 = vsel %vm4264, %v4238, %v4296
        %v4305 = vsel %vm4265, %v4243, %v4297
        %v4306 = vsel %vm4266, %v4248, %v4298
        %v4307 = vsel %vm4267, %v4253, %v4299
        %v4308 = vsel %vm4268, %v4258, %v4300
        %s4309 = scalar_lea.vmem %s470, 64 [#allocation7]
        %4310 = vst.msk [vmem:[%s4309] sm:$0xff] %vm2583, %v4301
        %4311 = vst.msk [vmem:[%s4309 + $0x8] sm:$0xff] %vm2583, %v4302
        %4312 = vst.msk [vmem:[%s4309 + $0x10] sm:$0xff] %vm2583, %v4303
        %4313 = vst.msk [vmem:[%s4309 + $0x18] sm:$0xff] %vm2583, %v4304
        %4314 = vst.msk [vmem:[%s4309 + $0x20] sm:$0xff] %vm2583, %v4305
        %4315 = vst.msk [vmem:[%s4309 + $0x28] sm:$0xff] %vm2583, %v4306
        %4316 = vst.msk [vmem:[%s4309 + $0x30] sm:$0xff] %vm2583, %v4307
        %4317 = vst.msk [vmem:[%s4309 + $0x38] sm:$0xff] %vm2583, %v4308
        %s4318 = sld [smem:[#allocation3 + $0x14]]
        %v4319 = vstv %s4318
        %v4320 = vmul.f32 %v4319, %v888
        %v4321 = vmul.f32 %v4319, %v889
        %v4322 = vmul.f32 %v4319, %v890
        %v4323 = vmul.f32 %v4319, %v891
        %v4324 = vmul.f32 %v4319, %v892
        %v4325 = vmul.f32 %v4319, %v893
        %v4326 = vmul.f32 %v4319, %v894
        %v4327 = vmul.f32 %v4319, %v895
        %s4328 = sld [smem:[#allocation3 + $0x94]]
        %v4329 = vstv %s4328
        %v4330 = vmul.f32 %v4329, %v897
        %v4331 = vmul.f32 %v4329, %v898
        %v4332 = vmul.f32 %v4329, %v899
        %v4333 = vmul.f32 %v4329, %v900
        %v4334 = vmul.f32 %v4329, %v901
        %v4335 = vmul.f32 %v4329, %v902
        %v4336 = vmul.f32 %v4329, %v903
        %v4337 = vmul.f32 %v4329, %v904
        %v4338 = vadd.f32 %v4320, %v4330
        %v4339 = vadd.f32 %v4321, %v4331
        %v4340 = vadd.f32 %v4322, %v4332
        %v4341 = vadd.f32 %v4323, %v4333
        %v4342 = vadd.f32 %v4324, %v4334
        %v4343 = vadd.f32 %v4325, %v4335
        %v4344 = vadd.f32 %v4326, %v4336
        %v4345 = vadd.f32 %v4327, %v4337
        %s4346 = sld [smem:[#allocation3 + $0x114]]
        %v4347 = vstv %s4346
        %v4348 = vmul.f32 %v4347, %v906
        %v4349 = vmul.f32 %v4347, %v907
        %v4350 = vmul.f32 %v4347, %v908
        %v4351 = vmul.f32 %v4347, %v909
        %v4352 = vmul.f32 %v4347, %v910
        %v4353 = vmul.f32 %v4347, %v911
        %v4354 = vmul.f32 %v4347, %v912
        %v4355 = vmul.f32 %v4347, %v913
        %v4356 = vadd.f32 %v4338, %v4348
        %v4357 = vadd.f32 %v4339, %v4349
        %v4358 = vadd.f32 %v4340, %v4350
        %v4359 = vadd.f32 %v4341, %v4351
        %v4360 = vadd.f32 %v4342, %v4352
        %v4361 = vadd.f32 %v4343, %v4353
        %v4362 = vadd.f32 %v4344, %v4354
        %v4363 = vadd.f32 %v4345, %v4355
        %4364 = vset.pattern.permute.xlu0 20
        %4365 = vperm.xlu0 %4364, %v842
        %v4366 = vpop.permute.xlu0 %4365
        %4368 = vset.pattern.permute.xlu0 20
        %4369 = vperm.xlu0 %4368, %v847
        %v4370 = vpop.permute.xlu0 %4369
        %4372 = vset.pattern.permute.xlu0 20
        %4373 = vperm.xlu0 %4372, %v852
        %v4374 = vpop.permute.xlu0 %4373
        %4376 = vset.pattern.permute.xlu0 20
        %4377 = vperm.xlu0 %4376, %v857
        %v4378 = vpop.permute.xlu0 %4377
        %4380 = vset.pattern.permute.xlu0 20
        %4381 = vperm.xlu0 %4380, %v862
        %v4382 = vpop.permute.xlu0 %4381
        %4384 = vset.pattern.permute.xlu0 20
        %4385 = vperm.xlu0 %4384, %v867
        %v4386 = vpop.permute.xlu0 %4385
        %4388 = vset.pattern.permute.xlu0 20
        %4389 = vperm.xlu0 %4388, %v872
        %v4390 = vpop.permute.xlu0 %4389
        %4392 = vset.pattern.permute.xlu0 20
        %4393 = vperm.xlu0 %4392, %v877
        %v4394 = vpop.permute.xlu0 %4393
        %v4396 = vlaneseq
        %v4397 = vshrl.u32 %v4396, 7
        %v4398 = vsub.s32 4, %v4397
        %v4399 = vrot.slane %v720, %v4398
        %v4400 = vadd.f32 %v4366, %v4399
        %v4401 = vadd.f32 %v4370, %v4399
        %v4402 = vadd.f32 %v4374, %v4399
        %v4403 = vadd.f32 %v4378, %v4399
        %v4404 = vadd.f32 %v4382, %v4399
        %v4405 = vadd.f32 %v4386, %v4399
        %v4406 = vadd.f32 %v4390, %v4399
        %v4407 = vadd.f32 %v4394, %v4399
        %v4408 = vadd.f32 %v4400, %v4356
        %v4409 = vadd.f32 %v4401, %v4357
        %v4410 = vadd.f32 %v4402, %v4358
        %v4411 = vadd.f32 %v4403, %v4359
        %v4412 = vadd.f32 %v4404, %v4360
        %v4413 = vadd.f32 %v4405, %v4361
        %v4414 = vadd.f32 %v4406, %v4362
        %v4415 = vadd.f32 %v4407, %v4363
        %vm4416 = vcmp.gt.f32.partialorder %v4408, 0.0
        %vm4417 = vcmp.gt.f32.partialorder %v4409, 0.0
        %vm4418 = vcmp.gt.f32.partialorder %v4410, 0.0
        %vm4419 = vcmp.gt.f32.partialorder %v4411, 0.0
        %vm4420 = vcmp.gt.f32.partialorder %v4412, 0.0
        %vm4421 = vcmp.gt.f32.partialorder %v4413, 0.0
        %vm4422 = vcmp.gt.f32.partialorder %v4414, 0.0
        %vm4423 = vcmp.gt.f32.partialorder %v4415, 0.0
        %v4424 = vmul.f32 %v4408, 0.2
        %v4425 = vmul.f32 %v4409, 0.2
        %v4426 = vmul.f32 %v4410, 0.2
        %v4427 = vmul.f32 %v4411, 0.2
        %v4428 = vmul.f32 %v4412, 0.2
        %v4429 = vmul.f32 %v4413, 0.2
        %v4430 = vmul.f32 %v4414, 0.2
        %v4431 = vmul.f32 %v4415, 0.2
        %v4432 = vsel %vm4416, %v4408, %v4424
        %v4433 = vsel %vm4417, %v4409, %v4425
        %v4434 = vsel %vm4418, %v4410, %v4426
        %v4435 = vsel %vm4419, %v4411, %v4427
        %v4436 = vsel %vm4420, %v4412, %v4428
        %v4437 = vsel %vm4421, %v4413, %v4429
        %v4438 = vsel %vm4422, %v4414, %v4430
        %v4439 = vsel %vm4423, %v4415, %v4431
        %s4440 = sld [smem:[#allocation5 + $0x14]]
        %v4441 = vstv %s4440
        %v4442 = vmul.f32 %v4441, %v4432
        %v4443 = vmul.f32 %v4441, %v4433
        %v4444 = vmul.f32 %v4441, %v4434
        %v4445 = vmul.f32 %v4441, %v4435
        %v4446 = vmul.f32 %v4441, %v4436
        %v4447 = vmul.f32 %v4441, %v4437
        %v4448 = vmul.f32 %v4441, %v4438
        %v4449 = vmul.f32 %v4441, %v4439
        %v4450 = vadd.f32 %v4442, 0.0
        %v4451 = vadd.f32 %v4443, 0.0
        %v4452 = vadd.f32 %v4444, 0.0
        %v4453 = vadd.f32 %v4445, 0.0
        %v4454 = vadd.f32 %v4446, 0.0
        %v4455 = vadd.f32 %v4447, 0.0
        %v4456 = vadd.f32 %v4448, 0.0
        %v4457 = vadd.f32 %v4449, 0.0
        %s4458 = sld [smem:[#allocation3 + $0x15]]
        %v4459 = vstv %s4458
        %v4460 = vmul.f32 %v4459, %v888
        %v4461 = vmul.f32 %v4459, %v889
        %v4462 = vmul.f32 %v4459, %v890
        %v4463 = vmul.f32 %v4459, %v891
        %v4464 = vmul.f32 %v4459, %v892
        %v4465 = vmul.f32 %v4459, %v893
        %v4466 = vmul.f32 %v4459, %v894
        %v4467 = vmul.f32 %v4459, %v895
        %s4468 = sld [smem:[#allocation3 + $0x95]]
        %v4469 = vstv %s4468
        %v4470 = vmul.f32 %v4469, %v897
        %v4471 = vmul.f32 %v4469, %v898
        %v4472 = vmul.f32 %v4469, %v899
        %v4473 = vmul.f32 %v4469, %v900
        %v4474 = vmul.f32 %v4469, %v901
        %v4475 = vmul.f32 %v4469, %v902
        %v4476 = vmul.f32 %v4469, %v903
        %v4477 = vmul.f32 %v4469, %v904
        %v4478 = vadd.f32 %v4460, %v4470
        %v4479 = vadd.f32 %v4461, %v4471
        %v4480 = vadd.f32 %v4462, %v4472
        %v4481 = vadd.f32 %v4463, %v4473
        %v4482 = vadd.f32 %v4464, %v4474
        %v4483 = vadd.f32 %v4465, %v4475
        %v4484 = vadd.f32 %v4466, %v4476
        %v4485 = vadd.f32 %v4467, %v4477
        %s4486 = sld [smem:[#allocation3 + $0x115]]
        %v4487 = vstv %s4486
        %v4488 = vmul.f32 %v4487, %v906
        %v4489 = vmul.f32 %v4487, %v907
        %v4490 = vmul.f32 %v4487, %v908
        %v4491 = vmul.f32 %v4487, %v909
        %v4492 = vmul.f32 %v4487, %v910
        %v4493 = vmul.f32 %v4487, %v911
        %v4494 = vmul.f32 %v4487, %v912
        %v4495 = vmul.f32 %v4487, %v913
        %v4496 = vadd.f32 %v4478, %v4488
        %v4497 = vadd.f32 %v4479, %v4489
        %v4498 = vadd.f32 %v4480, %v4490
        %v4499 = vadd.f32 %v4481, %v4491
        %v4500 = vadd.f32 %v4482, %v4492
        %v4501 = vadd.f32 %v4483, %v4493
        %v4502 = vadd.f32 %v4484, %v4494
        %v4503 = vadd.f32 %v4485, %v4495
        %4504 = vset.pattern.permute.xlu0 21
        %4505 = vperm.xlu0 %4504, %v842
        %v4506 = vpop.permute.xlu0 %4505
        %4508 = vset.pattern.permute.xlu0 21
        %4509 = vperm.xlu0 %4508, %v847
        %v4510 = vpop.permute.xlu0 %4509
        %4512 = vset.pattern.permute.xlu0 21
        %4513 = vperm.xlu0 %4512, %v852
        %v4514 = vpop.permute.xlu0 %4513
        %4516 = vset.pattern.permute.xlu0 21
        %4517 = vperm.xlu0 %4516, %v857
        %v4518 = vpop.permute.xlu0 %4517
        %4520 = vset.pattern.permute.xlu0 21
        %4521 = vperm.xlu0 %4520, %v862
        %v4522 = vpop.permute.xlu0 %4521
        %4524 = vset.pattern.permute.xlu0 21
        %4525 = vperm.xlu0 %4524, %v867
        %v4526 = vpop.permute.xlu0 %4525
        %4528 = vset.pattern.permute.xlu0 21
        %4529 = vperm.xlu0 %4528, %v872
        %v4530 = vpop.permute.xlu0 %4529
        %4532 = vset.pattern.permute.xlu0 21
        %4533 = vperm.xlu0 %4532, %v877
        %v4534 = vpop.permute.xlu0 %4533
        %v4536 = vlaneseq
        %v4537 = vshrl.u32 %v4536, 7
        %v4538 = vsub.s32 5, %v4537
        %v4539 = vrot.slane %v720, %v4538
        %v4540 = vadd.f32 %v4506, %v4539
        %v4541 = vadd.f32 %v4510, %v4539
        %v4542 = vadd.f32 %v4514, %v4539
        %v4543 = vadd.f32 %v4518, %v4539
        %v4544 = vadd.f32 %v4522, %v4539
        %v4545 = vadd.f32 %v4526, %v4539
        %v4546 = vadd.f32 %v4530, %v4539
        %v4547 = vadd.f32 %v4534, %v4539
        %v4548 = vadd.f32 %v4540, %v4496
        %v4549 = vadd.f32 %v4541, %v4497
        %v4550 = vadd.f32 %v4542, %v4498
        %v4551 = vadd.f32 %v4543, %v4499
        %v4552 = vadd.f32 %v4544, %v4500
        %v4553 = vadd.f32 %v4545, %v4501
        %v4554 = vadd.f32 %v4546, %v4502
        %v4555 = vadd.f32 %v4547, %v4503
        %vm4556 = vcmp.gt.f32.partialorder %v4548, 0.0
        %vm4557 = vcmp.gt.f32.partialorder %v4549, 0.0
        %vm4558 = vcmp.gt.f32.partialorder %v4550, 0.0
        %vm4559 = vcmp.gt.f32.partialorder %v4551, 0.0
        %vm4560 = vcmp.gt.f32.partialorder %v4552, 0.0
        %vm4561 = vcmp.gt.f32.partialorder %v4553, 0.0
        %vm4562 = vcmp.gt.f32.partialorder %v4554, 0.0
        %vm4563 = vcmp.gt.f32.partialorder %v4555, 0.0
        %v4564 = vmul.f32 %v4548, 0.2
        %v4565 = vmul.f32 %v4549, 0.2
        %v4566 = vmul.f32 %v4550, 0.2
        %v4567 = vmul.f32 %v4551, 0.2
        %v4568 = vmul.f32 %v4552, 0.2
        %v4569 = vmul.f32 %v4553, 0.2
        %v4570 = vmul.f32 %v4554, 0.2
        %v4571 = vmul.f32 %v4555, 0.2
        %v4572 = vsel %vm4556, %v4548, %v4564
        %v4573 = vsel %vm4557, %v4549, %v4565
        %v4574 = vsel %vm4558, %v4550, %v4566
        %v4575 = vsel %vm4559, %v4551, %v4567
        %v4576 = vsel %vm4560, %v4552, %v4568
        %v4577 = vsel %vm4561, %v4553, %v4569
        %v4578 = vsel %vm4562, %v4554, %v4570
        %v4579 = vsel %vm4563, %v4555, %v4571
        %s4580 = sld [smem:[#allocation5 + $0x15]]
        %v4581 = vstv %s4580
        %v4582 = vmul.f32 %v4581, %v4572
        %v4583 = vmul.f32 %v4581, %v4573
        %v4584 = vmul.f32 %v4581, %v4574
        %v4585 = vmul.f32 %v4581, %v4575
        %v4586 = vmul.f32 %v4581, %v4576
        %v4587 = vmul.f32 %v4581, %v4577
        %v4588 = vmul.f32 %v4581, %v4578
        %v4589 = vmul.f32 %v4581, %v4579
        %v4590 = vadd.f32 %v4450, %v4582
        %v4591 = vadd.f32 %v4451, %v4583
        %v4592 = vadd.f32 %v4452, %v4584
        %v4593 = vadd.f32 %v4453, %v4585
        %v4594 = vadd.f32 %v4454, %v4586
        %v4595 = vadd.f32 %v4455, %v4587
        %v4596 = vadd.f32 %v4456, %v4588
        %v4597 = vadd.f32 %v4457, %v4589
        %s4598 = sld [smem:[#allocation3 + $0x16]]
        %v4599 = vstv %s4598
        %v4600 = vmul.f32 %v4599, %v888
        %v4601 = vmul.f32 %v4599, %v889
        %v4602 = vmul.f32 %v4599, %v890
        %v4603 = vmul.f32 %v4599, %v891
        %v4604 = vmul.f32 %v4599, %v892
        %v4605 = vmul.f32 %v4599, %v893
        %v4606 = vmul.f32 %v4599, %v894
        %v4607 = vmul.f32 %v4599, %v895
        %s4608 = sld [smem:[#allocation3 + $0x96]]
        %v4609 = vstv %s4608
        %v4610 = vmul.f32 %v4609, %v897
        %v4611 = vmul.f32 %v4609, %v898
        %v4612 = vmul.f32 %v4609, %v899
        %v4613 = vmul.f32 %v4609, %v900
        %v4614 = vmul.f32 %v4609, %v901
        %v4615 = vmul.f32 %v4609, %v902
        %v4616 = vmul.f32 %v4609, %v903
        %v4617 = vmul.f32 %v4609, %v904
        %v4618 = vadd.f32 %v4600, %v4610
        %v4619 = vadd.f32 %v4601, %v4611
        %v4620 = vadd.f32 %v4602, %v4612
        %v4621 = vadd.f32 %v4603, %v4613
        %v4622 = vadd.f32 %v4604, %v4614
        %v4623 = vadd.f32 %v4605, %v4615
        %v4624 = vadd.f32 %v4606, %v4616
        %v4625 = vadd.f32 %v4607, %v4617
        %s4626 = sld [smem:[#allocation3 + $0x116]]
        %v4627 = vstv %s4626
        %v4628 = vmul.f32 %v4627, %v906
        %v4629 = vmul.f32 %v4627, %v907
        %v4630 = vmul.f32 %v4627, %v908
        %v4631 = vmul.f32 %v4627, %v909
        %v4632 = vmul.f32 %v4627, %v910
        %v4633 = vmul.f32 %v4627, %v911
        %v4634 = vmul.f32 %v4627, %v912
        %v4635 = vmul.f32 %v4627, %v913
        %v4636 = vadd.f32 %v4618, %v4628
        %v4637 = vadd.f32 %v4619, %v4629
        %v4638 = vadd.f32 %v4620, %v4630
        %v4639 = vadd.f32 %v4621, %v4631
        %v4640 = vadd.f32 %v4622, %v4632
        %v4641 = vadd.f32 %v4623, %v4633
        %v4642 = vadd.f32 %v4624, %v4634
        %v4643 = vadd.f32 %v4625, %v4635
        %4644 = vset.pattern.permute.xlu0 22
        %4645 = vperm.xlu0 %4644, %v842
        %v4646 = vpop.permute.xlu0 %4645
        %4648 = vset.pattern.permute.xlu0 22
        %4649 = vperm.xlu0 %4648, %v847
        %v4650 = vpop.permute.xlu0 %4649
        %4652 = vset.pattern.permute.xlu0 22
        %4653 = vperm.xlu0 %4652, %v852
        %v4654 = vpop.permute.xlu0 %4653
        %4656 = vset.pattern.permute.xlu0 22
        %4657 = vperm.xlu0 %4656, %v857
        %v4658 = vpop.permute.xlu0 %4657
        %4660 = vset.pattern.permute.xlu0 22
        %4661 = vperm.xlu0 %4660, %v862
        %v4662 = vpop.permute.xlu0 %4661
        %4664 = vset.pattern.permute.xlu0 22
        %4665 = vperm.xlu0 %4664, %v867
        %v4666 = vpop.permute.xlu0 %4665
        %4668 = vset.pattern.permute.xlu0 22
        %4669 = vperm.xlu0 %4668, %v872
        %v4670 = vpop.permute.xlu0 %4669
        %4672 = vset.pattern.permute.xlu0 22
        %4673 = vperm.xlu0 %4672, %v877
        %v4674 = vpop.permute.xlu0 %4673
        %v4676 = vlaneseq
        %v4677 = vshrl.u32 %v4676, 7
        %v4678 = vsub.s32 6, %v4677
        %v4679 = vrot.slane %v720, %v4678
        %v4680 = vadd.f32 %v4646, %v4679
        %v4681 = vadd.f32 %v4650, %v4679
        %v4682 = vadd.f32 %v4654, %v4679
        %v4683 = vadd.f32 %v4658, %v4679
        %v4684 = vadd.f32 %v4662, %v4679
        %v4685 = vadd.f32 %v4666, %v4679
        %v4686 = vadd.f32 %v4670, %v4679
        %v4687 = vadd.f32 %v4674, %v4679
        %v4688 = vadd.f32 %v4680, %v4636
        %v4689 = vadd.f32 %v4681, %v4637
        %v4690 = vadd.f32 %v4682, %v4638
        %v4691 = vadd.f32 %v4683, %v4639
        %v4692 = vadd.f32 %v4684, %v4640
        %v4693 = vadd.f32 %v4685, %v4641
        %v4694 = vadd.f32 %v4686, %v4642
        %v4695 = vadd.f32 %v4687, %v4643
        %vm4696 = vcmp.gt.f32.partialorder %v4688, 0.0
        %vm4697 = vcmp.gt.f32.partialorder %v4689, 0.0
        %vm4698 = vcmp.gt.f32.partialorder %v4690, 0.0
        %vm4699 = vcmp.gt.f32.partialorder %v4691, 0.0
        %vm4700 = vcmp.gt.f32.partialorder %v4692, 0.0
        %vm4701 = vcmp.gt.f32.partialorder %v4693, 0.0
        %vm4702 = vcmp.gt.f32.partialorder %v4694, 0.0
        %vm4703 = vcmp.gt.f32.partialorder %v4695, 0.0
        %v4704 = vmul.f32 %v4688, 0.2
        %v4705 = vmul.f32 %v4689, 0.2
        %v4706 = vmul.f32 %v4690, 0.2
        %v4707 = vmul.f32 %v4691, 0.2
        %v4708 = vmul.f32 %v4692, 0.2
        %v4709 = vmul.f32 %v4693, 0.2
        %v4710 = vmul.f32 %v4694, 0.2
        %v4711 = vmul.f32 %v4695, 0.2
        %v4712 = vsel %vm4696, %v4688, %v4704
        %v4713 = vsel %vm4697, %v4689, %v4705
        %v4714 = vsel %vm4698, %v4690, %v4706
        %v4715 = vsel %vm4699, %v4691, %v4707
        %v4716 = vsel %vm4700, %v4692, %v4708
        %v4717 = vsel %vm4701, %v4693, %v4709
        %v4718 = vsel %vm4702, %v4694, %v4710
        %v4719 = vsel %vm4703, %v4695, %v4711
        %s4720 = sld [smem:[#allocation5 + $0x16]]
        %v4721 = vstv %s4720
        %v4722 = vmul.f32 %v4721, %v4712
        %v4723 = vmul.f32 %v4721, %v4713
        %v4724 = vmul.f32 %v4721, %v4714
        %v4725 = vmul.f32 %v4721, %v4715
        %v4726 = vmul.f32 %v4721, %v4716
        %v4727 = vmul.f32 %v4721, %v4717
        %v4728 = vmul.f32 %v4721, %v4718
        %v4729 = vmul.f32 %v4721, %v4719
        %v4730 = vadd.f32 %v4590, %v4722
        %v4731 = vadd.f32 %v4591, %v4723
        %v4732 = vadd.f32 %v4592, %v4724
        %v4733 = vadd.f32 %v4593, %v4725
        %v4734 = vadd.f32 %v4594, %v4726
        %v4735 = vadd.f32 %v4595, %v4727
        %v4736 = vadd.f32 %v4596, %v4728
        %v4737 = vadd.f32 %v4597, %v4729
        %s4738 = sld [smem:[#allocation3 + $0x17]]
        %v4739 = vstv %s4738
        %v4740 = vmul.f32 %v4739, %v888
        %v4741 = vmul.f32 %v4739, %v889
        %v4742 = vmul.f32 %v4739, %v890
        %v4743 = vmul.f32 %v4739, %v891
        %v4744 = vmul.f32 %v4739, %v892
        %v4745 = vmul.f32 %v4739, %v893
        %v4746 = vmul.f32 %v4739, %v894
        %v4747 = vmul.f32 %v4739, %v895
        %s4748 = sld [smem:[#allocation3 + $0x97]]
        %v4749 = vstv %s4748
        %v4750 = vmul.f32 %v4749, %v897
        %v4751 = vmul.f32 %v4749, %v898
        %v4752 = vmul.f32 %v4749, %v899
        %v4753 = vmul.f32 %v4749, %v900
        %v4754 = vmul.f32 %v4749, %v901
        %v4755 = vmul.f32 %v4749, %v902
        %v4756 = vmul.f32 %v4749, %v903
        %v4757 = vmul.f32 %v4749, %v904
        %v4758 = vadd.f32 %v4740, %v4750
        %v4759 = vadd.f32 %v4741, %v4751
        %v4760 = vadd.f32 %v4742, %v4752
        %v4761 = vadd.f32 %v4743, %v4753
        %v4762 = vadd.f32 %v4744, %v4754
        %v4763 = vadd.f32 %v4745, %v4755
        %v4764 = vadd.f32 %v4746, %v4756
        %v4765 = vadd.f32 %v4747, %v4757
        %s4766 = sld [smem:[#allocation3 + $0x117]]
        %v4767 = vstv %s4766
        %v4768 = vmul.f32 %v4767, %v906
        %v4769 = vmul.f32 %v4767, %v907
        %v4770 = vmul.f32 %v4767, %v908
        %v4771 = vmul.f32 %v4767, %v909
        %v4772 = vmul.f32 %v4767, %v910
        %v4773 = vmul.f32 %v4767, %v911
        %v4774 = vmul.f32 %v4767, %v912
        %v4775 = vmul.f32 %v4767, %v913
        %v4776 = vadd.f32 %v4758, %v4768
        %v4777 = vadd.f32 %v4759, %v4769
        %v4778 = vadd.f32 %v4760, %v4770
        %v4779 = vadd.f32 %v4761, %v4771
        %v4780 = vadd.f32 %v4762, %v4772
        %v4781 = vadd.f32 %v4763, %v4773
        %v4782 = vadd.f32 %v4764, %v4774
        %v4783 = vadd.f32 %v4765, %v4775
        %4784 = vset.pattern.permute.xlu0 23
        %4785 = vperm.xlu0 %4784, %v842
        %v4786 = vpop.permute.xlu0 %4785
        %4788 = vset.pattern.permute.xlu0 23
        %4789 = vperm.xlu0 %4788, %v847
        %v4790 = vpop.permute.xlu0 %4789
        %4792 = vset.pattern.permute.xlu0 23
        %4793 = vperm.xlu0 %4792, %v852
        %v4794 = vpop.permute.xlu0 %4793
        %4796 = vset.pattern.permute.xlu0 23
        %4797 = vperm.xlu0 %4796, %v857
        %v4798 = vpop.permute.xlu0 %4797
        %4800 = vset.pattern.permute.xlu0 23
        %4801 = vperm.xlu0 %4800, %v862
        %v4802 = vpop.permute.xlu0 %4801
        %4804 = vset.pattern.permute.xlu0 23
        %4805 = vperm.xlu0 %4804, %v867
        %v4806 = vpop.permute.xlu0 %4805
        %4808 = vset.pattern.permute.xlu0 23
        %4809 = vperm.xlu0 %4808, %v872
        %v4810 = vpop.permute.xlu0 %4809
        %4812 = vset.pattern.permute.xlu0 23
        %4813 = vperm.xlu0 %4812, %v877
        %v4814 = vpop.permute.xlu0 %4813
        %v4816 = vlaneseq
        %v4817 = vshrl.u32 %v4816, 7
        %v4818 = vsub.s32 7, %v4817
        %v4819 = vrot.slane %v720, %v4818
        %v4820 = vadd.f32 %v4786, %v4819
        %v4821 = vadd.f32 %v4790, %v4819
        %v4822 = vadd.f32 %v4794, %v4819
        %v4823 = vadd.f32 %v4798, %v4819
        %v4824 = vadd.f32 %v4802, %v4819
        %v4825 = vadd.f32 %v4806, %v4819
        %v4826 = vadd.f32 %v4810, %v4819
        %v4827 = vadd.f32 %v4814, %v4819
        %v4828 = vadd.f32 %v4820, %v4776
        %v4829 = vadd.f32 %v4821, %v4777
        %v4830 = vadd.f32 %v4822, %v4778
        %v4831 = vadd.f32 %v4823, %v4779
        %v4832 = vadd.f32 %v4824, %v4780
        %v4833 = vadd.f32 %v4825, %v4781
        %v4834 = vadd.f32 %v4826, %v4782
        %v4835 = vadd.f32 %v4827, %v4783
        %vm4836 = vcmp.gt.f32.partialorder %v4828, 0.0
        %vm4837 = vcmp.gt.f32.partialorder %v4829, 0.0
        %vm4838 = vcmp.gt.f32.partialorder %v4830, 0.0
        %vm4839 = vcmp.gt.f32.partialorder %v4831, 0.0
        %vm4840 = vcmp.gt.f32.partialorder %v4832, 0.0
        %vm4841 = vcmp.gt.f32.partialorder %v4833, 0.0
        %vm4842 = vcmp.gt.f32.partialorder %v4834, 0.0
        %vm4843 = vcmp.gt.f32.partialorder %v4835, 0.0
        %v4844 = vmul.f32 %v4828, 0.2
        %v4845 = vmul.f32 %v4829, 0.2
        %v4846 = vmul.f32 %v4830, 0.2
        %v4847 = vmul.f32 %v4831, 0.2
        %v4848 = vmul.f32 %v4832, 0.2
        %v4849 = vmul.f32 %v4833, 0.2
        %v4850 = vmul.f32 %v4834, 0.2
        %v4851 = vmul.f32 %v4835, 0.2
        %v4852 = vsel %vm4836, %v4828, %v4844
        %v4853 = vsel %vm4837, %v4829, %v4845
        %v4854 = vsel %vm4838, %v4830, %v4846
        %v4855 = vsel %vm4839, %v4831, %v4847
        %v4856 = vsel %vm4840, %v4832, %v4848
        %v4857 = vsel %vm4841, %v4833, %v4849
        %v4858 = vsel %vm4842, %v4834, %v4850
        %v4859 = vsel %vm4843, %v4835, %v4851
        %s4860 = sld [smem:[#allocation5 + $0x17]]
        %v4861 = vstv %s4860
        %v4862 = vmul.f32 %v4861, %v4852
        %v4863 = vmul.f32 %v4861, %v4853
        %v4864 = vmul.f32 %v4861, %v4854
        %v4865 = vmul.f32 %v4861, %v4855
        %v4866 = vmul.f32 %v4861, %v4856
        %v4867 = vmul.f32 %v4861, %v4857
        %v4868 = vmul.f32 %v4861, %v4858
        %v4869 = vmul.f32 %v4861, %v4859
        %v4870 = vadd.f32 %v4730, %v4862
        %v4871 = vadd.f32 %v4731, %v4863
        %v4872 = vadd.f32 %v4732, %v4864
        %v4873 = vadd.f32 %v4733, %v4865
        %v4874 = vadd.f32 %v4734, %v4866
        %v4875 = vadd.f32 %v4735, %v4867
        %v4876 = vadd.f32 %v4736, %v4868
        %v4877 = vadd.f32 %v4737, %v4869
        %s4878 = sld [smem:[#allocation3 + $0x18]]
        %v4879 = vstv %s4878
        %v4880 = vmul.f32 %v4879, %v888
        %v4881 = vmul.f32 %v4879, %v889
        %v4882 = vmul.f32 %v4879, %v890
        %v4883 = vmul.f32 %v4879, %v891
        %v4884 = vmul.f32 %v4879, %v892
        %v4885 = vmul.f32 %v4879, %v893
        %v4886 = vmul.f32 %v4879, %v894
        %v4887 = vmul.f32 %v4879, %v895
        %s4888 = sld [smem:[#allocation3 + $0x98]]
        %v4889 = vstv %s4888
        %v4890 = vmul.f32 %v4889, %v897
        %v4891 = vmul.f32 %v4889, %v898
        %v4892 = vmul.f32 %v4889, %v899
        %v4893 = vmul.f32 %v4889, %v900
        %v4894 = vmul.f32 %v4889, %v901
        %v4895 = vmul.f32 %v4889, %v902
        %v4896 = vmul.f32 %v4889, %v903
        %v4897 = vmul.f32 %v4889, %v904
        %v4898 = vadd.f32 %v4880, %v4890
        %v4899 = vadd.f32 %v4881, %v4891
        %v4900 = vadd.f32 %v4882, %v4892
        %v4901 = vadd.f32 %v4883, %v4893
        %v4902 = vadd.f32 %v4884, %v4894
        %v4903 = vadd.f32 %v4885, %v4895
        %v4904 = vadd.f32 %v4886, %v4896
        %v4905 = vadd.f32 %v4887, %v4897
        %s4906 = sld [smem:[#allocation3 + $0x118]]
        %v4907 = vstv %s4906
        %v4908 = vmul.f32 %v4907, %v906
        %v4909 = vmul.f32 %v4907, %v907
        %v4910 = vmul.f32 %v4907, %v908
        %v4911 = vmul.f32 %v4907, %v909
        %v4912 = vmul.f32 %v4907, %v910
        %v4913 = vmul.f32 %v4907, %v911
        %v4914 = vmul.f32 %v4907, %v912
        %v4915 = vmul.f32 %v4907, %v913
        %v4916 = vadd.f32 %v4898, %v4908
        %v4917 = vadd.f32 %v4899, %v4909
        %v4918 = vadd.f32 %v4900, %v4910
        %v4919 = vadd.f32 %v4901, %v4911
        %v4920 = vadd.f32 %v4902, %v4912
        %v4921 = vadd.f32 %v4903, %v4913
        %v4922 = vadd.f32 %v4904, %v4914
        %v4923 = vadd.f32 %v4905, %v4915
        %4924 = vset.pattern.permute.xlu0 24
        %4925 = vperm.xlu0 %4924, %v842
        %v4926 = vpop.permute.xlu0 %4925
        %4928 = vset.pattern.permute.xlu0 24
        %4929 = vperm.xlu0 %4928, %v847
        %v4930 = vpop.permute.xlu0 %4929
        %4932 = vset.pattern.permute.xlu0 24
        %4933 = vperm.xlu0 %4932, %v852
        %v4934 = vpop.permute.xlu0 %4933
        %4936 = vset.pattern.permute.xlu0 24
        %4937 = vperm.xlu0 %4936, %v857
        %v4938 = vpop.permute.xlu0 %4937
        %4940 = vset.pattern.permute.xlu0 24
        %4941 = vperm.xlu0 %4940, %v862
        %v4942 = vpop.permute.xlu0 %4941
        %4944 = vset.pattern.permute.xlu0 24
        %4945 = vperm.xlu0 %4944, %v867
        %v4946 = vpop.permute.xlu0 %4945
        %4948 = vset.pattern.permute.xlu0 24
        %4949 = vperm.xlu0 %4948, %v872
        %v4950 = vpop.permute.xlu0 %4949
        %4952 = vset.pattern.permute.xlu0 24
        %4953 = vperm.xlu0 %4952, %v877
        %v4954 = vpop.permute.xlu0 %4953
        %v4956 = vlaneseq
        %v4957 = vshrl.u32 %v4956, 7
        %v4958 = vsub.s32 0, %v4957
        %v4959 = vrot.slane %v721, %v4958
        %v4960 = vadd.f32 %v4926, %v4959
        %v4961 = vadd.f32 %v4930, %v4959
        %v4962 = vadd.f32 %v4934, %v4959
        %v4963 = vadd.f32 %v4938, %v4959
        %v4964 = vadd.f32 %v4942, %v4959
        %v4965 = vadd.f32 %v4946, %v4959
        %v4966 = vadd.f32 %v4950, %v4959
        %v4967 = vadd.f32 %v4954, %v4959
        %v4968 = vadd.f32 %v4960, %v4916
        %v4969 = vadd.f32 %v4961, %v4917
        %v4970 = vadd.f32 %v4962, %v4918
        %v4971 = vadd.f32 %v4963, %v4919
        %v4972 = vadd.f32 %v4964, %v4920
        %v4973 = vadd.f32 %v4965, %v4921
        %v4974 = vadd.f32 %v4966, %v4922
        %v4975 = vadd.f32 %v4967, %v4923
        %vm4976 = vcmp.gt.f32.partialorder %v4968, 0.0
        %vm4977 = vcmp.gt.f32.partialorder %v4969, 0.0
        %vm4978 = vcmp.gt.f32.partialorder %v4970, 0.0
        %vm4979 = vcmp.gt.f32.partialorder %v4971, 0.0
        %vm4980 = vcmp.gt.f32.partialorder %v4972, 0.0
        %vm4981 = vcmp.gt.f32.partialorder %v4973, 0.0
        %vm4982 = vcmp.gt.f32.partialorder %v4974, 0.0
        %vm4983 = vcmp.gt.f32.partialorder %v4975, 0.0
        %v4984 = vmul.f32 %v4968, 0.2
        %v4985 = vmul.f32 %v4969, 0.2
        %v4986 = vmul.f32 %v4970, 0.2
        %v4987 = vmul.f32 %v4971, 0.2
        %v4988 = vmul.f32 %v4972, 0.2
        %v4989 = vmul.f32 %v4973, 0.2
        %v4990 = vmul.f32 %v4974, 0.2
        %v4991 = vmul.f32 %v4975, 0.2
        %v4992 = vsel %vm4976, %v4968, %v4984
        %v4993 = vsel %vm4977, %v4969, %v4985
        %v4994 = vsel %vm4978, %v4970, %v4986
        %v4995 = vsel %vm4979, %v4971, %v4987
        %v4996 = vsel %vm4980, %v4972, %v4988
        %v4997 = vsel %vm4981, %v4973, %v4989
        %v4998 = vsel %vm4982, %v4974, %v4990
        %v4999 = vsel %vm4983, %v4975, %v4991
        %s5000 = sld [smem:[#allocation5 + $0x18]]
        %v5001 = vstv %s5000
        %v5002 = vmul.f32 %v5001, %v4992
        %v5003 = vmul.f32 %v5001, %v4993
        %v5004 = vmul.f32 %v5001, %v4994
        %v5005 = vmul.f32 %v5001, %v4995
        %v5006 = vmul.f32 %v5001, %v4996
        %v5007 = vmul.f32 %v5001, %v4997
        %v5008 = vmul.f32 %v5001, %v4998
        %v5009 = vmul.f32 %v5001, %v4999
        %v5010 = vadd.f32 %v4870, %v5002
        %v5011 = vadd.f32 %v4871, %v5003
        %v5012 = vadd.f32 %v4872, %v5004
        %v5013 = vadd.f32 %v4873, %v5005
        %v5014 = vadd.f32 %v4874, %v5006
        %v5015 = vadd.f32 %v4875, %v5007
        %v5016 = vadd.f32 %v4876, %v5008
        %v5017 = vadd.f32 %v4877, %v5009
        %s5018 = sld [smem:[#allocation3 + $0x19]]
        %v5019 = vstv %s5018
        %v5020 = vmul.f32 %v5019, %v888
        %v5021 = vmul.f32 %v5019, %v889
        %v5022 = vmul.f32 %v5019, %v890
        %v5023 = vmul.f32 %v5019, %v891
        %v5024 = vmul.f32 %v5019, %v892
        %v5025 = vmul.f32 %v5019, %v893
        %v5026 = vmul.f32 %v5019, %v894
        %v5027 = vmul.f32 %v5019, %v895
        %s5028 = sld [smem:[#allocation3 + $0x99]]
        %v5029 = vstv %s5028
        %v5030 = vmul.f32 %v5029, %v897
        %v5031 = vmul.f32 %v5029, %v898
        %v5032 = vmul.f32 %v5029, %v899
        %v5033 = vmul.f32 %v5029, %v900
        %v5034 = vmul.f32 %v5029, %v901
        %v5035 = vmul.f32 %v5029, %v902
        %v5036 = vmul.f32 %v5029, %v903
        %v5037 = vmul.f32 %v5029, %v904
        %v5038 = vadd.f32 %v5020, %v5030
        %v5039 = vadd.f32 %v5021, %v5031
        %v5040 = vadd.f32 %v5022, %v5032
        %v5041 = vadd.f32 %v5023, %v5033
        %v5042 = vadd.f32 %v5024, %v5034
        %v5043 = vadd.f32 %v5025, %v5035
        %v5044 = vadd.f32 %v5026, %v5036
        %v5045 = vadd.f32 %v5027, %v5037
        %s5046 = sld [smem:[#allocation3 + $0x119]]
        %v5047 = vstv %s5046
        %v5048 = vmul.f32 %v5047, %v906
        %v5049 = vmul.f32 %v5047, %v907
        %v5050 = vmul.f32 %v5047, %v908
        %v5051 = vmul.f32 %v5047, %v909
        %v5052 = vmul.f32 %v5047, %v910
        %v5053 = vmul.f32 %v5047, %v911
        %v5054 = vmul.f32 %v5047, %v912
        %v5055 = vmul.f32 %v5047, %v913
        %v5056 = vadd.f32 %v5038, %v5048
        %v5057 = vadd.f32 %v5039, %v5049
        %v5058 = vadd.f32 %v5040, %v5050
        %v5059 = vadd.f32 %v5041, %v5051
        %v5060 = vadd.f32 %v5042, %v5052
        %v5061 = vadd.f32 %v5043, %v5053
        %v5062 = vadd.f32 %v5044, %v5054
        %v5063 = vadd.f32 %v5045, %v5055
        %5064 = vset.pattern.permute.xlu0 25
        %5065 = vperm.xlu0 %5064, %v842
        %v5066 = vpop.permute.xlu0 %5065
        %5068 = vset.pattern.permute.xlu0 25
        %5069 = vperm.xlu0 %5068, %v847
        %v5070 = vpop.permute.xlu0 %5069
        %5072 = vset.pattern.permute.xlu0 25
        %5073 = vperm.xlu0 %5072, %v852
        %v5074 = vpop.permute.xlu0 %5073
        %5076 = vset.pattern.permute.xlu0 25
        %5077 = vperm.xlu0 %5076, %v857
        %v5078 = vpop.permute.xlu0 %5077
        %5080 = vset.pattern.permute.xlu0 25
        %5081 = vperm.xlu0 %5080, %v862
        %v5082 = vpop.permute.xlu0 %5081
        %5084 = vset.pattern.permute.xlu0 25
        %5085 = vperm.xlu0 %5084, %v867
        %v5086 = vpop.permute.xlu0 %5085
        %5088 = vset.pattern.permute.xlu0 25
        %5089 = vperm.xlu0 %5088, %v872
        %v5090 = vpop.permute.xlu0 %5089
        %5092 = vset.pattern.permute.xlu0 25
        %5093 = vperm.xlu0 %5092, %v877
        %v5094 = vpop.permute.xlu0 %5093
        %v5096 = vlaneseq
        %v5097 = vshrl.u32 %v5096, 7
        %v5098 = vsub.s32 1, %v5097
        %v5099 = vrot.slane %v721, %v5098
        %v5100 = vadd.f32 %v5066, %v5099
        %v5101 = vadd.f32 %v5070, %v5099
        %v5102 = vadd.f32 %v5074, %v5099
        %v5103 = vadd.f32 %v5078, %v5099
        %v5104 = vadd.f32 %v5082, %v5099
        %v5105 = vadd.f32 %v5086, %v5099
        %v5106 = vadd.f32 %v5090, %v5099
        %v5107 = vadd.f32 %v5094, %v5099
        %v5108 = vadd.f32 %v5100, %v5056
        %v5109 = vadd.f32 %v5101, %v5057
        %v5110 = vadd.f32 %v5102, %v5058
        %v5111 = vadd.f32 %v5103, %v5059
        %v5112 = vadd.f32 %v5104, %v5060
        %v5113 = vadd.f32 %v5105, %v5061
        %v5114 = vadd.f32 %v5106, %v5062
        %v5115 = vadd.f32 %v5107, %v5063
        %vm5116 = vcmp.gt.f32.partialorder %v5108, 0.0
        %vm5117 = vcmp.gt.f32.partialorder %v5109, 0.0
        %vm5118 = vcmp.gt.f32.partialorder %v5110, 0.0
        %vm5119 = vcmp.gt.f32.partialorder %v5111, 0.0
        %vm5120 = vcmp.gt.f32.partialorder %v5112, 0.0
        %vm5121 = vcmp.gt.f32.partialorder %v5113, 0.0
        %vm5122 = vcmp.gt.f32.partialorder %v5114, 0.0
        %vm5123 = vcmp.gt.f32.partialorder %v5115, 0.0
        %v5124 = vmul.f32 %v5108, 0.2
        %v5125 = vmul.f32 %v5109, 0.2
        %v5126 = vmul.f32 %v5110, 0.2
        %v5127 = vmul.f32 %v5111, 0.2
        %v5128 = vmul.f32 %v5112, 0.2
        %v5129 = vmul.f32 %v5113, 0.2
        %v5130 = vmul.f32 %v5114, 0.2
        %v5131 = vmul.f32 %v5115, 0.2
        %v5132 = vsel %vm5116, %v5108, %v5124
        %v5133 = vsel %vm5117, %v5109, %v5125
        %v5134 = vsel %vm5118, %v5110, %v5126
        %v5135 = vsel %vm5119, %v5111, %v5127
        %v5136 = vsel %vm5120, %v5112, %v5128
        %v5137 = vsel %vm5121, %v5113, %v5129
        %v5138 = vsel %vm5122, %v5114, %v5130
        %v5139 = vsel %vm5123, %v5115, %v5131
        %s5140 = sld [smem:[#allocation5 + $0x19]]
        %v5141 = vstv %s5140
        %v5142 = vmul.f32 %v5141, %v5132
        %v5143 = vmul.f32 %v5141, %v5133
        %v5144 = vmul.f32 %v5141, %v5134
        %v5145 = vmul.f32 %v5141, %v5135
        %v5146 = vmul.f32 %v5141, %v5136
        %v5147 = vmul.f32 %v5141, %v5137
        %v5148 = vmul.f32 %v5141, %v5138
        %v5149 = vmul.f32 %v5141, %v5139
        %v5150 = vadd.f32 %v5010, %v5142
        %v5151 = vadd.f32 %v5011, %v5143
        %v5152 = vadd.f32 %v5012, %v5144
        %v5153 = vadd.f32 %v5013, %v5145
        %v5154 = vadd.f32 %v5014, %v5146
        %v5155 = vadd.f32 %v5015, %v5147
        %v5156 = vadd.f32 %v5016, %v5148
        %v5157 = vadd.f32 %v5017, %v5149
        %s5158 = sld [smem:[#allocation3 + $0x1a]]
        %v5159 = vstv %s5158
        %v5160 = vmul.f32 %v5159, %v888
        %v5161 = vmul.f32 %v5159, %v889
        %v5162 = vmul.f32 %v5159, %v890
        %v5163 = vmul.f32 %v5159, %v891
        %v5164 = vmul.f32 %v5159, %v892
        %v5165 = vmul.f32 %v5159, %v893
        %v5166 = vmul.f32 %v5159, %v894
        %v5167 = vmul.f32 %v5159, %v895
        %s5168 = sld [smem:[#allocation3 + $0x9a]]
        %v5169 = vstv %s5168
        %v5170 = vmul.f32 %v5169, %v897
        %v5171 = vmul.f32 %v5169, %v898
        %v5172 = vmul.f32 %v5169, %v899
        %v5173 = vmul.f32 %v5169, %v900
        %v5174 = vmul.f32 %v5169, %v901
        %v5175 = vmul.f32 %v5169, %v902
        %v5176 = vmul.f32 %v5169, %v903
        %v5177 = vmul.f32 %v5169, %v904
        %v5178 = vadd.f32 %v5160, %v5170
        %v5179 = vadd.f32 %v5161, %v5171
        %v5180 = vadd.f32 %v5162, %v5172
        %v5181 = vadd.f32 %v5163, %v5173
        %v5182 = vadd.f32 %v5164, %v5174
        %v5183 = vadd.f32 %v5165, %v5175
        %v5184 = vadd.f32 %v5166, %v5176
        %v5185 = vadd.f32 %v5167, %v5177
        %s5186 = sld [smem:[#allocation3 + $0x11a]]
        %v5187 = vstv %s5186
        %v5188 = vmul.f32 %v5187, %v906
        %v5189 = vmul.f32 %v5187, %v907
        %v5190 = vmul.f32 %v5187, %v908
        %v5191 = vmul.f32 %v5187, %v909
        %v5192 = vmul.f32 %v5187, %v910
        %v5193 = vmul.f32 %v5187, %v911
        %v5194 = vmul.f32 %v5187, %v912
        %v5195 = vmul.f32 %v5187, %v913
        %v5196 = vadd.f32 %v5178, %v5188
        %v5197 = vadd.f32 %v5179, %v5189
        %v5198 = vadd.f32 %v5180, %v5190
        %v5199 = vadd.f32 %v5181, %v5191
        %v5200 = vadd.f32 %v5182, %v5192
        %v5201 = vadd.f32 %v5183, %v5193
        %v5202 = vadd.f32 %v5184, %v5194
        %v5203 = vadd.f32 %v5185, %v5195
        %5204 = vset.pattern.permute.xlu0 26
        %5205 = vperm.xlu0 %5204, %v842
        %v5206 = vpop.permute.xlu0 %5205
        %5208 = vset.pattern.permute.xlu0 26
        %5209 = vperm.xlu0 %5208, %v847
        %v5210 = vpop.permute.xlu0 %5209
        %5212 = vset.pattern.permute.xlu0 26
        %5213 = vperm.xlu0 %5212, %v852
        %v5214 = vpop.permute.xlu0 %5213
        %5216 = vset.pattern.permute.xlu0 26
        %5217 = vperm.xlu0 %5216, %v857
        %v5218 = vpop.permute.xlu0 %5217
        %5220 = vset.pattern.permute.xlu0 26
        %5221 = vperm.xlu0 %5220, %v862
        %v5222 = vpop.permute.xlu0 %5221
        %5224 = vset.pattern.permute.xlu0 26
        %5225 = vperm.xlu0 %5224, %v867
        %v5226 = vpop.permute.xlu0 %5225
        %5228 = vset.pattern.permute.xlu0 26
        %5229 = vperm.xlu0 %5228, %v872
        %v5230 = vpop.permute.xlu0 %5229
        %5232 = vset.pattern.permute.xlu0 26
        %5233 = vperm.xlu0 %5232, %v877
        %v5234 = vpop.permute.xlu0 %5233
        %v5236 = vlaneseq
        %v5237 = vshrl.u32 %v5236, 7
        %v5238 = vsub.s32 2, %v5237
        %v5239 = vrot.slane %v721, %v5238
        %v5240 = vadd.f32 %v5206, %v5239
        %v5241 = vadd.f32 %v5210, %v5239
        %v5242 = vadd.f32 %v5214, %v5239
        %v5243 = vadd.f32 %v5218, %v5239
        %v5244 = vadd.f32 %v5222, %v5239
        %v5245 = vadd.f32 %v5226, %v5239
        %v5246 = vadd.f32 %v5230, %v5239
        %v5247 = vadd.f32 %v5234, %v5239
        %v5248 = vadd.f32 %v5240, %v5196
        %v5249 = vadd.f32 %v5241, %v5197
        %v5250 = vadd.f32 %v5242, %v5198
        %v5251 = vadd.f32 %v5243, %v5199
        %v5252 = vadd.f32 %v5244, %v5200
        %v5253 = vadd.f32 %v5245, %v5201
        %v5254 = vadd.f32 %v5246, %v5202
        %v5255 = vadd.f32 %v5247, %v5203
        %vm5256 = vcmp.gt.f32.partialorder %v5248, 0.0
        %vm5257 = vcmp.gt.f32.partialorder %v5249, 0.0
        %vm5258 = vcmp.gt.f32.partialorder %v5250, 0.0
        %vm5259 = vcmp.gt.f32.partialorder %v5251, 0.0
        %vm5260 = vcmp.gt.f32.partialorder %v5252, 0.0
        %vm5261 = vcmp.gt.f32.partialorder %v5253, 0.0
        %vm5262 = vcmp.gt.f32.partialorder %v5254, 0.0
        %vm5263 = vcmp.gt.f32.partialorder %v5255, 0.0
        %v5264 = vmul.f32 %v5248, 0.2
        %v5265 = vmul.f32 %v5249, 0.2
        %v5266 = vmul.f32 %v5250, 0.2
        %v5267 = vmul.f32 %v5251, 0.2
        %v5268 = vmul.f32 %v5252, 0.2
        %v5269 = vmul.f32 %v5253, 0.2
        %v5270 = vmul.f32 %v5254, 0.2
        %v5271 = vmul.f32 %v5255, 0.2
        %v5272 = vsel %vm5256, %v5248, %v5264
        %v5273 = vsel %vm5257, %v5249, %v5265
        %v5274 = vsel %vm5258, %v5250, %v5266
        %v5275 = vsel %vm5259, %v5251, %v5267
        %v5276 = vsel %vm5260, %v5252, %v5268
        %v5277 = vsel %vm5261, %v5253, %v5269
        %v5278 = vsel %vm5262, %v5254, %v5270
        %v5279 = vsel %vm5263, %v5255, %v5271
        %s5280 = sld [smem:[#allocation5 + $0x1a]]
        %v5281 = vstv %s5280
        %v5282 = vmul.f32 %v5281, %v5272
        %v5283 = vmul.f32 %v5281, %v5273
        %v5284 = vmul.f32 %v5281, %v5274
        %v5285 = vmul.f32 %v5281, %v5275
        %v5286 = vmul.f32 %v5281, %v5276
        %v5287 = vmul.f32 %v5281, %v5277
        %v5288 = vmul.f32 %v5281, %v5278
        %v5289 = vmul.f32 %v5281, %v5279
        %v5290 = vadd.f32 %v5150, %v5282
        %v5291 = vadd.f32 %v5151, %v5283
        %v5292 = vadd.f32 %v5152, %v5284
        %v5293 = vadd.f32 %v5153, %v5285
        %v5294 = vadd.f32 %v5154, %v5286
        %v5295 = vadd.f32 %v5155, %v5287
        %v5296 = vadd.f32 %v5156, %v5288
        %v5297 = vadd.f32 %v5157, %v5289
        %s5298 = sld [smem:[#allocation3 + $0x1b]]
        %v5299 = vstv %s5298
        %v5300 = vmul.f32 %v5299, %v888
        %v5301 = vmul.f32 %v5299, %v889
        %v5302 = vmul.f32 %v5299, %v890
        %v5303 = vmul.f32 %v5299, %v891
        %v5304 = vmul.f32 %v5299, %v892
        %v5305 = vmul.f32 %v5299, %v893
        %v5306 = vmul.f32 %v5299, %v894
        %v5307 = vmul.f32 %v5299, %v895
        %s5308 = sld [smem:[#allocation3 + $0x9b]]
        %v5309 = vstv %s5308
        %v5310 = vmul.f32 %v5309, %v897
        %v5311 = vmul.f32 %v5309, %v898
        %v5312 = vmul.f32 %v5309, %v899
        %v5313 = vmul.f32 %v5309, %v900
        %v5314 = vmul.f32 %v5309, %v901
        %v5315 = vmul.f32 %v5309, %v902
        %v5316 = vmul.f32 %v5309, %v903
        %v5317 = vmul.f32 %v5309, %v904
        %v5318 = vadd.f32 %v5300, %v5310
        %v5319 = vadd.f32 %v5301, %v5311
        %v5320 = vadd.f32 %v5302, %v5312
        %v5321 = vadd.f32 %v5303, %v5313
        %v5322 = vadd.f32 %v5304, %v5314
        %v5323 = vadd.f32 %v5305, %v5315
        %v5324 = vadd.f32 %v5306, %v5316
        %v5325 = vadd.f32 %v5307, %v5317
        %s5326 = sld [smem:[#allocation3 + $0x11b]]
        %v5327 = vstv %s5326
        %v5328 = vmul.f32 %v5327, %v906
        %v5329 = vmul.f32 %v5327, %v907
        %v5330 = vmul.f32 %v5327, %v908
        %v5331 = vmul.f32 %v5327, %v909
        %v5332 = vmul.f32 %v5327, %v910
        %v5333 = vmul.f32 %v5327, %v911
        %v5334 = vmul.f32 %v5327, %v912
        %v5335 = vmul.f32 %v5327, %v913
        %v5336 = vadd.f32 %v5318, %v5328
        %v5337 = vadd.f32 %v5319, %v5329
        %v5338 = vadd.f32 %v5320, %v5330
        %v5339 = vadd.f32 %v5321, %v5331
        %v5340 = vadd.f32 %v5322, %v5332
        %v5341 = vadd.f32 %v5323, %v5333
        %v5342 = vadd.f32 %v5324, %v5334
        %v5343 = vadd.f32 %v5325, %v5335
        %5344 = vset.pattern.permute.xlu0 27
        %5345 = vperm.xlu0 %5344, %v842
        %v5346 = vpop.permute.xlu0 %5345
        %5348 = vset.pattern.permute.xlu0 27
        %5349 = vperm.xlu0 %5348, %v847
        %v5350 = vpop.permute.xlu0 %5349
        %5352 = vset.pattern.permute.xlu0 27
        %5353 = vperm.xlu0 %5352, %v852
        %v5354 = vpop.permute.xlu0 %5353
        %5356 = vset.pattern.permute.xlu0 27
        %5357 = vperm.xlu0 %5356, %v857
        %v5358 = vpop.permute.xlu0 %5357
        %5360 = vset.pattern.permute.xlu0 27
        %5361 = vperm.xlu0 %5360, %v862
        %v5362 = vpop.permute.xlu0 %5361
        %5364 = vset.pattern.permute.xlu0 27
        %5365 = vperm.xlu0 %5364, %v867
        %v5366 = vpop.permute.xlu0 %5365
        %5368 = vset.pattern.permute.xlu0 27
        %5369 = vperm.xlu0 %5368, %v872
        %v5370 = vpop.permute.xlu0 %5369
        %5372 = vset.pattern.permute.xlu0 27
        %5373 = vperm.xlu0 %5372, %v877
        %v5374 = vpop.permute.xlu0 %5373
        %v5376 = vlaneseq
        %v5377 = vshrl.u32 %v5376, 7
        %v5378 = vsub.s32 3, %v5377
        %v5379 = vrot.slane %v721, %v5378
        %v5380 = vadd.f32 %v5346, %v5379
        %v5381 = vadd.f32 %v5350, %v5379
        %v5382 = vadd.f32 %v5354, %v5379
        %v5383 = vadd.f32 %v5358, %v5379
        %v5384 = vadd.f32 %v5362, %v5379
        %v5385 = vadd.f32 %v5366, %v5379
        %v5386 = vadd.f32 %v5370, %v5379
        %v5387 = vadd.f32 %v5374, %v5379
        %v5388 = vadd.f32 %v5380, %v5336
        %v5389 = vadd.f32 %v5381, %v5337
        %v5390 = vadd.f32 %v5382, %v5338
        %v5391 = vadd.f32 %v5383, %v5339
        %v5392 = vadd.f32 %v5384, %v5340
        %v5393 = vadd.f32 %v5385, %v5341
        %v5394 = vadd.f32 %v5386, %v5342
        %v5395 = vadd.f32 %v5387, %v5343
        %vm5396 = vcmp.gt.f32.partialorder %v5388, 0.0
        %vm5397 = vcmp.gt.f32.partialorder %v5389, 0.0
        %vm5398 = vcmp.gt.f32.partialorder %v5390, 0.0
        %vm5399 = vcmp.gt.f32.partialorder %v5391, 0.0
        %vm5400 = vcmp.gt.f32.partialorder %v5392, 0.0
        %vm5401 = vcmp.gt.f32.partialorder %v5393, 0.0
        %vm5402 = vcmp.gt.f32.partialorder %v5394, 0.0
        %vm5403 = vcmp.gt.f32.partialorder %v5395, 0.0
        %v5404 = vmul.f32 %v5388, 0.2
        %v5405 = vmul.f32 %v5389, 0.2
        %v5406 = vmul.f32 %v5390, 0.2
        %v5407 = vmul.f32 %v5391, 0.2
        %v5408 = vmul.f32 %v5392, 0.2
        %v5409 = vmul.f32 %v5393, 0.2
        %v5410 = vmul.f32 %v5394, 0.2
        %v5411 = vmul.f32 %v5395, 0.2
        %v5412 = vsel %vm5396, %v5388, %v5404
        %v5413 = vsel %vm5397, %v5389, %v5405
        %v5414 = vsel %vm5398, %v5390, %v5406
        %v5415 = vsel %vm5399, %v5391, %v5407
        %v5416 = vsel %vm5400, %v5392, %v5408
        %v5417 = vsel %vm5401, %v5393, %v5409
        %v5418 = vsel %vm5402, %v5394, %v5410
        %v5419 = vsel %vm5403, %v5395, %v5411
        %s5420 = sld [smem:[#allocation5 + $0x1b]]
        %v5421 = vstv %s5420
        %v5422 = vmul.f32 %v5421, %v5412
        %v5423 = vmul.f32 %v5421, %v5413
        %v5424 = vmul.f32 %v5421, %v5414
        %v5425 = vmul.f32 %v5421, %v5415
        %v5426 = vmul.f32 %v5421, %v5416
        %v5427 = vmul.f32 %v5421, %v5417
        %v5428 = vmul.f32 %v5421, %v5418
        %v5429 = vmul.f32 %v5421, %v5419
        %v5430 = vadd.f32 %v5290, %v5422
        %v5431 = vadd.f32 %v5291, %v5423
        %v5432 = vadd.f32 %v5292, %v5424
        %v5433 = vadd.f32 %v5293, %v5425
        %v5434 = vadd.f32 %v5294, %v5426
        %v5435 = vadd.f32 %v5295, %v5427
        %v5436 = vadd.f32 %v5296, %v5428
        %v5437 = vadd.f32 %v5297, %v5429
        %s5438 = sld [smem:[#allocation3 + $0x1c]]
        %v5439 = vstv %s5438
        %v5440 = vmul.f32 %v5439, %v888
        %v5441 = vmul.f32 %v5439, %v889
        %v5442 = vmul.f32 %v5439, %v890
        %v5443 = vmul.f32 %v5439, %v891
        %v5444 = vmul.f32 %v5439, %v892
        %v5445 = vmul.f32 %v5439, %v893
        %v5446 = vmul.f32 %v5439, %v894
        %v5447 = vmul.f32 %v5439, %v895
        %s5448 = sld [smem:[#allocation3 + $0x9c]]
        %v5449 = vstv %s5448
        %v5450 = vmul.f32 %v5449, %v897
        %v5451 = vmul.f32 %v5449, %v898
        %v5452 = vmul.f32 %v5449, %v899
        %v5453 = vmul.f32 %v5449, %v900
        %v5454 = vmul.f32 %v5449, %v901
        %v5455 = vmul.f32 %v5449, %v902
        %v5456 = vmul.f32 %v5449, %v903
        %v5457 = vmul.f32 %v5449, %v904
        %v5458 = vadd.f32 %v5440, %v5450
        %v5459 = vadd.f32 %v5441, %v5451
        %v5460 = vadd.f32 %v5442, %v5452
        %v5461 = vadd.f32 %v5443, %v5453
        %v5462 = vadd.f32 %v5444, %v5454
        %v5463 = vadd.f32 %v5445, %v5455
        %v5464 = vadd.f32 %v5446, %v5456
        %v5465 = vadd.f32 %v5447, %v5457
        %s5466 = sld [smem:[#allocation3 + $0x11c]]
        %v5467 = vstv %s5466
        %v5468 = vmul.f32 %v5467, %v906
        %v5469 = vmul.f32 %v5467, %v907
        %v5470 = vmul.f32 %v5467, %v908
        %v5471 = vmul.f32 %v5467, %v909
        %v5472 = vmul.f32 %v5467, %v910
        %v5473 = vmul.f32 %v5467, %v911
        %v5474 = vmul.f32 %v5467, %v912
        %v5475 = vmul.f32 %v5467, %v913
        %v5476 = vadd.f32 %v5458, %v5468
        %v5477 = vadd.f32 %v5459, %v5469
        %v5478 = vadd.f32 %v5460, %v5470
        %v5479 = vadd.f32 %v5461, %v5471
        %v5480 = vadd.f32 %v5462, %v5472
        %v5481 = vadd.f32 %v5463, %v5473
        %v5482 = vadd.f32 %v5464, %v5474
        %v5483 = vadd.f32 %v5465, %v5475
        %5484 = vset.pattern.permute.xlu0 28
        %5485 = vperm.xlu0 %5484, %v842
        %v5486 = vpop.permute.xlu0 %5485
        %5488 = vset.pattern.permute.xlu0 28
        %5489 = vperm.xlu0 %5488, %v847
        %v5490 = vpop.permute.xlu0 %5489
        %5492 = vset.pattern.permute.xlu0 28
        %5493 = vperm.xlu0 %5492, %v852
        %v5494 = vpop.permute.xlu0 %5493
        %5496 = vset.pattern.permute.xlu0 28
        %5497 = vperm.xlu0 %5496, %v857
        %v5498 = vpop.permute.xlu0 %5497
        %5500 = vset.pattern.permute.xlu0 28
        %5501 = vperm.xlu0 %5500, %v862
        %v5502 = vpop.permute.xlu0 %5501
        %5504 = vset.pattern.permute.xlu0 28
        %5505 = vperm.xlu0 %5504, %v867
        %v5506 = vpop.permute.xlu0 %5505
        %5508 = vset.pattern.permute.xlu0 28
        %5509 = vperm.xlu0 %5508, %v872
        %v5510 = vpop.permute.xlu0 %5509
        %5512 = vset.pattern.permute.xlu0 28
        %5513 = vperm.xlu0 %5512, %v877
        %v5514 = vpop.permute.xlu0 %5513
        %v5516 = vlaneseq
        %v5517 = vshrl.u32 %v5516, 7
        %v5518 = vsub.s32 4, %v5517
        %v5519 = vrot.slane %v721, %v5518
        %v5520 = vadd.f32 %v5486, %v5519
        %v5521 = vadd.f32 %v5490, %v5519
        %v5522 = vadd.f32 %v5494, %v5519
        %v5523 = vadd.f32 %v5498, %v5519
        %v5524 = vadd.f32 %v5502, %v5519
        %v5525 = vadd.f32 %v5506, %v5519
        %v5526 = vadd.f32 %v5510, %v5519
        %v5527 = vadd.f32 %v5514, %v5519
        %v5528 = vadd.f32 %v5520, %v5476
        %v5529 = vadd.f32 %v5521, %v5477
        %v5530 = vadd.f32 %v5522, %v5478
        %v5531 = vadd.f32 %v5523, %v5479
        %v5532 = vadd.f32 %v5524, %v5480
        %v5533 = vadd.f32 %v5525, %v5481
        %v5534 = vadd.f32 %v5526, %v5482
        %v5535 = vadd.f32 %v5527, %v5483
        %vm5536 = vcmp.gt.f32.partialorder %v5528, 0.0
        %vm5537 = vcmp.gt.f32.partialorder %v5529, 0.0
        %vm5538 = vcmp.gt.f32.partialorder %v5530, 0.0
        %vm5539 = vcmp.gt.f32.partialorder %v5531, 0.0
        %vm5540 = vcmp.gt.f32.partialorder %v5532, 0.0
        %vm5541 = vcmp.gt.f32.partialorder %v5533, 0.0
        %vm5542 = vcmp.gt.f32.partialorder %v5534, 0.0
        %vm5543 = vcmp.gt.f32.partialorder %v5535, 0.0
        %v5544 = vmul.f32 %v5528, 0.2
        %v5545 = vmul.f32 %v5529, 0.2
        %v5546 = vmul.f32 %v5530, 0.2
        %v5547 = vmul.f32 %v5531, 0.2
        %v5548 = vmul.f32 %v5532, 0.2
        %v5549 = vmul.f32 %v5533, 0.2
        %v5550 = vmul.f32 %v5534, 0.2
        %v5551 = vmul.f32 %v5535, 0.2
        %v5552 = vsel %vm5536, %v5528, %v5544
        %v5553 = vsel %vm5537, %v5529, %v5545
        %v5554 = vsel %vm5538, %v5530, %v5546
        %v5555 = vsel %vm5539, %v5531, %v5547
        %v5556 = vsel %vm5540, %v5532, %v5548
        %v5557 = vsel %vm5541, %v5533, %v5549
        %v5558 = vsel %vm5542, %v5534, %v5550
        %v5559 = vsel %vm5543, %v5535, %v5551
        %s5560 = sld [smem:[#allocation5 + $0x1c]]
        %v5561 = vstv %s5560
        %v5562 = vmul.f32 %v5561, %v5552
        %v5563 = vmul.f32 %v5561, %v5553
        %v5564 = vmul.f32 %v5561, %v5554
        %v5565 = vmul.f32 %v5561, %v5555
        %v5566 = vmul.f32 %v5561, %v5556
        %v5567 = vmul.f32 %v5561, %v5557
        %v5568 = vmul.f32 %v5561, %v5558
        %v5569 = vmul.f32 %v5561, %v5559
        %v5570 = vadd.f32 %v5430, %v5562
        %v5571 = vadd.f32 %v5431, %v5563
        %v5572 = vadd.f32 %v5432, %v5564
        %v5573 = vadd.f32 %v5433, %v5565
        %v5574 = vadd.f32 %v5434, %v5566
        %v5575 = vadd.f32 %v5435, %v5567
        %v5576 = vadd.f32 %v5436, %v5568
        %v5577 = vadd.f32 %v5437, %v5569
        %s5578 = sld [smem:[#allocation3 + $0x1d]]
        %v5579 = vstv %s5578
        %v5580 = vmul.f32 %v5579, %v888
        %v5581 = vmul.f32 %v5579, %v889
        %v5582 = vmul.f32 %v5579, %v890
        %v5583 = vmul.f32 %v5579, %v891
        %v5584 = vmul.f32 %v5579, %v892
        %v5585 = vmul.f32 %v5579, %v893
        %v5586 = vmul.f32 %v5579, %v894
        %v5587 = vmul.f32 %v5579, %v895
        %s5588 = sld [smem:[#allocation3 + $0x9d]]
        %v5589 = vstv %s5588
        %v5590 = vmul.f32 %v5589, %v897
        %v5591 = vmul.f32 %v5589, %v898
        %v5592 = vmul.f32 %v5589, %v899
        %v5593 = vmul.f32 %v5589, %v900
        %v5594 = vmul.f32 %v5589, %v901
        %v5595 = vmul.f32 %v5589, %v902
        %v5596 = vmul.f32 %v5589, %v903
        %v5597 = vmul.f32 %v5589, %v904
        %v5598 = vadd.f32 %v5580, %v5590
        %v5599 = vadd.f32 %v5581, %v5591
        %v5600 = vadd.f32 %v5582, %v5592
        %v5601 = vadd.f32 %v5583, %v5593
        %v5602 = vadd.f32 %v5584, %v5594
        %v5603 = vadd.f32 %v5585, %v5595
        %v5604 = vadd.f32 %v5586, %v5596
        %v5605 = vadd.f32 %v5587, %v5597
        %s5606 = sld [smem:[#allocation3 + $0x11d]]
        %v5607 = vstv %s5606
        %v5608 = vmul.f32 %v5607, %v906
        %v5609 = vmul.f32 %v5607, %v907
        %v5610 = vmul.f32 %v5607, %v908
        %v5611 = vmul.f32 %v5607, %v909
        %v5612 = vmul.f32 %v5607, %v910
        %v5613 = vmul.f32 %v5607, %v911
        %v5614 = vmul.f32 %v5607, %v912
        %v5615 = vmul.f32 %v5607, %v913
        %v5616 = vadd.f32 %v5598, %v5608
        %v5617 = vadd.f32 %v5599, %v5609
        %v5618 = vadd.f32 %v5600, %v5610
        %v5619 = vadd.f32 %v5601, %v5611
        %v5620 = vadd.f32 %v5602, %v5612
        %v5621 = vadd.f32 %v5603, %v5613
        %v5622 = vadd.f32 %v5604, %v5614
        %v5623 = vadd.f32 %v5605, %v5615
        %5624 = vset.pattern.permute.xlu0 29
        %5625 = vperm.xlu0 %5624, %v842
        %v5626 = vpop.permute.xlu0 %5625
        %5628 = vset.pattern.permute.xlu0 29
        %5629 = vperm.xlu0 %5628, %v847
        %v5630 = vpop.permute.xlu0 %5629
        %5632 = vset.pattern.permute.xlu0 29
        %5633 = vperm.xlu0 %5632, %v852
        %v5634 = vpop.permute.xlu0 %5633
        %5636 = vset.pattern.permute.xlu0 29
        %5637 = vperm.xlu0 %5636, %v857
        %v5638 = vpop.permute.xlu0 %5637
        %5640 = vset.pattern.permute.xlu0 29
        %5641 = vperm.xlu0 %5640, %v862
        %v5642 = vpop.permute.xlu0 %5641
        %5644 = vset.pattern.permute.xlu0 29
        %5645 = vperm.xlu0 %5644, %v867
        %v5646 = vpop.permute.xlu0 %5645
        %5648 = vset.pattern.permute.xlu0 29
        %5649 = vperm.xlu0 %5648, %v872
        %v5650 = vpop.permute.xlu0 %5649
        %5652 = vset.pattern.permute.xlu0 29
        %5653 = vperm.xlu0 %5652, %v877
        %v5654 = vpop.permute.xlu0 %5653
        %v5656 = vlaneseq
        %v5657 = vshrl.u32 %v5656, 7
        %v5658 = vsub.s32 5, %v5657
        %v5659 = vrot.slane %v721, %v5658
        %v5660 = vadd.f32 %v5626, %v5659
        %v5661 = vadd.f32 %v5630, %v5659
        %v5662 = vadd.f32 %v5634, %v5659
        %v5663 = vadd.f32 %v5638, %v5659
        %v5664 = vadd.f32 %v5642, %v5659
        %v5665 = vadd.f32 %v5646, %v5659
        %v5666 = vadd.f32 %v5650, %v5659
        %v5667 = vadd.f32 %v5654, %v5659
        %v5668 = vadd.f32 %v5660, %v5616
        %v5669 = vadd.f32 %v5661, %v5617
        %v5670 = vadd.f32 %v5662, %v5618
        %v5671 = vadd.f32 %v5663, %v5619
        %v5672 = vadd.f32 %v5664, %v5620
        %v5673 = vadd.f32 %v5665, %v5621
        %v5674 = vadd.f32 %v5666, %v5622
        %v5675 = vadd.f32 %v5667, %v5623
        %vm5676 = vcmp.gt.f32.partialorder %v5668, 0.0
        %vm5677 = vcmp.gt.f32.partialorder %v5669, 0.0
        %vm5678 = vcmp.gt.f32.partialorder %v5670, 0.0
        %vm5679 = vcmp.gt.f32.partialorder %v5671, 0.0
        %vm5680 = vcmp.gt.f32.partialorder %v5672, 0.0
        %vm5681 = vcmp.gt.f32.partialorder %v5673, 0.0
        %vm5682 = vcmp.gt.f32.partialorder %v5674, 0.0
        %vm5683 = vcmp.gt.f32.partialorder %v5675, 0.0
        %v5684 = vmul.f32 %v5668, 0.2
        %v5685 = vmul.f32 %v5669, 0.2
        %v5686 = vmul.f32 %v5670, 0.2
        %v5687 = vmul.f32 %v5671, 0.2
        %v5688 = vmul.f32 %v5672, 0.2
        %v5689 = vmul.f32 %v5673, 0.2
        %v5690 = vmul.f32 %v5674, 0.2
        %v5691 = vmul.f32 %v5675, 0.2
        %v5692 = vsel %vm5676, %v5668, %v5684
        %v5693 = vsel %vm5677, %v5669, %v5685
        %v5694 = vsel %vm5678, %v5670, %v5686
        %v5695 = vsel %vm5679, %v5671, %v5687
        %v5696 = vsel %vm5680, %v5672, %v5688
        %v5697 = vsel %vm5681, %v5673, %v5689
        %v5698 = vsel %vm5682, %v5674, %v5690
        %v5699 = vsel %vm5683, %v5675, %v5691
        %s5700 = sld [smem:[#allocation5 + $0x1d]]
        %v5701 = vstv %s5700
        %v5702 = vmul.f32 %v5701, %v5692
        %v5703 = vmul.f32 %v5701, %v5693
        %v5704 = vmul.f32 %v5701, %v5694
        %v5705 = vmul.f32 %v5701, %v5695
        %v5706 = vmul.f32 %v5701, %v5696
        %v5707 = vmul.f32 %v5701, %v5697
        %v5708 = vmul.f32 %v5701, %v5698
        %v5709 = vmul.f32 %v5701, %v5699
        %v5710 = vadd.f32 %v5570, %v5702
        %v5711 = vadd.f32 %v5571, %v5703
        %v5712 = vadd.f32 %v5572, %v5704
        %v5713 = vadd.f32 %v5573, %v5705
        %v5714 = vadd.f32 %v5574, %v5706
        %v5715 = vadd.f32 %v5575, %v5707
        %v5716 = vadd.f32 %v5576, %v5708
        %v5717 = vadd.f32 %v5577, %v5709
        %v5718 = vsel %vm2322, %v5710, -1e+30
        %v5719 = vsel %vm2323, %v5711, -1e+30
        %v5720 = vsel %vm2324, %v5712, -1e+30
        %v5721 = vsel %vm2325, %v5713, -1e+30
        %v5722 = vsel %vm2326, %v5714, -1e+30
        %v5723 = vsel %vm2327, %v5715, -1e+30
        %v5724 = vsel %vm2328, %v5716, -1e+30
        %v5725 = vsel %vm2329, %v5717, -1e+30
        %5726 = vmax.xlane.f32.xlu0 %v5718
        %v5727 = vpop.xlane.xlu0 %5726
        %5728 = vmax.xlane.f32.xlu0 %v5719
        %v5729 = vpop.xlane.xlu0 %5728
        %5730 = vmax.xlane.f32.xlu0 %v5720
        %v5731 = vpop.xlane.xlu0 %5730
        %5732 = vmax.xlane.f32.xlu0 %v5721
        %v5733 = vpop.xlane.xlu0 %5732
        %5734 = vmax.xlane.f32.xlu0 %v5722
        %v5735 = vpop.xlane.xlu0 %5734
        %5736 = vmax.xlane.f32.xlu0 %v5723
        %v5737 = vpop.xlane.xlu0 %5736
        %5738 = vmax.xlane.f32.xlu0 %v5724
        %v5739 = vpop.xlane.xlu0 %5738
        %5740 = vmax.xlane.f32.xlu0 %v5725
        %v5741 = vpop.xlane.xlu0 %5740
        %v5742 = vsub.f32 %v5718, %v5727
        %v5743 = vsub.f32 %v5719, %v5729
        %v5744 = vsub.f32 %v5720, %v5731
        %v5745 = vsub.f32 %v5721, %v5733
        %v5746 = vsub.f32 %v5722, %v5735
        %v5747 = vsub.f32 %v5723, %v5737
        %v5748 = vsub.f32 %v5724, %v5739
        %v5749 = vsub.f32 %v5725, %v5741
        %v5750 = vmul.f32 %v5742, 1.442695
        %v5751 = vpow.pop %v5750
        %v5752 = vmul.f32 %v5743, 1.442695
        %v5753 = vpow.pop %v5752
        %v5754 = vmul.f32 %v5744, 1.442695
        %v5755 = vpow.pop %v5754
        %v5756 = vmul.f32 %v5745, 1.442695
        %v5757 = vpow.pop %v5756
        %v5758 = vmul.f32 %v5746, 1.442695
        %v5759 = vpow.pop %v5758
        %v5760 = vmul.f32 %v5747, 1.442695
        %v5761 = vpow.pop %v5760
        %v5762 = vmul.f32 %v5748, 1.442695
        %v5763 = vpow.pop %v5762
        %v5764 = vmul.f32 %v5749, 1.442695
        %v5765 = vpow.pop %v5764
        %v5766 = vmul.f32 %v5751, %v880
        %v5767 = vmul.f32 %v5753, %v881
        %v5768 = vmul.f32 %v5755, %v882
        %v5769 = vmul.f32 %v5757, %v883
        %v5770 = vmul.f32 %v5759, %v884
        %v5771 = vmul.f32 %v5761, %v885
        %v5772 = vmul.f32 %v5763, %v886
        %v5773 = vmul.f32 %v5765, %v887
        %5774 = vadd.xlane.f32.xlu0 %v5766
        %v5775 = vpop.xlane.xlu0 %5774
        %5776 = vadd.xlane.f32.xlu0 %v5767
        %v5777 = vpop.xlane.xlu0 %5776
        %5778 = vadd.xlane.f32.xlu0 %v5768
        %v5779 = vpop.xlane.xlu0 %5778
        %5780 = vadd.xlane.f32.xlu0 %v5769
        %v5781 = vpop.xlane.xlu0 %5780
        %5782 = vadd.xlane.f32.xlu0 %v5770
        %v5783 = vpop.xlane.xlu0 %5782
        %5784 = vadd.xlane.f32.xlu0 %v5771
        %v5785 = vpop.xlane.xlu0 %5784
        %5786 = vadd.xlane.f32.xlu0 %v5772
        %v5787 = vpop.xlane.xlu0 %5786
        %5788 = vadd.xlane.f32.xlu0 %v5773
        %v5789 = vpop.xlane.xlu0 %5788
        %v5790 = vmax.f32 %v5775, 1e-20
        %v5791 = vmax.f32 %v5777, 1e-20
        %v5792 = vmax.f32 %v5779, 1e-20
        %v5793 = vmax.f32 %v5781, 1e-20
        %v5794 = vmax.f32 %v5783, 1e-20
        %v5795 = vmax.f32 %v5785, 1e-20
        %v5796 = vmax.f32 %v5787, 1e-20
        %v5797 = vmax.f32 %v5789, 1e-20
        %v5798 = vrcp.pop %v5790
        %v5799 = vmul.f32 %v5766, %v5798
        %v5800 = vrcp.pop %v5791
        %v5801 = vmul.f32 %v5767, %v5800
        %v5802 = vrcp.pop %v5792
        %v5803 = vmul.f32 %v5768, %v5802
        %v5804 = vrcp.pop %v5793
        %v5805 = vmul.f32 %v5769, %v5804
        %v5806 = vrcp.pop %v5794
        %v5807 = vmul.f32 %v5770, %v5806
        %v5808 = vrcp.pop %v5795
        %v5809 = vmul.f32 %v5771, %v5808
        %v5810 = vrcp.pop %v5796
        %v5811 = vmul.f32 %v5772, %v5810
        %v5812 = vrcp.pop %v5797
        %v5813 = vmul.f32 %v5773, %v5812
        %5814 = vrot.lane.b32.xlu0 %v624, 108
        %v5815 = vpop.permute.xlu0 %5814
        %5816 = vrot.lane.b32.xlu0 %v629, 108
        %v5817 = vpop.permute.xlu0 %5816
        %5818 = vrot.lane.b32.xlu0 %v634, 108
        %v5819 = vpop.permute.xlu0 %5818
        %5820 = vrot.lane.b32.xlu0 %v639, 108
        %v5821 = vpop.permute.xlu0 %5820
        %5822 = vrot.lane.b32.xlu0 %v644, 108
        %v5823 = vpop.permute.xlu0 %5822
        %5824 = vrot.lane.b32.xlu0 %v649, 108
        %v5825 = vpop.permute.xlu0 %5824
        %5826 = vrot.lane.b32.xlu0 %v654, 108
        %v5827 = vpop.permute.xlu0 %5826
        %5828 = vrot.lane.b32.xlu0 %v659, 108
        %v5829 = vpop.permute.xlu0 %5828
        %5830 = vrot.lane.b32.xlu0 %v664, 108
        %v5831 = vpop.permute.xlu0 %5830
        %5832 = vrot.lane.b32.xlu0 %v669, 108
        %v5833 = vpop.permute.xlu0 %5832
        %5834 = vrot.lane.b32.xlu0 %v674, 108
        %v5835 = vpop.permute.xlu0 %5834
        %5836 = vrot.lane.b32.xlu0 %v679, 108
        %v5837 = vpop.permute.xlu0 %5836
        %5838 = vrot.lane.b32.xlu0 %v684, 108
        %v5839 = vpop.permute.xlu0 %5838
        %5840 = vrot.lane.b32.xlu0 %v689, 108
        %v5841 = vpop.permute.xlu0 %5840
        %5842 = vrot.lane.b32.xlu0 %v694, 108
        %v5843 = vpop.permute.xlu0 %5842
        %5844 = vrot.lane.b32.xlu0 %v699, 108
        %v5845 = vpop.permute.xlu0 %5844
        %5862 = vrot.lane.b32.xlu0 %v2429, 108
        %v5863 = vpop.permute.xlu0 %5862
        %5865 = vmatprep.subr.mxu0 0.0
        %5866 = vmatpush1.msra.mxu0 %v5845
        %5867 = vmatprep.subr.mxu0 0.0
        %5868 = vmatpush1.msra.mxu0 %v5843
        %5869 = vmatprep.subr.mxu0 0.0
        %5870 = vmatpush1.msra.mxu0 %v5841
        %5871 = vmatprep.subr.mxu0 0.0
        %5872 = vmatpush1.msra.mxu0 %v5839
        %5873 = vmatprep.subr.mxu0 0.0
        %5874 = vmatpush1.msra.mxu0 %v5837
        %5875 = vmatprep.subr.mxu0 0.0
        %5876 = vmatpush1.msra.mxu0 %v5835
        %5877 = vmatprep.subr.mxu0 0.0
        %5878 = vmatpush1.msra.mxu0 %v5833
        %5879 = vmatprep.subr.mxu0 0.0
        %5880 = vmatpush1.msra.mxu0 %v5831
        %5881 = vmatprep.subr.mxu0 0.0
        %5882 = vmatpush1.msra.mxu0 %v5829
        %5883 = vmatprep.subr.mxu0 0.0
        %5884 = vmatpush1.msra.mxu0 %v5827
        %5885 = vmatprep.subr.mxu0 0.0
        %5886 = vmatpush1.msra.mxu0 %v5825
        %5887 = vmatprep.subr.mxu0 0.0
        %5888 = vmatpush1.msra.mxu0 %v5823
        %5889 = vmatprep.subr.mxu0 0.0
        %5890 = vmatpush1.msra.mxu0 %v5821
        %5891 = vmatprep.subr.mxu0 0.0
        %5892 = vmatpush1.msra.mxu0 %v5819
        %5893 = vmatprep.subr.mxu0 0.0
        %5894 = vmatpush1.msra.mxu0 %v5817
        %5895 = vmatprep.subr.mxu0 0.0
        %5896 = vmatpush1.msra.mxu0 %v5815
        %5897 = vmatprep.subr.mxu0 0.0
        %5898 = vmatpush2.msra.mxu0 0.0
        %5899 = vmatprep.subr.mxu0 0.0
        %5900 = vmatpush2.msra.mxu0 0.0
        %5901 = vmatprep.subr.mxu0 0.0
        %5902 = vmatpush2.msra.mxu0 0.0
        %5903 = vmatprep.subr.mxu0 0.0
        %5904 = vmatpush2.msra.mxu0 0.0
        %5905 = vmatprep.subr.mxu0 0.0
        %5906 = vmatpush2.msra.mxu0 0.0
        %5907 = vmatprep.subr.mxu0 0.0
        %5908 = vmatpush2.msra.mxu0 0.0
        %5909 = vmatprep.subr.mxu0 0.0
        %5910 = vmatpush2.msra.mxu0 0.0
        %5911 = vmatprep.subr.mxu0 0.0
        %5912 = vmatpush2.msra.mxu0 0.0
        %5913 = vmatprep.subr.mxu0 0.0
        %5914 = vmatpush2.msra.mxu0 0.0
        %5915 = vmatprep.subr.mxu0 0.0
        %5916 = vmatpush2.msra.mxu0 0.0
        %5917 = vmatprep.subr.mxu0 0.0
        %5918 = vmatpush2.msra.mxu0 0.0
        %5919 = vmatprep.subr.mxu0 0.0
        %5920 = vmatpush2.msra.mxu0 0.0
        %5921 = vmatprep.subr.mxu0 0.0
        %5922 = vmatpush2.msra.mxu0 0.0
        %5923 = vmatprep.subr.mxu0 0.0
        %5924 = vmatpush2.msra.mxu0 0.0
        %5925 = vmatprep.subr.mxu0 0.0
        %5926 = vmatpush2.msra.mxu0 0.0
        %5927 = vmatprep.subr.mxu0 0.0
        %5928 = vmatpush2.msra.mxu0 0.0
        %5929 = vmatprep.mubr.f32.mxu0 0.0
        %5930 = vmatmul.mubr.f32.gmra.mxu0 %v5799
        %v5931 = vpop.f32.mrf.mxu0
        %v5932 = vadd.f32 %v5863, %v5931
        %v5933 = vpop.f32.mrf.mxu0
        %5934 = vmatprep.mubr.f32.mxu0 0.0
        %5935 = vmatmul.mubr.f32.gmra.mxu0 %v5801
        %v5936 = vpop.f32.mrf.mxu0
        %v5937 = vadd.f32 %v5863, %v5936
        %v5938 = vpop.f32.mrf.mxu0
        %5939 = vmatprep.mubr.f32.mxu0 0.0
        %5940 = vmatmul.mubr.f32.gmra.mxu0 %v5803
        %v5941 = vpop.f32.mrf.mxu0
        %v5942 = vadd.f32 %v5863, %v5941
        %v5943 = vpop.f32.mrf.mxu0
        %5944 = vmatprep.mubr.f32.mxu0 0.0
        %5945 = vmatmul.mubr.f32.gmra.mxu0 %v5805
        %v5946 = vpop.f32.mrf.mxu0
        %v5947 = vadd.f32 %v5863, %v5946
        %v5948 = vpop.f32.mrf.mxu0
        %5949 = vmatprep.mubr.f32.mxu0 0.0
        %5950 = vmatmul.mubr.f32.gmra.mxu0 %v5807
        %v5951 = vpop.f32.mrf.mxu0
        %v5952 = vadd.f32 %v5863, %v5951
        %v5953 = vpop.f32.mrf.mxu0
        %5954 = vmatprep.mubr.f32.mxu0 0.0
        %5955 = vmatmul.mubr.f32.gmra.mxu0 %v5809
        %v5956 = vpop.f32.mrf.mxu0
        %v5957 = vadd.f32 %v5863, %v5956
        %v5958 = vpop.f32.mrf.mxu0
        %5959 = vmatprep.mubr.f32.mxu0 0.0
        %5960 = vmatmul.mubr.f32.gmra.mxu0 %v5811
        %v5961 = vpop.f32.mrf.mxu0
        %v5962 = vadd.f32 %v5863, %v5961
        %v5963 = vpop.f32.mrf.mxu0
        %5964 = vmatprep.mubr.f32.mxu0 0.0
        %5965 = vmatmul.mubr.f32.gmra.mxu0 %v5813
        %v5966 = vpop.f32.mrf.mxu0
        %v5967 = vadd.f32 %v5863, %v5966
        %v5968 = vpop.f32.mrf.mxu0
        %5969 = vdwg.mxu0
        %vm5970 = vcmp.gt.f32.partialorder %v5932, 0.0
        %vm5971 = vcmp.gt.f32.partialorder %v5937, 0.0
        %vm5972 = vcmp.gt.f32.partialorder %v5942, 0.0
        %vm5973 = vcmp.gt.f32.partialorder %v5947, 0.0
        %vm5974 = vcmp.gt.f32.partialorder %v5952, 0.0
        %vm5975 = vcmp.gt.f32.partialorder %v5957, 0.0
        %vm5976 = vcmp.gt.f32.partialorder %v5962, 0.0
        %vm5977 = vcmp.gt.f32.partialorder %v5967, 0.0
        %v5978 = vmin.f32 %v5932, 0.0
        %v5979 = vmin.f32 %v5937, 0.0
        %v5980 = vmin.f32 %v5942, 0.0
        %v5981 = vmin.f32 %v5947, 0.0
        %v5982 = vmin.f32 %v5952, 0.0
        %v5983 = vmin.f32 %v5957, 0.0
        %v5984 = vmin.f32 %v5962, 0.0
        %v5985 = vmin.f32 %v5967, 0.0
        %v5986 = vmul.f32 %v5978, 1.442695
        %v5987 = vpow.pop %v5986
        %v5988 = vmul.f32 %v5979, 1.442695
        %v5989 = vpow.pop %v5988
        %v5990 = vmul.f32 %v5980, 1.442695
        %v5991 = vpow.pop %v5990
        %v5992 = vmul.f32 %v5981, 1.442695
        %v5993 = vpow.pop %v5992
        %v5994 = vmul.f32 %v5982, 1.442695
        %v5995 = vpow.pop %v5994
        %v5996 = vmul.f32 %v5983, 1.442695
        %v5997 = vpow.pop %v5996
        %v5998 = vmul.f32 %v5984, 1.442695
        %v5999 = vpow.pop %v5998
        %v6000 = vmul.f32 %v5985, 1.442695
        %v6001 = vpow.pop %v6000
        %v6002 = vsub.f32 %v5987, 1.0
        %v6003 = vsub.f32 %v5989, 1.0
        %v6004 = vsub.f32 %v5991, 1.0
        %v6005 = vsub.f32 %v5993, 1.0
        %v6006 = vsub.f32 %v5995, 1.0
        %v6007 = vsub.f32 %v5997, 1.0
        %v6008 = vsub.f32 %v5999, 1.0
        %v6009 = vsub.f32 %v6001, 1.0
        %v6010 = vsel %vm5970, %v5932, %v6002
        %v6011 = vsel %vm5971, %v5937, %v6003
        %v6012 = vsel %vm5972, %v5942, %v6004
        %v6013 = vsel %vm5973, %v5947, %v6005
        %v6014 = vsel %vm5974, %v5952, %v6006
        %v6015 = vsel %vm5975, %v5957, %v6007
        %v6016 = vsel %vm5976, %v5962, %v6008
        %v6017 = vsel %vm5977, %v5967, %v6009
        %s6018 = scalar_lea.vmem %s470, 128 [#allocation7]
        %6019 = vst.msk [vmem:[%s6018] sm:$0xff] %vm2583, %v6010
        %6020 = vst.msk [vmem:[%s6018 + $0x8] sm:$0xff] %vm2583, %v6011
        %6021 = vst.msk [vmem:[%s6018 + $0x10] sm:$0xff] %vm2583, %v6012
        %6022 = vst.msk [vmem:[%s6018 + $0x18] sm:$0xff] %vm2583, %v6013
        %6023 = vst.msk [vmem:[%s6018 + $0x20] sm:$0xff] %vm2583, %v6014
        %6024 = vst.msk [vmem:[%s6018 + $0x28] sm:$0xff] %vm2583, %v6015
        %6025 = vst.msk [vmem:[%s6018 + $0x30] sm:$0xff] %vm2583, %v6016
        %6026 = vst.msk [vmem:[%s6018 + $0x38] sm:$0xff] %vm2583, %v6017
        %s6027 = sand.u32 %s207, 1
        %s6028 = sand.u32 %s207, 1
        %s6029 = smul.addr %s6028, 192
        %s6030 = scalar_lea.vmem [#allocation7], %s6029
        // Predicated region
        $region99: #{gat_model_forward.2} parent=85 // pred_check
          %p6031 = pneg %p217
        $region100: #{gat_model_forward.2} parent=85 // pred_check_branch
          %6033 = sbr.rel (%p6031) target = $region102
        $region101: #{gat_model_forward.2} parent=85 // pred_region
          %s6034 = smul.u32 8, %s21
          %s6035 = smul.addr %s6034, 8
          %s6036 = scalar_lea.vmem %s8, %s6035
          // Predicated region
          $region103: #{gat_model_forward.2} parent=101 // pred_check
            _
          $region104: #{gat_model_forward.2} parent=101 // pred_check_branch
            %6038 = sbr.rel (0) target = $region106
          $region105: #{gat_model_forward.2} parent=101 // pred_region
            // Predicated region
            $region107: #{gat_model_forward.2} parent=105 // pred_check
              _
            $region108: #{gat_model_forward.2} parent=105 // pred_check_branch
              %6040 = sbr.rel (0) target = $region110
            $region109: #{gat_model_forward.2} parent=105 // pred_region
              // Predicated region
              $region122: #{gat_model_forward.2} parent=109 // pred_check
                _
              $region123: #{gat_model_forward.2} parent=109 // pred_check_branch
                %6102 = sbr.rel (0) target = $region125
              $region124: #{gat_model_forward.2} parent=109 // pred_region
                loop: start=0, step=1, limit=1
                $region126: #{gat_model_forward.2} parent=124 // loop_pre_header
                  _
                $region127: #{gat_model_forward.2} parent=124 // loop_header
                  %s6104 = sphi 0, %s6108
                  %p6105 = scmp.ge.s32.totalorder %s6104, 1
                  %s6109 = sphi %s6030, %s6030
                  %s6110 = sphi %s6036, %s6036
                $region128: #{gat_model_forward.2} parent=124 // loop_header_branch
                  %6107 = sbr.rel (%p6105) target = $region132
                $region129: #{gat_model_forward.2} parent=124 // loop_body
                  %v6111 = vld [vmem:[%s6109] sm:$0xff]
                  %6112 = vst [vmem:[%s6110] sm:$0xff] %v6111
                  %v6113 = vld [vmem:[%s6109 + $0x8] sm:$0xff]
                  %6114 = vst [vmem:[%s6110 + $0x8] sm:$0xff] %v6113
                  %v6115 = vld [vmem:[%s6109 + $0x10] sm:$0xff]
                  %6116 = vst [vmem:[%s6110 + $0x10] sm:$0xff] %v6115
                  %v6117 = vld [vmem:[%s6109 + $0x18] sm:$0xff]
                  %6118 = vst [vmem:[%s6110 + $0x18] sm:$0xff] %v6117
                  %v6119 = vld [vmem:[%s6109 + $0x20] sm:$0xff]
                  %6120 = vst [vmem:[%s6110 + $0x20] sm:$0xff] %v6119
                  %v6121 = vld [vmem:[%s6109 + $0x28] sm:$0xff]
                  %6122 = vst [vmem:[%s6110 + $0x28] sm:$0xff] %v6121
                  %v6123 = vld [vmem:[%s6109 + $0x30] sm:$0xff]
                  %6124 = vst [vmem:[%s6110 + $0x30] sm:$0xff] %v6123
                  %v6125 = vld [vmem:[%s6109 + $0x38] sm:$0xff]
                  %6126 = vst [vmem:[%s6110 + $0x38] sm:$0xff] %v6125
                  %v6127 = vld [vmem:[%s6109 + $0x40] sm:$0xff]
                  %6128 = vst [vmem:[%s6110 + $0x80] sm:$0xff] %v6127
                  %v6129 = vld [vmem:[%s6109 + $0x48] sm:$0xff]
                  %6130 = vst [vmem:[%s6110 + $0x88] sm:$0xff] %v6129
                  %v6131 = vld [vmem:[%s6109 + $0x50] sm:$0xff]
                  %6132 = vst [vmem:[%s6110 + $0x90] sm:$0xff] %v6131
                  %v6133 = vld [vmem:[%s6109 + $0x58] sm:$0xff]
                  %6134 = vst [vmem:[%s6110 + $0x98] sm:$0xff] %v6133
                  %v6135 = vld [vmem:[%s6109 + $0x60] sm:$0xff]
                  %6136 = vst [vmem:[%s6110 + $0xa0] sm:$0xff] %v6135
                  %v6137 = vld [vmem:[%s6109 + $0x68] sm:$0xff]
                  %6138 = vst [vmem:[%s6110 + $0xa8] sm:$0xff] %v6137
                  %v6139 = vld [vmem:[%s6109 + $0x70] sm:$0xff]
                  %6140 = vst [vmem:[%s6110 + $0xb0] sm:$0xff] %v6139
                  %v6141 = vld [vmem:[%s6109 + $0x78] sm:$0xff]
                  %6142 = vst [vmem:[%s6110 + $0xb8] sm:$0xff] %v6141
                  %v6143 = vld [vmem:[%s6109 + $0x80] sm:$0xff]
                  %6144 = vst [vmem:[%s6110 + $0x100] sm:$0xff] %v6143
                  %v6145 = vld [vmem:[%s6109 + $0x88] sm:$0xff]
                  %6146 = vst [vmem:[%s6110 + $0x108] sm:$0xff] %v6145
                  %v6147 = vld [vmem:[%s6109 + $0x90] sm:$0xff]
                  %6148 = vst [vmem:[%s6110 + $0x110] sm:$0xff] %v6147
                  %v6149 = vld [vmem:[%s6109 + $0x98] sm:$0xff]
                  %6150 = vst [vmem:[%s6110 + $0x118] sm:$0xff] %v6149
                  %v6151 = vld [vmem:[%s6109 + $0xa0] sm:$0xff]
                  %6152 = vst [vmem:[%s6110 + $0x120] sm:$0xff] %v6151
                  %v6153 = vld [vmem:[%s6109 + $0xa8] sm:$0xff]
                  %6154 = vst [vmem:[%s6110 + $0x128] sm:$0xff] %v6153
                  %v6155 = vld [vmem:[%s6109 + $0xb0] sm:$0xff]
                  %6156 = vst [vmem:[%s6110 + $0x130] sm:$0xff] %v6155
                  %v6157 = vld [vmem:[%s6109 + $0xb8] sm:$0xff]
                  %6158 = vst [vmem:[%s6110 + $0x138] sm:$0xff] %v6157
                $region130: #{gat_model_forward.2} parent=124 // loop_footer
                  %s6108 = sadd.s32 1, %s6104
                $region131: #{gat_model_forward.2} parent=124 // loop_footer_branch
                  %6103 = sbr.rel target = $region127
                $region132: #{gat_model_forward.2} parent=124 // loop_exit
                  _
              $region125: #{gat_model_forward.2} parent=109 // pred_fallthru
                _
              // Predicated region
              $region133: #{gat_model_forward.2} parent=109 // pred_check
                _
              $region134: #{gat_model_forward.2} parent=109 // pred_check_branch
                %6160 = sbr.rel target = $region136
              $region135: #{gat_model_forward.2} parent=109 // pred_region
                _
              $region136: #{gat_model_forward.2} parent=109 // pred_fallthru
                _
            $region110: #{gat_model_forward.2} parent=105 // pred_fallthru
              _
            // Predicated region
            $region111: #{gat_model_forward.2} parent=105 // pred_check
              _
            $region112: #{gat_model_forward.2} parent=105 // pred_check_branch
              %6042 = sbr.rel target = $region114
            $region113: #{gat_model_forward.2} parent=105 // pred_region
              %s6044 = ssub.s32 256, 1
              loop: start=0, step=1, limit=1
              $region115: #{gat_model_forward.2} parent=113 // loop_pre_header
                _
              $region116: #{gat_model_forward.2} parent=113 // loop_header
                %s6046 = sphi 0, %s6050
                %p6047 = scmp.ge.s32.totalorder %s6046, 1
                %s6051 = sphi %s6030, %s6030
                %s6052 = sphi %s6036, %s6036
              $region117: #{gat_model_forward.2} parent=113 // loop_header_branch
                %6049 = sbr.rel (%p6047) target = $region121
              $region118: #{gat_model_forward.2} parent=113 // loop_body
                %v6053 = vld [vmem:[%s6051] sm:%s6044]
                %6054 = vst [vmem:[%s6052] sm:%s6044] %v6053
                %v6055 = vld [vmem:[%s6051 + $0x8] sm:%s6044]
                %6056 = vst [vmem:[%s6052 + $0x8] sm:%s6044] %v6055
                %v6057 = vld [vmem:[%s6051 + $0x10] sm:%s6044]
                %6058 = vst [vmem:[%s6052 + $0x10] sm:%s6044] %v6057
                %v6059 = vld [vmem:[%s6051 + $0x18] sm:%s6044]
                %6060 = vst [vmem:[%s6052 + $0x18] sm:%s6044] %v6059
                %v6061 = vld [vmem:[%s6051 + $0x20] sm:%s6044]
                %6062 = vst [vmem:[%s6052 + $0x20] sm:%s6044] %v6061
                %v6063 = vld [vmem:[%s6051 + $0x28] sm:%s6044]
                %6064 = vst [vmem:[%s6052 + $0x28] sm:%s6044] %v6063
                %v6065 = vld [vmem:[%s6051 + $0x30] sm:%s6044]
                %6066 = vst [vmem:[%s6052 + $0x30] sm:%s6044] %v6065
                %v6067 = vld [vmem:[%s6051 + $0x38] sm:%s6044]
                %6068 = vst [vmem:[%s6052 + $0x38] sm:%s6044] %v6067
                %v6069 = vld [vmem:[%s6051 + $0x40] sm:%s6044]
                %6070 = vst [vmem:[%s6052 + $0x80] sm:%s6044] %v6069
                %v6071 = vld [vmem:[%s6051 + $0x48] sm:%s6044]
                %6072 = vst [vmem:[%s6052 + $0x88] sm:%s6044] %v6071
                %v6073 = vld [vmem:[%s6051 + $0x50] sm:%s6044]
                %6074 = vst [vmem:[%s6052 + $0x90] sm:%s6044] %v6073
                %v6075 = vld [vmem:[%s6051 + $0x58] sm:%s6044]
                %6076 = vst [vmem:[%s6052 + $0x98] sm:%s6044] %v6075
                %v6077 = vld [vmem:[%s6051 + $0x60] sm:%s6044]
                %6078 = vst [vmem:[%s6052 + $0xa0] sm:%s6044] %v6077
                %v6079 = vld [vmem:[%s6051 + $0x68] sm:%s6044]
                %6080 = vst [vmem:[%s6052 + $0xa8] sm:%s6044] %v6079
                %v6081 = vld [vmem:[%s6051 + $0x70] sm:%s6044]
                %6082 = vst [vmem:[%s6052 + $0xb0] sm:%s6044] %v6081
                %v6083 = vld [vmem:[%s6051 + $0x78] sm:%s6044]
                %6084 = vst [vmem:[%s6052 + $0xb8] sm:%s6044] %v6083
                %v6085 = vld [vmem:[%s6051 + $0x80] sm:%s6044]
                %6086 = vst [vmem:[%s6052 + $0x100] sm:%s6044] %v6085
                %v6087 = vld [vmem:[%s6051 + $0x88] sm:%s6044]
                %6088 = vst [vmem:[%s6052 + $0x108] sm:%s6044] %v6087
                %v6089 = vld [vmem:[%s6051 + $0x90] sm:%s6044]
                %6090 = vst [vmem:[%s6052 + $0x110] sm:%s6044] %v6089
                %v6091 = vld [vmem:[%s6051 + $0x98] sm:%s6044]
                %6092 = vst [vmem:[%s6052 + $0x118] sm:%s6044] %v6091
                %v6093 = vld [vmem:[%s6051 + $0xa0] sm:%s6044]
                %6094 = vst [vmem:[%s6052 + $0x120] sm:%s6044] %v6093
                %v6095 = vld [vmem:[%s6051 + $0xa8] sm:%s6044]
                %6096 = vst [vmem:[%s6052 + $0x128] sm:%s6044] %v6095
                %v6097 = vld [vmem:[%s6051 + $0xb0] sm:%s6044]
                %6098 = vst [vmem:[%s6052 + $0x130] sm:%s6044] %v6097
                %v6099 = vld [vmem:[%s6051 + $0xb8] sm:%s6044]
                %6100 = vst [vmem:[%s6052 + $0x138] sm:%s6044] %v6099
              $region119: #{gat_model_forward.2} parent=113 // loop_footer
                %s6050 = sadd.s32 1, %s6046
              $region120: #{gat_model_forward.2} parent=113 // loop_footer_branch
                %6045 = sbr.rel target = $region116
              $region121: #{gat_model_forward.2} parent=113 // loop_exit
                _
            $region114: #{gat_model_forward.2} parent=105 // pred_fallthru
              _
          $region106: #{gat_model_forward.2} parent=101 // pred_fallthru
            _
          %6161 = vnop
        $region102: #{gat_model_forward.2} parent=85 // pred_fallthru
          _
      $region86: #{gat_model_forward.2} parent=5 // pred_fallthru
        _
      %p6162 = scmp.le.s32.totalorder 2, %s16
      // Predicated region
      $region137: #{gat_model_forward.2} parent=5 // pred_check
        %p6163 = pneg %p6162
      $region138: #{gat_model_forward.2} parent=5 // pred_check_branch
        %6165 = sbr.rel (%p6163) target = $region140
      $region139: #{gat_model_forward.2} parent=5 // pred_region
        %s6166 = ssub.s32 %s16, 2
        // Predicated region
        $region141: #{gat_model_forward.2} parent=139 // pred_check
          %p6167 = pneg %p223
        $region142: #{gat_model_forward.2} parent=139 // pred_check_branch
          %6169 = sbr.rel (%p6167) target = $region144
        $region143: #{gat_model_forward.2} parent=139 // pred_region
          %s6170 = sand.u32 %s208, 1
          %s6171 = sand.u32 %s208, 1
          %s6172 = smul.addr %s6171, 192
          %s6173 = scalar_lea.vmem [#allocation7], %s6172
        $region144: #{gat_model_forward.2} parent=139 // pred_fallthru
          _
      $region140: #{gat_model_forward.2} parent=5 // pred_fallthru
        _
    $region6: #{gat_model_forward.2} parent=1 // loop_footer
      %s20 = sadd.s32 1, %s16
    $region7: #{gat_model_forward.2} parent=1 // loop_footer_branch
      %15 = sbr.rel target = $region3
    $region8: #{gat_model_forward.2} parent=1 // loop_exit
      _
    %6174 = vsyncpa [#allocation4], 1
    %s6175 = scalar_lea.sflag [#allocation4], 1
    %6176 = vsyncpa %s6175, 1
    %6177 = vsyncpa [#allocation6], 1

</llo_original>
